<compile_context>
chip_gen: v5e
topology: v5e:2x2
jax: 0.10.0
libtpu: 0.0.40
codegen_flags: <defaults>
</compile_context>

<pallas_src>
import functools
import math

import jax
import jax.numpy as jnp
from jax import lax
from jax.experimental import pallas as pl
from jax.experimental.pallas import tpu as pltpu


# ----------------------------------------------------------------------------
# shared math helpers (used verbatim by the Pallas kernel and the reference)
# ----------------------------------------------------------------------------
def _mxu_dot(a, b):
    """Matmul with bf16 operands, f32 accumulation (MXU fast path)."""
    return jnp.dot(a.astype(jnp.bfloat16), b.astype(jnp.bfloat16),
                   preferred_element_type=jnp.float32)


def _mxu_dot_nt(a, b):
    """a @ b.T with the transpose folded into the MXU (contract last dims)."""
    return lax.dot_general(a.astype(jnp.bfloat16), b.astype(jnp.bfloat16),
                           dimension_numbers=(((1,), (1,)), ((), ())),
                           preferred_element_type=jnp.float32)


def _layer_norm(x, gamma, beta, eps=1e-5):
    mu = jnp.mean(x, axis=-1, keepdims=True)
    var = jnp.mean(jnp.square(x - mu), axis=-1, keepdims=True)
    return (x - mu) * lax.rsqrt(var + eps) * gamma + beta


def timing_signal(length, channels, min_timescale=1.0, max_timescale=10000.0):
    """QANet/PIECER sinusoid timing signal, shape (length, channels)."""
    position = jnp.arange(length, dtype=jnp.float32)
    num_timescales = channels // 2
    log_timescale_increment = (math.log(float(max_timescale) / float(min_timescale))
                               / (float(num_timescales) - 1))
    inv_timescales = min_timescale * jnp.exp(
        jnp.arange(num_timescales, dtype=jnp.float32) * -log_timescale_increment)
    scaled_time = position[:, None] * inv_timescales[None, :]
    signal = jnp.concatenate([jnp.sin(scaled_time), jnp.cos(scaled_time)], axis=1)
    if channels % 2:
        signal = jnp.pad(signal, ((0, 0), (0, channels % 2)))
    return signal


def _encoder_block_math(x_ds, mask_1s, pos_sd,
                        lnc_g, lnc_b, dw_w, pw_w, pw_b,   # per-conv-layer lists
                        ln1_g, ln1_b, w_qkv,
                        ln2_g, ln2_b, ffn1_w, ffn1_b, ffn2_w, ffn2_b,
                        *, kernel_size, num_head):
    """Single-example EncoderBlock forward on channels-last 2-D tiles.

    x_ds: (D, S), mask_1s: (1, S) float {0,1}, returns (D, S).
    Shared by the Pallas kernel body and the pure-JAX reference so both run
    identical math (including bf16 matmul rounding).
    """
    D, S = x_ds.shape
    dk = D // num_head
    pad = kernel_size // 2
    conv_num = len(pw_w)

    # PosEncoder: add the sinusoid timing signal, work channels-last.
    out = jnp.transpose(x_ds, (1, 0)) + pos_sd                         # (S, D)

    # conv_num x (LayerNorm -> depthwise conv -> 1x1 conv + bias -> ReLU) + res
    for i in range(conv_num):
        res = out
        h = _layer_norm(out, lnc_g[i], lnc_b[i])
        zp = jnp.zeros((pad, D), dtype=h.dtype)
        hp = jnp.concatenate([zp, h, zp], axis=0)                      # (S+2p, D)
        acc = hp[0:S, :] * dw_w[i][0:1, :]
        for t in range(1, kernel_size):
            acc = acc + hp[t:t + S, :] * dw_w[i][t:t + 1, :]
        h = jnp.maximum(_mxu_dot(acc, pw_w[i]) + pw_b[i], 0.0)
        out = h + res

    # multi-head self attention (fused QKV projection, key masking) + residual
    res = out
    h = _layer_norm(out, ln1_g, ln1_b)
    qkv = _mxu_dot(h, w_qkv)                                           # (S, 3D)
    q = qkv[:, :D] * float(dk) ** -0.5
    k = qkv[:, D:2 * D]
    v = qkv[:, 2 * D:]
    neg = (1.0 - mask_1s) * (-1e30)                                    # (1, S)
    heads = []
    for hd in range(num_head):
        sl = slice(hd * dk, (hd + 1) * dk)
        logits = _mxu_dot_nt(q[:, sl], k[:, sl])                       # (S, S)
        logits = logits * mask_1s + neg                                # mask keys
        logits = logits - jnp.max(logits, axis=-1, keepdims=True)
        p = jnp.exp(logits)
        p = p / jnp.sum(p, axis=-1, keepdims=True)
        heads.append(_mxu_dot(p, v[:, sl]))                            # (S, dk)
    out = jnp.concatenate(heads, axis=-1) + res                        # (S, D)

    # FFN (two 1x1 convs) + residual
    res = out
    h = _layer_norm(out, ln2_g, ln2_b)
    h = jnp.maximum(_mxu_dot(h, ffn1_w) + ffn1_b, 0.0)
    h = _mxu_dot(h, ffn2_w) + ffn2_b
    out = h + res

    return jnp.transpose(out, (1, 0))                                  # (D, S)


# ----------------------------------------------------------------------------
# Pallas kernel + wrapper
# ----------------------------------------------------------------------------
def encoder_block_kernel(x_ref, mask_ref, pos_ref,
                         lnc_g_ref, lnc_b_ref, dw_w_ref, pw_w_ref, pw_b_ref,
                         ln1_g_ref, ln1_b_ref, w_qkv_ref,
                         ln2_g_ref, ln2_b_ref, ffn1_w_ref, ffn1_b_ref,
                         ffn2_w_ref, ffn2_b_ref, out_ref,
                         *, conv_num, kernel_size, num_head):
    out = _encoder_block_math(
        x_ref[0], mask_ref[0], pos_ref[...],
        [lnc_g_ref[i] for i in range(conv_num)],
        [lnc_b_ref[i] for i in range(conv_num)],
        [dw_w_ref[i] for i in range(conv_num)],
        [pw_w_ref[i] for i in range(conv_num)],
        [pw_b_ref[i] for i in range(conv_num)],
        ln1_g_ref[...], ln1_b_ref[...], w_qkv_ref[...],
        ln2_g_ref[...], ln2_b_ref[...],
        ffn1_w_ref[...], ffn1_b_ref[...], ffn2_w_ref[...], ffn2_b_ref[...],
        kernel_size=kernel_size, num_head=num_head)
    out_ref[0] = out.astype(out_ref.dtype)          # lane-dense (D, S) store


def encoder_block_forward(x, mask, params, *, conv_num, kernel_size, num_head,
                          l=None, blks=None):
    """EncoderBlock inference forward.  x: (B, d_model, S), mask: (B, S).

    `l` / `blks` only parameterize stochastic layer-dropout, which is identity
    in eval mode, so they are accepted for signature fidelity but unused.
    """
    # TODO(synk): training-mode dropout / stochastic layer_dropout not implemented
    #             (this is the eval/inference forward pass).
    del l, blks
    B, D, S = x.shape
    assert D % num_head == 0
    pos = timing_signal(S, D)                                    # (S, D)
    mask3 = mask.astype(jnp.float32).reshape(B, 1, S)

    kernel = functools.partial(encoder_block_kernel, conv_num=conv_num,
                               kernel_size=kernel_size, num_head=num_head)
    full2 = lambda b: (0, 0)
    full3 = lambda b: (0, 0, 0)

    return pl.pallas_call(
        kernel,
        out_shape=jax.ShapeDtypeStruct((B, D, S), jnp.float32),
        grid_spec=pltpu.PrefetchScalarGridSpec(
            num_scalar_prefetch=0,
            grid=(B,),
            in_specs=[
                pl.BlockSpec((1, D, S), lambda b: (b, 0, 0)),          # x
                pl.BlockSpec((1, 1, S), lambda b: (b, 0, 0)),          # mask
                pl.BlockSpec((S, D), full2),                           # pos signal
                pl.BlockSpec((conv_num, 1, D), full3),                 # LN_C gamma
                pl.BlockSpec((conv_num, 1, D), full3),                 # LN_C beta
                pl.BlockSpec((conv_num, kernel_size, D), full3),       # depthwise w
                pl.BlockSpec((conv_num, D, D), full3),                 # pointwise w
                pl.BlockSpec((conv_num, 1, D), full3),                 # pointwise b
                pl.BlockSpec((1, D), full2),                           # LN_1 gamma
                pl.BlockSpec((1, D), full2),                           # LN_1 beta
                pl.BlockSpec((D, 3 * D), full2),                       # fused QKV w
                pl.BlockSpec((1, D), full2),                           # LN_2 gamma
                pl.BlockSpec((1, D), full2),                           # LN_2 beta
                pl.BlockSpec((D, D), full2),                           # FFN_1 w
                pl.BlockSpec((1, D), full2),                           # FFN_1 b
                pl.BlockSpec((D, D), full2),                           # FFN_2 w
                pl.BlockSpec((1, D), full2),                           # FFN_2 b
            ],
            out_specs=pl.BlockSpec((1, D, S), lambda b: (b, 0, 0)),
        ),
        compiler_params=pltpu.CompilerParams(
            dimension_semantics=("parallel",)),
    )(x, mask3, pos,
      params["lnc_g"], params["lnc_b"], params["dw_w"], params["pw_w"],
      params["pw_b"], params["ln1_g"], params["ln1_b"], params["w_qkv"],
      params["ln2_g"], params["ln2_b"], params["ffn1_w"], params["ffn1_b"],
      params["ffn2_w"], params["ffn2_b"])


# ----------------------------------------------------------------------------
# pure-JAX reference (same math, vmapped over batch) for correctness checking
# ----------------------------------------------------------------------------
def reference_forward(x, mask, params, *, conv_num, kernel_size, num_head):
    B, D, S = x.shape
    pos = timing_signal(S, D)
    m = mask.astype(jnp.float32).reshape(B, 1, S)

    def one_example(xb, mb):
        return _encoder_block_math(
            xb, mb, pos,
            [params["lnc_g"][i] for i in range(conv_num)],
            [params["lnc_b"][i] for i in range(conv_num)],
            [params["dw_w"][i] for i in range(conv_num)],
            [params["pw_w"][i] for i in range(conv_num)],
            [params["pw_b"][i] for i in range(conv_num)],
            params["ln1_g"], params["ln1_b"], params["w_qkv"],
            params["ln2_g"], params["ln2_b"],
            params["ffn1_w"], params["ffn1_b"],
            params["ffn2_w"], params["ffn2_b"],
            kernel_size=kernel_size, num_head=num_head)

    return jax.vmap(one_example)(x, m)


if __name__ == "__main__":
    # Small, canonical PIECER/QANet-like shapes: d_model=128, heads=8, k=7.
    B, D, S = 2, 128, 128
    conv_num, kernel_size, num_head = 2, 7, 8

    key = jax.random.PRNGKey(0)
    ks = jax.random.split(key, 16)
    x = jax.random.normal(ks[0], (B, D, S), jnp.float32)
    lengths = jnp.array([S, S - 32])
    mask = (jnp.arange(S)[None, :] < lengths[:, None]).astype(jnp.float32)

    wscale = 1.0 / math.sqrt(D)
    params = dict(
        lnc_g=1.0 + 0.1 * jax.random.normal(ks[1], (conv_num, 1, D), jnp.float32),
        lnc_b=0.1 * jax.random.normal(ks[2], (conv_num, 1, D), jnp.float32),
        dw_w=0.3 * jax.random.normal(ks[3], (conv_num, kernel_size, D), jnp.float32),
        pw_w=wscale * jax.random.normal(ks[4], (conv_num, D, D), jnp.float32),
        pw_b=0.1 * jax.random.normal(ks[5], (conv_num, 1, D), jnp.float32),
        ln1_g=1.0 + 0.1 * jax.random.normal(ks[6], (1, D), jnp.float32),
        ln1_b=0.1 * jax.random.normal(ks[7], (1, D), jnp.float32),
        w_qkv=wscale * jax.random.normal(ks[8], (D, 3 * D), jnp.float32),
        ln2_g=1.0 + 0.1 * jax.random.normal(ks[9], (1, D), jnp.float32),
        ln2_b=0.1 * jax.random.normal(ks[10], (1, D), jnp.float32),
        ffn1_w=wscale * jax.random.normal(ks[11], (D, D), jnp.float32),
        ffn1_b=0.1 * jax.random.normal(ks[12], (1, D), jnp.float32),
        ffn2_w=wscale * jax.random.normal(ks[13], (D, D), jnp.float32),
        ffn2_b=0.1 * jax.random.normal(ks[14], (1, D), jnp.float32),
    )

    out = encoder_block_forward(x, mask, params, conv_num=conv_num,
                                kernel_size=kernel_size, num_head=num_head,
                                l=1, blks=7)
    out = jax.block_until_ready(out)

    ref = reference_forward(x, mask, params, conv_num=conv_num,
                            kernel_size=kernel_size, num_head=num_head)
    assert out.shape == (B, D, S), out.shape
    assert jnp.allclose(out, ref, atol=1e-2, rtol=1e-2), \
        float(jnp.max(jnp.abs(out - ref)))

    print("KERNEL_OK")
</pallas_src>

<mosaic_0001>
module attributes {stable_mosaic.version = 11 : i64} {
  func.func @encoder_block_kernel(%arg0: i32, %arg1: memref<1x128x128xf32, #tpu.memory_space<vmem>>, %arg2: memref<1x1x128xf32, #tpu.memory_space<vmem>>, %arg3: memref<128x128xf32, #tpu.memory_space<vmem>>, %arg4: memref<2x1x128xf32, #tpu.memory_space<vmem>>, %arg5: memref<2x1x128xf32, #tpu.memory_space<vmem>>, %arg6: memref<2x7x128xf32, #tpu.memory_space<vmem>>, %arg7: memref<2x128x128xf32, #tpu.memory_space<vmem>>, %arg8: memref<2x1x128xf32, #tpu.memory_space<vmem>>, %arg9: memref<1x128xf32, #tpu.memory_space<vmem>>, %arg10: memref<1x128xf32, #tpu.memory_space<vmem>>, %arg11: memref<128x384xf32, #tpu.memory_space<vmem>>, %arg12: memref<1x128xf32, #tpu.memory_space<vmem>>, %arg13: memref<1x128xf32, #tpu.memory_space<vmem>>, %arg14: memref<128x128xf32, #tpu.memory_space<vmem>>, %arg15: memref<1x128xf32, #tpu.memory_space<vmem>>, %arg16: memref<128x128xf32, #tpu.memory_space<vmem>>, %arg17: memref<1x128xf32, #tpu.memory_space<vmem>>, %arg18: memref<1x128x128xf32, #tpu.memory_space<vmem>>) attributes {dimension_semantics = [#tpu.dimension_semantics<parallel>], iteration_bounds = array<i64: 2>, scalar_prefetch = 0 : i64, scratch_operands = 0 : i64, tpu.core_type = #tpu.core_type<tc>, window_params = [{transform_indices = @transform_0, window_bounds = array<i64: 1, 128, 128>}, {transform_indices = @transform_1, window_bounds = array<i64: 1, 1, 128>}, {pipeline_mode = #tpu.pipeline_mode<synchronous>, transform_indices = @transform_2, window_bounds = array<i64: 128, 128>}, {pipeline_mode = #tpu.pipeline_mode<synchronous>, transform_indices = @transform_3, window_bounds = array<i64: 2, 1, 128>}, {pipeline_mode = #tpu.pipeline_mode<synchronous>, transform_indices = @transform_4, window_bounds = array<i64: 2, 1, 128>}, {pipeline_mode = #tpu.pipeline_mode<synchronous>, transform_indices = @transform_5, window_bounds = array<i64: 2, 7, 128>}, {pipeline_mode = #tpu.pipeline_mode<synchronous>, transform_indices = @transform_6, window_bounds = array<i64: 2, 128, 128>}, {pipeline_mode = #tpu.pipeline_mode<synchronous>, transform_indices = @transform_7, window_bounds = array<i64: 2, 1, 128>}, {pipeline_mode = #tpu.pipeline_mode<synchronous>, transform_indices = @transform_8, window_bounds = array<i64: 1, 128>}, {pipeline_mode = #tpu.pipeline_mode<synchronous>, transform_indices = @transform_9, window_bounds = array<i64: 1, 128>}, {pipeline_mode = #tpu.pipeline_mode<synchronous>, transform_indices = @transform_10, window_bounds = array<i64: 128, 384>}, {pipeline_mode = #tpu.pipeline_mode<synchronous>, transform_indices = @transform_11, window_bounds = array<i64: 1, 128>}, {pipeline_mode = #tpu.pipeline_mode<synchronous>, transform_indices = @transform_12, window_bounds = array<i64: 1, 128>}, {pipeline_mode = #tpu.pipeline_mode<synchronous>, transform_indices = @transform_13, window_bounds = array<i64: 128, 128>}, {pipeline_mode = #tpu.pipeline_mode<synchronous>, transform_indices = @transform_14, window_bounds = array<i64: 1, 128>}, {pipeline_mode = #tpu.pipeline_mode<synchronous>, transform_indices = @transform_15, window_bounds = array<i64: 128, 128>}, {pipeline_mode = #tpu.pipeline_mode<synchronous>, transform_indices = @transform_16, window_bounds = array<i64: 1, 128>}, {transform_indices = @transform_17, window_bounds = array<i64: 1, 128, 128>}]} {
    %c0 = arith.constant 0 : index
    %c0_0 = arith.constant 0 : index
    %c0_1 = arith.constant 0 : index
    %0 = vector.load %arg1[%c0, %c0_0, %c0_1] : memref<1x128x128xf32, #tpu.memory_space<vmem>>, vector<1x128x128xf32>
    %1 = vector.shape_cast %0 : vector<1x128x128xf32> to vector<128x128xf32>
    %c0_2 = arith.constant 0 : index
    %c0_3 = arith.constant 0 : index
    %c0_4 = arith.constant 0 : index
    %2 = vector.load %arg2[%c0_2, %c0_3, %c0_4] : memref<1x1x128xf32, #tpu.memory_space<vmem>>, vector<1x1x128xf32>
    %3 = vector.shape_cast %2 : vector<1x1x128xf32> to vector<1x128xf32>
    %c0_5 = arith.constant 0 : index
    %c0_6 = arith.constant 0 : index
    %4 = vector.load %arg3[%c0_5, %c0_6] : memref<128x128xf32, #tpu.memory_space<vmem>>, vector<128x128xf32>
    %c0_7 = arith.constant 0 : index
    %c0_8 = arith.constant 0 : index
    %c0_9 = arith.constant 0 : index
    %5 = vector.load %arg4[%c0_7, %c0_8, %c0_9] : memref<2x1x128xf32, #tpu.memory_space<vmem>>, vector<1x1x128xf32>
    %6 = vector.shape_cast %5 : vector<1x1x128xf32> to vector<1x128xf32>
    %c1 = arith.constant 1 : index
    %c0_10 = arith.constant 0 : index
    %c0_11 = arith.constant 0 : index
    %7 = vector.load %arg4[%c1, %c0_10, %c0_11] : memref<2x1x128xf32, #tpu.memory_space<vmem>>, vector<1x1x128xf32>
    %8 = vector.shape_cast %7 : vector<1x1x128xf32> to vector<1x128xf32>
    %c0_12 = arith.constant 0 : index
    %c0_13 = arith.constant 0 : index
    %c0_14 = arith.constant 0 : index
    %9 = vector.load %arg5[%c0_12, %c0_13, %c0_14] : memref<2x1x128xf32, #tpu.memory_space<vmem>>, vector<1x1x128xf32>
    %10 = vector.shape_cast %9 : vector<1x1x128xf32> to vector<1x128xf32>
    %c1_15 = arith.constant 1 : index
    %c0_16 = arith.constant 0 : index
    %c0_17 = arith.constant 0 : index
    %11 = vector.load %arg5[%c1_15, %c0_16, %c0_17] : memref<2x1x128xf32, #tpu.memory_space<vmem>>, vector<1x1x128xf32>
    %12 = vector.shape_cast %11 : vector<1x1x128xf32> to vector<1x128xf32>
    %c0_18 = arith.constant 0 : index
    %c0_19 = arith.constant 0 : index
    %c0_20 = arith.constant 0 : index
    %13 = vector.load %arg6[%c0_18, %c0_19, %c0_20] : memref<2x7x128xf32, #tpu.memory_space<vmem>>, vector<1x7x128xf32>
    %14 = vector.shape_cast %13 : vector<1x7x128xf32> to vector<7x128xf32>
    %c1_21 = arith.constant 1 : index
    %c0_22 = arith.constant 0 : index
    %c0_23 = arith.constant 0 : index
    %15 = vector.load %arg6[%c1_21, %c0_22, %c0_23] : memref<2x7x128xf32, #tpu.memory_space<vmem>>, vector<1x7x128xf32>
    %16 = vector.shape_cast %15 : vector<1x7x128xf32> to vector<7x128xf32>
    %c0_24 = arith.constant 0 : index
    %c0_25 = arith.constant 0 : index
    %c0_26 = arith.constant 0 : index
    %17 = vector.load %arg7[%c0_24, %c0_25, %c0_26] : memref<2x128x128xf32, #tpu.memory_space<vmem>>, vector<1x128x128xf32>
    %18 = vector.shape_cast %17 : vector<1x128x128xf32> to vector<128x128xf32>
    %c1_27 = arith.constant 1 : index
    %c0_28 = arith.constant 0 : index
    %c0_29 = arith.constant 0 : index
    %19 = vector.load %arg7[%c1_27, %c0_28, %c0_29] : memref<2x128x128xf32, #tpu.memory_space<vmem>>, vector<1x128x128xf32>
    %20 = vector.shape_cast %19 : vector<1x128x128xf32> to vector<128x128xf32>
    %c0_30 = arith.constant 0 : index
    %c0_31 = arith.constant 0 : index
    %c0_32 = arith.constant 0 : index
    %21 = vector.load %arg8[%c0_30, %c0_31, %c0_32] : memref<2x1x128xf32, #tpu.memory_space<vmem>>, vector<1x1x128xf32>
    %22 = vector.shape_cast %21 : vector<1x1x128xf32> to vector<1x128xf32>
    %c1_33 = arith.constant 1 : index
    %c0_34 = arith.constant 0 : index
    %c0_35 = arith.constant 0 : index
    %23 = vector.load %arg8[%c1_33, %c0_34, %c0_35] : memref<2x1x128xf32, #tpu.memory_space<vmem>>, vector<1x1x128xf32>
    %24 = vector.shape_cast %23 : vector<1x1x128xf32> to vector<1x128xf32>
    %c0_36 = arith.constant 0 : index
    %c0_37 = arith.constant 0 : index
    %25 = vector.load %arg9[%c0_36, %c0_37] : memref<1x128xf32, #tpu.memory_space<vmem>>, vector<1x128xf32>
    %c0_38 = arith.constant 0 : index
    %c0_39 = arith.constant 0 : index
    %26 = vector.load %arg10[%c0_38, %c0_39] : memref<1x128xf32, #tpu.memory_space<vmem>>, vector<1x128xf32>
    %c0_40 = arith.constant 0 : index
    %c0_41 = arith.constant 0 : index
    %27 = vector.load %arg11[%c0_40, %c0_41] : memref<128x384xf32, #tpu.memory_space<vmem>>, vector<128x384xf32>
    %c0_42 = arith.constant 0 : index
    %c0_43 = arith.constant 0 : index
    %28 = vector.load %arg12[%c0_42, %c0_43] : memref<1x128xf32, #tpu.memory_space<vmem>>, vector<1x128xf32>
    %c0_44 = arith.constant 0 : index
    %c0_45 = arith.constant 0 : index
    %29 = vector.load %arg13[%c0_44, %c0_45] : memref<1x128xf32, #tpu.memory_space<vmem>>, vector<1x128xf32>
    %c0_46 = arith.constant 0 : index
    %c0_47 = arith.constant 0 : index
    %30 = vector.load %arg14[%c0_46, %c0_47] : memref<128x128xf32, #tpu.memory_space<vmem>>, vector<128x128xf32>
    %c0_48 = arith.constant 0 : index
    %c0_49 = arith.constant 0 : index
    %31 = vector.load %arg15[%c0_48, %c0_49] : memref<1x128xf32, #tpu.memory_space<vmem>>, vector<1x128xf32>
    %c0_50 = arith.constant 0 : index
    %c0_51 = arith.constant 0 : index
    %32 = vector.load %arg16[%c0_50, %c0_51] : memref<128x128xf32, #tpu.memory_space<vmem>>, vector<128x128xf32>
    %c0_52 = arith.constant 0 : index
    %c0_53 = arith.constant 0 : index
    %33 = vector.load %arg17[%c0_52, %c0_53] : memref<1x128xf32, #tpu.memory_space<vmem>>, vector<1x128xf32>
    %34 = tpu.transpose %1, [1, 0] : vector<128x128xf32> -> vector<128x128xf32>
    %35 = arith.addf %34, %4 : vector<128x128xf32>
    %cst = arith.constant dense<0.000000e+00> : vector<128xf32>
    %36 = vector.multi_reduction <add>, %35, %cst [1] : vector<128x128xf32> to vector<128xf32>
    %37 = vector.shape_cast %36 : vector<128xf32> to vector<128x1xf32>
    %cst_54 = arith.constant 1.280000e+02 : f32
    %38 = vector.broadcast %cst_54 : f32 to vector<128x1xf32>
    %39 = arith.divf %37, %38 : vector<128x1xf32>
    %40 = vector.broadcast %39 : vector<128x1xf32> to vector<128x128xf32>
    %41 = arith.subf %35, %40 : vector<128x128xf32>
    %42 = arith.mulf %41, %41 : vector<128x128xf32>
    %cst_55 = arith.constant dense<0.000000e+00> : vector<128xf32>
    %43 = vector.multi_reduction <add>, %42, %cst_55 [1] : vector<128x128xf32> to vector<128xf32>
    %44 = vector.shape_cast %43 : vector<128xf32> to vector<128x1xf32>
    %cst_56 = arith.constant 1.280000e+02 : f32
    %45 = vector.broadcast %cst_56 : f32 to vector<128x1xf32>
    %46 = arith.divf %44, %45 : vector<128x1xf32>
    %47 = vector.broadcast %39 : vector<128x1xf32> to vector<128x128xf32>
    %48 = arith.subf %35, %47 : vector<128x128xf32>
    %cst_57 = arith.constant 9.99999974E-6 : f32
    %49 = vector.broadcast %cst_57 : f32 to vector<128x1xf32>
    %50 = arith.addf %46, %49 : vector<128x1xf32>
    %51 = math.rsqrt %50 : vector<128x1xf32>
    %52 = vector.broadcast %51 : vector<128x1xf32> to vector<128x128xf32>
    %53 = arith.mulf %48, %52 : vector<128x128xf32>
    %54 = vector.broadcast %6 : vector<1x128xf32> to vector<128x128xf32>
    %55 = arith.mulf %53, %54 : vector<128x128xf32>
    %56 = vector.broadcast %10 : vector<1x128xf32> to vector<128x128xf32>
    %57 = arith.addf %55, %56 : vector<128x128xf32>
    %cst_58 = arith.constant 0.000000e+00 : f32
    %58 = vector.broadcast %cst_58 : f32 to vector<3x128xf32>
    %59 = tpu.concatenate %58, %57, %58 in 0 : vector<3x128xf32>, vector<128x128xf32>, vector<3x128xf32> -> vector<134x128xf32>
    %60 = vector.extract_strided_slice %59 {offsets = [0, 0], sizes = [128, 128], strides = [1, 1]} : vector<134x128xf32> to vector<128x128xf32>
    %61 = vector.extract_strided_slice %14 {offsets = [0, 0], sizes = [1, 128], strides = [1, 1]} : vector<7x128xf32> to vector<1x128xf32>
    %62 = vector.broadcast %61 : vector<1x128xf32> to vector<128x128xf32>
    %63 = arith.mulf %60, %62 : vector<128x128xf32>
    %64 = vector.extract_strided_slice %59 {offsets = [1, 0], sizes = [128, 128], strides = [1, 1]} : vector<134x128xf32> to vector<128x128xf32>
    %65 = vector.extract_strided_slice %14 {offsets = [1, 0], sizes = [1, 128], strides = [1, 1]} : vector<7x128xf32> to vector<1x128xf32>
    %66 = vector.broadcast %65 : vector<1x128xf32> to vector<128x128xf32>
    %67 = arith.mulf %64, %66 : vector<128x128xf32>
    %68 = arith.addf %63, %67 : vector<128x128xf32>
    %69 = vector.extract_strided_slice %59 {offsets = [2, 0], sizes = [128, 128], strides = [1, 1]} : vector<134x128xf32> to vector<128x128xf32>
    %70 = vector.extract_strided_slice %14 {offsets = [2, 0], sizes = [1, 128], strides = [1, 1]} : vector<7x128xf32> to vector<1x128xf32>
    %71 = vector.broadcast %70 : vector<1x128xf32> to vector<128x128xf32>
    %72 = arith.mulf %69, %71 : vector<128x128xf32>
    %73 = arith.addf %68, %72 : vector<128x128xf32>
    %74 = vector.extract_strided_slice %59 {offsets = [3, 0], sizes = [128, 128], strides = [1, 1]} : vector<134x128xf32> to vector<128x128xf32>
    %75 = vector.extract_strided_slice %14 {offsets = [3, 0], sizes = [1, 128], strides = [1, 1]} : vector<7x128xf32> to vector<1x128xf32>
    %76 = vector.broadcast %75 : vector<1x128xf32> to vector<128x128xf32>
    %77 = arith.mulf %74, %76 : vector<128x128xf32>
    %78 = arith.addf %73, %77 : vector<128x128xf32>
    %79 = vector.extract_strided_slice %59 {offsets = [4, 0], sizes = [128, 128], strides = [1, 1]} : vector<134x128xf32> to vector<128x128xf32>
    %80 = vector.extract_strided_slice %14 {offsets = [4, 0], sizes = [1, 128], strides = [1, 1]} : vector<7x128xf32> to vector<1x128xf32>
    %81 = vector.broadcast %80 : vector<1x128xf32> to vector<128x128xf32>
    %82 = arith.mulf %79, %81 : vector<128x128xf32>
    %83 = arith.addf %78, %82 : vector<128x128xf32>
    %84 = vector.extract_strided_slice %59 {offsets = [5, 0], sizes = [128, 128], strides = [1, 1]} : vector<134x128xf32> to vector<128x128xf32>
    %85 = vector.extract_strided_slice %14 {offsets = [5, 0], sizes = [1, 128], strides = [1, 1]} : vector<7x128xf32> to vector<1x128xf32>
    %86 = vector.broadcast %85 : vector<1x128xf32> to vector<128x128xf32>
    %87 = arith.mulf %84, %86 : vector<128x128xf32>
    %88 = arith.addf %83, %87 : vector<128x128xf32>
    %89 = vector.extract_strided_slice %59 {offsets = [6, 0], sizes = [128, 128], strides = [1, 1]} : vector<134x128xf32> to vector<128x128xf32>
    %90 = vector.extract_strided_slice %14 {offsets = [6, 0], sizes = [1, 128], strides = [1, 1]} : vector<7x128xf32> to vector<1x128xf32>
    %91 = vector.broadcast %90 : vector<1x128xf32> to vector<128x128xf32>
    %92 = arith.mulf %89, %91 : vector<128x128xf32>
    %93 = arith.addf %88, %92 : vector<128x128xf32>
    %94 = arith.truncf %93 : vector<128x128xf32> to vector<128x128xbf16>
    %95 = arith.truncf %18 : vector<128x128xf32> to vector<128x128xbf16>
    %cst_59 = arith.constant dense<0.000000e+00> : vector<128x128xf32>
    %96 = tpu.matmul %94, %95, %cst_59 {dimension_numbers = #tpu.dot_dimension_numbers<[1], [0], [0], [1], [0, 0, 1, 1], [], []>} : vector<128x128xbf16>, vector<128x128xbf16>, vector<128x128xf32> -> vector<128x128xf32>
    %97 = vector.broadcast %22 : vector<1x128xf32> to vector<128x128xf32>
    %98 = arith.addf %96, %97 : vector<128x128xf32>
    %cst_60 = arith.constant 0.000000e+00 : f32
    %99 = vector.broadcast %cst_60 : f32 to vector<128x128xf32>
    %100 = arith.maximumf %98, %99 : vector<128x128xf32>
    %101 = arith.addf %100, %35 : vector<128x128xf32>
    %cst_61 = arith.constant dense<0.000000e+00> : vector<128xf32>
    %102 = vector.multi_reduction <add>, %101, %cst_61 [1] : vector<128x128xf32> to vector<128xf32>
    %103 = vector.shape_cast %102 : vector<128xf32> to vector<128x1xf32>
    %cst_62 = arith.constant 1.280000e+02 : f32
    %104 = vector.broadcast %cst_62 : f32 to vector<128x1xf32>
    %105 = arith.divf %103, %104 : vector<128x1xf32>
    %106 = vector.broadcast %105 : vector<128x1xf32> to vector<128x128xf32>
    %107 = arith.subf %101, %106 : vector<128x128xf32>
    %108 = arith.mulf %107, %107 : vector<128x128xf32>
    %cst_63 = arith.constant dense<0.000000e+00> : vector<128xf32>
    %109 = vector.multi_reduction <add>, %108, %cst_63 [1] : vector<128x128xf32> to vector<128xf32>
    %110 = vector.shape_cast %109 : vector<128xf32> to vector<128x1xf32>
    %cst_64 = arith.constant 1.280000e+02 : f32
    %111 = vector.broadcast %cst_64 : f32 to vector<128x1xf32>
    %112 = arith.divf %110, %111 : vector<128x1xf32>
    %113 = vector.broadcast %105 : vector<128x1xf32> to vector<128x128xf32>
    %114 = arith.subf %101, %113 : vector<128x128xf32>
    %cst_65 = arith.constant 9.99999974E-6 : f32
    %115 = vector.broadcast %cst_65 : f32 to vector<128x1xf32>
    %116 = arith.addf %112, %115 : vector<128x1xf32>
    %117 = math.rsqrt %116 : vector<128x1xf32>
    %118 = vector.broadcast %117 : vector<128x1xf32> to vector<128x128xf32>
    %119 = arith.mulf %114, %118 : vector<128x128xf32>
    %120 = vector.broadcast %8 : vector<1x128xf32> to vector<128x128xf32>
    %121 = arith.mulf %119, %120 : vector<128x128xf32>
    %122 = vector.broadcast %12 : vector<1x128xf32> to vector<128x128xf32>
    %123 = arith.addf %121, %122 : vector<128x128xf32>
    %cst_66 = arith.constant 0.000000e+00 : f32
    %124 = vector.broadcast %cst_66 : f32 to vector<3x128xf32>
    %125 = tpu.concatenate %124, %123, %124 in 0 : vector<3x128xf32>, vector<128x128xf32>, vector<3x128xf32> -> vector<134x128xf32>
    %126 = vector.extract_strided_slice %125 {offsets = [0, 0], sizes = [128, 128], strides = [1, 1]} : vector<134x128xf32> to vector<128x128xf32>
    %127 = vector.extract_strided_slice %16 {offsets = [0, 0], sizes = [1, 128], strides = [1, 1]} : vector<7x128xf32> to vector<1x128xf32>
    %128 = vector.broadcast %127 : vector<1x128xf32> to vector<128x128xf32>
    %129 = arith.mulf %126, %128 : vector<128x128xf32>
    %130 = vector.extract_strided_slice %125 {offsets = [1, 0], sizes = [128, 128], strides = [1, 1]} : vector<134x128xf32> to vector<128x128xf32>
    %131 = vector.extract_strided_slice %16 {offsets = [1, 0], sizes = [1, 128], strides = [1, 1]} : vector<7x128xf32> to vector<1x128xf32>
    %132 = vector.broadcast %131 : vector<1x128xf32> to vector<128x128xf32>
    %133 = arith.mulf %130, %132 : vector<128x128xf32>
    %134 = arith.addf %129, %133 : vector<128x128xf32>
    %135 = vector.extract_strided_slice %125 {offsets = [2, 0], sizes = [128, 128], strides = [1, 1]} : vector<134x128xf32> to vector<128x128xf32>
    %136 = vector.extract_strided_slice %16 {offsets = [2, 0], sizes = [1, 128], strides = [1, 1]} : vector<7x128xf32> to vector<1x128xf32>
    %137 = vector.broadcast %136 : vector<1x128xf32> to vector<128x128xf32>
    %138 = arith.mulf %135, %137 : vector<128x128xf32>
    %139 = arith.addf %134, %138 : vector<128x128xf32>
    %140 = vector.extract_strided_slice %125 {offsets = [3, 0], sizes = [128, 128], strides = [1, 1]} : vector<134x128xf32> to vector<128x128xf32>
    %141 = vector.extract_strided_slice %16 {offsets = [3, 0], sizes = [1, 128], strides = [1, 1]} : vector<7x128xf32> to vector<1x128xf32>
    %142 = vector.broadcast %141 : vector<1x128xf32> to vector<128x128xf32>
    %143 = arith.mulf %140, %142 : vector<128x128xf32>
    %144 = arith.addf %139, %143 : vector<128x128xf32>
    %145 = vector.extract_strided_slice %125 {offsets = [4, 0], sizes = [128, 128], strides = [1, 1]} : vector<134x128xf32> to vector<128x128xf32>
    %146 = vector.extract_strided_slice %16 {offsets = [4, 0], sizes = [1, 128], strides = [1, 1]} : vector<7x128xf32> to vector<1x128xf32>
    %147 = vector.broadcast %146 : vector<1x128xf32> to vector<128x128xf32>
    %148 = arith.mulf %145, %147 : vector<128x128xf32>
    %149 = arith.addf %144, %148 : vector<128x128xf32>
    %150 = vector.extract_strided_slice %125 {offsets = [5, 0], sizes = [128, 128], strides = [1, 1]} : vector<134x128xf32> to vector<128x128xf32>
    %151 = vector.extract_strided_slice %16 {offsets = [5, 0], sizes = [1, 128], strides = [1, 1]} : vector<7x128xf32> to vector<1x128xf32>
    %152 = vector.broadcast %151 : vector<1x128xf32> to vector<128x128xf32>
    %153 = arith.mulf %150, %152 : vector<128x128xf32>
    %154 = arith.addf %149, %153 : vector<128x128xf32>
    %155 = vector.extract_strided_slice %125 {offsets = [6, 0], sizes = [128, 128], strides = [1, 1]} : vector<134x128xf32> to vector<128x128xf32>
    %156 = vector.extract_strided_slice %16 {offsets = [6, 0], sizes = [1, 128], strides = [1, 1]} : vector<7x128xf32> to vector<1x128xf32>
    %157 = vector.broadcast %156 : vector<1x128xf32> to vector<128x128xf32>
    %158 = arith.mulf %155, %157 : vector<128x128xf32>
    %159 = arith.addf %154, %158 : vector<128x128xf32>
    %160 = arith.truncf %159 : vector<128x128xf32> to vector<128x128xbf16>
    %161 = arith.truncf %20 : vector<128x128xf32> to vector<128x128xbf16>
    %cst_67 = arith.constant dense<0.000000e+00> : vector<128x128xf32>
    %162 = tpu.matmul %160, %161, %cst_67 {dimension_numbers = #tpu.dot_dimension_numbers<[1], [0], [0], [1], [0, 0, 1, 1], [], []>} : vector<128x128xbf16>, vector<128x128xbf16>, vector<128x128xf32> -> vector<128x128xf32>
    %163 = vector.broadcast %24 : vector<1x128xf32> to vector<128x128xf32>
    %164 = arith.addf %162, %163 : vector<128x128xf32>
    %cst_68 = arith.constant 0.000000e+00 : f32
    %165 = vector.broadcast %cst_68 : f32 to vector<128x128xf32>
    %166 = arith.maximumf %164, %165 : vector<128x128xf32>
    %167 = arith.addf %166, %101 : vector<128x128xf32>
    %cst_69 = arith.constant dense<0.000000e+00> : vector<128xf32>
    %168 = vector.multi_reduction <add>, %167, %cst_69 [1] : vector<128x128xf32> to vector<128xf32>
    %169 = vector.shape_cast %168 : vector<128xf32> to vector<128x1xf32>
    %cst_70 = arith.constant 1.280000e+02 : f32
    %170 = vector.broadcast %cst_70 : f32 to vector<128x1xf32>
    %171 = arith.divf %169, %170 : vector<128x1xf32>
    %172 = vector.broadcast %171 : vector<128x1xf32> to vector<128x128xf32>
    %173 = arith.subf %167, %172 : vector<128x128xf32>
    %174 = arith.mulf %173, %173 : vector<128x128xf32>
    %cst_71 = arith.constant dense<0.000000e+00> : vector<128xf32>
    %175 = vector.multi_reduction <add>, %174, %cst_71 [1] : vector<128x128xf32> to vector<128xf32>
    %176 = vector.shape_cast %175 : vector<128xf32> to vector<128x1xf32>
    %cst_72 = arith.constant 1.280000e+02 : f32
    %177 = vector.broadcast %cst_72 : f32 to vector<128x1xf32>
    %178 = arith.divf %176, %177 : vector<128x1xf32>
    %179 = vector.broadcast %171 : vector<128x1xf32> to vector<128x128xf32>
    %180 = arith.subf %167, %179 : vector<128x128xf32>
    %cst_73 = arith.constant 9.99999974E-6 : f32
    %181 = vector.broadcast %cst_73 : f32 to vector<128x1xf32>
    %182 = arith.addf %178, %181 : vector<128x1xf32>
    %183 = math.rsqrt %182 : vector<128x1xf32>
    %184 = vector.broadcast %183 : vector<128x1xf32> to vector<128x128xf32>
    %185 = arith.mulf %180, %184 : vector<128x128xf32>
    %186 = vector.broadcast %25 : vector<1x128xf32> to vector<128x128xf32>
    %187 = arith.mulf %185, %186 : vector<128x128xf32>
    %188 = vector.broadcast %26 : vector<1x128xf32> to vector<128x128xf32>
    %189 = arith.addf %187, %188 : vector<128x128xf32>
    %190 = arith.truncf %189 : vector<128x128xf32> to vector<128x128xbf16>
    %191 = arith.truncf %27 : vector<128x384xf32> to vector<128x384xbf16>
    %cst_74 = arith.constant dense<0.000000e+00> : vector<128x384xf32>
    %192 = tpu.matmul %190, %191, %cst_74 {dimension_numbers = #tpu.dot_dimension_numbers<[1], [0], [0], [1], [0, 0, 1, 1], [], []>} : vector<128x128xbf16>, vector<128x384xbf16>, vector<128x384xf32> -> vector<128x384xf32>
    %193 = vector.extract_strided_slice %192 {offsets = [0, 0], sizes = [128, 128], strides = [1, 1]} : vector<128x384xf32> to vector<128x128xf32>
    %cst_75 = arith.constant 2.500000e-01 : f32
    %194 = vector.broadcast %cst_75 : f32 to vector<128x128xf32>
    %195 = arith.mulf %193, %194 : vector<128x128xf32>
    %196 = vector.extract_strided_slice %192 {offsets = [0, 128], sizes = [128, 128], strides = [1, 1]} : vector<128x384xf32> to vector<128x128xf32>
    %197 = vector.extract_strided_slice %192 {offsets = [0, 256], sizes = [128, 128], strides = [1, 1]} : vector<128x384xf32> to vector<128x128xf32>
    %cst_76 = arith.constant 1.000000e+00 : f32
    %198 = vector.broadcast %cst_76 : f32 to vector<1x128xf32>
    %199 = arith.subf %198, %3 : vector<1x128xf32>
    %cst_77 = arith.constant -1.000000e+30 : f32
    %200 = vector.broadcast %cst_77 : f32 to vector<1x128xf32>
    %201 = arith.mulf %199, %200 : vector<1x128xf32>
    %202 = vector.extract_strided_slice %195 {offsets = [0, 0], sizes = [128, 16], strides = [1, 1]} : vector<128x128xf32> to vector<128x16xf32>
    %203 = vector.extract_strided_slice %196 {offsets = [0, 0], sizes = [128, 16], strides = [1, 1]} : vector<128x128xf32> to vector<128x16xf32>
    %204 = arith.truncf %202 : vector<128x16xf32> to vector<128x16xbf16>
    %205 = arith.truncf %203 : vector<128x16xf32> to vector<128x16xbf16>
    %cst_78 = arith.constant dense<0.000000e+00> : vector<128x128xf32>
    %206 = tpu.matmul %204, %205, %cst_78 {dimension_numbers = #tpu.dot_dimension_numbers<[1], [1], [0], [0], [0, 0, 1, 0], [], []>} : vector<128x16xbf16>, vector<128x16xbf16>, vector<128x128xf32> -> vector<128x128xf32>
    %207 = vector.broadcast %3 : vector<1x128xf32> to vector<128x128xf32>
    %208 = arith.mulf %206, %207 : vector<128x128xf32>
    %209 = vector.broadcast %201 : vector<1x128xf32> to vector<128x128xf32>
    %210 = arith.addf %208, %209 : vector<128x128xf32>
    %cst_79 = arith.constant dense<0xFF800000> : vector<128xf32>
    %211 = vector.multi_reduction <maximumf>, %210, %cst_79 [1] : vector<128x128xf32> to vector<128xf32>
    %212 = vector.shape_cast %211 : vector<128xf32> to vector<128x1xf32>
    %213 = vector.broadcast %212 : vector<128x1xf32> to vector<128x128xf32>
    %214 = arith.subf %210, %213 : vector<128x128xf32>
    %215 = math.exp %214 : vector<128x128xf32>
    %cst_80 = arith.constant dense<0.000000e+00> : vector<128xf32>
    %216 = vector.multi_reduction <add>, %215, %cst_80 [1] : vector<128x128xf32> to vector<128xf32>
    %217 = vector.shape_cast %216 : vector<128xf32> to vector<128x1xf32>
    %218 = vector.broadcast %217 : vector<128x1xf32> to vector<128x128xf32>
    %219 = arith.divf %215, %218 : vector<128x128xf32>
    %220 = vector.extract_strided_slice %197 {offsets = [0, 0], sizes = [128, 16], strides = [1, 1]} : vector<128x128xf32> to vector<128x16xf32>
    %221 = arith.truncf %219 : vector<128x128xf32> to vector<128x128xbf16>
    %222 = arith.truncf %220 : vector<128x16xf32> to vector<128x16xbf16>
    %cst_81 = arith.constant dense<0.000000e+00> : vector<128x16xf32>
    %223 = tpu.matmul %221, %222, %cst_81 {dimension_numbers = #tpu.dot_dimension_numbers<[1], [0], [0], [1], [0, 0, 1, 1], [], []>} : vector<128x128xbf16>, vector<128x16xbf16>, vector<128x16xf32> -> vector<128x16xf32>
    %224 = vector.extract_strided_slice %195 {offsets = [0, 16], sizes = [128, 16], strides = [1, 1]} : vector<128x128xf32> to vector<128x16xf32>
    %225 = vector.extract_strided_slice %196 {offsets = [0, 16], sizes = [128, 16], strides = [1, 1]} : vector<128x128xf32> to vector<128x16xf32>
    %226 = arith.truncf %224 : vector<128x16xf32> to vector<128x16xbf16>
    %227 = arith.truncf %225 : vector<128x16xf32> to vector<128x16xbf16>
    %cst_82 = arith.constant dense<0.000000e+00> : vector<128x128xf32>
    %228 = tpu.matmul %226, %227, %cst_82 {dimension_numbers = #tpu.dot_dimension_numbers<[1], [1], [0], [0], [0, 0, 1, 0], [], []>} : vector<128x16xbf16>, vector<128x16xbf16>, vector<128x128xf32> -> vector<128x128xf32>
    %229 = vector.broadcast %3 : vector<1x128xf32> to vector<128x128xf32>
    %230 = arith.mulf %228, %229 : vector<128x128xf32>
    %231 = vector.broadcast %201 : vector<1x128xf32> to vector<128x128xf32>
    %232 = arith.addf %230, %231 : vector<128x128xf32>
    %cst_83 = arith.constant dense<0xFF800000> : vector<128xf32>
    %233 = vector.multi_reduction <maximumf>, %232, %cst_83 [1] : vector<128x128xf32> to vector<128xf32>
    %234 = vector.shape_cast %233 : vector<128xf32> to vector<128x1xf32>
    %235 = vector.broadcast %234 : vector<128x1xf32> to vector<128x128xf32>
    %236 = arith.subf %232, %235 : vector<128x128xf32>
    %237 = math.exp %236 : vector<128x128xf32>
    %cst_84 = arith.constant dense<0.000000e+00> : vector<128xf32>
    %238 = vector.multi_reduction <add>, %237, %cst_84 [1] : vector<128x128xf32> to vector<128xf32>
    %239 = vector.shape_cast %238 : vector<128xf32> to vector<128x1xf32>
    %240 = vector.broadcast %239 : vector<128x1xf32> to vector<128x128xf32>
    %241 = arith.divf %237, %240 : vector<128x128xf32>
    %242 = vector.extract_strided_slice %197 {offsets = [0, 16], sizes = [128, 16], strides = [1, 1]} : vector<128x128xf32> to vector<128x16xf32>
    %243 = arith.truncf %241 : vector<128x128xf32> to vector<128x128xbf16>
    %244 = arith.truncf %242 : vector<128x16xf32> to vector<128x16xbf16>
    %cst_85 = arith.constant dense<0.000000e+00> : vector<128x16xf32>
    %245 = tpu.matmul %243, %244, %cst_85 {dimension_numbers = #tpu.dot_dimension_numbers<[1], [0], [0], [1], [0, 0, 1, 1], [], []>} : vector<128x128xbf16>, vector<128x16xbf16>, vector<128x16xf32> -> vector<128x16xf32>
    %246 = vector.extract_strided_slice %195 {offsets = [0, 32], sizes = [128, 16], strides = [1, 1]} : vector<128x128xf32> to vector<128x16xf32>
    %247 = vector.extract_strided_slice %196 {offsets = [0, 32], sizes = [128, 16], strides = [1, 1]} : vector<128x128xf32> to vector<128x16xf32>
    %248 = arith.truncf %246 : vector<128x16xf32> to vector<128x16xbf16>
    %249 = arith.truncf %247 : vector<128x16xf32> to vector<128x16xbf16>
    %cst_86 = arith.constant dense<0.000000e+00> : vector<128x128xf32>
    %250 = tpu.matmul %248, %249, %cst_86 {dimension_numbers = #tpu.dot_dimension_numbers<[1], [1], [0], [0], [0, 0, 1, 0], [], []>} : vector<128x16xbf16>, vector<128x16xbf16>, vector<128x128xf32> -> vector<128x128xf32>
    %251 = vector.broadcast %3 : vector<1x128xf32> to vector<128x128xf32>
    %252 = arith.mulf %250, %251 : vector<128x128xf32>
    %253 = vector.broadcast %201 : vector<1x128xf32> to vector<128x128xf32>
    %254 = arith.addf %252, %253 : vector<128x128xf32>
    %cst_87 = arith.constant dense<0xFF800000> : vector<128xf32>
    %255 = vector.multi_reduction <maximumf>, %254, %cst_87 [1] : vector<128x128xf32> to vector<128xf32>
    %256 = vector.shape_cast %255 : vector<128xf32> to vector<128x1xf32>
    %257 = vector.broadcast %256 : vector<128x1xf32> to vector<128x128xf32>
    %258 = arith.subf %254, %257 : vector<128x128xf32>
    %259 = math.exp %258 : vector<128x128xf32>
    %cst_88 = arith.constant dense<0.000000e+00> : vector<128xf32>
    %260 = vector.multi_reduction <add>, %259, %cst_88 [1] : vector<128x128xf32> to vector<128xf32>
    %261 = vector.shape_cast %260 : vector<128xf32> to vector<128x1xf32>
    %262 = vector.broadcast %261 : vector<128x1xf32> to vector<128x128xf32>
    %263 = arith.divf %259, %262 : vector<128x128xf32>
    %264 = vector.extract_strided_slice %197 {offsets = [0, 32], sizes = [128, 16], strides = [1, 1]} : vector<128x128xf32> to vector<128x16xf32>
    %265 = arith.truncf %263 : vector<128x128xf32> to vector<128x128xbf16>
    %266 = arith.truncf %264 : vector<128x16xf32> to vector<128x16xbf16>
    %cst_89 = arith.constant dense<0.000000e+00> : vector<128x16xf32>
    %267 = tpu.matmul %265, %266, %cst_89 {dimension_numbers = #tpu.dot_dimension_numbers<[1], [0], [0], [1], [0, 0, 1, 1], [], []>} : vector<128x128xbf16>, vector<128x16xbf16>, vector<128x16xf32> -> vector<128x16xf32>
    %268 = vector.extract_strided_slice %195 {offsets = [0, 48], sizes = [128, 16], strides = [1, 1]} : vector<128x128xf32> to vector<128x16xf32>
    %269 = vector.extract_strided_slice %196 {offsets = [0, 48], sizes = [128, 16], strides = [1, 1]} : vector<128x128xf32> to vector<128x16xf32>
    %270 = arith.truncf %268 : vector<128x16xf32> to vector<128x16xbf16>
    %271 = arith.truncf %269 : vector<128x16xf32> to vector<128x16xbf16>
    %cst_90 = arith.constant dense<0.000000e+00> : vector<128x128xf32>
    %272 = tpu.matmul %270, %271, %cst_90 {dimension_numbers = #tpu.dot_dimension_numbers<[1], [1], [0], [0], [0, 0, 1, 0], [], []>} : vector<128x16xbf16>, vector<128x16xbf16>, vector<128x128xf32> -> vector<128x128xf32>
    %273 = vector.broadcast %3 : vector<1x128xf32> to vector<128x128xf32>
    %274 = arith.mulf %272, %273 : vector<128x128xf32>
    %275 = vector.broadcast %201 : vector<1x128xf32> to vector<128x128xf32>
    %276 = arith.addf %274, %275 : vector<128x128xf32>
    %cst_91 = arith.constant dense<0xFF800000> : vector<128xf32>
    %277 = vector.multi_reduction <maximumf>, %276, %cst_91 [1] : vector<128x128xf32> to vector<128xf32>
    %278 = vector.shape_cast %277 : vector<128xf32> to vector<128x1xf32>
    %279 = vector.broadcast %278 : vector<128x1xf32> to vector<128x128xf32>
    %280 = arith.subf %276, %279 : vector<128x128xf32>
    %281 = math.exp %280 : vector<128x128xf32>
    %cst_92 = arith.constant dense<0.000000e+00> : vector<128xf32>
    %282 = vector.multi_reduction <add>, %281, %cst_92 [1] : vector<128x128xf32> to vector<128xf32>
    %283 = vector.shape_cast %282 : vector<128xf32> to vector<128x1xf32>
    %284 = vector.broadcast %283 : vector<128x1xf32> to vector<128x128xf32>
    %285 = arith.divf %281, %284 : vector<128x128xf32>
    %286 = vector.extract_strided_slice %197 {offsets = [0, 48], sizes = [128, 16], strides = [1, 1]} : vector<128x128xf32> to vector<128x16xf32>
    %287 = arith.truncf %285 : vector<128x128xf32> to vector<128x128xbf16>
    %288 = arith.truncf %286 : vector<128x16xf32> to vector<128x16xbf16>
    %cst_93 = arith.constant dense<0.000000e+00> : vector<128x16xf32>
    %289 = tpu.matmul %287, %288, %cst_93 {dimension_numbers = #tpu.dot_dimension_numbers<[1], [0], [0], [1], [0, 0, 1, 1], [], []>} : vector<128x128xbf16>, vector<128x16xbf16>, vector<128x16xf32> -> vector<128x16xf32>
    %290 = vector.extract_strided_slice %195 {offsets = [0, 64], sizes = [128, 16], strides = [1, 1]} : vector<128x128xf32> to vector<128x16xf32>
    %291 = vector.extract_strided_slice %196 {offsets = [0, 64], sizes = [128, 16], strides = [1, 1]} : vector<128x128xf32> to vector<128x16xf32>
    %292 = arith.truncf %290 : vector<128x16xf32> to vector<128x16xbf16>
    %293 = arith.truncf %291 : vector<128x16xf32> to vector<128x16xbf16>
    %cst_94 = arith.constant dense<0.000000e+00> : vector<128x128xf32>
    %294 = tpu.matmul %292, %293, %cst_94 {dimension_numbers = #tpu.dot_dimension_numbers<[1], [1], [0], [0], [0, 0, 1, 0], [], []>} : vector<128x16xbf16>, vector<128x16xbf16>, vector<128x128xf32> -> vector<128x128xf32>
    %295 = vector.broadcast %3 : vector<1x128xf32> to vector<128x128xf32>
    %296 = arith.mulf %294, %295 : vector<128x128xf32>
    %297 = vector.broadcast %201 : vector<1x128xf32> to vector<128x128xf32>
    %298 = arith.addf %296, %297 : vector<128x128xf32>
    %cst_95 = arith.constant dense<0xFF800000> : vector<128xf32>
    %299 = vector.multi_reduction <maximumf>, %298, %cst_95 [1] : vector<128x128xf32> to vector<128xf32>
    %300 = vector.shape_cast %299 : vector<128xf32> to vector<128x1xf32>
    %301 = vector.broadcast %300 : vector<128x1xf32> to vector<128x128xf32>
    %302 = arith.subf %298, %301 : vector<128x128xf32>
    %303 = math.exp %302 : vector<128x128xf32>
    %cst_96 = arith.constant dense<0.000000e+00> : vector<128xf32>
    %304 = vector.multi_reduction <add>, %303, %cst_96 [1] : vector<128x128xf32> to vector<128xf32>
    %305 = vector.shape_cast %304 : vector<128xf32> to vector<128x1xf32>
    %306 = vector.broadcast %305 : vector<128x1xf32> to vector<128x128xf32>
    %307 = arith.divf %303, %306 : vector<128x128xf32>
    %308 = vector.extract_strided_slice %197 {offsets = [0, 64], sizes = [128, 16], strides = [1, 1]} : vector<128x128xf32> to vector<128x16xf32>
    %309 = arith.truncf %307 : vector<128x128xf32> to vector<128x128xbf16>
    %310 = arith.truncf %308 : vector<128x16xf32> to vector<128x16xbf16>
    %cst_97 = arith.constant dense<0.000000e+00> : vector<128x16xf32>
    %311 = tpu.matmul %309, %310, %cst_97 {dimension_numbers = #tpu.dot_dimension_numbers<[1], [0], [0], [1], [0, 0, 1, 1], [], []>} : vector<128x128xbf16>, vector<128x16xbf16>, vector<128x16xf32> -> vector<128x16xf32>
    %312 = vector.extract_strided_slice %195 {offsets = [0, 80], sizes = [128, 16], strides = [1, 1]} : vector<128x128xf32> to vector<128x16xf32>
    %313 = vector.extract_strided_slice %196 {offsets = [0, 80], sizes = [128, 16], strides = [1, 1]} : vector<128x128xf32> to vector<128x16xf32>
    %314 = arith.truncf %312 : vector<128x16xf32> to vector<128x16xbf16>
    %315 = arith.truncf %313 : vector<128x16xf32> to vector<128x16xbf16>
    %cst_98 = arith.constant dense<0.000000e+00> : vector<128x128xf32>
    %316 = tpu.matmul %314, %315, %cst_98 {dimension_numbers = #tpu.dot_dimension_numbers<[1], [1], [0], [0], [0, 0, 1, 0], [], []>} : vector<128x16xbf16>, vector<128x16xbf16>, vector<128x128xf32> -> vector<128x128xf32>
    %317 = vector.broadcast %3 : vector<1x128xf32> to vector<128x128xf32>
    %318 = arith.mulf %316, %317 : vector<128x128xf32>
    %319 = vector.broadcast %201 : vector<1x128xf32> to vector<128x128xf32>
    %320 = arith.addf %318, %319 : vector<128x128xf32>
    %cst_99 = arith.constant dense<0xFF800000> : vector<128xf32>
    %321 = vector.multi_reduction <maximumf>, %320, %cst_99 [1] : vector<128x128xf32> to vector<128xf32>
    %322 = vector.shape_cast %321 : vector<128xf32> to vector<128x1xf32>
    %323 = vector.broadcast %322 : vector<128x1xf32> to vector<128x128xf32>
    %324 = arith.subf %320, %323 : vector<128x128xf32>
    %325 = math.exp %324 : vector<128x128xf32>
    %cst_100 = arith.constant dense<0.000000e+00> : vector<128xf32>
    %326 = vector.multi_reduction <add>, %325, %cst_100 [1] : vector<128x128xf32> to vector<128xf32>
    %327 = vector.shape_cast %326 : vector<128xf32> to vector<128x1xf32>
    %328 = vector.broadcast %327 : vector<128x1xf32> to vector<128x128xf32>
    %329 = arith.divf %325, %328 : vector<128x128xf32>
    %330 = vector.extract_strided_slice %197 {offsets = [0, 80], sizes = [128, 16], strides = [1, 1]} : vector<128x128xf32> to vector<128x16xf32>
    %331 = arith.truncf %329 : vector<128x128xf32> to vector<128x128xbf16>
    %332 = arith.truncf %330 : vector<128x16xf32> to vector<128x16xbf16>
    %cst_101 = arith.constant dense<0.000000e+00> : vector<128x16xf32>
    %333 = tpu.matmul %331, %332, %cst_101 {dimension_numbers = #tpu.dot_dimension_numbers<[1], [0], [0], [1], [0, 0, 1, 1], [], []>} : vector<128x128xbf16>, vector<128x16xbf16>, vector<128x16xf32> -> vector<128x16xf32>
    %334 = vector.extract_strided_slice %195 {offsets = [0, 96], sizes = [128, 16], strides = [1, 1]} : vector<128x128xf32> to vector<128x16xf32>
    %335 = vector.extract_strided_slice %196 {offsets = [0, 96], sizes = [128, 16], strides = [1, 1]} : vector<128x128xf32> to vector<128x16xf32>
    %336 = arith.truncf %334 : vector<128x16xf32> to vector<128x16xbf16>
    %337 = arith.truncf %335 : vector<128x16xf32> to vector<128x16xbf16>
    %cst_102 = arith.constant dense<0.000000e+00> : vector<128x128xf32>
    %338 = tpu.matmul %336, %337, %cst_102 {dimension_numbers = #tpu.dot_dimension_numbers<[1], [1], [0], [0], [0, 0, 1, 0], [], []>} : vector<128x16xbf16>, vector<128x16xbf16>, vector<128x128xf32> -> vector<128x128xf32>
    %339 = vector.broadcast %3 : vector<1x128xf32> to vector<128x128xf32>
    %340 = arith.mulf %338, %339 : vector<128x128xf32>
    %341 = vector.broadcast %201 : vector<1x128xf32> to vector<128x128xf32>
    %342 = arith.addf %340, %341 : vector<128x128xf32>
    %cst_103 = arith.constant dense<0xFF800000> : vector<128xf32>
    %343 = vector.multi_reduction <maximumf>, %342, %cst_103 [1] : vector<128x128xf32> to vector<128xf32>
    %344 = vector.shape_cast %343 : vector<128xf32> to vector<128x1xf32>
    %345 = vector.broadcast %344 : vector<128x1xf32> to vector<128x128xf32>
    %346 = arith.subf %342, %345 : vector<128x128xf32>
    %347 = math.exp %346 : vector<128x128xf32>
    %cst_104 = arith.constant dense<0.000000e+00> : vector<128xf32>
    %348 = vector.multi_reduction <add>, %347, %cst_104 [1] : vector<128x128xf32> to vector<128xf32>
    %349 = vector.shape_cast %348 : vector<128xf32> to vector<128x1xf32>
    %350 = vector.broadcast %349 : vector<128x1xf32> to vector<128x128xf32>
    %351 = arith.divf %347, %350 : vector<128x128xf32>
    %352 = vector.extract_strided_slice %197 {offsets = [0, 96], sizes = [128, 16], strides = [1, 1]} : vector<128x128xf32> to vector<128x16xf32>
    %353 = arith.truncf %351 : vector<128x128xf32> to vector<128x128xbf16>
    %354 = arith.truncf %352 : vector<128x16xf32> to vector<128x16xbf16>
    %cst_105 = arith.constant dense<0.000000e+00> : vector<128x16xf32>
    %355 = tpu.matmul %353, %354, %cst_105 {dimension_numbers = #tpu.dot_dimension_numbers<[1], [0], [0], [1], [0, 0, 1, 1], [], []>} : vector<128x128xbf16>, vector<128x16xbf16>, vector<128x16xf32> -> vector<128x16xf32>
    %356 = vector.extract_strided_slice %195 {offsets = [0, 112], sizes = [128, 16], strides = [1, 1]} : vector<128x128xf32> to vector<128x16xf32>
    %357 = vector.extract_strided_slice %196 {offsets = [0, 112], sizes = [128, 16], strides = [1, 1]} : vector<128x128xf32> to vector<128x16xf32>
    %358 = arith.truncf %356 : vector<128x16xf32> to vector<128x16xbf16>
    %359 = arith.truncf %357 : vector<128x16xf32> to vector<128x16xbf16>
    %cst_106 = arith.constant dense<0.000000e+00> : vector<128x128xf32>
    %360 = tpu.matmul %358, %359, %cst_106 {dimension_numbers = #tpu.dot_dimension_numbers<[1], [1], [0], [0], [0, 0, 1, 0], [], []>} : vector<128x16xbf16>, vector<128x16xbf16>, vector<128x128xf32> -> vector<128x128xf32>
    %361 = vector.broadcast %3 : vector<1x128xf32> to vector<128x128xf32>
    %362 = arith.mulf %360, %361 : vector<128x128xf32>
    %363 = vector.broadcast %201 : vector<1x128xf32> to vector<128x128xf32>
    %364 = arith.addf %362, %363 : vector<128x128xf32>
    %cst_107 = arith.constant dense<0xFF800000> : vector<128xf32>
    %365 = vector.multi_reduction <maximumf>, %364, %cst_107 [1] : vector<128x128xf32> to vector<128xf32>
    %366 = vector.shape_cast %365 : vector<128xf32> to vector<128x1xf32>
    %367 = vector.broadcast %366 : vector<128x1xf32> to vector<128x128xf32>
    %368 = arith.subf %364, %367 : vector<128x128xf32>
    %369 = math.exp %368 : vector<128x128xf32>
    %cst_108 = arith.constant dense<0.000000e+00> : vector<128xf32>
    %370 = vector.multi_reduction <add>, %369, %cst_108 [1] : vector<128x128xf32> to vector<128xf32>
    %371 = vector.shape_cast %370 : vector<128xf32> to vector<128x1xf32>
    %372 = vector.broadcast %371 : vector<128x1xf32> to vector<128x128xf32>
    %373 = arith.divf %369, %372 : vector<128x128xf32>
    %374 = vector.extract_strided_slice %197 {offsets = [0, 112], sizes = [128, 16], strides = [1, 1]} : vector<128x128xf32> to vector<128x16xf32>
    %375 = arith.truncf %373 : vector<128x128xf32> to vector<128x128xbf16>
    %376 = arith.truncf %374 : vector<128x16xf32> to vector<128x16xbf16>
    %cst_109 = arith.constant dense<0.000000e+00> : vector<128x16xf32>
    %377 = tpu.matmul %375, %376, %cst_109 {dimension_numbers = #tpu.dot_dimension_numbers<[1], [0], [0], [1], [0, 0, 1, 1], [], []>} : vector<128x128xbf16>, vector<128x16xbf16>, vector<128x16xf32> -> vector<128x16xf32>
    %378 = tpu.concatenate %223, %245, %267, %289, %311, %333, %355, %377 in 1 : vector<128x16xf32>, vector<128x16xf32>, vector<128x16xf32>, vector<128x16xf32>, vector<128x16xf32>, vector<128x16xf32>, vector<128x16xf32>, vector<128x16xf32> -> vector<128x128xf32>
    %379 = arith.addf %378, %167 : vector<128x128xf32>
    %cst_110 = arith.constant dense<0.000000e+00> : vector<128xf32>
    %380 = vector.multi_reduction <add>, %379, %cst_110 [1] : vector<128x128xf32> to vector<128xf32>
    %381 = vector.shape_cast %380 : vector<128xf32> to vector<128x1xf32>
    %cst_111 = arith.constant 1.280000e+02 : f32
    %382 = vector.broadcast %cst_111 : f32 to vector<128x1xf32>
    %383 = arith.divf %381, %382 : vector<128x1xf32>
    %384 = vector.broadcast %383 : vector<128x1xf32> to vector<128x128xf32>
    %385 = arith.subf %379, %384 : vector<128x128xf32>
    %386 = arith.mulf %385, %385 : vector<128x128xf32>
    %cst_112 = arith.constant dense<0.000000e+00> : vector<128xf32>
    %387 = vector.multi_reduction <add>, %386, %cst_112 [1] : vector<128x128xf32> to vector<128xf32>
    %388 = vector.shape_cast %387 : vector<128xf32> to vector<128x1xf32>
    %cst_113 = arith.constant 1.280000e+02 : f32
    %389 = vector.broadcast %cst_113 : f32 to vector<128x1xf32>
    %390 = arith.divf %388, %389 : vector<128x1xf32>
    %391 = vector.broadcast %383 : vector<128x1xf32> to vector<128x128xf32>
    %392 = arith.subf %379, %391 : vector<128x128xf32>
    %cst_114 = arith.constant 9.99999974E-6 : f32
    %393 = vector.broadcast %cst_114 : f32 to vector<128x1xf32>
    %394 = arith.addf %390, %393 : vector<128x1xf32>
    %395 = math.rsqrt %394 : vector<128x1xf32>
    %396 = vector.broadcast %395 : vector<128x1xf32> to vector<128x128xf32>
    %397 = arith.mulf %392, %396 : vector<128x128xf32>
    %398 = vector.broadcast %28 : vector<1x128xf32> to vector<128x128xf32>
    %399 = arith.mulf %397, %398 : vector<128x128xf32>
    %400 = vector.broadcast %29 : vector<1x128xf32> to vector<128x128xf32>
    %401 = arith.addf %399, %400 : vector<128x128xf32>
    %402 = arith.truncf %401 : vector<128x128xf32> to vector<128x128xbf16>
    %403 = arith.truncf %30 : vector<128x128xf32> to vector<128x128xbf16>
    %cst_115 = arith.constant dense<0.000000e+00> : vector<128x128xf32>
    %404 = tpu.matmul %402, %403, %cst_115 {dimension_numbers = #tpu.dot_dimension_numbers<[1], [0], [0], [1], [0, 0, 1, 1], [], []>} : vector<128x128xbf16>, vector<128x128xbf16>, vector<128x128xf32> -> vector<128x128xf32>
    %405 = vector.broadcast %31 : vector<1x128xf32> to vector<128x128xf32>
    %406 = arith.addf %404, %405 : vector<128x128xf32>
    %cst_116 = arith.constant 0.000000e+00 : f32
    %407 = vector.broadcast %cst_116 : f32 to vector<128x128xf32>
    %408 = arith.maximumf %406, %407 : vector<128x128xf32>
    %409 = arith.truncf %408 : vector<128x128xf32> to vector<128x128xbf16>
    %410 = arith.truncf %32 : vector<128x128xf32> to vector<128x128xbf16>
    %cst_117 = arith.constant dense<0.000000e+00> : vector<128x128xf32>
    %411 = tpu.matmul %409, %410, %cst_117 {dimension_numbers = #tpu.dot_dimension_numbers<[1], [0], [0], [1], [0, 0, 1, 1], [], []>} : vector<128x128xbf16>, vector<128x128xbf16>, vector<128x128xf32> -> vector<128x128xf32>
    %412 = vector.broadcast %33 : vector<1x128xf32> to vector<128x128xf32>
    %413 = arith.addf %411, %412 : vector<128x128xf32>
    %414 = arith.addf %413, %379 : vector<128x128xf32>
    %415 = tpu.transpose %414, [1, 0] : vector<128x128xf32> -> vector<128x128xf32>
    %c0_118 = arith.constant 0 : index
    %c0_119 = arith.constant 0 : index
    %c0_120 = arith.constant 0 : index
    %416 = vector.load %arg18[%c0_118, %c0_119, %c0_120] : memref<1x128x128xf32, #tpu.memory_space<vmem>>, vector<1x128x128xf32>
    %417 = vector.shape_cast %416 : vector<1x128x128xf32> to vector<128x128xf32>
    %418 = vector.shape_cast %415 : vector<128x128xf32> to vector<1x128x128xf32>
    tpu.vector_store %arg18[%c0_118, %c0_119, %c0_120], %418 {strides = array<i32>} : memref<1x128x128xf32, #tpu.memory_space<vmem>>, vector<1x128x128xf32>,
    return
  }
  func.func @transform_0(%arg0: i32) -> (i32, i32, i32) {
    %c0_i32 = arith.constant 0 : i32
    %c0_i32_0 = arith.constant 0 : i32
    %c0_i32_1 = arith.constant 0 : i32
    return %arg0, %c0_i32, %c0_i32_0 : i32, i32, i32
  }
  func.func @transform_1(%arg0: i32) -> (i32, i32, i32) {
    %c0_i32 = arith.constant 0 : i32
    %c0_i32_0 = arith.constant 0 : i32
    %c0_i32_1 = arith.constant 0 : i32
    return %arg0, %c0_i32, %c0_i32_0 : i32, i32, i32
  }
  func.func @transform_2(%arg0: i32) -> (i32, i32) {
    %c0_i32 = arith.constant 0 : i32
    %c0_i32_0 = arith.constant 0 : i32
    %c0_i32_1 = arith.constant 0 : i32
    return %c0_i32, %c0_i32_0 : i32, i32
  }
  func.func @transform_3(%arg0: i32) -> (i32, i32, i32) {
    %c0_i32 = arith.constant 0 : i32
    %c0_i32_0 = arith.constant 0 : i32
    %c0_i32_1 = arith.constant 0 : i32
    %c0_i32_2 = arith.constant 0 : i32
    return %c0_i32, %c0_i32_0, %c0_i32_1 : i32, i32, i32
  }
  func.func @transform_4(%arg0: i32) -> (i32, i32, i32) {
    %c0_i32 = arith.constant 0 : i32
    %c0_i32_0 = arith.constant 0 : i32
    %c0_i32_1 = arith.constant 0 : i32
    %c0_i32_2 = arith.constant 0 : i32
    return %c0_i32, %c0_i32_0, %c0_i32_1 : i32, i32, i32
  }
  func.func @transform_5(%arg0: i32) -> (i32, i32, i32) {
    %c0_i32 = arith.constant 0 : i32
    %c0_i32_0 = arith.constant 0 : i32
    %c0_i32_1 = arith.constant 0 : i32
    %c0_i32_2 = arith.constant 0 : i32
    return %c0_i32, %c0_i32_0, %c0_i32_1 : i32, i32, i32
  }
  func.func @transform_6(%arg0: i32) -> (i32, i32, i32) {
    %c0_i32 = arith.constant 0 : i32
    %c0_i32_0 = arith.constant 0 : i32
    %c0_i32_1 = arith.constant 0 : i32
    %c0_i32_2 = arith.constant 0 : i32
    return %c0_i32, %c0_i32_0, %c0_i32_1 : i32, i32, i32
  }
  func.func @transform_7(%arg0: i32) -> (i32, i32, i32) {
    %c0_i32 = arith.constant 0 : i32
    %c0_i32_0 = arith.constant 0 : i32
    %c0_i32_1 = arith.constant 0 : i32
    %c0_i32_2 = arith.constant 0 : i32
    return %c0_i32, %c0_i32_0, %c0_i32_1 : i32, i32, i32
  }
  func.func @transform_8(%arg0: i32) -> (i32, i32) {
    %c0_i32 = arith.constant 0 : i32
    %c0_i32_0 = arith.constant 0 : i32
    %c0_i32_1 = arith.constant 0 : i32
    return %c0_i32, %c0_i32_0 : i32, i32
  }
  func.func @transform_9(%arg0: i32) -> (i32, i32) {
    %c0_i32 = arith.constant 0 : i32
    %c0_i32_0 = arith.constant 0 : i32
    %c0_i32_1 = arith.constant 0 : i32
    return %c0_i32, %c0_i32_0 : i32, i32
  }
  func.func @transform_10(%arg0: i32) -> (i32, i32) {
    %c0_i32 = arith.constant 0 : i32
    %c0_i32_0 = arith.constant 0 : i32
    %c0_i32_1 = arith.constant 0 : i32
    return %c0_i32, %c0_i32_0 : i32, i32
  }
  func.func @transform_11(%arg0: i32) -> (i32, i32) {
    %c0_i32 = arith.constant 0 : i32
    %c0_i32_0 = arith.constant 0 : i32
    %c0_i32_1 = arith.constant 0 : i32
    return %c0_i32, %c0_i32_0 : i32, i32
  }
  func.func @transform_12(%arg0: i32) -> (i32, i32) {
    %c0_i32 = arith.constant 0 : i32
    %c0_i32_0 = arith.constant 0 : i32
    %c0_i32_1 = arith.constant 0 : i32
    return %c0_i32, %c0_i32_0 : i32, i32
  }
  func.func @transform_13(%arg0: i32) -> (i32, i32) {
    %c0_i32 = arith.constant 0 : i32
    %c0_i32_0 = arith.constant 0 : i32
    %c0_i32_1 = arith.constant 0 : i32
    return %c0_i32, %c0_i32_0 : i32, i32
  }
  func.func @transform_14(%arg0: i32) -> (i32, i32) {
    %c0_i32 = arith.constant 0 : i32
    %c0_i32_0 = arith.constant 0 : i32
    %c0_i32_1 = arith.constant 0 : i32
    return %c0_i32, %c0_i32_0 : i32, i32
  }
  func.func @transform_15(%arg0: i32) -> (i32, i32) {
    %c0_i32 = arith.constant 0 : i32
    %c0_i32_0 = arith.constant 0 : i32
    %c0_i32_1 = arith.constant 0 : i32
    return %c0_i32, %c0_i32_0 : i32, i32
  }
  func.func @transform_16(%arg0: i32) -> (i32, i32) {
    %c0_i32 = arith.constant 0 : i32
    %c0_i32_0 = arith.constant 0 : i32
    %c0_i32_1 = arith.constant 0 : i32
    return %c0_i32, %c0_i32_0 : i32, i32
  }
  func.func @transform_17(%arg0: i32) -> (i32, i32, i32) {
    %c0_i32 = arith.constant 0 : i32
    %c0_i32_0 = arith.constant 0 : i32
    %c0_i32_1 = arith.constant 0 : i32
    return %arg0, %c0_i32, %c0_i32_0 : i32, i32, i32
  }
}

</mosaic_0001>

<llo_original>
// kernel: tpu_custom_call.1
$region0: #{tpu_custom_call.1}
  #allocation0 [shape = 'u32[]', space=smem, size = 0x4, offset = 0x4, fixed_abs, tag = 'smem constant byte address 0x4 - core index']
  #allocation1 [shape = 'u32[72,128]{1,0:T(1,128)}', space=vmem, size = 0x9000, scoped, tag = 'internal scratch']
  %s0 = inlined_call_operand.hbm [shape: f32[2,128,128], index: 0, kind: input, shape index: {}]
  %s1 = inlined_call_operand.vmem [shape: f32[2,1,128], index: 1, kind: input, shape index: {}]
  %s2 = inlined_call_operand.hbm [shape: f32[128,128], index: 2, kind: input, shape index: {}]
  %s3 = inlined_call_operand.vmem [shape: f32[2,1,128], index: 3, kind: input, shape index: {}]
  %s4 = inlined_call_operand.vmem [shape: f32[2,1,128], index: 4, kind: input, shape index: {}]
  %s5 = inlined_call_operand.vmem [shape: f32[2,7,128], index: 5, kind: input, shape index: {}]
  %s6 = inlined_call_operand.hbm [shape: f32[2,128,128], index: 6, kind: input, shape index: {}]
  %s7 = inlined_call_operand.vmem [shape: f32[2,1,128], index: 7, kind: input, shape index: {}]
  %s8 = inlined_call_operand.vmem [shape: f32[1,128], index: 8, kind: input, shape index: {}]
  %s9 = inlined_call_operand.vmem [shape: f32[1,128], index: 9, kind: input, shape index: {}]
  %s10 = inlined_call_operand.hbm [shape: f32[128,384], index: 10, kind: input, shape index: {}]
  %s11 = inlined_call_operand.vmem [shape: f32[1,128], index: 11, kind: input, shape index: {}]
  %s12 = inlined_call_operand.vmem [shape: f32[1,128], index: 12, kind: input, shape index: {}]
  %s13 = inlined_call_operand.hbm [shape: f32[128,128], index: 13, kind: input, shape index: {}]
  %s14 = inlined_call_operand.vmem [shape: f32[1,128], index: 14, kind: input, shape index: {}]
  %s15 = inlined_call_operand.hbm [shape: f32[128,128], index: 15, kind: input, shape index: {}]
  %s16 = inlined_call_operand.vmem [shape: f32[1,128], index: 16, kind: input, shape index: {}]
  %s17 = inlined_call_operand.hbm [shape: f32[2,128,128], index: 17, kind: output, shape index: {}]
  %s18 = sld [smem:[#allocation0]]
  $region125: #{tpu_custom_call.1} parent=0
    _
  %s20 = ssub.s32 1, %s18
  %s21 = scalar_select 0, %s20, %s18
  $region1: #{tpu_custom_call.1} parent=0
    #allocation2 [shape = 'u8[131072]{0}', space=vmem, size = 0x20000, scoped, tag = 'input window, operand 0']
    #allocation3 [shape = 's32[2]{0}', space=sflag, size = 0x8, scoped, tag = 'scoped memory for tpu_custom_call.1']
    #allocation4 [shape = 's32[2]{0}', space=sflag, size = 0x8, scoped, tag = 'scoped memory for tpu_custom_call.1']
    #allocation5 [shape = 'u8[65536]{0}', space=vmem, size = 0x10000, scoped, tag = 'input window, operand 2, single buffered']
    #allocation6 [shape = 's32[1]{0}', space=sflag, size = 0x4, scoped, tag = 'scoped memory for tpu_custom_call.1']
    #allocation7 [shape = 'u8[131072]{0}', space=vmem, size = 0x20000, scoped, tag = 'input window, operand 6, single buffered']
    #allocation8 [shape = 'u8[196608]{0}', space=vmem, size = 0x30000, scoped, tag = 'input window, operand 10, single buffered']
    #allocation9 [shape = 's32[1]{0}', space=sflag, size = 0x4, scoped, tag = 'scoped memory for tpu_custom_call.1']
    #allocation10 [shape = 'u8[65536]{0}', space=vmem, size = 0x10000, scoped, tag = 'input window, operand 13, single buffered']
    #allocation11 [shape = 'u8[65536]{0}', space=vmem, size = 0x10000, scoped, tag = 'input window, operand 15, single buffered']
    #allocation12 [shape = 's32[1]{0}', space=sflag, size = 0x4, scoped, tag = 'scoped memory for tpu_custom_call.1']
    #allocation13 [shape = 'u8[131072]{0}', space=vmem, size = 0x20000, scoped, tag = 'output window, operand 0']
    %22 = vsyncpa [#allocation3], 0
    %s23 = scalar_lea.sflag [#allocation3], 1
    %24 = vsyncpa %s23, 0
    %25 = vsyncpa [#allocation6], 0
    %26 = vsyncpa [#allocation9], 0
    %27 = vsyncpa [#allocation12], 0
    %28 = vsyncpa [#allocation4], 0
    %s29 = scalar_lea.sflag [#allocation4], 1
    %30 = vsyncpa %s29, 0
    loop: start=0, step=1, limit=4
    $region2: #{tpu_custom_call.1} parent=1 // loop_pre_header
      _
    $region3: #{tpu_custom_call.1} parent=1 // loop_header
      %s32 = sphi 0, %s36
      %p33 = scmp.ge.s32.totalorder %s32, 4
      %s42 = sphi 0, %s44
      %s45 = sphi 0, %s42
      %s46 = sphi 0, %s45
      %s62 = sphi 0, %s46
      %s68 = sphi 0, %s70
      %s71 = sphi 0, %s68
      %s72 = sphi 0, %s71
      %s88 = sphi 0, %s72
      %s92 = sphi 0, %s92
      %s94 = sphi 0, %s92
      %s95 = sphi 0, %s94
      %s109 = sphi 0, %s95
      %s113 = sphi 0, %s113
      %s115 = sphi 0, %s113
      %s116 = sphi 0, %s115
      %s130 = sphi 0, %s116
      %s134 = sphi 0, %s134
      %s136 = sphi 0, %s134
      %s137 = sphi 0, %s136
      %s151 = sphi 0, %s137
      %s155 = sphi 0, %s155
      %s157 = sphi 0, %s155
      %s158 = sphi 0, %s157
      %s172 = sphi 0, %s158
      %s176 = sphi 0, %s176
      %s178 = sphi 0, %s176
      %s179 = sphi 0, %s178
      %s193 = sphi 0, %s179
      %s197 = sphi 0, %s197
      %s199 = sphi 0, %s197
      %s200 = sphi 0, %s199
      %s214 = sphi 0, %s200
      %s218 = sphi 0, %s218
      %s220 = sphi 0, %s218
      %s221 = sphi 0, %s220
      %s235 = sphi 0, %s221
      %s239 = sphi 0, %s239
      %s241 = sphi 0, %s239
      %s242 = sphi 0, %s241
      %s256 = sphi 0, %s242
      %s260 = sphi 0, %s260
      %s262 = sphi 0, %s260
      %s263 = sphi 0, %s262
      %s277 = sphi 0, %s263
      %s281 = sphi 0, %s281
      %s283 = sphi 0, %s281
      %s284 = sphi 0, %s283
      %s298 = sphi 0, %s284
      %s302 = sphi 0, %s302
      %s304 = sphi 0, %s302
      %s305 = sphi 0, %s304
      %s319 = sphi 0, %s305
      %s323 = sphi 0, %s323
      %s325 = sphi 0, %s323
      %s326 = sphi 0, %s325
      %s340 = sphi 0, %s326
      %s344 = sphi 0, %s344
      %s346 = sphi 0, %s344
      %s347 = sphi 0, %s346
      %s361 = sphi 0, %s347
      %s365 = sphi 0, %s365
      %s367 = sphi 0, %s365
      %s368 = sphi 0, %s367
      %s382 = sphi 0, %s368
      %s386 = sphi 0, %s386
      %s388 = sphi 0, %s386
      %s389 = sphi 0, %s388
      %s403 = sphi 0, %s389
      %s409 = sphi 0, %s411
      %s412 = sphi 0, %s409
      %s413 = sphi 0, %s412
      %s429 = sphi 0, %s413
    $region4: #{tpu_custom_call.1} parent=1 // loop_header_branch
      %35 = sbr.rel (%p33) target = $region8
    $region5: #{tpu_custom_call.1} parent=1 // loop_body
      %s37 = ssub.s32 %s32, 1
      %s38 = ssub.s32 %s32, 2
      %s39 = sadd.s32 %s32, 1
      %s40 = ssub.s32 %s32, %s39
      %p41 = scmp.eq.s32.totalorder %s40, 0
      %s43 = sadd.s32 %s42, 1
      %s44 = scalar_select %p41, %s42, %s43
      %p47 = pneg %p41
      %p48 = scmp.eq.s32.totalorder %s32, 1
      %p49 = por %p47, %p48
      %p50 = scmp.ne.s32.totalorder %s42, %s45
      %p51 = scmp.eq.s32.totalorder %s32, 0
      %p52 = por %p50, %p51
      %p53 = scmp.ne.s32.totalorder %s42, %s45
      %p54 = scmp.eq.s32.totalorder %s37, 1
      %p55 = por %p53, %p54
      %p56 = scmp.ne.s32.totalorder %s45, %s46
      %p57 = scmp.eq.s32.totalorder %s37, 0
      %p58 = por %p56, %p57
      %p59 = scmp.ne.s32.totalorder %s45, %s46
      %p60 = scmp.eq.s32.totalorder %s38, 1
      %p61 = por %p59, %p60
      %p63 = scmp.ne.s32.totalorder %s46, %s62
      %p64 = scmp.eq.s32.totalorder %s38, 0
      %p65 = por %p63, %p64
      %s66 = ssub.s32 %s32, %s39
      %p67 = scmp.eq.s32.totalorder %s66, 0
      %s69 = sadd.s32 %s68, 1
      %s70 = scalar_select %p67, %s68, %s69
      %p73 = pneg %p67
      %p74 = scmp.eq.s32.totalorder %s32, 1
      %p75 = por %p73, %p74
      %p76 = scmp.ne.s32.totalorder %s68, %s71
      %p77 = scmp.eq.s32.totalorder %s32, 0
      %p78 = por %p76, %p77
      %p79 = scmp.ne.s32.totalorder %s68, %s71
      %p80 = scmp.eq.s32.totalorder %s37, 1
      %p81 = por %p79, %p80
      %p82 = scmp.ne.s32.totalorder %s71, %s72
      %p83 = scmp.eq.s32.totalorder %s37, 0
      %p84 = por %p82, %p83
      %p85 = scmp.ne.s32.totalorder %s71, %s72
      %p86 = scmp.eq.s32.totalorder %s38, 1
      %p87 = por %p85, %p86
      %p89 = scmp.ne.s32.totalorder %s72, %s88
      %p90 = scmp.eq.s32.totalorder %s38, 0
      %p91 = por %p89, %p90
      %s93 = sadd.s32 %s92, 1
      %p96 = scmp.eq.s32.totalorder %s32, 1
      %p97 = scmp.ne.s32.totalorder %s92, %s94
      %p98 = scmp.eq.s32.totalorder %s32, 0
      %p99 = por %p97, %p98
      %p100 = scmp.ne.s32.totalorder %s92, %s94
      %p101 = scmp.eq.s32.totalorder %s37, 1
      %p102 = por %p100, %p101
      %p103 = scmp.ne.s32.totalorder %s94, %s95
      %p104 = scmp.eq.s32.totalorder %s37, 0
      %p105 = por %p103, %p104
      %p106 = scmp.ne.s32.totalorder %s94, %s95
      %p107 = scmp.eq.s32.totalorder %s38, 1
      %p108 = por %p106, %p107
      %p110 = scmp.ne.s32.totalorder %s95, %s109
      %p111 = scmp.eq.s32.totalorder %s38, 0
      %p112 = por %p110, %p111
      %s114 = sadd.s32 %s113, 1
      %p117 = scmp.eq.s32.totalorder %s32, 1
      %p118 = scmp.ne.s32.totalorder %s113, %s115
      %p119 = scmp.eq.s32.totalorder %s32, 0
      %p120 = por %p118, %p119
      %p121 = scmp.ne.s32.totalorder %s113, %s115
      %p122 = scmp.eq.s32.totalorder %s37, 1
      %p123 = por %p121, %p122
      %p124 = scmp.ne.s32.totalorder %s115, %s116
      %p125 = scmp.eq.s32.totalorder %s37, 0
      %p126 = por %p124, %p125
      %p127 = scmp.ne.s32.totalorder %s115, %s116
      %p128 = scmp.eq.s32.totalorder %s38, 1
      %p129 = por %p127, %p128
      %p131 = scmp.ne.s32.totalorder %s116, %s130
      %p132 = scmp.eq.s32.totalorder %s38, 0
      %p133 = por %p131, %p132
      %s135 = sadd.s32 %s134, 1
      %p138 = scmp.eq.s32.totalorder %s32, 1
      %p139 = scmp.ne.s32.totalorder %s134, %s136
      %p140 = scmp.eq.s32.totalorder %s32, 0
      %p141 = por %p139, %p140
      %p142 = scmp.ne.s32.totalorder %s134, %s136
      %p143 = scmp.eq.s32.totalorder %s37, 1
      %p144 = por %p142, %p143
      %p145 = scmp.ne.s32.totalorder %s136, %s137
      %p146 = scmp.eq.s32.totalorder %s37, 0
      %p147 = por %p145, %p146
      %p148 = scmp.ne.s32.totalorder %s136, %s137
      %p149 = scmp.eq.s32.totalorder %s38, 1
      %p150 = por %p148, %p149
      %p152 = scmp.ne.s32.totalorder %s137, %s151
      %p153 = scmp.eq.s32.totalorder %s38, 0
      %p154 = por %p152, %p153
      %s156 = sadd.s32 %s155, 1
      %p159 = scmp.eq.s32.totalorder %s32, 1
      %p160 = scmp.ne.s32.totalorder %s155, %s157
      %p161 = scmp.eq.s32.totalorder %s32, 0
      %p162 = por %p160, %p161
      %p163 = scmp.ne.s32.totalorder %s155, %s157
      %p164 = scmp.eq.s32.totalorder %s37, 1
      %p165 = por %p163, %p164
      %p166 = scmp.ne.s32.totalorder %s157, %s158
      %p167 = scmp.eq.s32.totalorder %s37, 0
      %p168 = por %p166, %p167
      %p169 = scmp.ne.s32.totalorder %s157, %s158
      %p170 = scmp.eq.s32.totalorder %s38, 1
      %p171 = por %p169, %p170
      %p173 = scmp.ne.s32.totalorder %s158, %s172
      %p174 = scmp.eq.s32.totalorder %s38, 0
      %p175 = por %p173, %p174
      %s177 = sadd.s32 %s176, 1
      %p180 = scmp.eq.s32.totalorder %s32, 1
      %p181 = scmp.ne.s32.totalorder %s176, %s178
      %p182 = scmp.eq.s32.totalorder %s32, 0
      %p183 = por %p181, %p182
      %p184 = scmp.ne.s32.totalorder %s176, %s178
      %p185 = scmp.eq.s32.totalorder %s37, 1
      %p186 = por %p184, %p185
      %p187 = scmp.ne.s32.totalorder %s178, %s179
      %p188 = scmp.eq.s32.totalorder %s37, 0
      %p189 = por %p187, %p188
      %p190 = scmp.ne.s32.totalorder %s178, %s179
      %p191 = scmp.eq.s32.totalorder %s38, 1
      %p192 = por %p190, %p191
      %p194 = scmp.ne.s32.totalorder %s179, %s193
      %p195 = scmp.eq.s32.totalorder %s38, 0
      %p196 = por %p194, %p195
      %s198 = sadd.s32 %s197, 1
      %p201 = scmp.eq.s32.totalorder %s32, 1
      %p202 = scmp.ne.s32.totalorder %s197, %s199
      %p203 = scmp.eq.s32.totalorder %s32, 0
      %p204 = por %p202, %p203
      %p205 = scmp.ne.s32.totalorder %s197, %s199
      %p206 = scmp.eq.s32.totalorder %s37, 1
      %p207 = por %p205, %p206
      %p208 = scmp.ne.s32.totalorder %s199, %s200
      %p209 = scmp.eq.s32.totalorder %s37, 0
      %p210 = por %p208, %p209
      %p211 = scmp.ne.s32.totalorder %s199, %s200
      %p212 = scmp.eq.s32.totalorder %s38, 1
      %p213 = por %p211, %p212
      %p215 = scmp.ne.s32.totalorder %s200, %s214
      %p216 = scmp.eq.s32.totalorder %s38, 0
      %p217 = por %p215, %p216
      %s219 = sadd.s32 %s218, 1
      %p222 = scmp.eq.s32.totalorder %s32, 1
      %p223 = scmp.ne.s32.totalorder %s218, %s220
      %p224 = scmp.eq.s32.totalorder %s32, 0
      %p225 = por %p223, %p224
      %p226 = scmp.ne.s32.totalorder %s218, %s220
      %p227 = scmp.eq.s32.totalorder %s37, 1
      %p228 = por %p226, %p227
      %p229 = scmp.ne.s32.totalorder %s220, %s221
      %p230 = scmp.eq.s32.totalorder %s37, 0
      %p231 = por %p229, %p230
      %p232 = scmp.ne.s32.totalorder %s220, %s221
      %p233 = scmp.eq.s32.totalorder %s38, 1
      %p234 = por %p232, %p233
      %p236 = scmp.ne.s32.totalorder %s221, %s235
      %p237 = scmp.eq.s32.totalorder %s38, 0
      %p238 = por %p236, %p237
      %s240 = sadd.s32 %s239, 1
      %p243 = scmp.eq.s32.totalorder %s32, 1
      %p244 = scmp.ne.s32.totalorder %s239, %s241
      %p245 = scmp.eq.s32.totalorder %s32, 0
      %p246 = por %p244, %p245
      %p247 = scmp.ne.s32.totalorder %s239, %s241
      %p248 = scmp.eq.s32.totalorder %s37, 1
      %p249 = por %p247, %p248
      %p250 = scmp.ne.s32.totalorder %s241, %s242
      %p251 = scmp.eq.s32.totalorder %s37, 0
      %p252 = por %p250, %p251
      %p253 = scmp.ne.s32.totalorder %s241, %s242
      %p254 = scmp.eq.s32.totalorder %s38, 1
      %p255 = por %p253, %p254
      %p257 = scmp.ne.s32.totalorder %s242, %s256
      %p258 = scmp.eq.s32.totalorder %s38, 0
      %p259 = por %p257, %p258
      %s261 = sadd.s32 %s260, 1
      %p264 = scmp.eq.s32.totalorder %s32, 1
      %p265 = scmp.ne.s32.totalorder %s260, %s262
      %p266 = scmp.eq.s32.totalorder %s32, 0
      %p267 = por %p265, %p266
      %p268 = scmp.ne.s32.totalorder %s260, %s262
      %p269 = scmp.eq.s32.totalorder %s37, 1
      %p270 = por %p268, %p269
      %p271 = scmp.ne.s32.totalorder %s262, %s263
      %p272 = scmp.eq.s32.totalorder %s37, 0
      %p273 = por %p271, %p272
      %p274 = scmp.ne.s32.totalorder %s262, %s263
      %p275 = scmp.eq.s32.totalorder %s38, 1
      %p276 = por %p274, %p275
      %p278 = scmp.ne.s32.totalorder %s263, %s277
      %p279 = scmp.eq.s32.totalorder %s38, 0
      %p280 = por %p278, %p279
      %s282 = sadd.s32 %s281, 1
      %p285 = scmp.eq.s32.totalorder %s32, 1
      %p286 = scmp.ne.s32.totalorder %s281, %s283
      %p287 = scmp.eq.s32.totalorder %s32, 0
      %p288 = por %p286, %p287
      %p289 = scmp.ne.s32.totalorder %s281, %s283
      %p290 = scmp.eq.s32.totalorder %s37, 1
      %p291 = por %p289, %p290
      %p292 = scmp.ne.s32.totalorder %s283, %s284
      %p293 = scmp.eq.s32.totalorder %s37, 0
      %p294 = por %p292, %p293
      %p295 = scmp.ne.s32.totalorder %s283, %s284
      %p296 = scmp.eq.s32.totalorder %s38, 1
      %p297 = por %p295, %p296
      %p299 = scmp.ne.s32.totalorder %s284, %s298
      %p300 = scmp.eq.s32.totalorder %s38, 0
      %p301 = por %p299, %p300
      %s303 = sadd.s32 %s302, 1
      %p306 = scmp.eq.s32.totalorder %s32, 1
      %p307 = scmp.ne.s32.totalorder %s302, %s304
      %p308 = scmp.eq.s32.totalorder %s32, 0
      %p309 = por %p307, %p308
      %p310 = scmp.ne.s32.totalorder %s302, %s304
      %p311 = scmp.eq.s32.totalorder %s37, 1
      %p312 = por %p310, %p311
      %p313 = scmp.ne.s32.totalorder %s304, %s305
      %p314 = scmp.eq.s32.totalorder %s37, 0
      %p315 = por %p313, %p314
      %p316 = scmp.ne.s32.totalorder %s304, %s305
      %p317 = scmp.eq.s32.totalorder %s38, 1
      %p318 = por %p316, %p317
      %p320 = scmp.ne.s32.totalorder %s305, %s319
      %p321 = scmp.eq.s32.totalorder %s38, 0
      %p322 = por %p320, %p321
      %s324 = sadd.s32 %s323, 1
      %p327 = scmp.eq.s32.totalorder %s32, 1
      %p328 = scmp.ne.s32.totalorder %s323, %s325
      %p329 = scmp.eq.s32.totalorder %s32, 0
      %p330 = por %p328, %p329
      %p331 = scmp.ne.s32.totalorder %s323, %s325
      %p332 = scmp.eq.s32.totalorder %s37, 1
      %p333 = por %p331, %p332
      %p334 = scmp.ne.s32.totalorder %s325, %s326
      %p335 = scmp.eq.s32.totalorder %s37, 0
      %p336 = por %p334, %p335
      %p337 = scmp.ne.s32.totalorder %s325, %s326
      %p338 = scmp.eq.s32.totalorder %s38, 1
      %p339 = por %p337, %p338
      %p341 = scmp.ne.s32.totalorder %s326, %s340
      %p342 = scmp.eq.s32.totalorder %s38, 0
      %p343 = por %p341, %p342
      %s345 = sadd.s32 %s344, 1
      %p348 = scmp.eq.s32.totalorder %s32, 1
      %p349 = scmp.ne.s32.totalorder %s344, %s346
      %p350 = scmp.eq.s32.totalorder %s32, 0
      %p351 = por %p349, %p350
      %p352 = scmp.ne.s32.totalorder %s344, %s346
      %p353 = scmp.eq.s32.totalorder %s37, 1
      %p354 = por %p352, %p353
      %p355 = scmp.ne.s32.totalorder %s346, %s347
      %p356 = scmp.eq.s32.totalorder %s37, 0
      %p357 = por %p355, %p356
      %p358 = scmp.ne.s32.totalorder %s346, %s347
      %p359 = scmp.eq.s32.totalorder %s38, 1
      %p360 = por %p358, %p359
      %p362 = scmp.ne.s32.totalorder %s347, %s361
      %p363 = scmp.eq.s32.totalorder %s38, 0
      %p364 = por %p362, %p363
      %s366 = sadd.s32 %s365, 1
      %p369 = scmp.eq.s32.totalorder %s32, 1
      %p370 = scmp.ne.s32.totalorder %s365, %s367
      %p371 = scmp.eq.s32.totalorder %s32, 0
      %p372 = por %p370, %p371
      %p373 = scmp.ne.s32.totalorder %s365, %s367
      %p374 = scmp.eq.s32.totalorder %s37, 1
      %p375 = por %p373, %p374
      %p376 = scmp.ne.s32.totalorder %s367, %s368
      %p377 = scmp.eq.s32.totalorder %s37, 0
      %p378 = por %p376, %p377
      %p379 = scmp.ne.s32.totalorder %s367, %s368
      %p380 = scmp.eq.s32.totalorder %s38, 1
      %p381 = por %p379, %p380
      %p383 = scmp.ne.s32.totalorder %s368, %s382
      %p384 = scmp.eq.s32.totalorder %s38, 0
      %p385 = por %p383, %p384
      %s387 = sadd.s32 %s386, 1
      %p390 = scmp.eq.s32.totalorder %s32, 1
      %p391 = scmp.ne.s32.totalorder %s386, %s388
      %p392 = scmp.eq.s32.totalorder %s32, 0
      %p393 = por %p391, %p392
      %p394 = scmp.ne.s32.totalorder %s386, %s388
      %p395 = scmp.eq.s32.totalorder %s37, 1
      %p396 = por %p394, %p395
      %p397 = scmp.ne.s32.totalorder %s388, %s389
      %p398 = scmp.eq.s32.totalorder %s37, 0
      %p399 = por %p397, %p398
      %p400 = scmp.ne.s32.totalorder %s388, %s389
      %p401 = scmp.eq.s32.totalorder %s38, 1
      %p402 = por %p400, %p401
      %p404 = scmp.ne.s32.totalorder %s389, %s403
      %p405 = scmp.eq.s32.totalorder %s38, 0
      %p406 = por %p404, %p405
      %s407 = ssub.s32 %s32, %s39
      %p408 = scmp.eq.s32.totalorder %s407, 0
      %s410 = sadd.s32 %s409, 1
      %s411 = scalar_select %p408, %s409, %s410
      %p414 = pneg %p408
      %p415 = scmp.eq.s32.totalorder %s32, 1
      %p416 = por %p414, %p415
      %p417 = scmp.ne.s32.totalorder %s409, %s412
      %p418 = scmp.eq.s32.totalorder %s32, 0
      %p419 = por %p417, %p418
      %p420 = scmp.ne.s32.totalorder %s409, %s412
      %p421 = scmp.eq.s32.totalorder %s37, 1
      %p422 = por %p420, %p421
      %p423 = scmp.ne.s32.totalorder %s412, %s413
      %p424 = scmp.eq.s32.totalorder %s37, 0
      %p425 = por %p423, %p424
      %p426 = scmp.ne.s32.totalorder %s412, %s413
      %p427 = scmp.eq.s32.totalorder %s38, 1
      %p428 = por %p426, %p427
      %p430 = scmp.ne.s32.totalorder %s413, %s429
      %p431 = scmp.eq.s32.totalorder %s38, 0
      %p432 = por %p430, %p431
      %p433 = scmp.le.s32.totalorder 1, %s32
      %p434 = scmp.lt.s32.totalorder %s32, 3
      %p435 = pnand %p433, %p434
      %p436 = pneg %p435
      // Predicated region
      $region9: #{tpu_custom_call.1} parent=5 // pred_check
        _
      $region10: #{tpu_custom_call.1} parent=5 // pred_check_branch
        %438 = sbr.rel (%p435) target = $region12
      $region11: #{tpu_custom_call.1} parent=5 // pred_region
        %s439 = ssub.s32 %s32, 1
        // Predicated region
        $region13: #{tpu_custom_call.1} parent=11 // pred_check
          %p440 = pneg %p105
        $region14: #{tpu_custom_call.1} parent=11 // pred_check_branch
          %442 = sbr.rel (%p440) target = $region16
        $region15: #{tpu_custom_call.1} parent=11 // pred_region
          %444 = vsyncadd [#allocation6], 0
          %s445 = sshll.u32 %s2, 4
          %s446 = int_to_ptr.hbm [resolvable:$true] %s445
          %s447 = sshll.u32 [#allocation5], 4
          %s448 = int_to_ptr.vmem [resolvable:$true] %s447
          %453 = dma.hbm_to_vmem [thread:$0]  %s446, 2048, %s448, [#allocation6], 128, 128, 8
        $region16: #{tpu_custom_call.1} parent=11 // pred_fallthru
          _
        // Predicated region
        $region17: #{tpu_custom_call.1} parent=11 // pred_check
          %p454 = pneg %p126
        $region18: #{tpu_custom_call.1} parent=11 // pred_check_branch
          %456 = sbr.rel (%p454) target = $region20
        $region19: #{tpu_custom_call.1} parent=11 // pred_region
          _
        $region20: #{tpu_custom_call.1} parent=11 // pred_fallthru
          _
        // Predicated region
        $region21: #{tpu_custom_call.1} parent=11 // pred_check
          %p457 = pneg %p147
        $region22: #{tpu_custom_call.1} parent=11 // pred_check_branch
          %459 = sbr.rel (%p457) target = $region24
        $region23: #{tpu_custom_call.1} parent=11 // pred_region
          _
        $region24: #{tpu_custom_call.1} parent=11 // pred_fallthru
          _
        // Predicated region
        $region25: #{tpu_custom_call.1} parent=11 // pred_check
          %p460 = pneg %p168
        $region26: #{tpu_custom_call.1} parent=11 // pred_check_branch
          %462 = sbr.rel (%p460) target = $region28
        $region27: #{tpu_custom_call.1} parent=11 // pred_region
          _
        $region28: #{tpu_custom_call.1} parent=11 // pred_fallthru
          _
        // Predicated region
        $region29: #{tpu_custom_call.1} parent=11 // pred_check
          %p463 = pneg %p189
        $region30: #{tpu_custom_call.1} parent=11 // pred_check_branch
          %465 = sbr.rel (%p463) target = $region32
        $region31: #{tpu_custom_call.1} parent=11 // pred_region
          %467 = vsyncadd [#allocation6], 0
          %s468 = sshll.u32 %s6, 4
          %s469 = int_to_ptr.hbm [resolvable:$true] %s468
          %s470 = sshll.u32 [#allocation7], 4
          %s471 = int_to_ptr.vmem [resolvable:$true] %s470
          %476 = dma.hbm_to_vmem [thread:$0]  %s469, 4096, %s471, [#allocation6], 128, 128, 8
        $region32: #{tpu_custom_call.1} parent=11 // pred_fallthru
          _
        // Predicated region
        $region33: #{tpu_custom_call.1} parent=11 // pred_check
          %p477 = pneg %p210
        $region34: #{tpu_custom_call.1} parent=11 // pred_check_branch
          %479 = sbr.rel (%p477) target = $region36
        $region35: #{tpu_custom_call.1} parent=11 // pred_region
          _
        $region36: #{tpu_custom_call.1} parent=11 // pred_fallthru
          _
        // Predicated region
        $region37: #{tpu_custom_call.1} parent=11 // pred_check
          %p480 = pneg %p231
        $region38: #{tpu_custom_call.1} parent=11 // pred_check_branch
          %482 = sbr.rel (%p480) target = $region40
        $region39: #{tpu_custom_call.1} parent=11 // pred_region
          _
        $region40: #{tpu_custom_call.1} parent=11 // pred_fallthru
          _
        // Predicated region
        $region41: #{tpu_custom_call.1} parent=11 // pred_check
          %p483 = pneg %p252
        $region42: #{tpu_custom_call.1} parent=11 // pred_check_branch
          %485 = sbr.rel (%p483) target = $region44
        $region43: #{tpu_custom_call.1} parent=11 // pred_region
          _
        $region44: #{tpu_custom_call.1} parent=11 // pred_fallthru
          _
        // Predicated region
        $region45: #{tpu_custom_call.1} parent=11 // pred_check
          %p486 = pneg %p273
        $region46: #{tpu_custom_call.1} parent=11 // pred_check_branch
          %488 = sbr.rel (%p486) target = $region48
        $region47: #{tpu_custom_call.1} parent=11 // pred_region
          %490 = vsyncadd [#allocation9], 0
          %s491 = sshll.u32 %s10, 4
          %s492 = int_to_ptr.hbm [resolvable:$true] %s491
          %s493 = sshll.u32 [#allocation8], 4
          %s494 = int_to_ptr.vmem [resolvable:$true] %s493
          %499 = dma.hbm_to_vmem [thread:$0]  %s492, 6144, %s494, [#allocation9], 384, 384, 24
        $region48: #{tpu_custom_call.1} parent=11 // pred_fallthru
          _
        // Predicated region
        $region49: #{tpu_custom_call.1} parent=11 // pred_check
          %p500 = pneg %p294
        $region50: #{tpu_custom_call.1} parent=11 // pred_check_branch
          %502 = sbr.rel (%p500) target = $region52
        $region51: #{tpu_custom_call.1} parent=11 // pred_region
          _
        $region52: #{tpu_custom_call.1} parent=11 // pred_fallthru
          _
        // Predicated region
        $region53: #{tpu_custom_call.1} parent=11 // pred_check
          %p503 = pneg %p315
        $region54: #{tpu_custom_call.1} parent=11 // pred_check_branch
          %505 = sbr.rel (%p503) target = $region56
        $region55: #{tpu_custom_call.1} parent=11 // pred_region
          _
        $region56: #{tpu_custom_call.1} parent=11 // pred_fallthru
          _
        // Predicated region
        $region57: #{tpu_custom_call.1} parent=11 // pred_check
          %p506 = pneg %p336
        $region58: #{tpu_custom_call.1} parent=11 // pred_check_branch
          %508 = sbr.rel (%p506) target = $region60
        $region59: #{tpu_custom_call.1} parent=11 // pred_region
          %510 = vsyncadd [#allocation9], 0
          %s511 = sshll.u32 %s13, 4
          %s512 = int_to_ptr.hbm [resolvable:$true] %s511
          %s513 = sshll.u32 [#allocation10], 4
          %s514 = int_to_ptr.vmem [resolvable:$true] %s513
          %519 = dma.hbm_to_vmem [thread:$0]  %s512, 2048, %s514, [#allocation9], 128, 128, 8
        $region60: #{tpu_custom_call.1} parent=11 // pred_fallthru
          _
        // Predicated region
        $region61: #{tpu_custom_call.1} parent=11 // pred_check
          %p520 = pneg %p357
        $region62: #{tpu_custom_call.1} parent=11 // pred_check_branch
          %522 = sbr.rel (%p520) target = $region64
        $region63: #{tpu_custom_call.1} parent=11 // pred_region
          _
        $region64: #{tpu_custom_call.1} parent=11 // pred_fallthru
          _
        // Predicated region
        $region65: #{tpu_custom_call.1} parent=11 // pred_check
          %p523 = pneg %p378
        $region66: #{tpu_custom_call.1} parent=11 // pred_check_branch
          %525 = sbr.rel (%p523) target = $region68
        $region67: #{tpu_custom_call.1} parent=11 // pred_region
          %527 = vsyncadd [#allocation12], 0
          %s528 = sshll.u32 %s15, 4
          %s529 = int_to_ptr.hbm [resolvable:$true] %s528
          %s530 = sshll.u32 [#allocation11], 4
          %s531 = int_to_ptr.vmem [resolvable:$true] %s530
          %536 = dma.hbm_to_vmem [thread:$0]  %s529, 2048, %s531, [#allocation12], 128, 128, 8
        $region68: #{tpu_custom_call.1} parent=11 // pred_fallthru
          _
        // Predicated region
        $region69: #{tpu_custom_call.1} parent=11 // pred_check
          %p537 = pneg %p399
        $region70: #{tpu_custom_call.1} parent=11 // pred_check_branch
          %539 = sbr.rel (%p537) target = $region72
        $region71: #{tpu_custom_call.1} parent=11 // pred_region
          _
        $region72: #{tpu_custom_call.1} parent=11 // pred_fallthru
          _
      $region12: #{tpu_custom_call.1} parent=5 // pred_fallthru
        _
      %p540 = scmp.lt.s32.totalorder %s32, 2
      // Predicated region
      $region73: #{tpu_custom_call.1} parent=5 // pred_check
        %p541 = pneg %p540
      $region74: #{tpu_custom_call.1} parent=5 // pred_check_branch
        %543 = sbr.rel (%p541) target = $region76
      $region75: #{tpu_custom_call.1} parent=5 // pred_region
        // Predicated region
        $region77: #{tpu_custom_call.1} parent=75 // pred_check
          %p544 = pneg %p52
        $region78: #{tpu_custom_call.1} parent=75 // pred_check_branch
          %546 = sbr.rel (%p544) target = $region80
        $region79: #{tpu_custom_call.1} parent=75 // pred_region
          %s547 = sand.u32 %s42, 1
          %s548 = scalar_lea.sflag [#allocation3], %s547
          %s549 = sand.u32 %s42, 1
          %s550 = smul.addr %s549, 128
          %s551 = scalar_lea.vmem [#allocation2], %s550
          %553 = vsyncadd %s548, 0
          %s554 = smul.addr %s32, 16
          %s555 = smul.addr %s554, 8
          %s556 = scalar_lea.hbm %s0, %s555
          %s557 = sshll.u32 %s556, 4
          %s558 = int_to_ptr.hbm [resolvable:$true] %s557
          %s559 = sshll.u32 %s551, 4
          %s560 = int_to_ptr.vmem [resolvable:$true] %s559
          %565 = dma.hbm_to_vmem [thread:$0]  %s558, 2048, %s560, %s548, 128, 128, 8
        $region80: #{tpu_custom_call.1} parent=75 // pred_fallthru
          _
        // Predicated region
        $region81: #{tpu_custom_call.1} parent=75 // pred_check
          %p566 = pneg %p78
        $region82: #{tpu_custom_call.1} parent=75 // pred_check_branch
          %568 = sbr.rel (%p566) target = $region84
        $region83: #{tpu_custom_call.1} parent=75 // pred_region
          %p569 = scmp.lt.s32.totalorder %s32, 1
          %s570 = scalar_select %p569, %s32, 1
          %s571 = scalar_lea.vmem %s1, %s570
        $region84: #{tpu_custom_call.1} parent=75 // pred_fallthru
          _
      $region76: #{tpu_custom_call.1} parent=5 // pred_fallthru
        _
      %p572 = scmp.le.s32.totalorder 1, %s32
      %p573 = scmp.lt.s32.totalorder %s32, 3
      %p574 = pnand %p572, %p573
      %p575 = pneg %p574
      // Predicated region
      $region85: #{tpu_custom_call.1} parent=5 // pred_check
        _
      $region86: #{tpu_custom_call.1} parent=5 // pred_check_branch
        %577 = sbr.rel (%p574) target = $region88
      $region87: #{tpu_custom_call.1} parent=5 // pred_region
        %s578 = ssub.s32 %s32, 1
        %s579 = sand.u32 %s45, 1
        %s580 = scalar_lea.sflag [#allocation3], %s579
        %s581 = sand.u32 %s45, 1
        %s582 = smul.addr %s581, 128
        %s583 = scalar_lea.vmem [#allocation2], %s582
        // Predicated region
        $region89: #{tpu_custom_call.1} parent=87 // pred_check
          %p584 = pneg %p58
        $region90: #{tpu_custom_call.1} parent=87 // pred_check_branch
          %586 = sbr.rel (%p584) target = $region92
        $region91: #{tpu_custom_call.1} parent=87 // pred_region
          %588 = dma.done %s580, 2048
        $region92: #{tpu_custom_call.1} parent=87 // pred_fallthru
          _
        // Predicated region
        $region93: #{tpu_custom_call.1} parent=87 // pred_check
          %p589 = pneg %p105
        $region94: #{tpu_custom_call.1} parent=87 // pred_check_branch
          %591 = sbr.rel (%p589) target = $region96
        $region95: #{tpu_custom_call.1} parent=87 // pred_region
          %593 = dma.done [#allocation6], 2048
        $region96: #{tpu_custom_call.1} parent=87 // pred_fallthru
          _
        // Predicated region
        $region97: #{tpu_custom_call.1} parent=87 // pred_check
          %p594 = pneg %p189
        $region98: #{tpu_custom_call.1} parent=87 // pred_check_branch
          %596 = sbr.rel (%p594) target = $region100
        $region99: #{tpu_custom_call.1} parent=87 // pred_region
          %598 = dma.done [#allocation6], 4096
        $region100: #{tpu_custom_call.1} parent=87 // pred_fallthru
          _
        // Predicated region
        $region101: #{tpu_custom_call.1} parent=87 // pred_check
          %p599 = pneg %p273
        $region102: #{tpu_custom_call.1} parent=87 // pred_check_branch
          %601 = sbr.rel (%p599) target = $region104
        $region103: #{tpu_custom_call.1} parent=87 // pred_region
          %603 = dma.done [#allocation9], 6144
        $region104: #{tpu_custom_call.1} parent=87 // pred_fallthru
          _
        // Predicated region
        $region105: #{tpu_custom_call.1} parent=87 // pred_check
          %p604 = pneg %p336
        $region106: #{tpu_custom_call.1} parent=87 // pred_check_branch
          %606 = sbr.rel (%p604) target = $region108
        $region107: #{tpu_custom_call.1} parent=87 // pred_region
          %608 = dma.done [#allocation9], 2048
        $region108: #{tpu_custom_call.1} parent=87 // pred_fallthru
          _
        // Predicated region
        $region109: #{tpu_custom_call.1} parent=87 // pred_check
          %p609 = pneg %p378
        $region110: #{tpu_custom_call.1} parent=87 // pred_check_branch
          %611 = sbr.rel (%p609) target = $region112
        $region111: #{tpu_custom_call.1} parent=87 // pred_region
          %613 = dma.done [#allocation12], 2048
        $region112: #{tpu_custom_call.1} parent=87 // pred_fallthru
          _
        %s614 = sand.u32 %s45, 1
        %s615 = scalar_lea.sflag [#allocation3], %s614
        %s616 = sand.u32 %s45, 1
        %s617 = smul.addr %s616, 128
        %s618 = scalar_lea.vmem [#allocation2], %s617
        %p619 = pneg %p58
        %p620 = pneg %p55
        %p621 = scmp.lt.s32.totalorder %s37, 1
        %s622 = scalar_select %p621, %s37, 1
        %s623 = scalar_lea.vmem %s1, %s622
        %p624 = pneg %p84
        %p625 = pneg %p81
        %p626 = pneg %p105
        %p627 = pneg %p102
        %p628 = pneg %p126
        %p629 = pneg %p123
        %p630 = pneg %p147
        %p631 = pneg %p144
        %p632 = pneg %p168
        %p633 = pneg %p165
        %p634 = pneg %p189
        %p635 = pneg %p186
        %p636 = pneg %p210
        %p637 = pneg %p207
        %p638 = pneg %p231
        %p639 = pneg %p228
        %p640 = pneg %p252
        %p641 = pneg %p249
        %p642 = pneg %p273
        %p643 = pneg %p270
        %p644 = pneg %p294
        %p645 = pneg %p291
        %p646 = pneg %p315
        %p647 = pneg %p312
        %p648 = pneg %p336
        %p649 = pneg %p333
        %p650 = pneg %p357
        %p651 = pneg %p354
        %p652 = pneg %p378
        %p653 = pneg %p375
        %p654 = pneg %p399
        %p655 = pneg %p396
        %p656 = pneg %p425
        %p657 = pneg %p422
        %s658 = sand.u32 %s412, 1
        %s659 = scalar_lea.sflag [#allocation4], %s658
        %s660 = sand.u32 %s412, 1
        %s661 = smul.addr %s660, 128
        %s662 = scalar_lea.vmem [#allocation13], %s661
        %p663 = scmp.lt.s32.totalorder %s37, 1
        %s664 = scalar_select %p663, %s37, 1
        %s665 = scalar_lea.vmem %s1, %s664
        %v666 = vld [vmem:[%s583] sm:$0xff]
        %v667 = vld [vmem:[%s583 + $0x8] sm:$0xff]
        %v668 = vld [vmem:[%s583 + $0x10] sm:$0xff]
        %v669 = vld [vmem:[%s583 + $0x18] sm:$0xff]
        %v670 = vld [vmem:[%s583 + $0x20] sm:$0xff]
        %v671 = vld [vmem:[%s583 + $0x28] sm:$0xff]
        %v672 = vld [vmem:[%s583 + $0x30] sm:$0xff]
        %v673 = vld [vmem:[%s583 + $0x38] sm:$0xff]
        %v674 = vld [vmem:[%s583 + $0x40] sm:$0xff]
        %v675 = vld [vmem:[%s583 + $0x48] sm:$0xff]
        %v676 = vld [vmem:[%s583 + $0x50] sm:$0xff]
        %v677 = vld [vmem:[%s583 + $0x58] sm:$0xff]
        %v678 = vld [vmem:[%s583 + $0x60] sm:$0xff]
        %v679 = vld [vmem:[%s583 + $0x68] sm:$0xff]
        %v680 = vld [vmem:[%s583 + $0x70] sm:$0xff]
        %v681 = vld [vmem:[%s583 + $0x78] sm:$0xff]
        %v682 = vld [vmem:[%s665] sm:$0x1]
        %v683 = vld [vmem:[#allocation5] sm:$0xff]
        %v684 = vld [vmem:[#allocation5 + $0x8] sm:$0xff]
        %v685 = vld [vmem:[#allocation5 + $0x10] sm:$0xff]
        %v686 = vld [vmem:[#allocation5 + $0x18] sm:$0xff]
        %v687 = vld [vmem:[#allocation5 + $0x20] sm:$0xff]
        %v688 = vld [vmem:[#allocation5 + $0x28] sm:$0xff]
        %v689 = vld [vmem:[#allocation5 + $0x30] sm:$0xff]
        %v690 = vld [vmem:[#allocation5 + $0x38] sm:$0xff]
        %v691 = vld [vmem:[#allocation5 + $0x40] sm:$0xff]
        %v692 = vld [vmem:[#allocation5 + $0x48] sm:$0xff]
        %v693 = vld [vmem:[#allocation5 + $0x50] sm:$0xff]
        %v694 = vld [vmem:[#allocation5 + $0x58] sm:$0xff]
        %v695 = vld [vmem:[#allocation5 + $0x60] sm:$0xff]
        %v696 = vld [vmem:[#allocation5 + $0x68] sm:$0xff]
        %v697 = vld [vmem:[#allocation5 + $0x70] sm:$0xff]
        %v698 = vld [vmem:[#allocation5 + $0x78] sm:$0xff]
        %v699 = vld [vmem:[%s3] sm:$0x1]
        %s700 = scalar_lea.vmem %s3, 1
        %v701 = vld [vmem:[%s700] sm:$0x1]
        %v702 = vld [vmem:[%s4] sm:$0x1]
        %s703 = scalar_lea.vmem %s4, 1
        %v704 = vld [vmem:[%s703] sm:$0x1]
        %v705 = vld [vmem:[%s5] sm:$0x7f]
        %s706 = scalar_lea.vmem %s5, 8
        %v707 = vld [vmem:[%s706] sm:$0x7f]
        %v708 = vld [vmem:[#allocation7] sm:$0xff]
        %v709 = vld [vmem:[#allocation7 + $0x8] sm:$0xff]
        %v710 = vld [vmem:[#allocation7 + $0x10] sm:$0xff]
        %v711 = vld [vmem:[#allocation7 + $0x18] sm:$0xff]
        %v712 = vld [vmem:[#allocation7 + $0x20] sm:$0xff]
        %v713 = vld [vmem:[#allocation7 + $0x28] sm:$0xff]
        %v714 = vld [vmem:[#allocation7 + $0x30] sm:$0xff]
        %v715 = vld [vmem:[#allocation7 + $0x38] sm:$0xff]
        %v716 = vld [vmem:[#allocation7 + $0x40] sm:$0xff]
        %v717 = vld [vmem:[#allocation7 + $0x48] sm:$0xff]
        %v718 = vld [vmem:[#allocation7 + $0x50] sm:$0xff]
        %v719 = vld [vmem:[#allocation7 + $0x58] sm:$0xff]
        %v720 = vld [vmem:[#allocation7 + $0x60] sm:$0xff]
        %v721 = vld [vmem:[#allocation7 + $0x68] sm:$0xff]
        %v722 = vld [vmem:[#allocation7 + $0x70] sm:$0xff]
        %v723 = vld [vmem:[#allocation7 + $0x78] sm:$0xff]
        %s724 = scalar_lea.vmem [#allocation7], 128
        %v725 = vld [vmem:[%s724] sm:$0xff]
        %v726 = vld [vmem:[%s724 + $0x8] sm:$0xff]
        %v727 = vld [vmem:[%s724 + $0x10] sm:$0xff]
        %v728 = vld [vmem:[%s724 + $0x18] sm:$0xff]
        %v729 = vld [vmem:[%s724 + $0x20] sm:$0xff]
        %v730 = vld [vmem:[%s724 + $0x28] sm:$0xff]
        %v731 = vld [vmem:[%s724 + $0x30] sm:$0xff]
        %v732 = vld [vmem:[%s724 + $0x38] sm:$0xff]
        %v733 = vld [vmem:[%s724 + $0x40] sm:$0xff]
        %v734 = vld [vmem:[%s724 + $0x48] sm:$0xff]
        %v735 = vld [vmem:[%s724 + $0x50] sm:$0xff]
        %v736 = vld [vmem:[%s724 + $0x58] sm:$0xff]
        %v737 = vld [vmem:[%s724 + $0x60] sm:$0xff]
        %v738 = vld [vmem:[%s724 + $0x68] sm:$0xff]
        %v739 = vld [vmem:[%s724 + $0x70] sm:$0xff]
        %v740 = vld [vmem:[%s724 + $0x78] sm:$0xff]
        %v741 = vld [vmem:[%s7] sm:$0x1]
        %s742 = scalar_lea.vmem %s7, 1
        %v743 = vld [vmem:[%s742] sm:$0x1]
        %v744 = vld [vmem:[%s8] sm:$0x1]
        %v745 = vld [vmem:[%s9] sm:$0x1]
        %v746 = vld [vmem:[#allocation8] sm:$0xff]
        %v747 = vld [vmem:[#allocation8 + $0x8] sm:$0xff]
        %v748 = vld [vmem:[#allocation8 + $0x10] sm:$0xff]
        %v749 = vld [vmem:[#allocation8 + $0x18] sm:$0xff]
        %v750 = vld [vmem:[#allocation8 + $0x20] sm:$0xff]
        %v751 = vld [vmem:[#allocation8 + $0x28] sm:$0xff]
        %v752 = vld [vmem:[#allocation8 + $0x30] sm:$0xff]
        %v753 = vld [vmem:[#allocation8 + $0x38] sm:$0xff]
        %v754 = vld [vmem:[#allocation8 + $0x40] sm:$0xff]
        %v755 = vld [vmem:[#allocation8 + $0x48] sm:$0xff]
        %v756 = vld [vmem:[#allocation8 + $0x50] sm:$0xff]
        %v757 = vld [vmem:[#allocation8 + $0x58] sm:$0xff]
        %v758 = vld [vmem:[#allocation8 + $0x60] sm:$0xff]
        %v759 = vld [vmem:[#allocation8 + $0x68] sm:$0xff]
        %v760 = vld [vmem:[#allocation8 + $0x70] sm:$0xff]
        %v761 = vld [vmem:[#allocation8 + $0x78] sm:$0xff]
        %v762 = vld [vmem:[#allocation8 + $0x80] sm:$0xff]
        %v763 = vld [vmem:[#allocation8 + $0x88] sm:$0xff]
        %v764 = vld [vmem:[#allocation8 + $0x90] sm:$0xff]
        %v765 = vld [vmem:[#allocation8 + $0x98] sm:$0xff]
        %v766 = vld [vmem:[#allocation8 + $0xa0] sm:$0xff]
        %v767 = vld [vmem:[#allocation8 + $0xa8] sm:$0xff]
        %v768 = vld [vmem:[#allocation8 + $0xb0] sm:$0xff]
        %v769 = vld [vmem:[#allocation8 + $0xb8] sm:$0xff]
        %v770 = vld [vmem:[#allocation8 + $0xc0] sm:$0xff]
        %v771 = vld [vmem:[#allocation8 + $0xc8] sm:$0xff]
        %v772 = vld [vmem:[#allocation8 + $0xd0] sm:$0xff]
        %v773 = vld [vmem:[#allocation8 + $0xd8] sm:$0xff]
        %v774 = vld [vmem:[#allocation8 + $0xe0] sm:$0xff]
        %v775 = vld [vmem:[#allocation8 + $0xe8] sm:$0xff]
        %v776 = vld [vmem:[#allocation8 + $0xf0] sm:$0xff]
        %v777 = vld [vmem:[#allocation8 + $0xf8] sm:$0xff]
        %v778 = vld [vmem:[#allocation8 + $0x100] sm:$0xff]
        %v779 = vld [vmem:[#allocation8 + $0x108] sm:$0xff]
        %v780 = vld [vmem:[#allocation8 + $0x110] sm:$0xff]
        %v781 = vld [vmem:[#allocation8 + $0x118] sm:$0xff]
        %v782 = vld [vmem:[#allocation8 + $0x120] sm:$0xff]
        %v783 = vld [vmem:[#allocation8 + $0x128] sm:$0xff]
        %v784 = vld [vmem:[#allocation8 + $0x130] sm:$0xff]
        %v785 = vld [vmem:[#allocation8 + $0x138] sm:$0xff]
        %v786 = vld [vmem:[#allocation8 + $0x140] sm:$0xff]
        %v787 = vld [vmem:[#allocation8 + $0x148] sm:$0xff]
        %v788 = vld [vmem:[#allocation8 + $0x150] sm:$0xff]
        %v789 = vld [vmem:[#allocation8 + $0x158] sm:$0xff]
        %v790 = vld [vmem:[#allocation8 + $0x160] sm:$0xff]
        %v791 = vld [vmem:[#allocation8 + $0x168] sm:$0xff]
        %v792 = vld [vmem:[#allocation8 + $0x170] sm:$0xff]
        %v793 = vld [vmem:[#allocation8 + $0x178] sm:$0xff]
        %v794 = vld [vmem:[%s11] sm:$0x1]
        %v795 = vld [vmem:[%s12] sm:$0x1]
        %v796 = vld [vmem:[#allocation10] sm:$0xff]
        %v797 = vld [vmem:[#allocation10 + $0x8] sm:$0xff]
        %v798 = vld [vmem:[#allocation10 + $0x10] sm:$0xff]
        %v799 = vld [vmem:[#allocation10 + $0x18] sm:$0xff]
        %v800 = vld [vmem:[#allocation10 + $0x20] sm:$0xff]
        %v801 = vld [vmem:[#allocation10 + $0x28] sm:$0xff]
        %v802 = vld [vmem:[#allocation10 + $0x30] sm:$0xff]
        %v803 = vld [vmem:[#allocation10 + $0x38] sm:$0xff]
        %v804 = vld [vmem:[#allocation10 + $0x40] sm:$0xff]
        %v805 = vld [vmem:[#allocation10 + $0x48] sm:$0xff]
        %v806 = vld [vmem:[#allocation10 + $0x50] sm:$0xff]
        %v807 = vld [vmem:[#allocation10 + $0x58] sm:$0xff]
        %v808 = vld [vmem:[#allocation10 + $0x60] sm:$0xff]
        %v809 = vld [vmem:[#allocation10 + $0x68] sm:$0xff]
        %v810 = vld [vmem:[#allocation10 + $0x70] sm:$0xff]
        %v811 = vld [vmem:[#allocation10 + $0x78] sm:$0xff]
        %v812 = vld [vmem:[%s14] sm:$0x1]
        %v813 = vld [vmem:[#allocation11] sm:$0xff]
        %v814 = vld [vmem:[#allocation11 + $0x8] sm:$0xff]
        %v815 = vld [vmem:[#allocation11 + $0x10] sm:$0xff]
        %v816 = vld [vmem:[#allocation11 + $0x18] sm:$0xff]
        %v817 = vld [vmem:[#allocation11 + $0x20] sm:$0xff]
        %v818 = vld [vmem:[#allocation11 + $0x28] sm:$0xff]
        %v819 = vld [vmem:[#allocation11 + $0x30] sm:$0xff]
        %v820 = vld [vmem:[#allocation11 + $0x38] sm:$0xff]
        %v821 = vld [vmem:[#allocation11 + $0x40] sm:$0xff]
        %v822 = vld [vmem:[#allocation11 + $0x48] sm:$0xff]
        %v823 = vld [vmem:[#allocation11 + $0x50] sm:$0xff]
        %v824 = vld [vmem:[#allocation11 + $0x58] sm:$0xff]
        %v825 = vld [vmem:[#allocation11 + $0x60] sm:$0xff]
        %v826 = vld [vmem:[#allocation11 + $0x68] sm:$0xff]
        %v827 = vld [vmem:[#allocation11 + $0x70] sm:$0xff]
        %v828 = vld [vmem:[#allocation11 + $0x78] sm:$0xff]
        %v829 = vld [vmem:[%s16] sm:$0x1]
        %830 = vxpose.xlu0.b32.start [1/16] %v666, 128
        %831 = vxpose.xlu0.b32.cont [2/16] %v667, 128
        %832 = vxpose.xlu0.b32.cont [3/16] %v668, 128
        %833 = vxpose.xlu0.b32.cont [4/16] %v669, 128
        %834 = vxpose.xlu0.b32.cont [5/16] %v670, 128
        %835 = vxpose.xlu0.b32.cont [6/16] %v671, 128
        %836 = vxpose.xlu0.b32.cont [7/16] %v672, 128
        %837 = vxpose.xlu0.b32.cont [8/16] %v673, 128
        %838 = vxpose.xlu0.b32.cont [9/16] %v674, 128
        %839 = vxpose.xlu0.b32.cont [10/16] %v675, 128
        %840 = vxpose.xlu0.b32.cont [11/16] %v676, 128
        %841 = vxpose.xlu0.b32.cont [12/16] %v677, 128
        %842 = vxpose.xlu0.b32.cont [13/16] %v678, 128
        %843 = vxpose.xlu0.b32.cont [14/16] %v679, 128
        %844 = vxpose.xlu0.b32.cont [15/16] %v680, 128
        %845 = vxpose.xlu0.b32.end [16/16] %v681, 128
        %v846 = vpop.trf.xlu0
        %v847 = vpop.trf.xlu0
        %v848 = vpop.trf.xlu0
        %v849 = vpop.trf.xlu0
        %v850 = vpop.trf.xlu0
        %v851 = vpop.trf.xlu0
        %v852 = vpop.trf.xlu0
        %v853 = vpop.trf.xlu0
        %v854 = vpop.trf.xlu0
        %v855 = vpop.trf.xlu0
        %v856 = vpop.trf.xlu0
        %v857 = vpop.trf.xlu0
        %v858 = vpop.trf.xlu0
        %v859 = vpop.trf.xlu0
        %v860 = vpop.trf.xlu0
        %v861 = vpop.trf.xlu0
        %v862 = vadd.f32 %v846, %v683
        %v863 = vadd.f32 %v847, %v684
        %v864 = vadd.f32 %v848, %v685
        %v865 = vadd.f32 %v849, %v686
        %v866 = vadd.f32 %v850, %v687
        %v867 = vadd.f32 %v851, %v688
        %v868 = vadd.f32 %v852, %v689
        %v869 = vadd.f32 %v853, %v690
        %v870 = vadd.f32 %v854, %v691
        %v871 = vadd.f32 %v855, %v692
        %v872 = vadd.f32 %v856, %v693
        %v873 = vadd.f32 %v857, %v694
        %v874 = vadd.f32 %v858, %v695
        %v875 = vadd.f32 %v859, %v696
        %v876 = vadd.f32 %v860, %v697
        %v877 = vadd.f32 %v861, %v698
        %878 = vadd.xlane.f32.xlu0 %v862
        %v879 = vpop.xlane.xlu0 %878
        %880 = vadd.xlane.f32.xlu0 %v863
        %v881 = vpop.xlane.xlu0 %880
        %882 = vadd.xlane.f32.xlu0 %v864
        %v883 = vpop.xlane.xlu0 %882
        %884 = vadd.xlane.f32.xlu0 %v865
        %v885 = vpop.xlane.xlu0 %884
        %886 = vadd.xlane.f32.xlu0 %v866
        %v887 = vpop.xlane.xlu0 %886
        %888 = vadd.xlane.f32.xlu0 %v867
        %v889 = vpop.xlane.xlu0 %888
        %890 = vadd.xlane.f32.xlu0 %v868
        %v891 = vpop.xlane.xlu0 %890
        %892 = vadd.xlane.f32.xlu0 %v869
        %v893 = vpop.xlane.xlu0 %892
        %894 = vadd.xlane.f32.xlu0 %v870
        %v895 = vpop.xlane.xlu0 %894
        %896 = vadd.xlane.f32.xlu0 %v871
        %v897 = vpop.xlane.xlu0 %896
        %898 = vadd.xlane.f32.xlu0 %v872
        %v899 = vpop.xlane.xlu0 %898
        %900 = vadd.xlane.f32.xlu0 %v873
        %v901 = vpop.xlane.xlu0 %900
        %902 = vadd.xlane.f32.xlu0 %v874
        %v903 = vpop.xlane.xlu0 %902
        %904 = vadd.xlane.f32.xlu0 %v875
        %v905 = vpop.xlane.xlu0 %904
        %906 = vadd.xlane.f32.xlu0 %v876
        %v907 = vpop.xlane.xlu0 %906
        %908 = vadd.xlane.f32.xlu0 %v877
        %v909 = vpop.xlane.xlu0 %908
        %v910 = vrcp.pop 128.0
        %v911 = vmul.f32 128.0, %v910
        %v912 = vsub.f32 1.0, %v911
        %v913 = vmul.f32 %v910, %v912
        %v914 = vadd.f32 %v910, %v913
        %vm915 = vweird.f32 %v910
        %v916 = vsel %vm915, %v910, %v914
        %v917 = vmul.f32 %v879, %v916
        %v918 = vmul.f32 %v881, %v916
        %v919 = vmul.f32 %v883, %v916
        %v920 = vmul.f32 %v885, %v916
        %v921 = vmul.f32 %v887, %v916
        %v922 = vmul.f32 %v889, %v916
        %v923 = vmul.f32 %v891, %v916
        %v924 = vmul.f32 %v893, %v916
        %v925 = vmul.f32 %v895, %v916
        %v926 = vmul.f32 %v897, %v916
        %v927 = vmul.f32 %v899, %v916
        %v928 = vmul.f32 %v901, %v916
        %v929 = vmul.f32 %v903, %v916
        %v930 = vmul.f32 %v905, %v916
        %v931 = vmul.f32 %v907, %v916
        %v932 = vmul.f32 %v909, %v916
        %v933 = vsub.f32 %v862, %v917
        %v934 = vsub.f32 %v863, %v918
        %v935 = vsub.f32 %v864, %v919
        %v936 = vsub.f32 %v865, %v920
        %v937 = vsub.f32 %v866, %v921
        %v938 = vsub.f32 %v867, %v922
        %v939 = vsub.f32 %v868, %v923
        %v940 = vsub.f32 %v869, %v924
        %v941 = vsub.f32 %v870, %v925
        %v942 = vsub.f32 %v871, %v926
        %v943 = vsub.f32 %v872, %v927
        %v944 = vsub.f32 %v873, %v928
        %v945 = vsub.f32 %v874, %v929
        %v946 = vsub.f32 %v875, %v930
        %v947 = vsub.f32 %v876, %v931
        %v948 = vsub.f32 %v877, %v932
        %v949 = vmul.f32 %v933, %v933
        %v950 = vmul.f32 %v934, %v934
        %v951 = vmul.f32 %v935, %v935
        %v952 = vmul.f32 %v936, %v936
        %v953 = vmul.f32 %v937, %v937
        %v954 = vmul.f32 %v938, %v938
        %v955 = vmul.f32 %v939, %v939
        %v956 = vmul.f32 %v940, %v940
        %v957 = vmul.f32 %v941, %v941
        %v958 = vmul.f32 %v942, %v942
        %v959 = vmul.f32 %v943, %v943
        %v960 = vmul.f32 %v944, %v944
        %v961 = vmul.f32 %v945, %v945
        %v962 = vmul.f32 %v946, %v946
        %v963 = vmul.f32 %v947, %v947
        %v964 = vmul.f32 %v948, %v948
        %965 = vadd.xlane.f32.xlu0 %v949
        %v966 = vpop.xlane.xlu0 %965
        %967 = vadd.xlane.f32.xlu0 %v950
        %v968 = vpop.xlane.xlu0 %967
        %969 = vadd.xlane.f32.xlu0 %v951
        %v970 = vpop.xlane.xlu0 %969
        %971 = vadd.xlane.f32.xlu0 %v952
        %v972 = vpop.xlane.xlu0 %971
        %973 = vadd.xlane.f32.xlu0 %v953
        %v974 = vpop.xlane.xlu0 %973
        %975 = vadd.xlane.f32.xlu0 %v954
        %v976 = vpop.xlane.xlu0 %975
        %977 = vadd.xlane.f32.xlu0 %v955
        %v978 = vpop.xlane.xlu0 %977
        %979 = vadd.xlane.f32.xlu0 %v956
        %v980 = vpop.xlane.xlu0 %979
        %981 = vadd.xlane.f32.xlu0 %v957
        %v982 = vpop.xlane.xlu0 %981
        %983 = vadd.xlane.f32.xlu0 %v958
        %v984 = vpop.xlane.xlu0 %983
        %985 = vadd.xlane.f32.xlu0 %v959
        %v986 = vpop.xlane.xlu0 %985
        %987 = vadd.xlane.f32.xlu0 %v960
        %v988 = vpop.xlane.xlu0 %987
        %989 = vadd.xlane.f32.xlu0 %v961
        %v990 = vpop.xlane.xlu0 %989
        %991 = vadd.xlane.f32.xlu0 %v962
        %v992 = vpop.xlane.xlu0 %991
        %993 = vadd.xlane.f32.xlu0 %v963
        %v994 = vpop.xlane.xlu0 %993
        %995 = vadd.xlane.f32.xlu0 %v964
        %v996 = vpop.xlane.xlu0 %995
        %v997 = vmul.f32 %v966, %v916
        %v998 = vmul.f32 %v968, %v916
        %v999 = vmul.f32 %v970, %v916
        %v1000 = vmul.f32 %v972, %v916
        %v1001 = vmul.f32 %v974, %v916
        %v1002 = vmul.f32 %v976, %v916
        %v1003 = vmul.f32 %v978, %v916
        %v1004 = vmul.f32 %v980, %v916
        %v1005 = vmul.f32 %v982, %v916
        %v1006 = vmul.f32 %v984, %v916
        %v1007 = vmul.f32 %v986, %v916
        %v1008 = vmul.f32 %v988, %v916
        %v1009 = vmul.f32 %v990, %v916
        %v1010 = vmul.f32 %v992, %v916
        %v1011 = vmul.f32 %v994, %v916
        %v1012 = vmul.f32 %v996, %v916
        %v1013 = vadd.f32 %v997, 1e-05
        %v1014 = vadd.f32 %v998, 1e-05
        %v1015 = vadd.f32 %v999, 1e-05
        %v1016 = vadd.f32 %v1000, 1e-05
        %v1017 = vadd.f32 %v1001, 1e-05
        %v1018 = vadd.f32 %v1002, 1e-05
        %v1019 = vadd.f32 %v1003, 1e-05
        %v1020 = vadd.f32 %v1004, 1e-05
        %v1021 = vadd.f32 %v1005, 1e-05
        %v1022 = vadd.f32 %v1006, 1e-05
        %v1023 = vadd.f32 %v1007, 1e-05
        %v1024 = vadd.f32 %v1008, 1e-05
        %v1025 = vadd.f32 %v1009, 1e-05
        %v1026 = vadd.f32 %v1010, 1e-05
        %v1027 = vadd.f32 %v1011, 1e-05
        %v1028 = vadd.f32 %v1012, 1e-05
        %v1029 = vrsqrt.pop %v1013
        %v1030 = vmul.f32 %v1029, %v1013
        %v1031 = vmul.f32 %v1030, %v1029
        %v1032 = vmul.f32 0.5, %v1031
        %v1033 = vsub.f32 1.5, %v1032
        %v1034 = vmul.f32 %v1029, %v1033
        %vm1035 = vweird.f32 %v1013
        %vm1036 = vweird.f32 %v1029
        %vm1037 = vmor %vm1035, %vm1036
        %v1038 = vsel %vm1037, %v1029, %v1034
        %v1039 = vrsqrt.pop %v1014
        %v1040 = vmul.f32 %v1039, %v1014
        %v1041 = vmul.f32 %v1040, %v1039
        %v1042 = vmul.f32 0.5, %v1041
        %v1043 = vsub.f32 1.5, %v1042
        %v1044 = vmul.f32 %v1039, %v1043
        %vm1045 = vweird.f32 %v1014
        %vm1046 = vweird.f32 %v1039
        %vm1047 = vmor %vm1045, %vm1046
        %v1048 = vsel %vm1047, %v1039, %v1044
        %v1049 = vrsqrt.pop %v1015
        %v1050 = vmul.f32 %v1049, %v1015
        %v1051 = vmul.f32 %v1050, %v1049
        %v1052 = vmul.f32 0.5, %v1051
        %v1053 = vsub.f32 1.5, %v1052
        %v1054 = vmul.f32 %v1049, %v1053
        %vm1055 = vweird.f32 %v1015
        %vm1056 = vweird.f32 %v1049
        %vm1057 = vmor %vm1055, %vm1056
        %v1058 = vsel %vm1057, %v1049, %v1054
        %v1059 = vrsqrt.pop %v1016
        %v1060 = vmul.f32 %v1059, %v1016
        %v1061 = vmul.f32 %v1060, %v1059
        %v1062 = vmul.f32 0.5, %v1061
        %v1063 = vsub.f32 1.5, %v1062
        %v1064 = vmul.f32 %v1059, %v1063
        %vm1065 = vweird.f32 %v1016
        %vm1066 = vweird.f32 %v1059
        %vm1067 = vmor %vm1065, %vm1066
        %v1068 = vsel %vm1067, %v1059, %v1064
        %v1069 = vrsqrt.pop %v1017
        %v1070 = vmul.f32 %v1069, %v1017
        %v1071 = vmul.f32 %v1070, %v1069
        %v1072 = vmul.f32 0.5, %v1071
        %v1073 = vsub.f32 1.5, %v1072
        %v1074 = vmul.f32 %v1069, %v1073
        %vm1075 = vweird.f32 %v1017
        %vm1076 = vweird.f32 %v1069
        %vm1077 = vmor %vm1075, %vm1076
        %v1078 = vsel %vm1077, %v1069, %v1074
        %v1079 = vrsqrt.pop %v1018
        %v1080 = vmul.f32 %v1079, %v1018
        %v1081 = vmul.f32 %v1080, %v1079
        %v1082 = vmul.f32 0.5, %v1081
        %v1083 = vsub.f32 1.5, %v1082
        %v1084 = vmul.f32 %v1079, %v1083
        %vm1085 = vweird.f32 %v1018
        %vm1086 = vweird.f32 %v1079
        %vm1087 = vmor %vm1085, %vm1086
        %v1088 = vsel %vm1087, %v1079, %v1084
        %v1089 = vrsqrt.pop %v1019
        %v1090 = vmul.f32 %v1089, %v1019
        %v1091 = vmul.f32 %v1090, %v1089
        %v1092 = vmul.f32 0.5, %v1091
        %v1093 = vsub.f32 1.5, %v1092
        %v1094 = vmul.f32 %v1089, %v1093
        %vm1095 = vweird.f32 %v1019
        %vm1096 = vweird.f32 %v1089
        %vm1097 = vmor %vm1095, %vm1096
        %v1098 = vsel %vm1097, %v1089, %v1094
        %v1099 = vrsqrt.pop %v1020
        %v1100 = vmul.f32 %v1099, %v1020
        %v1101 = vmul.f32 %v1100, %v1099
        %v1102 = vmul.f32 0.5, %v1101
        %v1103 = vsub.f32 1.5, %v1102
        %v1104 = vmul.f32 %v1099, %v1103
        %vm1105 = vweird.f32 %v1020
        %vm1106 = vweird.f32 %v1099
        %vm1107 = vmor %vm1105, %vm1106
        %v1108 = vsel %vm1107, %v1099, %v1104
        %v1109 = vrsqrt.pop %v1021
        %v1110 = vmul.f32 %v1109, %v1021
        %v1111 = vmul.f32 %v1110, %v1109
        %v1112 = vmul.f32 0.5, %v1111
        %v1113 = vsub.f32 1.5, %v1112
        %v1114 = vmul.f32 %v1109, %v1113
        %vm1115 = vweird.f32 %v1021
        %vm1116 = vweird.f32 %v1109
        %vm1117 = vmor %vm1115, %vm1116
        %v1118 = vsel %vm1117, %v1109, %v1114
        %v1119 = vrsqrt.pop %v1022
        %v1120 = vmul.f32 %v1119, %v1022
        %v1121 = vmul.f32 %v1120, %v1119
        %v1122 = vmul.f32 0.5, %v1121
        %v1123 = vsub.f32 1.5, %v1122
        %v1124 = vmul.f32 %v1119, %v1123
        %vm1125 = vweird.f32 %v1022
        %vm1126 = vweird.f32 %v1119
        %vm1127 = vmor %vm1125, %vm1126
        %v1128 = vsel %vm1127, %v1119, %v1124
        %v1129 = vrsqrt.pop %v1023
        %v1130 = vmul.f32 %v1129, %v1023
        %v1131 = vmul.f32 %v1130, %v1129
        %v1132 = vmul.f32 0.5, %v1131
        %v1133 = vsub.f32 1.5, %v1132
        %v1134 = vmul.f32 %v1129, %v1133
        %vm1135 = vweird.f32 %v1023
        %vm1136 = vweird.f32 %v1129
        %vm1137 = vmor %vm1135, %vm1136
        %v1138 = vsel %vm1137, %v1129, %v1134
        %v1139 = vrsqrt.pop %v1024
        %v1140 = vmul.f32 %v1139, %v1024
        %v1141 = vmul.f32 %v1140, %v1139
        %v1142 = vmul.f32 0.5, %v1141
        %v1143 = vsub.f32 1.5, %v1142
        %v1144 = vmul.f32 %v1139, %v1143
        %vm1145 = vweird.f32 %v1024
        %vm1146 = vweird.f32 %v1139
        %vm1147 = vmor %vm1145, %vm1146
        %v1148 = vsel %vm1147, %v1139, %v1144
        %v1149 = vrsqrt.pop %v1025
        %v1150 = vmul.f32 %v1149, %v1025
        %v1151 = vmul.f32 %v1150, %v1149
        %v1152 = vmul.f32 0.5, %v1151
        %v1153 = vsub.f32 1.5, %v1152
        %v1154 = vmul.f32 %v1149, %v1153
        %vm1155 = vweird.f32 %v1025
        %vm1156 = vweird.f32 %v1149
        %vm1157 = vmor %vm1155, %vm1156
        %v1158 = vsel %vm1157, %v1149, %v1154
        %v1159 = vrsqrt.pop %v1026
        %v1160 = vmul.f32 %v1159, %v1026
        %v1161 = vmul.f32 %v1160, %v1159
        %v1162 = vmul.f32 0.5, %v1161
        %v1163 = vsub.f32 1.5, %v1162
        %v1164 = vmul.f32 %v1159, %v1163
        %vm1165 = vweird.f32 %v1026
        %vm1166 = vweird.f32 %v1159
        %vm1167 = vmor %vm1165, %vm1166
        %v1168 = vsel %vm1167, %v1159, %v1164
        %v1169 = vrsqrt.pop %v1027
        %v1170 = vmul.f32 %v1169, %v1027
        %v1171 = vmul.f32 %v1170, %v1169
        %v1172 = vmul.f32 0.5, %v1171
        %v1173 = vsub.f32 1.5, %v1172
        %v1174 = vmul.f32 %v1169, %v1173
        %vm1175 = vweird.f32 %v1027
        %vm1176 = vweird.f32 %v1169
        %vm1177 = vmor %vm1175, %vm1176
        %v1178 = vsel %vm1177, %v1169, %v1174
        %v1179 = vrsqrt.pop %v1028
        %v1180 = vmul.f32 %v1179, %v1028
        %v1181 = vmul.f32 %v1180, %v1179
        %v1182 = vmul.f32 0.5, %v1181
        %v1183 = vsub.f32 1.5, %v1182
        %v1184 = vmul.f32 %v1179, %v1183
        %vm1185 = vweird.f32 %v1028
        %vm1186 = vweird.f32 %v1179
        %vm1187 = vmor %vm1185, %vm1186
        %v1188 = vsel %vm1187, %v1179, %v1184
        %v1189 = vmul.f32 %v933, %v1038
        %v1190 = vmul.f32 %v934, %v1048
        %v1191 = vmul.f32 %v935, %v1058
        %v1192 = vmul.f32 %v936, %v1068
        %v1193 = vmul.f32 %v937, %v1078
        %v1194 = vmul.f32 %v938, %v1088
        %v1195 = vmul.f32 %v939, %v1098
        %v1196 = vmul.f32 %v940, %v1108
        %v1197 = vmul.f32 %v941, %v1118
        %v1198 = vmul.f32 %v942, %v1128
        %v1199 = vmul.f32 %v943, %v1138
        %v1200 = vmul.f32 %v944, %v1148
        %v1201 = vmul.f32 %v945, %v1158
        %v1202 = vmul.f32 %v946, %v1168
        %v1203 = vmul.f32 %v947, %v1178
        %v1204 = vmul.f32 %v948, %v1188
        %v1206 = vperm.slane %v699, 0
        %v1208 = vmul.f32 %v1189, %v1206
        %v1209 = vmul.f32 %v1190, %v1206
        %v1210 = vmul.f32 %v1191, %v1206
        %v1211 = vmul.f32 %v1192, %v1206
        %v1212 = vmul.f32 %v1193, %v1206
        %v1213 = vmul.f32 %v1194, %v1206
        %v1214 = vmul.f32 %v1195, %v1206
        %v1215 = vmul.f32 %v1196, %v1206
        %v1216 = vmul.f32 %v1197, %v1206
        %v1217 = vmul.f32 %v1198, %v1206
        %v1218 = vmul.f32 %v1199, %v1206
        %v1219 = vmul.f32 %v1200, %v1206
        %v1220 = vmul.f32 %v1201, %v1206
        %v1221 = vmul.f32 %v1202, %v1206
        %v1222 = vmul.f32 %v1203, %v1206
        %v1223 = vmul.f32 %v1204, %v1206
        %v1225 = vperm.slane %v702, 0
        %v1227 = vadd.f32 %v1208, %v1225
        %v1228 = vadd.f32 %v1209, %v1225
        %v1229 = vadd.f32 %v1210, %v1225
        %v1230 = vadd.f32 %v1211, %v1225
        %v1231 = vadd.f32 %v1212, %v1225
        %v1232 = vadd.f32 %v1213, %v1225
        %v1233 = vadd.f32 %v1214, %v1225
        %v1234 = vadd.f32 %v1215, %v1225
        %v1235 = vadd.f32 %v1216, %v1225
        %v1236 = vadd.f32 %v1217, %v1225
        %v1237 = vadd.f32 %v1218, %v1225
        %v1238 = vadd.f32 %v1219, %v1225
        %v1239 = vadd.f32 %v1220, %v1225
        %v1240 = vadd.f32 %v1221, %v1225
        %v1241 = vadd.f32 %v1222, %v1225
        %v1242 = vadd.f32 %v1223, %v1225
        %vm1259 = vcmask 1042432
        %v1260 = vrot.slane %v1227, 5
        %v1261 = vrot.slane %v1228, 5
        %v1262 = vsel %vm1259, %v1260, %v1261
        %v1263 = vrot.slane %v1229, 5
        %v1264 = vsel %vm1259, %v1261, %v1263
        %v1265 = vrot.slane %v1230, 5
        %v1266 = vsel %vm1259, %v1263, %v1265
        %v1267 = vrot.slane %v1231, 5
        %v1268 = vsel %vm1259, %v1265, %v1267
        %v1269 = vrot.slane %v1232, 5
        %v1270 = vsel %vm1259, %v1267, %v1269
        %v1271 = vrot.slane %v1233, 5
        %v1272 = vsel %vm1259, %v1269, %v1271
        %v1273 = vrot.slane %v1234, 5
        %v1274 = vsel %vm1259, %v1271, %v1273
        %v1275 = vrot.slane %v1235, 5
        %v1276 = vsel %vm1259, %v1273, %v1275
        %v1277 = vrot.slane %v1236, 5
        %v1278 = vsel %vm1259, %v1275, %v1277
        %v1279 = vrot.slane %v1237, 5
        %v1280 = vsel %vm1259, %v1277, %v1279
        %v1281 = vrot.slane %v1238, 5
        %v1282 = vsel %vm1259, %v1279, %v1281
        %v1283 = vrot.slane %v1239, 5
        %v1284 = vsel %vm1259, %v1281, %v1283
        %v1285 = vrot.slane %v1240, 5
        %v1286 = vsel %vm1259, %v1283, %v1285
        %v1287 = vrot.slane %v1241, 5
        %v1288 = vsel %vm1259, %v1285, %v1287
        %v1289 = vrot.slane %v1242, 5
        %v1290 = vsel %vm1259, %v1287, %v1289
        %v1308 = vsel %vm1259, 0.0, %v1260
        %v1309 = vsel %vm1259, %v1289, 0.0
        %v1310 = vperm.slane %v705, 0
        %v1311 = vmul.f32 %v1308, %v1310
        %v1312 = vmul.f32 %v1262, %v1310
        %v1313 = vmul.f32 %v1264, %v1310
        %v1314 = vmul.f32 %v1266, %v1310
        %v1315 = vmul.f32 %v1268, %v1310
        %v1316 = vmul.f32 %v1270, %v1310
        %v1317 = vmul.f32 %v1272, %v1310
        %v1318 = vmul.f32 %v1274, %v1310
        %v1319 = vmul.f32 %v1276, %v1310
        %v1320 = vmul.f32 %v1278, %v1310
        %v1321 = vmul.f32 %v1280, %v1310
        %v1322 = vmul.f32 %v1282, %v1310
        %v1323 = vmul.f32 %v1284, %v1310
        %v1324 = vmul.f32 %v1286, %v1310
        %v1325 = vmul.f32 %v1288, %v1310
        %v1326 = vmul.f32 %v1290, %v1310
        %v1327 = vperm.slane %v705, 1
        %v1328 = vmul.f32 %v1308, %v1327
        %v1329 = vmul.f32 %v1262, %v1327
        %v1330 = vmul.f32 %v1264, %v1327
        %v1331 = vmul.f32 %v1266, %v1327
        %v1332 = vmul.f32 %v1268, %v1327
        %v1333 = vmul.f32 %v1270, %v1327
        %v1334 = vmul.f32 %v1272, %v1327
        %v1335 = vmul.f32 %v1274, %v1327
        %v1336 = vmul.f32 %v1276, %v1327
        %v1337 = vmul.f32 %v1278, %v1327
        %v1338 = vmul.f32 %v1280, %v1327
        %v1339 = vmul.f32 %v1282, %v1327
        %v1340 = vmul.f32 %v1284, %v1327
        %v1341 = vmul.f32 %v1286, %v1327
        %v1342 = vmul.f32 %v1288, %v1327
        %v1343 = vmul.f32 %v1290, %v1327
        %v1344 = vmul.f32 %v1309, %v1327
        %vm1362 = vcmask 1046528
        %v1363 = vrot.slane %v1328, 1
        %v1364 = vrot.slane %v1329, 1
        %v1365 = vsel %vm1362, %v1363, %v1364
        %v1366 = vrot.slane %v1330, 1
        %v1367 = vsel %vm1362, %v1364, %v1366
        %v1368 = vrot.slane %v1331, 1
        %v1369 = vsel %vm1362, %v1366, %v1368
        %v1370 = vrot.slane %v1332, 1
        %v1371 = vsel %vm1362, %v1368, %v1370
        %v1372 = vrot.slane %v1333, 1
        %v1373 = vsel %vm1362, %v1370, %v1372
        %v1374 = vrot.slane %v1334, 1
        %v1375 = vsel %vm1362, %v1372, %v1374
        %v1376 = vrot.slane %v1335, 1
        %v1377 = vsel %vm1362, %v1374, %v1376
        %v1378 = vrot.slane %v1336, 1
        %v1379 = vsel %vm1362, %v1376, %v1378
        %v1380 = vrot.slane %v1337, 1
        %v1381 = vsel %vm1362, %v1378, %v1380
        %v1382 = vrot.slane %v1338, 1
        %v1383 = vsel %vm1362, %v1380, %v1382
        %v1384 = vrot.slane %v1339, 1
        %v1385 = vsel %vm1362, %v1382, %v1384
        %v1386 = vrot.slane %v1340, 1
        %v1387 = vsel %vm1362, %v1384, %v1386
        %v1388 = vrot.slane %v1341, 1
        %v1389 = vsel %vm1362, %v1386, %v1388
        %v1390 = vrot.slane %v1342, 1
        %v1391 = vsel %vm1362, %v1388, %v1390
        %v1392 = vrot.slane %v1343, 1
        %v1393 = vsel %vm1362, %v1390, %v1392
        %v1394 = vrot.slane %v1344, 1
        %v1395 = vsel %vm1362, %v1392, %v1394
        %v1412 = vadd.f32 %v1311, %v1365
        %v1413 = vadd.f32 %v1312, %v1367
        %v1414 = vadd.f32 %v1313, %v1369
        %v1415 = vadd.f32 %v1314, %v1371
        %v1416 = vadd.f32 %v1315, %v1373
        %v1417 = vadd.f32 %v1316, %v1375
        %v1418 = vadd.f32 %v1317, %v1377
        %v1419 = vadd.f32 %v1318, %v1379
        %v1420 = vadd.f32 %v1319, %v1381
        %v1421 = vadd.f32 %v1320, %v1383
        %v1422 = vadd.f32 %v1321, %v1385
        %v1423 = vadd.f32 %v1322, %v1387
        %v1424 = vadd.f32 %v1323, %v1389
        %v1425 = vadd.f32 %v1324, %v1391
        %v1426 = vadd.f32 %v1325, %v1393
        %v1427 = vadd.f32 %v1326, %v1395
        %v1428 = vperm.slane %v705, 2
        %v1429 = vmul.f32 %v1308, %v1428
        %v1430 = vmul.f32 %v1262, %v1428
        %v1431 = vmul.f32 %v1264, %v1428
        %v1432 = vmul.f32 %v1266, %v1428
        %v1433 = vmul.f32 %v1268, %v1428
        %v1434 = vmul.f32 %v1270, %v1428
        %v1435 = vmul.f32 %v1272, %v1428
        %v1436 = vmul.f32 %v1274, %v1428
        %v1437 = vmul.f32 %v1276, %v1428
        %v1438 = vmul.f32 %v1278, %v1428
        %v1439 = vmul.f32 %v1280, %v1428
        %v1440 = vmul.f32 %v1282, %v1428
        %v1441 = vmul.f32 %v1284, %v1428
        %v1442 = vmul.f32 %v1286, %v1428
        %v1443 = vmul.f32 %v1288, %v1428
        %v1444 = vmul.f32 %v1290, %v1428
        %v1445 = vmul.f32 %v1309, %v1428
        %vm1463 = vcmask 1045504
        %v1464 = vrot.slane %v1429, 2
        %v1465 = vrot.slane %v1430, 2
        %v1466 = vsel %vm1463, %v1464, %v1465
        %v1467 = vrot.slane %v1431, 2
        %v1468 = vsel %vm1463, %v1465, %v1467
        %v1469 = vrot.slane %v1432, 2
        %v1470 = vsel %vm1463, %v1467, %v1469
        %v1471 = vrot.slane %v1433, 2
        %v1472 = vsel %vm1463, %v1469, %v1471
        %v1473 = vrot.slane %v1434, 2
        %v1474 = vsel %vm1463, %v1471, %v1473
        %v1475 = vrot.slane %v1435, 2
        %v1476 = vsel %vm1463, %v1473, %v1475
        %v1477 = vrot.slane %v1436, 2
        %v1478 = vsel %vm1463, %v1475, %v1477
        %v1479 = vrot.slane %v1437, 2
        %v1480 = vsel %vm1463, %v1477, %v1479
        %v1481 = vrot.slane %v1438, 2
        %v1482 = vsel %vm1463, %v1479, %v1481
        %v1483 = vrot.slane %v1439, 2
        %v1484 = vsel %vm1463, %v1481, %v1483
        %v1485 = vrot.slane %v1440, 2
        %v1486 = vsel %vm1463, %v1483, %v1485
        %v1487 = vrot.slane %v1441, 2
        %v1488 = vsel %vm1463, %v1485, %v1487
        %v1489 = vrot.slane %v1442, 2
        %v1490 = vsel %vm1463, %v1487, %v1489
        %v1491 = vrot.slane %v1443, 2
        %v1492 = vsel %vm1463, %v1489, %v1491
        %v1493 = vrot.slane %v1444, 2
        %v1494 = vsel %vm1463, %v1491, %v1493
        %v1495 = vrot.slane %v1445, 2
        %v1496 = vsel %vm1463, %v1493, %v1495
        %v1513 = vadd.f32 %v1412, %v1466
        %v1514 = vadd.f32 %v1413, %v1468
        %v1515 = vadd.f32 %v1414, %v1470
        %v1516 = vadd.f32 %v1415, %v1472
        %v1517 = vadd.f32 %v1416, %v1474
        %v1518 = vadd.f32 %v1417, %v1476
        %v1519 = vadd.f32 %v1418, %v1478
        %v1520 = vadd.f32 %v1419, %v1480
        %v1521 = vadd.f32 %v1420, %v1482
        %v1522 = vadd.f32 %v1421, %v1484
        %v1523 = vadd.f32 %v1422, %v1486
        %v1524 = vadd.f32 %v1423, %v1488
        %v1525 = vadd.f32 %v1424, %v1490
        %v1526 = vadd.f32 %v1425, %v1492
        %v1527 = vadd.f32 %v1426, %v1494
        %v1528 = vadd.f32 %v1427, %v1496
        %v1529 = vperm.slane %v705, 3
        %v1530 = vmul.f32 %v1308, %v1529
        %v1531 = vmul.f32 %v1262, %v1529
        %v1532 = vmul.f32 %v1264, %v1529
        %v1533 = vmul.f32 %v1266, %v1529
        %v1534 = vmul.f32 %v1268, %v1529
        %v1535 = vmul.f32 %v1270, %v1529
        %v1536 = vmul.f32 %v1272, %v1529
        %v1537 = vmul.f32 %v1274, %v1529
        %v1538 = vmul.f32 %v1276, %v1529
        %v1539 = vmul.f32 %v1278, %v1529
        %v1540 = vmul.f32 %v1280, %v1529
        %v1541 = vmul.f32 %v1282, %v1529
        %v1542 = vmul.f32 %v1284, %v1529
        %v1543 = vmul.f32 %v1286, %v1529
        %v1544 = vmul.f32 %v1288, %v1529
        %v1545 = vmul.f32 %v1290, %v1529
        %v1546 = vmul.f32 %v1309, %v1529
        %vm1564 = vcmask 1044480
        %v1565 = vrot.slane %v1530, 3
        %v1566 = vrot.slane %v1531, 3
        %v1567 = vsel %vm1564, %v1565, %v1566
        %v1568 = vrot.slane %v1532, 3
        %v1569 = vsel %vm1564, %v1566, %v1568
        %v1570 = vrot.slane %v1533, 3
        %v1571 = vsel %vm1564, %v1568, %v1570
        %v1572 = vrot.slane %v1534, 3
        %v1573 = vsel %vm1564, %v1570, %v1572
        %v1574 = vrot.slane %v1535, 3
        %v1575 = vsel %vm1564, %v1572, %v1574
        %v1576 = vrot.slane %v1536, 3
        %v1577 = vsel %vm1564, %v1574, %v1576
        %v1578 = vrot.slane %v1537, 3
        %v1579 = vsel %vm1564, %v1576, %v1578
        %v1580 = vrot.slane %v1538, 3
        %v1581 = vsel %vm1564, %v1578, %v1580
        %v1582 = vrot.slane %v1539, 3
        %v1583 = vsel %vm1564, %v1580, %v1582
        %v1584 = vrot.slane %v1540, 3
        %v1585 = vsel %vm1564, %v1582, %v1584
        %v1586 = vrot.slane %v1541, 3
        %v1587 = vsel %vm1564, %v1584, %v1586
        %v1588 = vrot.slane %v1542, 3
        %v1589 = vsel %vm1564, %v1586, %v1588
        %v1590 = vrot.slane %v1543, 3
        %v1591 = vsel %vm1564, %v1588, %v1590
        %v1592 = vrot.slane %v1544, 3
        %v1593 = vsel %vm1564, %v1590, %v1592
        %v1594 = vrot.slane %v1545, 3
        %v1595 = vsel %vm1564, %v1592, %v1594
        %v1596 = vrot.slane %v1546, 3
        %v1597 = vsel %vm1564, %v1594, %v1596
        %v1614 = vadd.f32 %v1513, %v1567
        %v1615 = vadd.f32 %v1514, %v1569
        %v1616 = vadd.f32 %v1515, %v1571
        %v1617 = vadd.f32 %v1516, %v1573
        %v1618 = vadd.f32 %v1517, %v1575
        %v1619 = vadd.f32 %v1518, %v1577
        %v1620 = vadd.f32 %v1519, %v1579
        %v1621 = vadd.f32 %v1520, %v1581
        %v1622 = vadd.f32 %v1521, %v1583
        %v1623 = vadd.f32 %v1522, %v1585
        %v1624 = vadd.f32 %v1523, %v1587
        %v1625 = vadd.f32 %v1524, %v1589
        %v1626 = vadd.f32 %v1525, %v1591
        %v1627 = vadd.f32 %v1526, %v1593
        %v1628 = vadd.f32 %v1527, %v1595
        %v1629 = vadd.f32 %v1528, %v1597
        %v1630 = vperm.slane %v705, 4
        %v1631 = vmul.f32 %v1308, %v1630
        %v1632 = vmul.f32 %v1262, %v1630
        %v1633 = vmul.f32 %v1264, %v1630
        %v1634 = vmul.f32 %v1266, %v1630
        %v1635 = vmul.f32 %v1268, %v1630
        %v1636 = vmul.f32 %v1270, %v1630
        %v1637 = vmul.f32 %v1272, %v1630
        %v1638 = vmul.f32 %v1274, %v1630
        %v1639 = vmul.f32 %v1276, %v1630
        %v1640 = vmul.f32 %v1278, %v1630
        %v1641 = vmul.f32 %v1280, %v1630
        %v1642 = vmul.f32 %v1282, %v1630
        %v1643 = vmul.f32 %v1284, %v1630
        %v1644 = vmul.f32 %v1286, %v1630
        %v1645 = vmul.f32 %v1288, %v1630
        %v1646 = vmul.f32 %v1290, %v1630
        %v1647 = vmul.f32 %v1309, %v1630
        %vm1665 = vcmask 1043456
        %v1666 = vrot.slane %v1631, 4
        %v1667 = vrot.slane %v1632, 4
        %v1668 = vsel %vm1665, %v1666, %v1667
        %v1669 = vrot.slane %v1633, 4
        %v1670 = vsel %vm1665, %v1667, %v1669
        %v1671 = vrot.slane %v1634, 4
        %v1672 = vsel %vm1665, %v1669, %v1671
        %v1673 = vrot.slane %v1635, 4
        %v1674 = vsel %vm1665, %v1671, %v1673
        %v1675 = vrot.slane %v1636, 4
        %v1676 = vsel %vm1665, %v1673, %v1675
        %v1677 = vrot.slane %v1637, 4
        %v1678 = vsel %vm1665, %v1675, %v1677
        %v1679 = vrot.slane %v1638, 4
        %v1680 = vsel %vm1665, %v1677, %v1679
        %v1681 = vrot.slane %v1639, 4
        %v1682 = vsel %vm1665, %v1679, %v1681
        %v1683 = vrot.slane %v1640, 4
        %v1684 = vsel %vm1665, %v1681, %v1683
        %v1685 = vrot.slane %v1641, 4
        %v1686 = vsel %vm1665, %v1683, %v1685
        %v1687 = vrot.slane %v1642, 4
        %v1688 = vsel %vm1665, %v1685, %v1687
        %v1689 = vrot.slane %v1643, 4
        %v1690 = vsel %vm1665, %v1687, %v1689
        %v1691 = vrot.slane %v1644, 4
        %v1692 = vsel %vm1665, %v1689, %v1691
        %v1693 = vrot.slane %v1645, 4
        %v1694 = vsel %vm1665, %v1691, %v1693
        %v1695 = vrot.slane %v1646, 4
        %v1696 = vsel %vm1665, %v1693, %v1695
        %v1697 = vrot.slane %v1647, 4
        %v1698 = vsel %vm1665, %v1695, %v1697
        %v1715 = vadd.f32 %v1614, %v1668
        %v1716 = vadd.f32 %v1615, %v1670
        %v1717 = vadd.f32 %v1616, %v1672
        %v1718 = vadd.f32 %v1617, %v1674
        %v1719 = vadd.f32 %v1618, %v1676
        %v1720 = vadd.f32 %v1619, %v1678
        %v1721 = vadd.f32 %v1620, %v1680
        %v1722 = vadd.f32 %v1621, %v1682
        %v1723 = vadd.f32 %v1622, %v1684
        %v1724 = vadd.f32 %v1623, %v1686
        %v1725 = vadd.f32 %v1624, %v1688
        %v1726 = vadd.f32 %v1625, %v1690
        %v1727 = vadd.f32 %v1626, %v1692
        %v1728 = vadd.f32 %v1627, %v1694
        %v1729 = vadd.f32 %v1628, %v1696
        %v1730 = vadd.f32 %v1629, %v1698
        %v1731 = vperm.slane %v705, 5
        %v1732 = vmul.f32 %v1308, %v1731
        %v1733 = vmul.f32 %v1262, %v1731
        %v1734 = vmul.f32 %v1264, %v1731
        %v1735 = vmul.f32 %v1266, %v1731
        %v1736 = vmul.f32 %v1268, %v1731
        %v1737 = vmul.f32 %v1270, %v1731
        %v1738 = vmul.f32 %v1272, %v1731
        %v1739 = vmul.f32 %v1274, %v1731
        %v1740 = vmul.f32 %v1276, %v1731
        %v1741 = vmul.f32 %v1278, %v1731
        %v1742 = vmul.f32 %v1280, %v1731
        %v1743 = vmul.f32 %v1282, %v1731
        %v1744 = vmul.f32 %v1284, %v1731
        %v1745 = vmul.f32 %v1286, %v1731
        %v1746 = vmul.f32 %v1288, %v1731
        %v1747 = vmul.f32 %v1290, %v1731
        %v1748 = vmul.f32 %v1309, %v1731
        %v1766 = vrot.slane %v1732, 5
        %v1767 = vrot.slane %v1733, 5
        %v1768 = vsel %vm1259, %v1766, %v1767
        %v1769 = vrot.slane %v1734, 5
        %v1770 = vsel %vm1259, %v1767, %v1769
        %v1771 = vrot.slane %v1735, 5
        %v1772 = vsel %vm1259, %v1769, %v1771
        %v1773 = vrot.slane %v1736, 5
        %v1774 = vsel %vm1259, %v1771, %v1773
        %v1775 = vrot.slane %v1737, 5
        %v1776 = vsel %vm1259, %v1773, %v1775
        %v1777 = vrot.slane %v1738, 5
        %v1778 = vsel %vm1259, %v1775, %v1777
        %v1779 = vrot.slane %v1739, 5
        %v1780 = vsel %vm1259, %v1777, %v1779
        %v1781 = vrot.slane %v1740, 5
        %v1782 = vsel %vm1259, %v1779, %v1781
        %v1783 = vrot.slane %v1741, 5
        %v1784 = vsel %vm1259, %v1781, %v1783
        %v1785 = vrot.slane %v1742, 5
        %v1786 = vsel %vm1259, %v1783, %v1785
        %v1787 = vrot.slane %v1743, 5
        %v1788 = vsel %vm1259, %v1785, %v1787
        %v1789 = vrot.slane %v1744, 5
        %v1790 = vsel %vm1259, %v1787, %v1789
        %v1791 = vrot.slane %v1745, 5
        %v1792 = vsel %vm1259, %v1789, %v1791
        %v1793 = vrot.slane %v1746, 5
        %v1794 = vsel %vm1259, %v1791, %v1793
        %v1795 = vrot.slane %v1747, 5
        %v1796 = vsel %vm1259, %v1793, %v1795
        %v1797 = vrot.slane %v1748, 5
        %v1798 = vsel %vm1259, %v1795, %v1797
        %v1815 = vadd.f32 %v1715, %v1768
        %v1816 = vadd.f32 %v1716, %v1770
        %v1817 = vadd.f32 %v1717, %v1772
        %v1818 = vadd.f32 %v1718, %v1774
        %v1819 = vadd.f32 %v1719, %v1776
        %v1820 = vadd.f32 %v1720, %v1778
        %v1821 = vadd.f32 %v1721, %v1780
        %v1822 = vadd.f32 %v1722, %v1782
        %v1823 = vadd.f32 %v1723, %v1784
        %v1824 = vadd.f32 %v1724, %v1786
        %v1825 = vadd.f32 %v1725, %v1788
        %v1826 = vadd.f32 %v1726, %v1790
        %v1827 = vadd.f32 %v1727, %v1792
        %v1828 = vadd.f32 %v1728, %v1794
        %v1829 = vadd.f32 %v1729, %v1796
        %v1830 = vadd.f32 %v1730, %v1798
        %v1831 = vperm.slane %v705, 6
        %v1832 = vmul.f32 %v1308, %v1831
        %v1833 = vmul.f32 %v1262, %v1831
        %v1834 = vmul.f32 %v1264, %v1831
        %v1835 = vmul.f32 %v1266, %v1831
        %v1836 = vmul.f32 %v1268, %v1831
        %v1837 = vmul.f32 %v1270, %v1831
        %v1838 = vmul.f32 %v1272, %v1831
        %v1839 = vmul.f32 %v1274, %v1831
        %v1840 = vmul.f32 %v1276, %v1831
        %v1841 = vmul.f32 %v1278, %v1831
        %v1842 = vmul.f32 %v1280, %v1831
        %v1843 = vmul.f32 %v1282, %v1831
        %v1844 = vmul.f32 %v1284, %v1831
        %v1845 = vmul.f32 %v1286, %v1831
        %v1846 = vmul.f32 %v1288, %v1831
        %v1847 = vmul.f32 %v1290, %v1831
        %v1848 = vmul.f32 %v1309, %v1831
        %vm1866 = vcmask 1041408
        %v1867 = vrot.slane %v1832, 6
        %v1868 = vrot.slane %v1833, 6
        %v1869 = vsel %vm1866, %v1867, %v1868
        %v1870 = vrot.slane %v1834, 6
        %v1871 = vsel %vm1866, %v1868, %v1870
        %v1872 = vrot.slane %v1835, 6
        %v1873 = vsel %vm1866, %v1870, %v1872
        %v1874 = vrot.slane %v1836, 6
        %v1875 = vsel %vm1866, %v1872, %v1874
        %v1876 = vrot.slane %v1837, 6
        %v1877 = vsel %vm1866, %v1874, %v1876
        %v1878 = vrot.slane %v1838, 6
        %v1879 = vsel %vm1866, %v1876, %v1878
        %v1880 = vrot.slane %v1839, 6
        %v1881 = vsel %vm1866, %v1878, %v1880
        %v1882 = vrot.slane %v1840, 6
        %v1883 = vsel %vm1866, %v1880, %v1882
        %v1884 = vrot.slane %v1841, 6
        %v1885 = vsel %vm1866, %v1882, %v1884
        %v1886 = vrot.slane %v1842, 6
        %v1887 = vsel %vm1866, %v1884, %v1886
        %v1888 = vrot.slane %v1843, 6
        %v1889 = vsel %vm1866, %v1886, %v1888
        %v1890 = vrot.slane %v1844, 6
        %v1891 = vsel %vm1866, %v1888, %v1890
        %v1892 = vrot.slane %v1845, 6
        %v1893 = vsel %vm1866, %v1890, %v1892
        %v1894 = vrot.slane %v1846, 6
        %v1895 = vsel %vm1866, %v1892, %v1894
        %v1896 = vrot.slane %v1847, 6
        %v1897 = vsel %vm1866, %v1894, %v1896
        %v1898 = vrot.slane %v1848, 6
        %v1899 = vsel %vm1866, %v1896, %v1898
        %v1916 = vadd.f32 %v1815, %v1869
        %v1917 = vadd.f32 %v1816, %v1871
        %v1918 = vadd.f32 %v1817, %v1873
        %v1919 = vadd.f32 %v1818, %v1875
        %v1920 = vadd.f32 %v1819, %v1877
        %v1921 = vadd.f32 %v1820, %v1879
        %v1922 = vadd.f32 %v1821, %v1881
        %v1923 = vadd.f32 %v1822, %v1883
        %v1924 = vadd.f32 %v1823, %v1885
        %v1925 = vadd.f32 %v1824, %v1887
        %v1926 = vadd.f32 %v1825, %v1889
        %v1927 = vadd.f32 %v1826, %v1891
        %v1928 = vadd.f32 %v1827, %v1893
        %v1929 = vadd.f32 %v1828, %v1895
        %v1930 = vadd.f32 %v1829, %v1897
        %v1931 = vadd.f32 %v1830, %v1899
        %v1932 = vpack.c.bf16 %v1917, %v1916
        %v1933 = vpack.c.bf16 %v1919, %v1918
        %v1934 = vpack.c.bf16 %v1921, %v1920
        %v1935 = vpack.c.bf16 %v1923, %v1922
        %v1936 = vpack.c.bf16 %v1925, %v1924
        %v1937 = vpack.c.bf16 %v1927, %v1926
        %v1938 = vpack.c.bf16 %v1929, %v1928
        %v1939 = vpack.c.bf16 %v1931, %v1930
        %v1940 = vpack.c.bf16 %v709, %v708
        %v1941 = vpack.c.bf16 %v711, %v710
        %v1942 = vpack.c.bf16 %v713, %v712
        %v1943 = vpack.c.bf16 %v715, %v714
        %v1944 = vpack.c.bf16 %v717, %v716
        %v1945 = vpack.c.bf16 %v719, %v718
        %v1946 = vpack.c.bf16 %v721, %v720
        %v1947 = vpack.c.bf16 %v723, %v722
        %v1949 = vperm.slane %v741, 0
        %1951 = vmatpush.bf16.msra.mxu0 %v1947
        %1952 = vmatpush.bf16.msra.mxu0 %v1946
        %1953 = vmatpush.bf16.msra.mxu0 %v1945
        %1954 = vmatpush.bf16.msra.mxu0 %v1944
        %1955 = vmatpush.bf16.msra.mxu0 %v1943
        %1956 = vmatpush.bf16.msra.mxu0 %v1942
        %1957 = vmatpush.bf16.msra.mxu0 %v1941
        %1958 = vmatpush.bf16.msra.mxu0 %v1940
        %1959 = vmatmul.bf16.gmra.mxu0 %v1932
        %v1960 = vpop.f32.mrf.mxu0
        %v1961 = vadd.f32 %v1949, %v1960
        %v1962 = vpop.f32.mrf.mxu0
        %v1963 = vadd.f32 %v1949, %v1962
        %1964 = vmatmul.bf16.gmra.mxu0 %v1933
        %v1965 = vpop.f32.mrf.mxu0
        %v1966 = vadd.f32 %v1949, %v1965
        %v1967 = vpop.f32.mrf.mxu0
        %v1968 = vadd.f32 %v1949, %v1967
        %1969 = vmatmul.bf16.gmra.mxu0 %v1934
        %v1970 = vpop.f32.mrf.mxu0
        %v1971 = vadd.f32 %v1949, %v1970
        %v1972 = vpop.f32.mrf.mxu0
        %v1973 = vadd.f32 %v1949, %v1972
        %1974 = vmatmul.bf16.gmra.mxu0 %v1935
        %v1975 = vpop.f32.mrf.mxu0
        %v1976 = vadd.f32 %v1949, %v1975
        %v1977 = vpop.f32.mrf.mxu0
        %v1978 = vadd.f32 %v1949, %v1977
        %1979 = vmatmul.bf16.gmra.mxu0 %v1936
        %v1980 = vpop.f32.mrf.mxu0
        %v1981 = vadd.f32 %v1949, %v1980
        %v1982 = vpop.f32.mrf.mxu0
        %v1983 = vadd.f32 %v1949, %v1982
        %1984 = vmatmul.bf16.gmra.mxu0 %v1937
        %v1985 = vpop.f32.mrf.mxu0
        %v1986 = vadd.f32 %v1949, %v1985
        %v1987 = vpop.f32.mrf.mxu0
        %v1988 = vadd.f32 %v1949, %v1987
        %1989 = vmatmul.bf16.gmra.mxu0 %v1938
        %v1990 = vpop.f32.mrf.mxu0
        %v1991 = vadd.f32 %v1949, %v1990
        %v1992 = vpop.f32.mrf.mxu0
        %v1993 = vadd.f32 %v1949, %v1992
        %1994 = vmatmul.bf16.gmra.mxu0 %v1939
        %v1995 = vpop.f32.mrf.mxu0
        %v1996 = vadd.f32 %v1949, %v1995
        %v1997 = vpop.f32.mrf.mxu0
        %v1998 = vadd.f32 %v1949, %v1997
        %1999 = vdwg.mxu0
        %v2000 = vmax.f32 %v1961, 0.0
        %v2001 = vmax.f32 %v1963, 0.0
        %v2002 = vmax.f32 %v1966, 0.0
        %v2003 = vmax.f32 %v1968, 0.0
        %v2004 = vmax.f32 %v1971, 0.0
        %v2005 = vmax.f32 %v1973, 0.0
        %v2006 = vmax.f32 %v1976, 0.0
        %v2007 = vmax.f32 %v1978, 0.0
        %v2008 = vmax.f32 %v1981, 0.0
        %v2009 = vmax.f32 %v1983, 0.0
        %v2010 = vmax.f32 %v1986, 0.0
        %v2011 = vmax.f32 %v1988, 0.0
        %v2012 = vmax.f32 %v1991, 0.0
        %v2013 = vmax.f32 %v1993, 0.0
        %v2014 = vmax.f32 %v1996, 0.0
        %v2015 = vmax.f32 %v1998, 0.0
        %v2016 = vadd.f32 %v2000, %v862
        %v2017 = vadd.f32 %v2001, %v863
        %v2018 = vadd.f32 %v2002, %v864
        %v2019 = vadd.f32 %v2003, %v865
        %v2020 = vadd.f32 %v2004, %v866
        %v2021 = vadd.f32 %v2005, %v867
        %v2022 = vadd.f32 %v2006, %v868
        %v2023 = vadd.f32 %v2007, %v869
        %v2024 = vadd.f32 %v2008, %v870
        %v2025 = vadd.f32 %v2009, %v871
        %v2026 = vadd.f32 %v2010, %v872
        %v2027 = vadd.f32 %v2011, %v873
        %v2028 = vadd.f32 %v2012, %v874
        %v2029 = vadd.f32 %v2013, %v875
        %v2030 = vadd.f32 %v2014, %v876
        %v2031 = vadd.f32 %v2015, %v877
        %2032 = vadd.xlane.f32.xlu0 %v2016
        %v2033 = vpop.xlane.xlu0 %2032
        %2034 = vadd.xlane.f32.xlu0 %v2017
        %v2035 = vpop.xlane.xlu0 %2034
        %2036 = vadd.xlane.f32.xlu0 %v2018
        %v2037 = vpop.xlane.xlu0 %2036
        %2038 = vadd.xlane.f32.xlu0 %v2019
        %v2039 = vpop.xlane.xlu0 %2038
        %2040 = vadd.xlane.f32.xlu0 %v2020
        %v2041 = vpop.xlane.xlu0 %2040
        %2042 = vadd.xlane.f32.xlu0 %v2021
        %v2043 = vpop.xlane.xlu0 %2042
        %2044 = vadd.xlane.f32.xlu0 %v2022
        %v2045 = vpop.xlane.xlu0 %2044
        %2046 = vadd.xlane.f32.xlu0 %v2023
        %v2047 = vpop.xlane.xlu0 %2046
        %2048 = vadd.xlane.f32.xlu0 %v2024
        %v2049 = vpop.xlane.xlu0 %2048
        %2050 = vadd.xlane.f32.xlu0 %v2025
        %v2051 = vpop.xlane.xlu0 %2050
        %2052 = vadd.xlane.f32.xlu0 %v2026
        %v2053 = vpop.xlane.xlu0 %2052
        %2054 = vadd.xlane.f32.xlu0 %v2027
        %v2055 = vpop.xlane.xlu0 %2054
        %2056 = vadd.xlane.f32.xlu0 %v2028
        %v2057 = vpop.xlane.xlu0 %2056
        %2058 = vadd.xlane.f32.xlu0 %v2029
        %v2059 = vpop.xlane.xlu0 %2058
        %2060 = vadd.xlane.f32.xlu0 %v2030
        %v2061 = vpop.xlane.xlu0 %2060
        %2062 = vadd.xlane.f32.xlu0 %v2031
        %v2063 = vpop.xlane.xlu0 %2062
        %v2064 = vmul.f32 %v2033, %v916
        %v2065 = vmul.f32 %v2035, %v916
        %v2066 = vmul.f32 %v2037, %v916
        %v2067 = vmul.f32 %v2039, %v916
        %v2068 = vmul.f32 %v2041, %v916
        %v2069 = vmul.f32 %v2043, %v916
        %v2070 = vmul.f32 %v2045, %v916
        %v2071 = vmul.f32 %v2047, %v916
        %v2072 = vmul.f32 %v2049, %v916
        %v2073 = vmul.f32 %v2051, %v916
        %v2074 = vmul.f32 %v2053, %v916
        %v2075 = vmul.f32 %v2055, %v916
        %v2076 = vmul.f32 %v2057, %v916
        %v2077 = vmul.f32 %v2059, %v916
        %v2078 = vmul.f32 %v2061, %v916
        %v2079 = vmul.f32 %v2063, %v916
        %v2080 = vsub.f32 %v2016, %v2064
        %v2081 = vsub.f32 %v2017, %v2065
        %v2082 = vsub.f32 %v2018, %v2066
        %v2083 = vsub.f32 %v2019, %v2067
        %v2084 = vsub.f32 %v2020, %v2068
        %v2085 = vsub.f32 %v2021, %v2069
        %v2086 = vsub.f32 %v2022, %v2070
        %v2087 = vsub.f32 %v2023, %v2071
        %v2088 = vsub.f32 %v2024, %v2072
        %v2089 = vsub.f32 %v2025, %v2073
        %v2090 = vsub.f32 %v2026, %v2074
        %v2091 = vsub.f32 %v2027, %v2075
        %v2092 = vsub.f32 %v2028, %v2076
        %v2093 = vsub.f32 %v2029, %v2077
        %v2094 = vsub.f32 %v2030, %v2078
        %v2095 = vsub.f32 %v2031, %v2079
        %v2096 = vmul.f32 %v2080, %v2080
        %v2097 = vmul.f32 %v2081, %v2081
        %v2098 = vmul.f32 %v2082, %v2082
        %v2099 = vmul.f32 %v2083, %v2083
        %v2100 = vmul.f32 %v2084, %v2084
        %v2101 = vmul.f32 %v2085, %v2085
        %v2102 = vmul.f32 %v2086, %v2086
        %v2103 = vmul.f32 %v2087, %v2087
        %v2104 = vmul.f32 %v2088, %v2088
        %v2105 = vmul.f32 %v2089, %v2089
        %v2106 = vmul.f32 %v2090, %v2090
        %v2107 = vmul.f32 %v2091, %v2091
        %v2108 = vmul.f32 %v2092, %v2092
        %v2109 = vmul.f32 %v2093, %v2093
        %v2110 = vmul.f32 %v2094, %v2094
        %v2111 = vmul.f32 %v2095, %v2095
        %2112 = vadd.xlane.f32.xlu0 %v2096
        %v2113 = vpop.xlane.xlu0 %2112
        %2114 = vadd.xlane.f32.xlu0 %v2097
        %v2115 = vpop.xlane.xlu0 %2114
        %2116 = vadd.xlane.f32.xlu0 %v2098
        %v2117 = vpop.xlane.xlu0 %2116
        %2118 = vadd.xlane.f32.xlu0 %v2099
        %v2119 = vpop.xlane.xlu0 %2118
        %2120 = vadd.xlane.f32.xlu0 %v2100
        %v2121 = vpop.xlane.xlu0 %2120
        %2122 = vadd.xlane.f32.xlu0 %v2101
        %v2123 = vpop.xlane.xlu0 %2122
        %2124 = vadd.xlane.f32.xlu0 %v2102
        %v2125 = vpop.xlane.xlu0 %2124
        %2126 = vadd.xlane.f32.xlu0 %v2103
        %v2127 = vpop.xlane.xlu0 %2126
        %2128 = vadd.xlane.f32.xlu0 %v2104
        %v2129 = vpop.xlane.xlu0 %2128
        %2130 = vadd.xlane.f32.xlu0 %v2105
        %v2131 = vpop.xlane.xlu0 %2130
        %2132 = vadd.xlane.f32.xlu0 %v2106
        %v2133 = vpop.xlane.xlu0 %2132
        %2134 = vadd.xlane.f32.xlu0 %v2107
        %v2135 = vpop.xlane.xlu0 %2134
        %2136 = vadd.xlane.f32.xlu0 %v2108
        %v2137 = vpop.xlane.xlu0 %2136
        %2138 = vadd.xlane.f32.xlu0 %v2109
        %v2139 = vpop.xlane.xlu0 %2138
        %2140 = vadd.xlane.f32.xlu0 %v2110
        %v2141 = vpop.xlane.xlu0 %2140
        %2142 = vadd.xlane.f32.xlu0 %v2111
        %v2143 = vpop.xlane.xlu0 %2142
        %v2144 = vmul.f32 %v2113, %v916
        %v2145 = vmul.f32 %v2115, %v916
        %v2146 = vmul.f32 %v2117, %v916
        %v2147 = vmul.f32 %v2119, %v916
        %v2148 = vmul.f32 %v2121, %v916
        %v2149 = vmul.f32 %v2123, %v916
        %v2150 = vmul.f32 %v2125, %v916
        %v2151 = vmul.f32 %v2127, %v916
        %v2152 = vmul.f32 %v2129, %v916
        %v2153 = vmul.f32 %v2131, %v916
        %v2154 = vmul.f32 %v2133, %v916
        %v2155 = vmul.f32 %v2135, %v916
        %v2156 = vmul.f32 %v2137, %v916
        %v2157 = vmul.f32 %v2139, %v916
        %v2158 = vmul.f32 %v2141, %v916
        %v2159 = vmul.f32 %v2143, %v916
        %v2160 = vadd.f32 %v2144, 1e-05
        %v2161 = vadd.f32 %v2145, 1e-05
        %v2162 = vadd.f32 %v2146, 1e-05
        %v2163 = vadd.f32 %v2147, 1e-05
        %v2164 = vadd.f32 %v2148, 1e-05
        %v2165 = vadd.f32 %v2149, 1e-05
        %v2166 = vadd.f32 %v2150, 1e-05
        %v2167 = vadd.f32 %v2151, 1e-05
        %v2168 = vadd.f32 %v2152, 1e-05
        %v2169 = vadd.f32 %v2153, 1e-05
        %v2170 = vadd.f32 %v2154, 1e-05
        %v2171 = vadd.f32 %v2155, 1e-05
        %v2172 = vadd.f32 %v2156, 1e-05
        %v2173 = vadd.f32 %v2157, 1e-05
        %v2174 = vadd.f32 %v2158, 1e-05
        %v2175 = vadd.f32 %v2159, 1e-05
        %v2176 = vrsqrt.pop %v2160
        %v2177 = vmul.f32 %v2176, %v2160
        %v2178 = vmul.f32 %v2177, %v2176
        %v2179 = vmul.f32 0.5, %v2178
        %v2180 = vsub.f32 1.5, %v2179
        %v2181 = vmul.f32 %v2176, %v2180
        %vm2182 = vweird.f32 %v2160
        %vm2183 = vweird.f32 %v2176
        %vm2184 = vmor %vm2182, %vm2183
        %v2185 = vsel %vm2184, %v2176, %v2181
        %v2186 = vrsqrt.pop %v2161
        %v2187 = vmul.f32 %v2186, %v2161
        %v2188 = vmul.f32 %v2187, %v2186
        %v2189 = vmul.f32 0.5, %v2188
        %v2190 = vsub.f32 1.5, %v2189
        %v2191 = vmul.f32 %v2186, %v2190
        %vm2192 = vweird.f32 %v2161
        %vm2193 = vweird.f32 %v2186
        %vm2194 = vmor %vm2192, %vm2193
        %v2195 = vsel %vm2194, %v2186, %v2191
        %v2196 = vrsqrt.pop %v2162
        %v2197 = vmul.f32 %v2196, %v2162
        %v2198 = vmul.f32 %v2197, %v2196
        %v2199 = vmul.f32 0.5, %v2198
        %v2200 = vsub.f32 1.5, %v2199
        %v2201 = vmul.f32 %v2196, %v2200
        %vm2202 = vweird.f32 %v2162
        %vm2203 = vweird.f32 %v2196
        %vm2204 = vmor %vm2202, %vm2203
        %v2205 = vsel %vm2204, %v2196, %v2201
        %v2206 = vrsqrt.pop %v2163
        %v2207 = vmul.f32 %v2206, %v2163
        %v2208 = vmul.f32 %v2207, %v2206
        %v2209 = vmul.f32 0.5, %v2208
        %v2210 = vsub.f32 1.5, %v2209
        %v2211 = vmul.f32 %v2206, %v2210
        %vm2212 = vweird.f32 %v2163
        %vm2213 = vweird.f32 %v2206
        %vm2214 = vmor %vm2212, %vm2213
        %v2215 = vsel %vm2214, %v2206, %v2211
        %v2216 = vrsqrt.pop %v2164
        %v2217 = vmul.f32 %v2216, %v2164
        %v2218 = vmul.f32 %v2217, %v2216
        %v2219 = vmul.f32 0.5, %v2218
        %v2220 = vsub.f32 1.5, %v2219
        %v2221 = vmul.f32 %v2216, %v2220
        %vm2222 = vweird.f32 %v2164
        %vm2223 = vweird.f32 %v2216
        %vm2224 = vmor %vm2222, %vm2223
        %v2225 = vsel %vm2224, %v2216, %v2221
        %v2226 = vrsqrt.pop %v2165
        %v2227 = vmul.f32 %v2226, %v2165
        %v2228 = vmul.f32 %v2227, %v2226
        %v2229 = vmul.f32 0.5, %v2228
        %v2230 = vsub.f32 1.5, %v2229
        %v2231 = vmul.f32 %v2226, %v2230
        %vm2232 = vweird.f32 %v2165
        %vm2233 = vweird.f32 %v2226
        %vm2234 = vmor %vm2232, %vm2233
        %v2235 = vsel %vm2234, %v2226, %v2231
        %v2236 = vrsqrt.pop %v2166
        %v2237 = vmul.f32 %v2236, %v2166
        %v2238 = vmul.f32 %v2237, %v2236
        %v2239 = vmul.f32 0.5, %v2238
        %v2240 = vsub.f32 1.5, %v2239
        %v2241 = vmul.f32 %v2236, %v2240
        %vm2242 = vweird.f32 %v2166
        %vm2243 = vweird.f32 %v2236
        %vm2244 = vmor %vm2242, %vm2243
        %v2245 = vsel %vm2244, %v2236, %v2241
        %v2246 = vrsqrt.pop %v2167
        %v2247 = vmul.f32 %v2246, %v2167
        %v2248 = vmul.f32 %v2247, %v2246
        %v2249 = vmul.f32 0.5, %v2248
        %v2250 = vsub.f32 1.5, %v2249
        %v2251 = vmul.f32 %v2246, %v2250
        %vm2252 = vweird.f32 %v2167
        %vm2253 = vweird.f32 %v2246
        %vm2254 = vmor %vm2252, %vm2253
        %v2255 = vsel %vm2254, %v2246, %v2251
        %v2256 = vrsqrt.pop %v2168
        %v2257 = vmul.f32 %v2256, %v2168
        %v2258 = vmul.f32 %v2257, %v2256
        %v2259 = vmul.f32 0.5, %v2258
        %v2260 = vsub.f32 1.5, %v2259
        %v2261 = vmul.f32 %v2256, %v2260
        %vm2262 = vweird.f32 %v2168
        %vm2263 = vweird.f32 %v2256
        %vm2264 = vmor %vm2262, %vm2263
        %v2265 = vsel %vm2264, %v2256, %v2261
        %v2266 = vrsqrt.pop %v2169
        %v2267 = vmul.f32 %v2266, %v2169
        %v2268 = vmul.f32 %v2267, %v2266
        %v2269 = vmul.f32 0.5, %v2268
        %v2270 = vsub.f32 1.5, %v2269
        %v2271 = vmul.f32 %v2266, %v2270
        %vm2272 = vweird.f32 %v2169
        %vm2273 = vweird.f32 %v2266
        %vm2274 = vmor %vm2272, %vm2273
        %v2275 = vsel %vm2274, %v2266, %v2271
        %v2276 = vrsqrt.pop %v2170
        %v2277 = vmul.f32 %v2276, %v2170
        %v2278 = vmul.f32 %v2277, %v2276
        %v2279 = vmul.f32 0.5, %v2278
        %v2280 = vsub.f32 1.5, %v2279
        %v2281 = vmul.f32 %v2276, %v2280
        %vm2282 = vweird.f32 %v2170
        %vm2283 = vweird.f32 %v2276
        %vm2284 = vmor %vm2282, %vm2283
        %v2285 = vsel %vm2284, %v2276, %v2281
        %v2286 = vrsqrt.pop %v2171
        %v2287 = vmul.f32 %v2286, %v2171
        %v2288 = vmul.f32 %v2287, %v2286
        %v2289 = vmul.f32 0.5, %v2288
        %v2290 = vsub.f32 1.5, %v2289
        %v2291 = vmul.f32 %v2286, %v2290
        %vm2292 = vweird.f32 %v2171
        %vm2293 = vweird.f32 %v2286
        %vm2294 = vmor %vm2292, %vm2293
        %v2295 = vsel %vm2294, %v2286, %v2291
        %v2296 = vrsqrt.pop %v2172
        %v2297 = vmul.f32 %v2296, %v2172
        %v2298 = vmul.f32 %v2297, %v2296
        %v2299 = vmul.f32 0.5, %v2298
        %v2300 = vsub.f32 1.5, %v2299
        %v2301 = vmul.f32 %v2296, %v2300
        %vm2302 = vweird.f32 %v2172
        %vm2303 = vweird.f32 %v2296
        %vm2304 = vmor %vm2302, %vm2303
        %v2305 = vsel %vm2304, %v2296, %v2301
        %v2306 = vrsqrt.pop %v2173
        %v2307 = vmul.f32 %v2306, %v2173
        %v2308 = vmul.f32 %v2307, %v2306
        %v2309 = vmul.f32 0.5, %v2308
        %v2310 = vsub.f32 1.5, %v2309
        %v2311 = vmul.f32 %v2306, %v2310
        %vm2312 = vweird.f32 %v2173
        %vm2313 = vweird.f32 %v2306
        %vm2314 = vmor %vm2312, %vm2313
        %v2315 = vsel %vm2314, %v2306, %v2311
        %v2316 = vrsqrt.pop %v2174
        %v2317 = vmul.f32 %v2316, %v2174
        %v2318 = vmul.f32 %v2317, %v2316
        %v2319 = vmul.f32 0.5, %v2318
        %v2320 = vsub.f32 1.5, %v2319
        %v2321 = vmul.f32 %v2316, %v2320
        %vm2322 = vweird.f32 %v2174
        %vm2323 = vweird.f32 %v2316
        %vm2324 = vmor %vm2322, %vm2323
        %v2325 = vsel %vm2324, %v2316, %v2321
        %v2326 = vrsqrt.pop %v2175
        %v2327 = vmul.f32 %v2326, %v2175
        %v2328 = vmul.f32 %v2327, %v2326
        %v2329 = vmul.f32 0.5, %v2328
        %v2330 = vsub.f32 1.5, %v2329
        %v2331 = vmul.f32 %v2326, %v2330
        %vm2332 = vweird.f32 %v2175
        %vm2333 = vweird.f32 %v2326
        %vm2334 = vmor %vm2332, %vm2333
        %v2335 = vsel %vm2334, %v2326, %v2331
        %v2336 = vmul.f32 %v2080, %v2185
        %v2337 = vmul.f32 %v2081, %v2195
        %v2338 = vmul.f32 %v2082, %v2205
        %v2339 = vmul.f32 %v2083, %v2215
        %v2340 = vmul.f32 %v2084, %v2225
        %v2341 = vmul.f32 %v2085, %v2235
        %v2342 = vmul.f32 %v2086, %v2245
        %v2343 = vmul.f32 %v2087, %v2255
        %v2344 = vmul.f32 %v2088, %v2265
        %v2345 = vmul.f32 %v2089, %v2275
        %v2346 = vmul.f32 %v2090, %v2285
        %v2347 = vmul.f32 %v2091, %v2295
        %v2348 = vmul.f32 %v2092, %v2305
        %v2349 = vmul.f32 %v2093, %v2315
        %v2350 = vmul.f32 %v2094, %v2325
        %v2351 = vmul.f32 %v2095, %v2335
        %v2353 = vperm.slane %v701, 0
        %v2355 = vmul.f32 %v2336, %v2353
        %v2356 = vmul.f32 %v2337, %v2353
        %v2357 = vmul.f32 %v2338, %v2353
        %v2358 = vmul.f32 %v2339, %v2353
        %v2359 = vmul.f32 %v2340, %v2353
        %v2360 = vmul.f32 %v2341, %v2353
        %v2361 = vmul.f32 %v2342, %v2353
        %v2362 = vmul.f32 %v2343, %v2353
        %v2363 = vmul.f32 %v2344, %v2353
        %v2364 = vmul.f32 %v2345, %v2353
        %v2365 = vmul.f32 %v2346, %v2353
        %v2366 = vmul.f32 %v2347, %v2353
        %v2367 = vmul.f32 %v2348, %v2353
        %v2368 = vmul.f32 %v2349, %v2353
        %v2369 = vmul.f32 %v2350, %v2353
        %v2370 = vmul.f32 %v2351, %v2353
        %v2372 = vperm.slane %v704, 0
        %v2374 = vadd.f32 %v2355, %v2372
        %v2375 = vadd.f32 %v2356, %v2372
        %v2376 = vadd.f32 %v2357, %v2372
        %v2377 = vadd.f32 %v2358, %v2372
        %v2378 = vadd.f32 %v2359, %v2372
        %v2379 = vadd.f32 %v2360, %v2372
        %v2380 = vadd.f32 %v2361, %v2372
        %v2381 = vadd.f32 %v2362, %v2372
        %v2382 = vadd.f32 %v2363, %v2372
        %v2383 = vadd.f32 %v2364, %v2372
        %v2384 = vadd.f32 %v2365, %v2372
        %v2385 = vadd.f32 %v2366, %v2372
        %v2386 = vadd.f32 %v2367, %v2372
        %v2387 = vadd.f32 %v2368, %v2372
        %v2388 = vadd.f32 %v2369, %v2372
        %v2389 = vadd.f32 %v2370, %v2372
        %v2406 = vrot.slane %v2374, 5
        %v2407 = vrot.slane %v2375, 5
        %v2408 = vsel %vm1259, %v2406, %v2407
        %v2409 = vrot.slane %v2376, 5
        %v2410 = vsel %vm1259, %v2407, %v2409
        %v2411 = vrot.slane %v2377, 5
        %v2412 = vsel %vm1259, %v2409, %v2411
        %v2413 = vrot.slane %v2378, 5
        %v2414 = vsel %vm1259, %v2411, %v2413
        %v2415 = vrot.slane %v2379, 5
        %v2416 = vsel %vm1259, %v2413, %v2415
        %v2417 = vrot.slane %v2380, 5
        %v2418 = vsel %vm1259, %v2415, %v2417
        %v2419 = vrot.slane %v2381, 5
        %v2420 = vsel %vm1259, %v2417, %v2419
        %v2421 = vrot.slane %v2382, 5
        %v2422 = vsel %vm1259, %v2419, %v2421
        %v2423 = vrot.slane %v2383, 5
        %v2424 = vsel %vm1259, %v2421, %v2423
        %v2425 = vrot.slane %v2384, 5
        %v2426 = vsel %vm1259, %v2423, %v2425
        %v2427 = vrot.slane %v2385, 5
        %v2428 = vsel %vm1259, %v2425, %v2427
        %v2429 = vrot.slane %v2386, 5
        %v2430 = vsel %vm1259, %v2427, %v2429
        %v2431 = vrot.slane %v2387, 5
        %v2432 = vsel %vm1259, %v2429, %v2431
        %v2433 = vrot.slane %v2388, 5
        %v2434 = vsel %vm1259, %v2431, %v2433
        %v2435 = vrot.slane %v2389, 5
        %v2436 = vsel %vm1259, %v2433, %v2435
        %v2454 = vsel %vm1259, 0.0, %v2406
        %v2455 = vsel %vm1259, %v2435, 0.0
        %v2456 = vperm.slane %v707, 0
        %v2457 = vmul.f32 %v2454, %v2456
        %v2458 = vmul.f32 %v2408, %v2456
        %v2459 = vmul.f32 %v2410, %v2456
        %v2460 = vmul.f32 %v2412, %v2456
        %v2461 = vmul.f32 %v2414, %v2456
        %v2462 = vmul.f32 %v2416, %v2456
        %v2463 = vmul.f32 %v2418, %v2456
        %v2464 = vmul.f32 %v2420, %v2456
        %v2465 = vmul.f32 %v2422, %v2456
        %v2466 = vmul.f32 %v2424, %v2456
        %v2467 = vmul.f32 %v2426, %v2456
        %v2468 = vmul.f32 %v2428, %v2456
        %v2469 = vmul.f32 %v2430, %v2456
        %v2470 = vmul.f32 %v2432, %v2456
        %v2471 = vmul.f32 %v2434, %v2456
        %v2472 = vmul.f32 %v2436, %v2456
        %v2473 = vperm.slane %v707, 1
        %v2474 = vmul.f32 %v2454, %v2473
        %v2475 = vmul.f32 %v2408, %v2473
        %v2476 = vmul.f32 %v2410, %v2473
        %v2477 = vmul.f32 %v2412, %v2473
        %v2478 = vmul.f32 %v2414, %v2473
        %v2479 = vmul.f32 %v2416, %v2473
        %v2480 = vmul.f32 %v2418, %v2473
        %v2481 = vmul.f32 %v2420, %v2473
        %v2482 = vmul.f32 %v2422, %v2473
        %v2483 = vmul.f32 %v2424, %v2473
        %v2484 = vmul.f32 %v2426, %v2473
        %v2485 = vmul.f32 %v2428, %v2473
        %v2486 = vmul.f32 %v2430, %v2473
        %v2487 = vmul.f32 %v2432, %v2473
        %v2488 = vmul.f32 %v2434, %v2473
        %v2489 = vmul.f32 %v2436, %v2473
        %v2490 = vmul.f32 %v2455, %v2473
        %v2508 = vrot.slane %v2474, 1
        %v2509 = vrot.slane %v2475, 1
        %v2510 = vsel %vm1362, %v2508, %v2509
        %v2511 = vrot.slane %v2476, 1
        %v2512 = vsel %vm1362, %v2509, %v2511
        %v2513 = vrot.slane %v2477, 1
        %v2514 = vsel %vm1362, %v2511, %v2513
        %v2515 = vrot.slane %v2478, 1
        %v2516 = vsel %vm1362, %v2513, %v2515
        %v2517 = vrot.slane %v2479, 1
        %v2518 = vsel %vm1362, %v2515, %v2517
        %v2519 = vrot.slane %v2480, 1
        %v2520 = vsel %vm1362, %v2517, %v2519
        %v2521 = vrot.slane %v2481, 1
        %v2522 = vsel %vm1362, %v2519, %v2521
        %v2523 = vrot.slane %v2482, 1
        %v2524 = vsel %vm1362, %v2521, %v2523
        %v2525 = vrot.slane %v2483, 1
        %v2526 = vsel %vm1362, %v2523, %v2525
        %v2527 = vrot.slane %v2484, 1
        %v2528 = vsel %vm1362, %v2525, %v2527
        %v2529 = vrot.slane %v2485, 1
        %v2530 = vsel %vm1362, %v2527, %v2529
        %v2531 = vrot.slane %v2486, 1
        %v2532 = vsel %vm1362, %v2529, %v2531
        %v2533 = vrot.slane %v2487, 1
        %v2534 = vsel %vm1362, %v2531, %v2533
        %v2535 = vrot.slane %v2488, 1
        %v2536 = vsel %vm1362, %v2533, %v2535
        %v2537 = vrot.slane %v2489, 1
        %v2538 = vsel %vm1362, %v2535, %v2537
        %v2539 = vrot.slane %v2490, 1
        %v2540 = vsel %vm1362, %v2537, %v2539
        %v2557 = vadd.f32 %v2457, %v2510
        %v2558 = vadd.f32 %v2458, %v2512
        %v2559 = vadd.f32 %v2459, %v2514
        %v2560 = vadd.f32 %v2460, %v2516
        %v2561 = vadd.f32 %v2461, %v2518
        %v2562 = vadd.f32 %v2462, %v2520
        %v2563 = vadd.f32 %v2463, %v2522
        %v2564 = vadd.f32 %v2464, %v2524
        %v2565 = vadd.f32 %v2465, %v2526
        %v2566 = vadd.f32 %v2466, %v2528
        %v2567 = vadd.f32 %v2467, %v2530
        %v2568 = vadd.f32 %v2468, %v2532
        %v2569 = vadd.f32 %v2469, %v2534
        %v2570 = vadd.f32 %v2470, %v2536
        %v2571 = vadd.f32 %v2471, %v2538
        %v2572 = vadd.f32 %v2472, %v2540
        %v2573 = vperm.slane %v707, 2
        %v2574 = vmul.f32 %v2454, %v2573
        %v2575 = vmul.f32 %v2408, %v2573
        %v2576 = vmul.f32 %v2410, %v2573
        %v2577 = vmul.f32 %v2412, %v2573
        %v2578 = vmul.f32 %v2414, %v2573
        %v2579 = vmul.f32 %v2416, %v2573
        %v2580 = vmul.f32 %v2418, %v2573
        %v2581 = vmul.f32 %v2420, %v2573
        %v2582 = vmul.f32 %v2422, %v2573
        %v2583 = vmul.f32 %v2424, %v2573
        %v2584 = vmul.f32 %v2426, %v2573
        %v2585 = vmul.f32 %v2428, %v2573
        %v2586 = vmul.f32 %v2430, %v2573
        %v2587 = vmul.f32 %v2432, %v2573
        %v2588 = vmul.f32 %v2434, %v2573
        %v2589 = vmul.f32 %v2436, %v2573
        %v2590 = vmul.f32 %v2455, %v2573
        %v2608 = vrot.slane %v2574, 2
        %v2609 = vrot.slane %v2575, 2
        %v2610 = vsel %vm1463, %v2608, %v2609
        %v2611 = vrot.slane %v2576, 2
        %v2612 = vsel %vm1463, %v2609, %v2611
        %v2613 = vrot.slane %v2577, 2
        %v2614 = vsel %vm1463, %v2611, %v2613
        %v2615 = vrot.slane %v2578, 2
        %v2616 = vsel %vm1463, %v2613, %v2615
        %v2617 = vrot.slane %v2579, 2
        %v2618 = vsel %vm1463, %v2615, %v2617
        %v2619 = vrot.slane %v2580, 2
        %v2620 = vsel %vm1463, %v2617, %v2619
        %v2621 = vrot.slane %v2581, 2
        %v2622 = vsel %vm1463, %v2619, %v2621
        %v2623 = vrot.slane %v2582, 2
        %v2624 = vsel %vm1463, %v2621, %v2623
        %v2625 = vrot.slane %v2583, 2
        %v2626 = vsel %vm1463, %v2623, %v2625
        %v2627 = vrot.slane %v2584, 2
        %v2628 = vsel %vm1463, %v2625, %v2627
        %v2629 = vrot.slane %v2585, 2
        %v2630 = vsel %vm1463, %v2627, %v2629
        %v2631 = vrot.slane %v2586, 2
        %v2632 = vsel %vm1463, %v2629, %v2631
        %v2633 = vrot.slane %v2587, 2
        %v2634 = vsel %vm1463, %v2631, %v2633
        %v2635 = vrot.slane %v2588, 2
        %v2636 = vsel %vm1463, %v2633, %v2635
        %v2637 = vrot.slane %v2589, 2
        %v2638 = vsel %vm1463, %v2635, %v2637
        %v2639 = vrot.slane %v2590, 2
        %v2640 = vsel %vm1463, %v2637, %v2639
        %v2657 = vadd.f32 %v2557, %v2610
        %v2658 = vadd.f32 %v2558, %v2612
        %v2659 = vadd.f32 %v2559, %v2614
        %v2660 = vadd.f32 %v2560, %v2616
        %v2661 = vadd.f32 %v2561, %v2618
        %v2662 = vadd.f32 %v2562, %v2620
        %v2663 = vadd.f32 %v2563, %v2622
        %v2664 = vadd.f32 %v2564, %v2624
        %v2665 = vadd.f32 %v2565, %v2626
        %v2666 = vadd.f32 %v2566, %v2628
        %v2667 = vadd.f32 %v2567, %v2630
        %v2668 = vadd.f32 %v2568, %v2632
        %v2669 = vadd.f32 %v2569, %v2634
        %v2670 = vadd.f32 %v2570, %v2636
        %v2671 = vadd.f32 %v2571, %v2638
        %v2672 = vadd.f32 %v2572, %v2640
        %v2673 = vperm.slane %v707, 3
        %v2674 = vmul.f32 %v2454, %v2673
        %v2675 = vmul.f32 %v2408, %v2673
        %v2676 = vmul.f32 %v2410, %v2673
        %v2677 = vmul.f32 %v2412, %v2673
        %v2678 = vmul.f32 %v2414, %v2673
        %v2679 = vmul.f32 %v2416, %v2673
        %v2680 = vmul.f32 %v2418, %v2673
        %v2681 = vmul.f32 %v2420, %v2673
        %v2682 = vmul.f32 %v2422, %v2673
        %v2683 = vmul.f32 %v2424, %v2673
        %v2684 = vmul.f32 %v2426, %v2673
        %v2685 = vmul.f32 %v2428, %v2673
        %v2686 = vmul.f32 %v2430, %v2673
        %v2687 = vmul.f32 %v2432, %v2673
        %v2688 = vmul.f32 %v2434, %v2673
        %v2689 = vmul.f32 %v2436, %v2673
        %v2690 = vmul.f32 %v2455, %v2673
        %v2708 = vrot.slane %v2674, 3
        %v2709 = vrot.slane %v2675, 3
        %v2710 = vsel %vm1564, %v2708, %v2709
        %v2711 = vrot.slane %v2676, 3
        %v2712 = vsel %vm1564, %v2709, %v2711
        %v2713 = vrot.slane %v2677, 3
        %v2714 = vsel %vm1564, %v2711, %v2713
        %v2715 = vrot.slane %v2678, 3
        %v2716 = vsel %vm1564, %v2713, %v2715
        %v2717 = vrot.slane %v2679, 3
        %v2718 = vsel %vm1564, %v2715, %v2717
        %v2719 = vrot.slane %v2680, 3
        %v2720 = vsel %vm1564, %v2717, %v2719
        %v2721 = vrot.slane %v2681, 3
        %v2722 = vsel %vm1564, %v2719, %v2721
        %v2723 = vrot.slane %v2682, 3
        %v2724 = vsel %vm1564, %v2721, %v2723
        %v2725 = vrot.slane %v2683, 3
        %v2726 = vsel %vm1564, %v2723, %v2725
        %v2727 = vrot.slane %v2684, 3
        %v2728 = vsel %vm1564, %v2725, %v2727
        %v2729 = vrot.slane %v2685, 3
        %v2730 = vsel %vm1564, %v2727, %v2729
        %v2731 = vrot.slane %v2686, 3
        %v2732 = vsel %vm1564, %v2729, %v2731
        %v2733 = vrot.slane %v2687, 3
        %v2734 = vsel %vm1564, %v2731, %v2733
        %v2735 = vrot.slane %v2688, 3
        %v2736 = vsel %vm1564, %v2733, %v2735
        %v2737 = vrot.slane %v2689, 3
        %v2738 = vsel %vm1564, %v2735, %v2737
        %v2739 = vrot.slane %v2690, 3
        %v2740 = vsel %vm1564, %v2737, %v2739
        %v2757 = vadd.f32 %v2657, %v2710
        %v2758 = vadd.f32 %v2658, %v2712
        %v2759 = vadd.f32 %v2659, %v2714
        %v2760 = vadd.f32 %v2660, %v2716
        %v2761 = vadd.f32 %v2661, %v2718
        %v2762 = vadd.f32 %v2662, %v2720
        %v2763 = vadd.f32 %v2663, %v2722
        %v2764 = vadd.f32 %v2664, %v2724
        %v2765 = vadd.f32 %v2665, %v2726
        %v2766 = vadd.f32 %v2666, %v2728
        %v2767 = vadd.f32 %v2667, %v2730
        %v2768 = vadd.f32 %v2668, %v2732
        %v2769 = vadd.f32 %v2669, %v2734
        %v2770 = vadd.f32 %v2670, %v2736
        %v2771 = vadd.f32 %v2671, %v2738
        %v2772 = vadd.f32 %v2672, %v2740
        %v2773 = vperm.slane %v707, 4
        %v2774 = vmul.f32 %v2454, %v2773
        %v2775 = vmul.f32 %v2408, %v2773
        %v2776 = vmul.f32 %v2410, %v2773
        %v2777 = vmul.f32 %v2412, %v2773
        %v2778 = vmul.f32 %v2414, %v2773
        %v2779 = vmul.f32 %v2416, %v2773
        %v2780 = vmul.f32 %v2418, %v2773
        %v2781 = vmul.f32 %v2420, %v2773
        %v2782 = vmul.f32 %v2422, %v2773
        %v2783 = vmul.f32 %v2424, %v2773
        %v2784 = vmul.f32 %v2426, %v2773
        %v2785 = vmul.f32 %v2428, %v2773
        %v2786 = vmul.f32 %v2430, %v2773
        %v2787 = vmul.f32 %v2432, %v2773
        %v2788 = vmul.f32 %v2434, %v2773
        %v2789 = vmul.f32 %v2436, %v2773
        %v2790 = vmul.f32 %v2455, %v2773
        %v2808 = vrot.slane %v2774, 4
        %v2809 = vrot.slane %v2775, 4
        %v2810 = vsel %vm1665, %v2808, %v2809
        %v2811 = vrot.slane %v2776, 4
        %v2812 = vsel %vm1665, %v2809, %v2811
        %v2813 = vrot.slane %v2777, 4
        %v2814 = vsel %vm1665, %v2811, %v2813
        %v2815 = vrot.slane %v2778, 4
        %v2816 = vsel %vm1665, %v2813, %v2815
        %v2817 = vrot.slane %v2779, 4
        %v2818 = vsel %vm1665, %v2815, %v2817
        %v2819 = vrot.slane %v2780, 4
        %v2820 = vsel %vm1665, %v2817, %v2819
        %v2821 = vrot.slane %v2781, 4
        %v2822 = vsel %vm1665, %v2819, %v2821
        %v2823 = vrot.slane %v2782, 4
        %v2824 = vsel %vm1665, %v2821, %v2823
        %v2825 = vrot.slane %v2783, 4
        %v2826 = vsel %vm1665, %v2823, %v2825
        %v2827 = vrot.slane %v2784, 4
        %v2828 = vsel %vm1665, %v2825, %v2827
        %v2829 = vrot.slane %v2785, 4
        %v2830 = vsel %vm1665, %v2827, %v2829
        %v2831 = vrot.slane %v2786, 4
        %v2832 = vsel %vm1665, %v2829, %v2831
        %v2833 = vrot.slane %v2787, 4
        %v2834 = vsel %vm1665, %v2831, %v2833
        %v2835 = vrot.slane %v2788, 4
        %v2836 = vsel %vm1665, %v2833, %v2835
        %v2837 = vrot.slane %v2789, 4
        %v2838 = vsel %vm1665, %v2835, %v2837
        %v2839 = vrot.slane %v2790, 4
        %v2840 = vsel %vm1665, %v2837, %v2839
        %v2857 = vadd.f32 %v2757, %v2810
        %v2858 = vadd.f32 %v2758, %v2812
        %v2859 = vadd.f32 %v2759, %v2814
        %v2860 = vadd.f32 %v2760, %v2816
        %v2861 = vadd.f32 %v2761, %v2818
        %v2862 = vadd.f32 %v2762, %v2820
        %v2863 = vadd.f32 %v2763, %v2822
        %v2864 = vadd.f32 %v2764, %v2824
        %v2865 = vadd.f32 %v2765, %v2826
        %v2866 = vadd.f32 %v2766, %v2828
        %v2867 = vadd.f32 %v2767, %v2830
        %v2868 = vadd.f32 %v2768, %v2832
        %v2869 = vadd.f32 %v2769, %v2834
        %v2870 = vadd.f32 %v2770, %v2836
        %v2871 = vadd.f32 %v2771, %v2838
        %v2872 = vadd.f32 %v2772, %v2840
        %v2873 = vperm.slane %v707, 5
        %v2874 = vmul.f32 %v2454, %v2873
        %v2875 = vmul.f32 %v2408, %v2873
        %v2876 = vmul.f32 %v2410, %v2873
        %v2877 = vmul.f32 %v2412, %v2873
        %v2878 = vmul.f32 %v2414, %v2873
        %v2879 = vmul.f32 %v2416, %v2873
        %v2880 = vmul.f32 %v2418, %v2873
        %v2881 = vmul.f32 %v2420, %v2873
        %v2882 = vmul.f32 %v2422, %v2873
        %v2883 = vmul.f32 %v2424, %v2873
        %v2884 = vmul.f32 %v2426, %v2873
        %v2885 = vmul.f32 %v2428, %v2873
        %v2886 = vmul.f32 %v2430, %v2873
        %v2887 = vmul.f32 %v2432, %v2873
        %v2888 = vmul.f32 %v2434, %v2873
        %v2889 = vmul.f32 %v2436, %v2873
        %v2890 = vmul.f32 %v2455, %v2873
        %v2908 = vrot.slane %v2874, 5
        %v2909 = vrot.slane %v2875, 5
        %v2910 = vsel %vm1259, %v2908, %v2909
        %v2911 = vrot.slane %v2876, 5
        %v2912 = vsel %vm1259, %v2909, %v2911
        %v2913 = vrot.slane %v2877, 5
        %v2914 = vsel %vm1259, %v2911, %v2913
        %v2915 = vrot.slane %v2878, 5
        %v2916 = vsel %vm1259, %v2913, %v2915
        %v2917 = vrot.slane %v2879, 5
        %v2918 = vsel %vm1259, %v2915, %v2917
        %v2919 = vrot.slane %v2880, 5
        %v2920 = vsel %vm1259, %v2917, %v2919
        %v2921 = vrot.slane %v2881, 5
        %v2922 = vsel %vm1259, %v2919, %v2921
        %v2923 = vrot.slane %v2882, 5
        %v2924 = vsel %vm1259, %v2921, %v2923
        %v2925 = vrot.slane %v2883, 5
        %v2926 = vsel %vm1259, %v2923, %v2925
        %v2927 = vrot.slane %v2884, 5
        %v2928 = vsel %vm1259, %v2925, %v2927
        %v2929 = vrot.slane %v2885, 5
        %v2930 = vsel %vm1259, %v2927, %v2929
        %v2931 = vrot.slane %v2886, 5
        %v2932 = vsel %vm1259, %v2929, %v2931
        %v2933 = vrot.slane %v2887, 5
        %v2934 = vsel %vm1259, %v2931, %v2933
        %v2935 = vrot.slane %v2888, 5
        %v2936 = vsel %vm1259, %v2933, %v2935
        %v2937 = vrot.slane %v2889, 5
        %v2938 = vsel %vm1259, %v2935, %v2937
        %v2939 = vrot.slane %v2890, 5
        %v2940 = vsel %vm1259, %v2937, %v2939
        %v2957 = vadd.f32 %v2857, %v2910
        %v2958 = vadd.f32 %v2858, %v2912
        %v2959 = vadd.f32 %v2859, %v2914
        %v2960 = vadd.f32 %v2860, %v2916
        %v2961 = vadd.f32 %v2861, %v2918
        %v2962 = vadd.f32 %v2862, %v2920
        %v2963 = vadd.f32 %v2863, %v2922
        %v2964 = vadd.f32 %v2864, %v2924
        %v2965 = vadd.f32 %v2865, %v2926
        %v2966 = vadd.f32 %v2866, %v2928
        %v2967 = vadd.f32 %v2867, %v2930
        %v2968 = vadd.f32 %v2868, %v2932
        %v2969 = vadd.f32 %v2869, %v2934
        %v2970 = vadd.f32 %v2870, %v2936
        %v2971 = vadd.f32 %v2871, %v2938
        %v2972 = vadd.f32 %v2872, %v2940
        %v2973 = vperm.slane %v707, 6
        %v2974 = vmul.f32 %v2454, %v2973
        %v2975 = vmul.f32 %v2408, %v2973
        %v2976 = vmul.f32 %v2410, %v2973
        %v2977 = vmul.f32 %v2412, %v2973
        %v2978 = vmul.f32 %v2414, %v2973
        %v2979 = vmul.f32 %v2416, %v2973
        %v2980 = vmul.f32 %v2418, %v2973
        %v2981 = vmul.f32 %v2420, %v2973
        %v2982 = vmul.f32 %v2422, %v2973
        %v2983 = vmul.f32 %v2424, %v2973
        %v2984 = vmul.f32 %v2426, %v2973
        %v2985 = vmul.f32 %v2428, %v2973
        %v2986 = vmul.f32 %v2430, %v2973
        %v2987 = vmul.f32 %v2432, %v2973
        %v2988 = vmul.f32 %v2434, %v2973
        %v2989 = vmul.f32 %v2436, %v2973
        %v2990 = vmul.f32 %v2455, %v2973
        %v3008 = vrot.slane %v2974, 6
        %v3009 = vrot.slane %v2975, 6
        %v3010 = vsel %vm1866, %v3008, %v3009
        %v3011 = vrot.slane %v2976, 6
        %v3012 = vsel %vm1866, %v3009, %v3011
        %v3013 = vrot.slane %v2977, 6
        %v3014 = vsel %vm1866, %v3011, %v3013
        %v3015 = vrot.slane %v2978, 6
        %v3016 = vsel %vm1866, %v3013, %v3015
        %v3017 = vrot.slane %v2979, 6
        %v3018 = vsel %vm1866, %v3015, %v3017
        %v3019 = vrot.slane %v2980, 6
        %v3020 = vsel %vm1866, %v3017, %v3019
        %v3021 = vrot.slane %v2981, 6
        %v3022 = vsel %vm1866, %v3019, %v3021
        %v3023 = vrot.slane %v2982, 6
        %v3024 = vsel %vm1866, %v3021, %v3023
        %v3025 = vrot.slane %v2983, 6
        %v3026 = vsel %vm1866, %v3023, %v3025
        %v3027 = vrot.slane %v2984, 6
        %v3028 = vsel %vm1866, %v3025, %v3027
        %v3029 = vrot.slane %v2985, 6
        %v3030 = vsel %vm1866, %v3027, %v3029
        %v3031 = vrot.slane %v2986, 6
        %v3032 = vsel %vm1866, %v3029, %v3031
        %v3033 = vrot.slane %v2987, 6
        %v3034 = vsel %vm1866, %v3031, %v3033
        %v3035 = vrot.slane %v2988, 6
        %v3036 = vsel %vm1866, %v3033, %v3035
        %v3037 = vrot.slane %v2989, 6
        %v3038 = vsel %vm1866, %v3035, %v3037
        %v3039 = vrot.slane %v2990, 6
        %v3040 = vsel %vm1866, %v3037, %v3039
        %v3057 = vadd.f32 %v2957, %v3010
        %v3058 = vadd.f32 %v2958, %v3012
        %v3059 = vadd.f32 %v2959, %v3014
        %v3060 = vadd.f32 %v2960, %v3016
        %v3061 = vadd.f32 %v2961, %v3018
        %v3062 = vadd.f32 %v2962, %v3020
        %v3063 = vadd.f32 %v2963, %v3022
        %v3064 = vadd.f32 %v2964, %v3024
        %v3065 = vadd.f32 %v2965, %v3026
        %v3066 = vadd.f32 %v2966, %v3028
        %v3067 = vadd.f32 %v2967, %v3030
        %v3068 = vadd.f32 %v2968, %v3032
        %v3069 = vadd.f32 %v2969, %v3034
        %v3070 = vadd.f32 %v2970, %v3036
        %v3071 = vadd.f32 %v2971, %v3038
        %v3072 = vadd.f32 %v2972, %v3040
        %v3073 = vpack.c.bf16 %v3058, %v3057
        %v3074 = vpack.c.bf16 %v3060, %v3059
        %v3075 = vpack.c.bf16 %v3062, %v3061
        %v3076 = vpack.c.bf16 %v3064, %v3063
        %v3077 = vpack.c.bf16 %v3066, %v3065
        %v3078 = vpack.c.bf16 %v3068, %v3067
        %v3079 = vpack.c.bf16 %v3070, %v3069
        %v3080 = vpack.c.bf16 %v3072, %v3071
        %v3081 = vpack.c.bf16 %v726, %v725
        %v3082 = vpack.c.bf16 %v728, %v727
        %v3083 = vpack.c.bf16 %v730, %v729
        %v3084 = vpack.c.bf16 %v732, %v731
        %v3085 = vpack.c.bf16 %v734, %v733
        %v3086 = vpack.c.bf16 %v736, %v735
        %v3087 = vpack.c.bf16 %v738, %v737
        %v3088 = vpack.c.bf16 %v740, %v739
        %v3090 = vperm.slane %v743, 0
        %3092 = vmatpush.bf16.msra.mxu0 %v3088
        %3093 = vmatpush.bf16.msra.mxu0 %v3087
        %3094 = vmatpush.bf16.msra.mxu0 %v3086
        %3095 = vmatpush.bf16.msra.mxu0 %v3085
        %3096 = vmatpush.bf16.msra.mxu0 %v3084
        %3097 = vmatpush.bf16.msra.mxu0 %v3083
        %3098 = vmatpush.bf16.msra.mxu0 %v3082
        %3099 = vmatpush.bf16.msra.mxu0 %v3081
        %3100 = vmatmul.bf16.gmra.mxu0 %v3073
        %v3101 = vpop.f32.mrf.mxu0
        %v3102 = vadd.f32 %v3090, %v3101
        %v3103 = vpop.f32.mrf.mxu0
        %v3104 = vadd.f32 %v3090, %v3103
        %3105 = vmatmul.bf16.gmra.mxu0 %v3074
        %v3106 = vpop.f32.mrf.mxu0
        %v3107 = vadd.f32 %v3090, %v3106
        %v3108 = vpop.f32.mrf.mxu0
        %v3109 = vadd.f32 %v3090, %v3108
        %3110 = vmatmul.bf16.gmra.mxu0 %v3075
        %v3111 = vpop.f32.mrf.mxu0
        %v3112 = vadd.f32 %v3090, %v3111
        %v3113 = vpop.f32.mrf.mxu0
        %v3114 = vadd.f32 %v3090, %v3113
        %3115 = vmatmul.bf16.gmra.mxu0 %v3076
        %v3116 = vpop.f32.mrf.mxu0
        %v3117 = vadd.f32 %v3090, %v3116
        %v3118 = vpop.f32.mrf.mxu0
        %v3119 = vadd.f32 %v3090, %v3118
        %3120 = vmatmul.bf16.gmra.mxu0 %v3077
        %v3121 = vpop.f32.mrf.mxu0
        %v3122 = vadd.f32 %v3090, %v3121
        %v3123 = vpop.f32.mrf.mxu0
        %v3124 = vadd.f32 %v3090, %v3123
        %3125 = vmatmul.bf16.gmra.mxu0 %v3078
        %v3126 = vpop.f32.mrf.mxu0
        %v3127 = vadd.f32 %v3090, %v3126
        %v3128 = vpop.f32.mrf.mxu0
        %v3129 = vadd.f32 %v3090, %v3128
        %3130 = vmatmul.bf16.gmra.mxu0 %v3079
        %v3131 = vpop.f32.mrf.mxu0
        %v3132 = vadd.f32 %v3090, %v3131
        %v3133 = vpop.f32.mrf.mxu0
        %v3134 = vadd.f32 %v3090, %v3133
        %3135 = vmatmul.bf16.gmra.mxu0 %v3080
        %v3136 = vpop.f32.mrf.mxu0
        %v3137 = vadd.f32 %v3090, %v3136
        %v3138 = vpop.f32.mrf.mxu0
        %v3139 = vadd.f32 %v3090, %v3138
        %3140 = vdwg.mxu0
        %v3141 = vmax.f32 %v3102, 0.0
        %v3142 = vmax.f32 %v3104, 0.0
        %v3143 = vmax.f32 %v3107, 0.0
        %v3144 = vmax.f32 %v3109, 0.0
        %v3145 = vmax.f32 %v3112, 0.0
        %v3146 = vmax.f32 %v3114, 0.0
        %v3147 = vmax.f32 %v3117, 0.0
        %v3148 = vmax.f32 %v3119, 0.0
        %v3149 = vmax.f32 %v3122, 0.0
        %v3150 = vmax.f32 %v3124, 0.0
        %v3151 = vmax.f32 %v3127, 0.0
        %v3152 = vmax.f32 %v3129, 0.0
        %v3153 = vmax.f32 %v3132, 0.0
        %v3154 = vmax.f32 %v3134, 0.0
        %v3155 = vmax.f32 %v3137, 0.0
        %v3156 = vmax.f32 %v3139, 0.0
        %v3157 = vadd.f32 %v3141, %v2016
        %v3158 = vadd.f32 %v3142, %v2017
        %v3159 = vadd.f32 %v3143, %v2018
        %v3160 = vadd.f32 %v3144, %v2019
        %v3161 = vadd.f32 %v3145, %v2020
        %v3162 = vadd.f32 %v3146, %v2021
        %v3163 = vadd.f32 %v3147, %v2022
        %v3164 = vadd.f32 %v3148, %v2023
        %v3165 = vadd.f32 %v3149, %v2024
        %v3166 = vadd.f32 %v3150, %v2025
        %v3167 = vadd.f32 %v3151, %v2026
        %v3168 = vadd.f32 %v3152, %v2027
        %v3169 = vadd.f32 %v3153, %v2028
        %v3170 = vadd.f32 %v3154, %v2029
        %v3171 = vadd.f32 %v3155, %v2030
        %v3172 = vadd.f32 %v3156, %v2031
        %3173 = vadd.xlane.f32.xlu0 %v3157
        %v3174 = vpop.xlane.xlu0 %3173
        %3175 = vadd.xlane.f32.xlu0 %v3158
        %v3176 = vpop.xlane.xlu0 %3175
        %3177 = vadd.xlane.f32.xlu0 %v3159
        %v3178 = vpop.xlane.xlu0 %3177
        %3179 = vadd.xlane.f32.xlu0 %v3160
        %v3180 = vpop.xlane.xlu0 %3179
        %3181 = vadd.xlane.f32.xlu0 %v3161
        %v3182 = vpop.xlane.xlu0 %3181
        %3183 = vadd.xlane.f32.xlu0 %v3162
        %v3184 = vpop.xlane.xlu0 %3183
        %3185 = vadd.xlane.f32.xlu0 %v3163
        %v3186 = vpop.xlane.xlu0 %3185
        %3187 = vadd.xlane.f32.xlu0 %v3164
        %v3188 = vpop.xlane.xlu0 %3187
        %3189 = vadd.xlane.f32.xlu0 %v3165
        %v3190 = vpop.xlane.xlu0 %3189
        %3191 = vadd.xlane.f32.xlu0 %v3166
        %v3192 = vpop.xlane.xlu0 %3191
        %3193 = vadd.xlane.f32.xlu0 %v3167
        %v3194 = vpop.xlane.xlu0 %3193
        %3195 = vadd.xlane.f32.xlu0 %v3168
        %v3196 = vpop.xlane.xlu0 %3195
        %3197 = vadd.xlane.f32.xlu0 %v3169
        %v3198 = vpop.xlane.xlu0 %3197
        %3199 = vadd.xlane.f32.xlu0 %v3170
        %v3200 = vpop.xlane.xlu0 %3199
        %3201 = vadd.xlane.f32.xlu0 %v3171
        %v3202 = vpop.xlane.xlu0 %3201
        %3203 = vadd.xlane.f32.xlu0 %v3172
        %v3204 = vpop.xlane.xlu0 %3203
        %v3205 = vmul.f32 %v3174, %v916
        %v3206 = vmul.f32 %v3176, %v916
        %v3207 = vmul.f32 %v3178, %v916
        %v3208 = vmul.f32 %v3180, %v916
        %v3209 = vmul.f32 %v3182, %v916
        %v3210 = vmul.f32 %v3184, %v916
        %v3211 = vmul.f32 %v3186, %v916
        %v3212 = vmul.f32 %v3188, %v916
        %v3213 = vmul.f32 %v3190, %v916
        %v3214 = vmul.f32 %v3192, %v916
        %v3215 = vmul.f32 %v3194, %v916
        %v3216 = vmul.f32 %v3196, %v916
        %v3217 = vmul.f32 %v3198, %v916
        %v3218 = vmul.f32 %v3200, %v916
        %v3219 = vmul.f32 %v3202, %v916
        %v3220 = vmul.f32 %v3204, %v916
        %v3221 = vsub.f32 %v3157, %v3205
        %v3222 = vsub.f32 %v3158, %v3206
        %v3223 = vsub.f32 %v3159, %v3207
        %v3224 = vsub.f32 %v3160, %v3208
        %v3225 = vsub.f32 %v3161, %v3209
        %v3226 = vsub.f32 %v3162, %v3210
        %v3227 = vsub.f32 %v3163, %v3211
        %v3228 = vsub.f32 %v3164, %v3212
        %v3229 = vsub.f32 %v3165, %v3213
        %v3230 = vsub.f32 %v3166, %v3214
        %v3231 = vsub.f32 %v3167, %v3215
        %v3232 = vsub.f32 %v3168, %v3216
        %v3233 = vsub.f32 %v3169, %v3217
        %v3234 = vsub.f32 %v3170, %v3218
        %v3235 = vsub.f32 %v3171, %v3219
        %v3236 = vsub.f32 %v3172, %v3220
        %v3237 = vmul.f32 %v3221, %v3221
        %v3238 = vmul.f32 %v3222, %v3222
        %v3239 = vmul.f32 %v3223, %v3223
        %v3240 = vmul.f32 %v3224, %v3224
        %v3241 = vmul.f32 %v3225, %v3225
        %v3242 = vmul.f32 %v3226, %v3226
        %v3243 = vmul.f32 %v3227, %v3227
        %v3244 = vmul.f32 %v3228, %v3228
        %v3245 = vmul.f32 %v3229, %v3229
        %v3246 = vmul.f32 %v3230, %v3230
        %v3247 = vmul.f32 %v3231, %v3231
        %v3248 = vmul.f32 %v3232, %v3232
        %v3249 = vmul.f32 %v3233, %v3233
        %v3250 = vmul.f32 %v3234, %v3234
        %v3251 = vmul.f32 %v3235, %v3235
        %v3252 = vmul.f32 %v3236, %v3236
        %3253 = vadd.xlane.f32.xlu0 %v3237
        %v3254 = vpop.xlane.xlu0 %3253
        %3255 = vadd.xlane.f32.xlu0 %v3238
        %v3256 = vpop.xlane.xlu0 %3255
        %3257 = vadd.xlane.f32.xlu0 %v3239
        %v3258 = vpop.xlane.xlu0 %3257
        %3259 = vadd.xlane.f32.xlu0 %v3240
        %v3260 = vpop.xlane.xlu0 %3259
        %3261 = vadd.xlane.f32.xlu0 %v3241
        %v3262 = vpop.xlane.xlu0 %3261
        %3263 = vadd.xlane.f32.xlu0 %v3242
        %v3264 = vpop.xlane.xlu0 %3263
        %3265 = vadd.xlane.f32.xlu0 %v3243
        %v3266 = vpop.xlane.xlu0 %3265
        %3267 = vadd.xlane.f32.xlu0 %v3244
        %v3268 = vpop.xlane.xlu0 %3267
        %3269 = vadd.xlane.f32.xlu0 %v3245
        %v3270 = vpop.xlane.xlu0 %3269
        %3271 = vadd.xlane.f32.xlu0 %v3246
        %v3272 = vpop.xlane.xlu0 %3271
        %3273 = vadd.xlane.f32.xlu0 %v3247
        %v3274 = vpop.xlane.xlu0 %3273
        %3275 = vadd.xlane.f32.xlu0 %v3248
        %v3276 = vpop.xlane.xlu0 %3275
        %3277 = vadd.xlane.f32.xlu0 %v3249
        %v3278 = vpop.xlane.xlu0 %3277
        %3279 = vadd.xlane.f32.xlu0 %v3250
        %v3280 = vpop.xlane.xlu0 %3279
        %3281 = vadd.xlane.f32.xlu0 %v3251
        %v3282 = vpop.xlane.xlu0 %3281
        %3283 = vadd.xlane.f32.xlu0 %v3252
        %v3284 = vpop.xlane.xlu0 %3283
        %v3285 = vmul.f32 %v3254, %v916
        %v3286 = vmul.f32 %v3256, %v916
        %v3287 = vmul.f32 %v3258, %v916
        %v3288 = vmul.f32 %v3260, %v916
        %v3289 = vmul.f32 %v3262, %v916
        %v3290 = vmul.f32 %v3264, %v916
        %v3291 = vmul.f32 %v3266, %v916
        %v3292 = vmul.f32 %v3268, %v916
        %v3293 = vmul.f32 %v3270, %v916
        %v3294 = vmul.f32 %v3272, %v916
        %v3295 = vmul.f32 %v3274, %v916
        %v3296 = vmul.f32 %v3276, %v916
        %v3297 = vmul.f32 %v3278, %v916
        %v3298 = vmul.f32 %v3280, %v916
        %v3299 = vmul.f32 %v3282, %v916
        %v3300 = vmul.f32 %v3284, %v916
        %v3301 = vadd.f32 %v3285, 1e-05
        %v3302 = vadd.f32 %v3286, 1e-05
        %v3303 = vadd.f32 %v3287, 1e-05
        %v3304 = vadd.f32 %v3288, 1e-05
        %v3305 = vadd.f32 %v3289, 1e-05
        %v3306 = vadd.f32 %v3290, 1e-05
        %v3307 = vadd.f32 %v3291, 1e-05
        %v3308 = vadd.f32 %v3292, 1e-05
        %v3309 = vadd.f32 %v3293, 1e-05
        %v3310 = vadd.f32 %v3294, 1e-05
        %v3311 = vadd.f32 %v3295, 1e-05
        %v3312 = vadd.f32 %v3296, 1e-05
        %v3313 = vadd.f32 %v3297, 1e-05
        %v3314 = vadd.f32 %v3298, 1e-05
        %v3315 = vadd.f32 %v3299, 1e-05
        %v3316 = vadd.f32 %v3300, 1e-05
        %v3317 = vrsqrt.pop %v3301
        %v3318 = vmul.f32 %v3317, %v3301
        %v3319 = vmul.f32 %v3318, %v3317
        %v3320 = vmul.f32 0.5, %v3319
        %v3321 = vsub.f32 1.5, %v3320
        %v3322 = vmul.f32 %v3317, %v3321
        %vm3323 = vweird.f32 %v3301
        %vm3324 = vweird.f32 %v3317
        %vm3325 = vmor %vm3323, %vm3324
        %v3326 = vsel %vm3325, %v3317, %v3322
        %v3327 = vrsqrt.pop %v3302
        %v3328 = vmul.f32 %v3327, %v3302
        %v3329 = vmul.f32 %v3328, %v3327
        %v3330 = vmul.f32 0.5, %v3329
        %v3331 = vsub.f32 1.5, %v3330
        %v3332 = vmul.f32 %v3327, %v3331
        %vm3333 = vweird.f32 %v3302
        %vm3334 = vweird.f32 %v3327
        %vm3335 = vmor %vm3333, %vm3334
        %v3336 = vsel %vm3335, %v3327, %v3332
        %v3337 = vrsqrt.pop %v3303
        %v3338 = vmul.f32 %v3337, %v3303
        %v3339 = vmul.f32 %v3338, %v3337
        %v3340 = vmul.f32 0.5, %v3339
        %v3341 = vsub.f32 1.5, %v3340
        %v3342 = vmul.f32 %v3337, %v3341
        %vm3343 = vweird.f32 %v3303
        %vm3344 = vweird.f32 %v3337
        %vm3345 = vmor %vm3343, %vm3344
        %v3346 = vsel %vm3345, %v3337, %v3342
        %v3347 = vrsqrt.pop %v3304
        %v3348 = vmul.f32 %v3347, %v3304
        %v3349 = vmul.f32 %v3348, %v3347
        %v3350 = vmul.f32 0.5, %v3349
        %v3351 = vsub.f32 1.5, %v3350
        %v3352 = vmul.f32 %v3347, %v3351
        %vm3353 = vweird.f32 %v3304
        %vm3354 = vweird.f32 %v3347
        %vm3355 = vmor %vm3353, %vm3354
        %v3356 = vsel %vm3355, %v3347, %v3352
        %v3357 = vrsqrt.pop %v3305
        %v3358 = vmul.f32 %v3357, %v3305
        %v3359 = vmul.f32 %v3358, %v3357
        %v3360 = vmul.f32 0.5, %v3359
        %v3361 = vsub.f32 1.5, %v3360
        %v3362 = vmul.f32 %v3357, %v3361
        %vm3363 = vweird.f32 %v3305
        %vm3364 = vweird.f32 %v3357
        %vm3365 = vmor %vm3363, %vm3364
        %v3366 = vsel %vm3365, %v3357, %v3362
        %v3367 = vrsqrt.pop %v3306
        %v3368 = vmul.f32 %v3367, %v3306
        %v3369 = vmul.f32 %v3368, %v3367
        %v3370 = vmul.f32 0.5, %v3369
        %v3371 = vsub.f32 1.5, %v3370
        %v3372 = vmul.f32 %v3367, %v3371
        %vm3373 = vweird.f32 %v3306
        %vm3374 = vweird.f32 %v3367
        %vm3375 = vmor %vm3373, %vm3374
        %v3376 = vsel %vm3375, %v3367, %v3372
        %v3377 = vrsqrt.pop %v3307
        %v3378 = vmul.f32 %v3377, %v3307
        %v3379 = vmul.f32 %v3378, %v3377
        %v3380 = vmul.f32 0.5, %v3379
        %v3381 = vsub.f32 1.5, %v3380
        %v3382 = vmul.f32 %v3377, %v3381
        %vm3383 = vweird.f32 %v3307
        %vm3384 = vweird.f32 %v3377
        %vm3385 = vmor %vm3383, %vm3384
        %v3386 = vsel %vm3385, %v3377, %v3382
        %v3387 = vrsqrt.pop %v3308
        %v3388 = vmul.f32 %v3387, %v3308
        %v3389 = vmul.f32 %v3388, %v3387
        %v3390 = vmul.f32 0.5, %v3389
        %v3391 = vsub.f32 1.5, %v3390
        %v3392 = vmul.f32 %v3387, %v3391
        %vm3393 = vweird.f32 %v3308
        %vm3394 = vweird.f32 %v3387
        %vm3395 = vmor %vm3393, %vm3394
        %v3396 = vsel %vm3395, %v3387, %v3392
        %v3397 = vrsqrt.pop %v3309
        %v3398 = vmul.f32 %v3397, %v3309
        %v3399 = vmul.f32 %v3398, %v3397
        %v3400 = vmul.f32 0.5, %v3399
        %v3401 = vsub.f32 1.5, %v3400
        %v3402 = vmul.f32 %v3397, %v3401
        %vm3403 = vweird.f32 %v3309
        %vm3404 = vweird.f32 %v3397
        %vm3405 = vmor %vm3403, %vm3404
        %v3406 = vsel %vm3405, %v3397, %v3402
        %v3407 = vrsqrt.pop %v3310
        %v3408 = vmul.f32 %v3407, %v3310
        %v3409 = vmul.f32 %v3408, %v3407
        %v3410 = vmul.f32 0.5, %v3409
        %v3411 = vsub.f32 1.5, %v3410
        %v3412 = vmul.f32 %v3407, %v3411
        %vm3413 = vweird.f32 %v3310
        %vm3414 = vweird.f32 %v3407
        %vm3415 = vmor %vm3413, %vm3414
        %v3416 = vsel %vm3415, %v3407, %v3412
        %v3417 = vrsqrt.pop %v3311
        %v3418 = vmul.f32 %v3417, %v3311
        %v3419 = vmul.f32 %v3418, %v3417
        %v3420 = vmul.f32 0.5, %v3419
        %v3421 = vsub.f32 1.5, %v3420
        %v3422 = vmul.f32 %v3417, %v3421
        %vm3423 = vweird.f32 %v3311
        %vm3424 = vweird.f32 %v3417
        %vm3425 = vmor %vm3423, %vm3424
        %v3426 = vsel %vm3425, %v3417, %v3422
        %v3427 = vrsqrt.pop %v3312
        %v3428 = vmul.f32 %v3427, %v3312
        %v3429 = vmul.f32 %v3428, %v3427
        %v3430 = vmul.f32 0.5, %v3429
        %v3431 = vsub.f32 1.5, %v3430
        %v3432 = vmul.f32 %v3427, %v3431
        %vm3433 = vweird.f32 %v3312
        %vm3434 = vweird.f32 %v3427
        %vm3435 = vmor %vm3433, %vm3434
        %v3436 = vsel %vm3435, %v3427, %v3432
        %v3437 = vrsqrt.pop %v3313
        %v3438 = vmul.f32 %v3437, %v3313
        %v3439 = vmul.f32 %v3438, %v3437
        %v3440 = vmul.f32 0.5, %v3439
        %v3441 = vsub.f32 1.5, %v3440
        %v3442 = vmul.f32 %v3437, %v3441
        %vm3443 = vweird.f32 %v3313
        %vm3444 = vweird.f32 %v3437
        %vm3445 = vmor %vm3443, %vm3444
        %v3446 = vsel %vm3445, %v3437, %v3442
        %v3447 = vrsqrt.pop %v3314
        %v3448 = vmul.f32 %v3447, %v3314
        %v3449 = vmul.f32 %v3448, %v3447
        %v3450 = vmul.f32 0.5, %v3449
        %v3451 = vsub.f32 1.5, %v3450
        %v3452 = vmul.f32 %v3447, %v3451
        %vm3453 = vweird.f32 %v3314
        %vm3454 = vweird.f32 %v3447
        %vm3455 = vmor %vm3453, %vm3454
        %v3456 = vsel %vm3455, %v3447, %v3452
        %v3457 = vrsqrt.pop %v3315
        %v3458 = vmul.f32 %v3457, %v3315
        %v3459 = vmul.f32 %v3458, %v3457
        %v3460 = vmul.f32 0.5, %v3459
        %v3461 = vsub.f32 1.5, %v3460
        %v3462 = vmul.f32 %v3457, %v3461
        %vm3463 = vweird.f32 %v3315
        %vm3464 = vweird.f32 %v3457
        %vm3465 = vmor %vm3463, %vm3464
        %v3466 = vsel %vm3465, %v3457, %v3462
        %v3467 = vrsqrt.pop %v3316
        %v3468 = vmul.f32 %v3467, %v3316
        %v3469 = vmul.f32 %v3468, %v3467
        %v3470 = vmul.f32 0.5, %v3469
        %v3471 = vsub.f32 1.5, %v3470
        %v3472 = vmul.f32 %v3467, %v3471
        %vm3473 = vweird.f32 %v3316
        %vm3474 = vweird.f32 %v3467
        %vm3475 = vmor %vm3473, %vm3474
        %v3476 = vsel %vm3475, %v3467, %v3472
        %v3477 = vmul.f32 %v3221, %v3326
        %v3478 = vmul.f32 %v3222, %v3336
        %v3479 = vmul.f32 %v3223, %v3346
        %v3480 = vmul.f32 %v3224, %v3356
        %v3481 = vmul.f32 %v3225, %v3366
        %v3482 = vmul.f32 %v3226, %v3376
        %v3483 = vmul.f32 %v3227, %v3386
        %v3484 = vmul.f32 %v3228, %v3396
        %v3485 = vmul.f32 %v3229, %v3406
        %v3486 = vmul.f32 %v3230, %v3416
        %v3487 = vmul.f32 %v3231, %v3426
        %v3488 = vmul.f32 %v3232, %v3436
        %v3489 = vmul.f32 %v3233, %v3446
        %v3490 = vmul.f32 %v3234, %v3456
        %v3491 = vmul.f32 %v3235, %v3466
        %v3492 = vmul.f32 %v3236, %v3476
        %v3494 = vperm.slane %v744, 0
        %v3496 = vmul.f32 %v3477, %v3494
        %v3497 = vmul.f32 %v3478, %v3494
        %v3498 = vmul.f32 %v3479, %v3494
        %v3499 = vmul.f32 %v3480, %v3494
        %v3500 = vmul.f32 %v3481, %v3494
        %v3501 = vmul.f32 %v3482, %v3494
        %v3502 = vmul.f32 %v3483, %v3494
        %v3503 = vmul.f32 %v3484, %v3494
        %v3504 = vmul.f32 %v3485, %v3494
        %v3505 = vmul.f32 %v3486, %v3494
        %v3506 = vmul.f32 %v3487, %v3494
        %v3507 = vmul.f32 %v3488, %v3494
        %v3508 = vmul.f32 %v3489, %v3494
        %v3509 = vmul.f32 %v3490, %v3494
        %v3510 = vmul.f32 %v3491, %v3494
        %v3511 = vmul.f32 %v3492, %v3494
        %v3513 = vperm.slane %v745, 0
        %v3515 = vadd.f32 %v3496, %v3513
        %v3516 = vadd.f32 %v3497, %v3513
        %v3517 = vadd.f32 %v3498, %v3513
        %v3518 = vadd.f32 %v3499, %v3513
        %v3519 = vadd.f32 %v3500, %v3513
        %v3520 = vadd.f32 %v3501, %v3513
        %v3521 = vadd.f32 %v3502, %v3513
        %v3522 = vadd.f32 %v3503, %v3513
        %v3523 = vadd.f32 %v3504, %v3513
        %v3524 = vadd.f32 %v3505, %v3513
        %v3525 = vadd.f32 %v3506, %v3513
        %v3526 = vadd.f32 %v3507, %v3513
        %v3527 = vadd.f32 %v3508, %v3513
        %v3528 = vadd.f32 %v3509, %v3513
        %v3529 = vadd.f32 %v3510, %v3513
        %v3530 = vadd.f32 %v3511, %v3513
        %v3531 = vpack.c.bf16 %v3516, %v3515
        %v3532 = vpack.c.bf16 %v3518, %v3517
        %v3533 = vpack.c.bf16 %v3520, %v3519
        %v3534 = vpack.c.bf16 %v3522, %v3521
        %v3535 = vpack.c.bf16 %v3524, %v3523
        %v3536 = vpack.c.bf16 %v3526, %v3525
        %v3537 = vpack.c.bf16 %v3528, %v3527
        %v3538 = vpack.c.bf16 %v3530, %v3529
        %v3539 = vpack.c.bf16 %v749, %v746
        %v3540 = vpack.c.bf16 %v750, %v747
        %v3541 = vpack.c.bf16 %v751, %v748
        %v3542 = vpack.c.bf16 %v755, %v752
        %v3543 = vpack.c.bf16 %v756, %v753
        %v3544 = vpack.c.bf16 %v757, %v754
        %v3545 = vpack.c.bf16 %v761, %v758
        %v3546 = vpack.c.bf16 %v762, %v759
        %v3547 = vpack.c.bf16 %v763, %v760
        %v3548 = vpack.c.bf16 %v767, %v764
        %v3549 = vpack.c.bf16 %v768, %v765
        %v3550 = vpack.c.bf16 %v769, %v766
        %v3551 = vpack.c.bf16 %v773, %v770
        %v3552 = vpack.c.bf16 %v774, %v771
        %v3553 = vpack.c.bf16 %v775, %v772
        %v3554 = vpack.c.bf16 %v779, %v776
        %v3555 = vpack.c.bf16 %v780, %v777
        %v3556 = vpack.c.bf16 %v781, %v778
        %v3557 = vpack.c.bf16 %v785, %v782
        %v3558 = vpack.c.bf16 %v786, %v783
        %v3559 = vpack.c.bf16 %v787, %v784
        %v3560 = vpack.c.bf16 %v791, %v788
        %v3561 = vpack.c.bf16 %v792, %v789
        %v3562 = vpack.c.bf16 %v793, %v790
        %3563 = vmatpush.bf16.msra.mxu0 %v3560
        %3564 = vmatpush.bf16.msra.mxu0 %v3557
        %3565 = vmatpush.bf16.msra.mxu0 %v3554
        %3566 = vmatpush.bf16.msra.mxu0 %v3551
        %3567 = vmatpush.bf16.msra.mxu0 %v3548
        %3568 = vmatpush.bf16.msra.mxu0 %v3545
        %3569 = vmatpush.bf16.msra.mxu0 %v3542
        %3570 = vmatpush.bf16.msra.mxu0 %v3539
        %3571 = vmatmul.bf16.gmra.mxu0 %v3531
        %v3572 = vpop.f32.mrf.mxu0
        %v3573 = vadd.f32 0.0, %v3572
        %v3574 = vpop.f32.mrf.mxu0
        %v3575 = vadd.f32 0.0, %v3574
        %3576 = vmatmul.bf16.gmra.mxu0 %v3532
        %v3577 = vpop.f32.mrf.mxu0
        %v3578 = vadd.f32 0.0, %v3577
        %v3579 = vpop.f32.mrf.mxu0
        %v3580 = vadd.f32 0.0, %v3579
        %3581 = vmatmul.bf16.gmra.mxu0 %v3533
        %v3582 = vpop.f32.mrf.mxu0
        %v3583 = vadd.f32 0.0, %v3582
        %v3584 = vpop.f32.mrf.mxu0
        %v3585 = vadd.f32 0.0, %v3584
        %3586 = vmatmul.bf16.gmra.mxu0 %v3534
        %v3587 = vpop.f32.mrf.mxu0
        %v3588 = vadd.f32 0.0, %v3587
        %v3589 = vpop.f32.mrf.mxu0
        %v3590 = vadd.f32 0.0, %v3589
        %3591 = vmatmul.bf16.gmra.mxu0 %v3535
        %v3592 = vpop.f32.mrf.mxu0
        %v3593 = vadd.f32 0.0, %v3592
        %v3594 = vpop.f32.mrf.mxu0
        %v3595 = vadd.f32 0.0, %v3594
        %3596 = vmatmul.bf16.gmra.mxu0 %v3536
        %v3597 = vpop.f32.mrf.mxu0
        %v3598 = vadd.f32 0.0, %v3597
        %v3599 = vpop.f32.mrf.mxu0
        %v3600 = vadd.f32 0.0, %v3599
        %3601 = vmatmul.bf16.gmra.mxu0 %v3537
        %v3602 = vpop.f32.mrf.mxu0
        %v3603 = vadd.f32 0.0, %v3602
        %v3604 = vpop.f32.mrf.mxu0
        %v3605 = vadd.f32 0.0, %v3604
        %3606 = vmatmul.bf16.gmra.mxu0 %v3538
        %v3607 = vpop.f32.mrf.mxu0
        %v3608 = vadd.f32 0.0, %v3607
        %v3609 = vpop.f32.mrf.mxu0
        %v3610 = vadd.f32 0.0, %v3609
        %3611 = vdwg.mxu0
        %3612 = vmatpush.bf16.msra.mxu0 %v3561
        %3613 = vmatpush.bf16.msra.mxu0 %v3558
        %3614 = vmatpush.bf16.msra.mxu0 %v3555
        %3615 = vmatpush.bf16.msra.mxu0 %v3552
        %3616 = vmatpush.bf16.msra.mxu0 %v3549
        %3617 = vmatpush.bf16.msra.mxu0 %v3546
        %3618 = vmatpush.bf16.msra.mxu0 %v3543
        %3619 = vmatpush.bf16.msra.mxu0 %v3540
        %3620 = vmatmul.bf16.gmra.mxu0 %v3531
        %v3621 = vpop.f32.mrf.mxu0
        %v3622 = vadd.f32 0.0, %v3621
        %v3623 = vpop.f32.mrf.mxu0
        %v3624 = vadd.f32 0.0, %v3623
        %3625 = vmatmul.bf16.gmra.mxu0 %v3532
        %v3626 = vpop.f32.mrf.mxu0
        %v3627 = vadd.f32 0.0, %v3626
        %v3628 = vpop.f32.mrf.mxu0
        %v3629 = vadd.f32 0.0, %v3628
        %3630 = vmatmul.bf16.gmra.mxu0 %v3533
        %v3631 = vpop.f32.mrf.mxu0
        %v3632 = vadd.f32 0.0, %v3631
        %v3633 = vpop.f32.mrf.mxu0
        %v3634 = vadd.f32 0.0, %v3633
        %3635 = vmatmul.bf16.gmra.mxu0 %v3534
        %v3636 = vpop.f32.mrf.mxu0
        %v3637 = vadd.f32 0.0, %v3636
        %v3638 = vpop.f32.mrf.mxu0
        %v3639 = vadd.f32 0.0, %v3638
        %3640 = vmatmul.bf16.gmra.mxu0 %v3535
        %v3641 = vpop.f32.mrf.mxu0
        %v3642 = vadd.f32 0.0, %v3641
        %v3643 = vpop.f32.mrf.mxu0
        %v3644 = vadd.f32 0.0, %v3643
        %3645 = vmatmul.bf16.gmra.mxu0 %v3536
        %v3646 = vpop.f32.mrf.mxu0
        %v3647 = vadd.f32 0.0, %v3646
        %v3648 = vpop.f32.mrf.mxu0
        %v3649 = vadd.f32 0.0, %v3648
        %3650 = vmatmul.bf16.gmra.mxu0 %v3537
        %v3651 = vpop.f32.mrf.mxu0
        %v3652 = vadd.f32 0.0, %v3651
        %v3653 = vpop.f32.mrf.mxu0
        %v3654 = vadd.f32 0.0, %v3653
        %3655 = vmatmul.bf16.gmra.mxu0 %v3538
        %v3656 = vpop.f32.mrf.mxu0
        %v3657 = vadd.f32 0.0, %v3656
        %v3658 = vpop.f32.mrf.mxu0
        %v3659 = vadd.f32 0.0, %v3658
        %3660 = vdwg.mxu0
        %3661 = vmatpush.bf16.msra.mxu0 %v3562
        %3662 = vmatpush.bf16.msra.mxu0 %v3559
        %3663 = vmatpush.bf16.msra.mxu0 %v3556
        %3664 = vmatpush.bf16.msra.mxu0 %v3553
        %3665 = vmatpush.bf16.msra.mxu0 %v3550
        %3666 = vmatpush.bf16.msra.mxu0 %v3547
        %3667 = vmatpush.bf16.msra.mxu0 %v3544
        %3668 = vmatpush.bf16.msra.mxu0 %v3541
        %3669 = vmatmul.bf16.gmra.mxu0 %v3531
        %v3670 = vpop.f32.mrf.mxu0
        %v3671 = vadd.f32 0.0, %v3670
        %v3672 = vpop.f32.mrf.mxu0
        %v3673 = vadd.f32 0.0, %v3672
        %3674 = vmatmul.bf16.gmra.mxu0 %v3532
        %v3675 = vpop.f32.mrf.mxu0
        %v3676 = vadd.f32 0.0, %v3675
        %v3677 = vpop.f32.mrf.mxu0
        %v3678 = vadd.f32 0.0, %v3677
        %3679 = vmatmul.bf16.gmra.mxu0 %v3533
        %v3680 = vpop.f32.mrf.mxu0
        %v3681 = vadd.f32 0.0, %v3680
        %v3682 = vpop.f32.mrf.mxu0
        %v3683 = vadd.f32 0.0, %v3682
        %3684 = vmatmul.bf16.gmra.mxu0 %v3534
        %v3685 = vpop.f32.mrf.mxu0
        %v3686 = vadd.f32 0.0, %v3685
        %v3687 = vpop.f32.mrf.mxu0
        %v3688 = vadd.f32 0.0, %v3687
        %3689 = vmatmul.bf16.gmra.mxu0 %v3535
        %v3690 = vpop.f32.mrf.mxu0
        %v3691 = vadd.f32 0.0, %v3690
        %v3692 = vpop.f32.mrf.mxu0
        %v3693 = vadd.f32 0.0, %v3692
        %3694 = vmatmul.bf16.gmra.mxu0 %v3536
        %v3695 = vpop.f32.mrf.mxu0
        %v3696 = vadd.f32 0.0, %v3695
        %v3697 = vpop.f32.mrf.mxu0
        %v3698 = vadd.f32 0.0, %v3697
        %3699 = vmatmul.bf16.gmra.mxu0 %v3537
        %v3700 = vpop.f32.mrf.mxu0
        %v3701 = vadd.f32 0.0, %v3700
        %v3702 = vpop.f32.mrf.mxu0
        %v3703 = vadd.f32 0.0, %v3702
        %3704 = vmatmul.bf16.gmra.mxu0 %v3538
        %v3705 = vpop.f32.mrf.mxu0
        %v3706 = vadd.f32 0.0, %v3705
        %v3707 = vpop.f32.mrf.mxu0
        %v3708 = vadd.f32 0.0, %v3707
        %3709 = vdwg.mxu0
        %v3710 = vmul.f32 %v3573, 0.25
        %v3711 = vmul.f32 %v3575, 0.25
        %v3712 = vmul.f32 %v3578, 0.25
        %v3713 = vmul.f32 %v3580, 0.25
        %v3714 = vmul.f32 %v3583, 0.25
        %v3715 = vmul.f32 %v3585, 0.25
        %v3716 = vmul.f32 %v3588, 0.25
        %v3717 = vmul.f32 %v3590, 0.25
        %v3718 = vmul.f32 %v3593, 0.25
        %v3719 = vmul.f32 %v3595, 0.25
        %v3720 = vmul.f32 %v3598, 0.25
        %v3721 = vmul.f32 %v3600, 0.25
        %v3722 = vmul.f32 %v3603, 0.25
        %v3723 = vmul.f32 %v3605, 0.25
        %v3724 = vmul.f32 %v3608, 0.25
        %v3725 = vmul.f32 %v3610, 0.25
        %v3726 = vsub.f32 1.0, %v682
        %v3727 = vmul.f32 %v3726, -1e+30
        %v3728 = vpack.c.bf16 %v3711, %v3710
        %v3729 = vpack.c.bf16 %v3713, %v3712
        %v3730 = vpack.c.bf16 %v3715, %v3714
        %v3731 = vpack.c.bf16 %v3717, %v3716
        %v3732 = vpack.c.bf16 %v3719, %v3718
        %v3733 = vpack.c.bf16 %v3721, %v3720
        %v3734 = vpack.c.bf16 %v3723, %v3722
        %v3735 = vpack.c.bf16 %v3725, %v3724
        %v3736 = vpack.c.bf16 %v3624, %v3622
        %v3737 = vpack.c.bf16 %v3629, %v3627
        %v3738 = vpack.c.bf16 %v3634, %v3632
        %v3739 = vpack.c.bf16 %v3639, %v3637
        %v3740 = vpack.c.bf16 %v3644, %v3642
        %v3741 = vpack.c.bf16 %v3649, %v3647
        %v3742 = vpack.c.bf16 %v3654, %v3652
        %v3743 = vpack.c.bf16 %v3659, %v3657
        %vm3744 = vcmask 130048
        %v3746 = vsel %vm3744, %v3728, 0
        %v3749 = vsel %vm3744, %v3729, 0
        %v3752 = vsel %vm3744, %v3730, 0
        %v3755 = vsel %vm3744, %v3731, 0
        %v3758 = vsel %vm3744, %v3732, 0
        %v3761 = vsel %vm3744, %v3733, 0
        %v3764 = vsel %vm3744, %v3734, 0
        %v3767 = vsel %vm3744, %v3735, 0
        %v3770 = vsel %vm3744, %v3736, 0
        %v3773 = vsel %vm3744, %v3737, 0
        %v3776 = vsel %vm3744, %v3738, 0
        %v3779 = vsel %vm3744, %v3739, 0
        %v3782 = vsel %vm3744, %v3740, 0
        %v3785 = vsel %vm3744, %v3741, 0
        %v3788 = vsel %vm3744, %v3742, 0
        %v3791 = vsel %vm3744, %v3743, 0
        %3793 = vmatpush.bf16.xpose.msra.mxu0 %v3791
        %3794 = vmatpush.bf16.xpose.msra.mxu0 %v3788
        %3795 = vmatpush.bf16.xpose.msra.mxu0 %v3785
        %3796 = vmatpush.bf16.xpose.msra.mxu0 %v3782
        %3797 = vmatpush.bf16.xpose.msra.mxu0 %v3779
        %3798 = vmatpush.bf16.xpose.msra.mxu0 %v3776
        %3799 = vmatpush.bf16.xpose.msra.mxu0 %v3773
        %3800 = vmatpush.bf16.xpose.msra.mxu0 %v3770
        %3801 = vmatmul.bf16.gmra.mxu0 %v3746
        %v3802 = vpop.f32.mrf.mxu0
        %v3803 = vadd.f32 0.0, %v3802
        %v3804 = vpop.f32.mrf.mxu0
        %v3805 = vadd.f32 0.0, %v3804
        %3806 = vmatmul.bf16.gmra.mxu0 %v3749
        %v3807 = vpop.f32.mrf.mxu0
        %v3808 = vadd.f32 0.0, %v3807
        %v3809 = vpop.f32.mrf.mxu0
        %v3810 = vadd.f32 0.0, %v3809
        %3811 = vmatmul.bf16.gmra.mxu0 %v3752
        %v3812 = vpop.f32.mrf.mxu0
        %v3813 = vadd.f32 0.0, %v3812
        %v3814 = vpop.f32.mrf.mxu0
        %v3815 = vadd.f32 0.0, %v3814
        %3816 = vmatmul.bf16.gmra.mxu0 %v3755
        %v3817 = vpop.f32.mrf.mxu0
        %v3818 = vadd.f32 0.0, %v3817
        %v3819 = vpop.f32.mrf.mxu0
        %v3820 = vadd.f32 0.0, %v3819
        %3821 = vmatmul.bf16.gmra.mxu0 %v3758
        %v3822 = vpop.f32.mrf.mxu0
        %v3823 = vadd.f32 0.0, %v3822
        %v3824 = vpop.f32.mrf.mxu0
        %v3825 = vadd.f32 0.0, %v3824
        %3826 = vmatmul.bf16.gmra.mxu0 %v3761
        %v3827 = vpop.f32.mrf.mxu0
        %v3828 = vadd.f32 0.0, %v3827
        %v3829 = vpop.f32.mrf.mxu0
        %v3830 = vadd.f32 0.0, %v3829
        %3831 = vmatmul.bf16.gmra.mxu0 %v3764
        %v3832 = vpop.f32.mrf.mxu0
        %v3833 = vadd.f32 0.0, %v3832
        %v3834 = vpop.f32.mrf.mxu0
        %v3835 = vadd.f32 0.0, %v3834
        %3836 = vmatmul.bf16.gmra.mxu0 %v3767
        %v3837 = vpop.f32.mrf.mxu0
        %v3838 = vadd.f32 0.0, %v3837
        %v3839 = vpop.f32.mrf.mxu0
        %v3840 = vadd.f32 0.0, %v3839
        %3841 = vdwg.mxu0
        %v3843 = vperm.slane %v682, 0
        %v3845 = vmul.f32 %v3803, %v3843
        %v3846 = vmul.f32 %v3805, %v3843
        %v3847 = vmul.f32 %v3808, %v3843
        %v3848 = vmul.f32 %v3810, %v3843
        %v3849 = vmul.f32 %v3813, %v3843
        %v3850 = vmul.f32 %v3815, %v3843
        %v3851 = vmul.f32 %v3818, %v3843
        %v3852 = vmul.f32 %v3820, %v3843
        %v3853 = vmul.f32 %v3823, %v3843
        %v3854 = vmul.f32 %v3825, %v3843
        %v3855 = vmul.f32 %v3828, %v3843
        %v3856 = vmul.f32 %v3830, %v3843
        %v3857 = vmul.f32 %v3833, %v3843
        %v3858 = vmul.f32 %v3835, %v3843
        %v3859 = vmul.f32 %v3838, %v3843
        %v3860 = vmul.f32 %v3840, %v3843
        %v3862 = vperm.slane %v3727, 0
        %v3864 = vadd.f32 %v3845, %v3862
        %v3865 = vadd.f32 %v3846, %v3862
        %v3866 = vadd.f32 %v3847, %v3862
        %v3867 = vadd.f32 %v3848, %v3862
        %v3868 = vadd.f32 %v3849, %v3862
        %v3869 = vadd.f32 %v3850, %v3862
        %v3870 = vadd.f32 %v3851, %v3862
        %v3871 = vadd.f32 %v3852, %v3862
        %v3872 = vadd.f32 %v3853, %v3862
        %v3873 = vadd.f32 %v3854, %v3862
        %v3874 = vadd.f32 %v3855, %v3862
        %v3875 = vadd.f32 %v3856, %v3862
        %v3876 = vadd.f32 %v3857, %v3862
        %v3877 = vadd.f32 %v3858, %v3862
        %v3878 = vadd.f32 %v3859, %v3862
        %v3879 = vadd.f32 %v3860, %v3862
        %3880 = vmax.xlane.f32.xlu0 %v3864
        %v3881 = vpop.xlane.xlu0 %3880
        %3882 = vmax.xlane.f32.xlu0 %v3865
        %v3883 = vpop.xlane.xlu0 %3882
        %3884 = vmax.xlane.f32.xlu0 %v3866
        %v3885 = vpop.xlane.xlu0 %3884
        %3886 = vmax.xlane.f32.xlu0 %v3867
        %v3887 = vpop.xlane.xlu0 %3886
        %3888 = vmax.xlane.f32.xlu0 %v3868
        %v3889 = vpop.xlane.xlu0 %3888
        %3890 = vmax.xlane.f32.xlu0 %v3869
        %v3891 = vpop.xlane.xlu0 %3890
        %3892 = vmax.xlane.f32.xlu0 %v3870
        %v3893 = vpop.xlane.xlu0 %3892
        %3894 = vmax.xlane.f32.xlu0 %v3871
        %v3895 = vpop.xlane.xlu0 %3894
        %3896 = vmax.xlane.f32.xlu0 %v3872
        %v3897 = vpop.xlane.xlu0 %3896
        %3898 = vmax.xlane.f32.xlu0 %v3873
        %v3899 = vpop.xlane.xlu0 %3898
        %3900 = vmax.xlane.f32.xlu0 %v3874
        %v3901 = vpop.xlane.xlu0 %3900
        %3902 = vmax.xlane.f32.xlu0 %v3875
        %v3903 = vpop.xlane.xlu0 %3902
        %3904 = vmax.xlane.f32.xlu0 %v3876
        %v3905 = vpop.xlane.xlu0 %3904
        %3906 = vmax.xlane.f32.xlu0 %v3877
        %v3907 = vpop.xlane.xlu0 %3906
        %3908 = vmax.xlane.f32.xlu0 %v3878
        %v3909 = vpop.xlane.xlu0 %3908
        %3910 = vmax.xlane.f32.xlu0 %v3879
        %v3911 = vpop.xlane.xlu0 %3910
        %v3912 = vsub.f32 %v3864, %v3881
        %v3913 = vsub.f32 %v3865, %v3883
        %v3914 = vsub.f32 %v3866, %v3885
        %v3915 = vsub.f32 %v3867, %v3887
        %v3916 = vsub.f32 %v3868, %v3889
        %v3917 = vsub.f32 %v3869, %v3891
        %v3918 = vsub.f32 %v3870, %v3893
        %v3919 = vsub.f32 %v3871, %v3895
        %v3920 = vsub.f32 %v3872, %v3897
        %v3921 = vsub.f32 %v3873, %v3899
        %v3922 = vsub.f32 %v3874, %v3901
        %v3923 = vsub.f32 %v3875, %v3903
        %v3924 = vsub.f32 %v3876, %v3905
        %v3925 = vsub.f32 %v3877, %v3907
        %v3926 = vsub.f32 %v3878, %v3909
        %v3927 = vsub.f32 %v3879, %v3911
        %v3928 = vmul.f32 %v3912, 1.442695
        %v3929 = vpow.pop %v3928
        %v3930 = vmul.f32 %v3913, 1.442695
        %v3931 = vpow.pop %v3930
        %v3932 = vmul.f32 %v3914, 1.442695
        %v3933 = vpow.pop %v3932
        %v3934 = vmul.f32 %v3915, 1.442695
        %v3935 = vpow.pop %v3934
        %v3936 = vmul.f32 %v3916, 1.442695
        %v3937 = vpow.pop %v3936
        %v3938 = vmul.f32 %v3917, 1.442695
        %v3939 = vpow.pop %v3938
        %v3940 = vmul.f32 %v3918, 1.442695
        %v3941 = vpow.pop %v3940
        %v3942 = vmul.f32 %v3919, 1.442695
        %v3943 = vpow.pop %v3942
        %v3944 = vmul.f32 %v3920, 1.442695
        %v3945 = vpow.pop %v3944
        %v3946 = vmul.f32 %v3921, 1.442695
        %v3947 = vpow.pop %v3946
        %v3948 = vmul.f32 %v3922, 1.442695
        %v3949 = vpow.pop %v3948
        %v3950 = vmul.f32 %v3923, 1.442695
        %v3951 = vpow.pop %v3950
        %v3952 = vmul.f32 %v3924, 1.442695
        %v3953 = vpow.pop %v3952
        %v3954 = vmul.f32 %v3925, 1.442695
        %v3955 = vpow.pop %v3954
        %v3956 = vmul.f32 %v3926, 1.442695
        %v3957 = vpow.pop %v3956
        %v3958 = vmul.f32 %v3927, 1.442695
        %v3959 = vpow.pop %v3958
        %3960 = vadd.xlane.f32.xlu0 %v3929
        %v3961 = vpop.xlane.xlu0 %3960
        %3962 = vadd.xlane.f32.xlu0 %v3931
        %v3963 = vpop.xlane.xlu0 %3962
        %3964 = vadd.xlane.f32.xlu0 %v3933
        %v3965 = vpop.xlane.xlu0 %3964
        %3966 = vadd.xlane.f32.xlu0 %v3935
        %v3967 = vpop.xlane.xlu0 %3966
        %3968 = vadd.xlane.f32.xlu0 %v3937
        %v3969 = vpop.xlane.xlu0 %3968
        %3970 = vadd.xlane.f32.xlu0 %v3939
        %v3971 = vpop.xlane.xlu0 %3970
        %3972 = vadd.xlane.f32.xlu0 %v3941
        %v3973 = vpop.xlane.xlu0 %3972
        %3974 = vadd.xlane.f32.xlu0 %v3943
        %v3975 = vpop.xlane.xlu0 %3974
        %3976 = vadd.xlane.f32.xlu0 %v3945
        %v3977 = vpop.xlane.xlu0 %3976
        %3978 = vadd.xlane.f32.xlu0 %v3947
        %v3979 = vpop.xlane.xlu0 %3978
        %3980 = vadd.xlane.f32.xlu0 %v3949
        %v3981 = vpop.xlane.xlu0 %3980
        %3982 = vadd.xlane.f32.xlu0 %v3951
        %v3983 = vpop.xlane.xlu0 %3982
        %3984 = vadd.xlane.f32.xlu0 %v3953
        %v3985 = vpop.xlane.xlu0 %3984
        %3986 = vadd.xlane.f32.xlu0 %v3955
        %v3987 = vpop.xlane.xlu0 %3986
        %3988 = vadd.xlane.f32.xlu0 %v3957
        %v3989 = vpop.xlane.xlu0 %3988
        %3990 = vadd.xlane.f32.xlu0 %v3959
        %v3991 = vpop.xlane.xlu0 %3990
        %v3992 = vrcp.pop %v3961
        %v3993 = vmul.f32 %v3961, %v3992
        %v3994 = vsub.f32 1.0, %v3993
        %v3995 = vmul.f32 %v3992, %v3994
        %v3996 = vadd.f32 %v3992, %v3995
        %vm3997 = vweird.f32 %v3961
        %vm3998 = vweird.f32 %v3992
        %vm3999 = vmor %vm3997, %vm3998
        %v4000 = vsel %vm3999, %v3992, %v3996
        %v4001 = vand.u32 2147483647, %v3961
        %vm4002 = vcmp.eq.f32.partialorder %v4001, 8.507059e+37
        %v4003 = vand.u32 %v3961, 2147483648
        %v4004 = vor.u32 1.1754944e-38, %v4003
        %v4005 = vsel %vm4002, %v4004, %v4000
        %v4006 = vmul.f32 %v3929, %v4005
        %v4007 = vrcp.pop %v3963
        %v4008 = vmul.f32 %v3963, %v4007
        %v4009 = vsub.f32 1.0, %v4008
        %v4010 = vmul.f32 %v4007, %v4009
        %v4011 = vadd.f32 %v4007, %v4010
        %vm4012 = vweird.f32 %v3963
        %vm4013 = vweird.f32 %v4007
        %vm4014 = vmor %vm4012, %vm4013
        %v4015 = vsel %vm4014, %v4007, %v4011
        %v4016 = vand.u32 2147483647, %v3963
        %vm4017 = vcmp.eq.f32.partialorder %v4016, 8.507059e+37
        %v4018 = vand.u32 %v3963, 2147483648
        %v4019 = vor.u32 1.1754944e-38, %v4018
        %v4020 = vsel %vm4017, %v4019, %v4015
        %v4021 = vmul.f32 %v3931, %v4020
        %v4022 = vrcp.pop %v3965
        %v4023 = vmul.f32 %v3965, %v4022
        %v4024 = vsub.f32 1.0, %v4023
        %v4025 = vmul.f32 %v4022, %v4024
        %v4026 = vadd.f32 %v4022, %v4025
        %vm4027 = vweird.f32 %v3965
        %vm4028 = vweird.f32 %v4022
        %vm4029 = vmor %vm4027, %vm4028
        %v4030 = vsel %vm4029, %v4022, %v4026
        %v4031 = vand.u32 2147483647, %v3965
        %vm4032 = vcmp.eq.f32.partialorder %v4031, 8.507059e+37
        %v4033 = vand.u32 %v3965, 2147483648
        %v4034 = vor.u32 1.1754944e-38, %v4033
        %v4035 = vsel %vm4032, %v4034, %v4030
        %v4036 = vmul.f32 %v3933, %v4035
        %v4037 = vrcp.pop %v3967
        %v4038 = vmul.f32 %v3967, %v4037
        %v4039 = vsub.f32 1.0, %v4038
        %v4040 = vmul.f32 %v4037, %v4039
        %v4041 = vadd.f32 %v4037, %v4040
        %vm4042 = vweird.f32 %v3967
        %vm4043 = vweird.f32 %v4037
        %vm4044 = vmor %vm4042, %vm4043
        %v4045 = vsel %vm4044, %v4037, %v4041
        %v4046 = vand.u32 2147483647, %v3967
        %vm4047 = vcmp.eq.f32.partialorder %v4046, 8.507059e+37
        %v4048 = vand.u32 %v3967, 2147483648
        %v4049 = vor.u32 1.1754944e-38, %v4048
        %v4050 = vsel %vm4047, %v4049, %v4045
        %v4051 = vmul.f32 %v3935, %v4050
        %v4052 = vrcp.pop %v3969
        %v4053 = vmul.f32 %v3969, %v4052
        %v4054 = vsub.f32 1.0, %v4053
        %v4055 = vmul.f32 %v4052, %v4054
        %v4056 = vadd.f32 %v4052, %v4055
        %vm4057 = vweird.f32 %v3969
        %vm4058 = vweird.f32 %v4052
        %vm4059 = vmor %vm4057, %vm4058
        %v4060 = vsel %vm4059, %v4052, %v4056
        %v4061 = vand.u32 2147483647, %v3969
        %vm4062 = vcmp.eq.f32.partialorder %v4061, 8.507059e+37
        %v4063 = vand.u32 %v3969, 2147483648
        %v4064 = vor.u32 1.1754944e-38, %v4063
        %v4065 = vsel %vm4062, %v4064, %v4060
        %v4066 = vmul.f32 %v3937, %v4065
        %v4067 = vrcp.pop %v3971
        %v4068 = vmul.f32 %v3971, %v4067
        %v4069 = vsub.f32 1.0, %v4068
        %v4070 = vmul.f32 %v4067, %v4069
        %v4071 = vadd.f32 %v4067, %v4070
        %vm4072 = vweird.f32 %v3971
        %vm4073 = vweird.f32 %v4067
        %vm4074 = vmor %vm4072, %vm4073
        %v4075 = vsel %vm4074, %v4067, %v4071
        %v4076 = vand.u32 2147483647, %v3971
        %vm4077 = vcmp.eq.f32.partialorder %v4076, 8.507059e+37
        %v4078 = vand.u32 %v3971, 2147483648
        %v4079 = vor.u32 1.1754944e-38, %v4078
        %v4080 = vsel %vm4077, %v4079, %v4075
        %v4081 = vmul.f32 %v3939, %v4080
        %v4082 = vrcp.pop %v3973
        %v4083 = vmul.f32 %v3973, %v4082
        %v4084 = vsub.f32 1.0, %v4083
        %v4085 = vmul.f32 %v4082, %v4084
        %v4086 = vadd.f32 %v4082, %v4085
        %vm4087 = vweird.f32 %v3973
        %vm4088 = vweird.f32 %v4082
        %vm4089 = vmor %vm4087, %vm4088
        %v4090 = vsel %vm4089, %v4082, %v4086
        %v4091 = vand.u32 2147483647, %v3973
        %vm4092 = vcmp.eq.f32.partialorder %v4091, 8.507059e+37
        %v4093 = vand.u32 %v3973, 2147483648
        %v4094 = vor.u32 1.1754944e-38, %v4093
        %v4095 = vsel %vm4092, %v4094, %v4090
        %v4096 = vmul.f32 %v3941, %v4095
        %v4097 = vrcp.pop %v3975
        %v4098 = vmul.f32 %v3975, %v4097
        %v4099 = vsub.f32 1.0, %v4098
        %v4100 = vmul.f32 %v4097, %v4099
        %v4101 = vadd.f32 %v4097, %v4100
        %vm4102 = vweird.f32 %v3975
        %vm4103 = vweird.f32 %v4097
        %vm4104 = vmor %vm4102, %vm4103
        %v4105 = vsel %vm4104, %v4097, %v4101
        %v4106 = vand.u32 2147483647, %v3975
        %vm4107 = vcmp.eq.f32.partialorder %v4106, 8.507059e+37
        %v4108 = vand.u32 %v3975, 2147483648
        %v4109 = vor.u32 1.1754944e-38, %v4108
        %v4110 = vsel %vm4107, %v4109, %v4105
        %v4111 = vmul.f32 %v3943, %v4110
        %v4112 = vrcp.pop %v3977
        %v4113 = vmul.f32 %v3977, %v4112
        %v4114 = vsub.f32 1.0, %v4113
        %v4115 = vmul.f32 %v4112, %v4114
        %v4116 = vadd.f32 %v4112, %v4115
        %vm4117 = vweird.f32 %v3977
        %vm4118 = vweird.f32 %v4112
        %vm4119 = vmor %vm4117, %vm4118
        %v4120 = vsel %vm4119, %v4112, %v4116
        %v4121 = vand.u32 2147483647, %v3977
        %vm4122 = vcmp.eq.f32.partialorder %v4121, 8.507059e+37
        %v4123 = vand.u32 %v3977, 2147483648
        %v4124 = vor.u32 1.1754944e-38, %v4123
        %v4125 = vsel %vm4122, %v4124, %v4120
        %v4126 = vmul.f32 %v3945, %v4125
        %v4127 = vrcp.pop %v3979
        %v4128 = vmul.f32 %v3979, %v4127
        %v4129 = vsub.f32 1.0, %v4128
        %v4130 = vmul.f32 %v4127, %v4129
        %v4131 = vadd.f32 %v4127, %v4130
        %vm4132 = vweird.f32 %v3979
        %vm4133 = vweird.f32 %v4127
        %vm4134 = vmor %vm4132, %vm4133
        %v4135 = vsel %vm4134, %v4127, %v4131
        %v4136 = vand.u32 2147483647, %v3979
        %vm4137 = vcmp.eq.f32.partialorder %v4136, 8.507059e+37
        %v4138 = vand.u32 %v3979, 2147483648
        %v4139 = vor.u32 1.1754944e-38, %v4138
        %v4140 = vsel %vm4137, %v4139, %v4135
        %v4141 = vmul.f32 %v3947, %v4140
        %v4142 = vrcp.pop %v3981
        %v4143 = vmul.f32 %v3981, %v4142
        %v4144 = vsub.f32 1.0, %v4143
        %v4145 = vmul.f32 %v4142, %v4144
        %v4146 = vadd.f32 %v4142, %v4145
        %vm4147 = vweird.f32 %v3981
        %vm4148 = vweird.f32 %v4142
        %vm4149 = vmor %vm4147, %vm4148
        %v4150 = vsel %vm4149, %v4142, %v4146
        %v4151 = vand.u32 2147483647, %v3981
        %vm4152 = vcmp.eq.f32.partialorder %v4151, 8.507059e+37
        %v4153 = vand.u32 %v3981, 2147483648
        %v4154 = vor.u32 1.1754944e-38, %v4153
        %v4155 = vsel %vm4152, %v4154, %v4150
        %v4156 = vmul.f32 %v3949, %v4155
        %v4157 = vrcp.pop %v3983
        %v4158 = vmul.f32 %v3983, %v4157
        %v4159 = vsub.f32 1.0, %v4158
        %v4160 = vmul.f32 %v4157, %v4159
        %v4161 = vadd.f32 %v4157, %v4160
        %vm4162 = vweird.f32 %v3983
        %vm4163 = vweird.f32 %v4157
        %vm4164 = vmor %vm4162, %vm4163
        %v4165 = vsel %vm4164, %v4157, %v4161
        %v4166 = vand.u32 2147483647, %v3983
        %vm4167 = vcmp.eq.f32.partialorder %v4166, 8.507059e+37
        %v4168 = vand.u32 %v3983, 2147483648
        %v4169 = vor.u32 1.1754944e-38, %v4168
        %v4170 = vsel %vm4167, %v4169, %v4165
        %v4171 = vmul.f32 %v3951, %v4170
        %v4172 = vrcp.pop %v3985
        %v4173 = vmul.f32 %v3985, %v4172
        %v4174 = vsub.f32 1.0, %v4173
        %v4175 = vmul.f32 %v4172, %v4174
        %v4176 = vadd.f32 %v4172, %v4175
        %vm4177 = vweird.f32 %v3985
        %vm4178 = vweird.f32 %v4172
        %vm4179 = vmor %vm4177, %vm4178
        %v4180 = vsel %vm4179, %v4172, %v4176
        %v4181 = vand.u32 2147483647, %v3985
        %vm4182 = vcmp.eq.f32.partialorder %v4181, 8.507059e+37
        %v4183 = vand.u32 %v3985, 2147483648
        %v4184 = vor.u32 1.1754944e-38, %v4183
        %v4185 = vsel %vm4182, %v4184, %v4180
        %v4186 = vmul.f32 %v3953, %v4185
        %v4187 = vrcp.pop %v3987
        %v4188 = vmul.f32 %v3987, %v4187
        %v4189 = vsub.f32 1.0, %v4188
        %v4190 = vmul.f32 %v4187, %v4189
        %v4191 = vadd.f32 %v4187, %v4190
        %vm4192 = vweird.f32 %v3987
        %vm4193 = vweird.f32 %v4187
        %vm4194 = vmor %vm4192, %vm4193
        %v4195 = vsel %vm4194, %v4187, %v4191
        %v4196 = vand.u32 2147483647, %v3987
        %vm4197 = vcmp.eq.f32.partialorder %v4196, 8.507059e+37
        %v4198 = vand.u32 %v3987, 2147483648
        %v4199 = vor.u32 1.1754944e-38, %v4198
        %v4200 = vsel %vm4197, %v4199, %v4195
        %v4201 = vmul.f32 %v3955, %v4200
        %v4202 = vrcp.pop %v3989
        %v4203 = vmul.f32 %v3989, %v4202
        %v4204 = vsub.f32 1.0, %v4203
        %v4205 = vmul.f32 %v4202, %v4204
        %v4206 = vadd.f32 %v4202, %v4205
        %vm4207 = vweird.f32 %v3989
        %vm4208 = vweird.f32 %v4202
        %vm4209 = vmor %vm4207, %vm4208
        %v4210 = vsel %vm4209, %v4202, %v4206
        %v4211 = vand.u32 2147483647, %v3989
        %vm4212 = vcmp.eq.f32.partialorder %v4211, 8.507059e+37
        %v4213 = vand.u32 %v3989, 2147483648
        %v4214 = vor.u32 1.1754944e-38, %v4213
        %v4215 = vsel %vm4212, %v4214, %v4210
        %v4216 = vmul.f32 %v3957, %v4215
        %v4217 = vrcp.pop %v3991
        %v4218 = vmul.f32 %v3991, %v4217
        %v4219 = vsub.f32 1.0, %v4218
        %v4220 = vmul.f32 %v4217, %v4219
        %v4221 = vadd.f32 %v4217, %v4220
        %vm4222 = vweird.f32 %v3991
        %vm4223 = vweird.f32 %v4217
        %vm4224 = vmor %vm4222, %vm4223
        %v4225 = vsel %vm4224, %v4217, %v4221
        %v4226 = vand.u32 2147483647, %v3991
        %vm4227 = vcmp.eq.f32.partialorder %v4226, 8.507059e+37
        %v4228 = vand.u32 %v3991, 2147483648
        %v4229 = vor.u32 1.1754944e-38, %v4228
        %v4230 = vsel %vm4227, %v4229, %v4225
        %v4231 = vmul.f32 %v3959, %v4230
        %v4232 = vpack.c.bf16 %v4021, %v4006
        %v4233 = vpack.c.bf16 %v4051, %v4036
        %v4234 = vpack.c.bf16 %v4081, %v4066
        %v4235 = vpack.c.bf16 %v4111, %v4096
        %v4236 = vpack.c.bf16 %v4141, %v4126
        %v4237 = vpack.c.bf16 %v4171, %v4156
        %v4238 = vpack.c.bf16 %v4201, %v4186
        %v4239 = vpack.c.bf16 %v4231, %v4216
        %v4240 = vpack.c.bf16 %v3673, %v3671
        %v4241 = vpack.c.bf16 %v3678, %v3676
        %v4242 = vpack.c.bf16 %v3683, %v3681
        %v4243 = vpack.c.bf16 %v3688, %v3686
        %v4244 = vpack.c.bf16 %v3693, %v3691
        %v4245 = vpack.c.bf16 %v3698, %v3696
        %v4246 = vpack.c.bf16 %v3703, %v3701
        %v4247 = vpack.c.bf16 %v3708, %v3706
        %4248 = vmatpush.bf16.msra.mxu0 %v4247
        %4249 = vmatpush.bf16.msra.mxu0 %v4246
        %4250 = vmatpush.bf16.msra.mxu0 %v4245
        %4251 = vmatpush.bf16.msra.mxu0 %v4244
        %4252 = vmatpush.bf16.msra.mxu0 %v4243
        %4253 = vmatpush.bf16.msra.mxu0 %v4242
        %4254 = vmatpush.bf16.msra.mxu0 %v4241
        %4255 = vmatpush.bf16.msra.mxu0 %v4240
        %4256 = vmatmul.bf16.gmra.mxu0 %v4232
        %v4257 = vpop.f32.mrf.mxu0
        %v4258 = vadd.f32 0.0, %v4257
        %v4259 = vpop.f32.mrf.mxu0
        %v4260 = vadd.f32 0.0, %v4259
        %4261 = vmatmul.bf16.gmra.mxu0 %v4233
        %v4262 = vpop.f32.mrf.mxu0
        %v4263 = vadd.f32 0.0, %v4262
        %v4264 = vpop.f32.mrf.mxu0
        %v4265 = vadd.f32 0.0, %v4264
        %4266 = vmatmul.bf16.gmra.mxu0 %v4234
        %v4267 = vpop.f32.mrf.mxu0
        %v4268 = vadd.f32 0.0, %v4267
        %v4269 = vpop.f32.mrf.mxu0
        %v4270 = vadd.f32 0.0, %v4269
        %4271 = vmatmul.bf16.gmra.mxu0 %v4235
        %v4272 = vpop.f32.mrf.mxu0
        %v4273 = vadd.f32 0.0, %v4272
        %v4274 = vpop.f32.mrf.mxu0
        %v4275 = vadd.f32 0.0, %v4274
        %4276 = vmatmul.bf16.gmra.mxu0 %v4236
        %v4277 = vpop.f32.mrf.mxu0
        %v4278 = vadd.f32 0.0, %v4277
        %v4279 = vpop.f32.mrf.mxu0
        %v4280 = vadd.f32 0.0, %v4279
        %4281 = vmatmul.bf16.gmra.mxu0 %v4237
        %v4282 = vpop.f32.mrf.mxu0
        %v4283 = vadd.f32 0.0, %v4282
        %v4284 = vpop.f32.mrf.mxu0
        %v4285 = vadd.f32 0.0, %v4284
        %4286 = vmatmul.bf16.gmra.mxu0 %v4238
        %v4287 = vpop.f32.mrf.mxu0
        %v4288 = vadd.f32 0.0, %v4287
        %v4289 = vpop.f32.mrf.mxu0
        %v4290 = vadd.f32 0.0, %v4289
        %4291 = vmatmul.bf16.gmra.mxu0 %v4239
        %v4292 = vpop.f32.mrf.mxu0
        %v4293 = vadd.f32 0.0, %v4292
        %v4294 = vpop.f32.mrf.mxu0
        %v4295 = vadd.f32 0.0, %v4294
        %4296 = vdwg.mxu0
        %4305 = vrot.lane.b32.xlu0 %v3728, 112
        %v4306 = vpop.permute.xlu0 %4305
        %4307 = vrot.lane.b32.xlu0 %v3729, 112
        %v4308 = vpop.permute.xlu0 %4307
        %4309 = vrot.lane.b32.xlu0 %v3730, 112
        %v4310 = vpop.permute.xlu0 %4309
        %4311 = vrot.lane.b32.xlu0 %v3731, 112
        %v4312 = vpop.permute.xlu0 %4311
        %4313 = vrot.lane.b32.xlu0 %v3732, 112
        %v4314 = vpop.permute.xlu0 %4313
        %4315 = vrot.lane.b32.xlu0 %v3733, 112
        %v4316 = vpop.permute.xlu0 %4315
        %4317 = vrot.lane.b32.xlu0 %v3734, 112
        %v4318 = vpop.permute.xlu0 %4317
        %4319 = vrot.lane.b32.xlu0 %v3735, 112
        %v4320 = vpop.permute.xlu0 %4319
        %4329 = vrot.lane.b32.xlu0 %v3736, 112
        %v4330 = vpop.permute.xlu0 %4329
        %4331 = vrot.lane.b32.xlu0 %v3737, 112
        %v4332 = vpop.permute.xlu0 %4331
        %4333 = vrot.lane.b32.xlu0 %v3738, 112
        %v4334 = vpop.permute.xlu0 %4333
        %4335 = vrot.lane.b32.xlu0 %v3739, 112
        %v4336 = vpop.permute.xlu0 %4335
        %4337 = vrot.lane.b32.xlu0 %v3740, 112
        %v4338 = vpop.permute.xlu0 %4337
        %4339 = vrot.lane.b32.xlu0 %v3741, 112
        %v4340 = vpop.permute.xlu0 %4339
        %4341 = vrot.lane.b32.xlu0 %v3742, 112
        %v4342 = vpop.permute.xlu0 %4341
        %4343 = vrot.lane.b32.xlu0 %v3743, 112
        %v4344 = vpop.permute.xlu0 %4343
        %v4346 = vsel %vm3744, %v4306, 0
        %v4349 = vsel %vm3744, %v4308, 0
        %v4352 = vsel %vm3744, %v4310, 0
        %v4355 = vsel %vm3744, %v4312, 0
        %v4358 = vsel %vm3744, %v4314, 0
        %v4361 = vsel %vm3744, %v4316, 0
        %v4364 = vsel %vm3744, %v4318, 0
        %v4367 = vsel %vm3744, %v4320, 0
        %v4370 = vsel %vm3744, %v4330, 0
        %v4373 = vsel %vm3744, %v4332, 0
        %v4376 = vsel %vm3744, %v4334, 0
        %v4379 = vsel %vm3744, %v4336, 0
        %v4382 = vsel %vm3744, %v4338, 0
        %v4385 = vsel %vm3744, %v4340, 0
        %v4388 = vsel %vm3744, %v4342, 0
        %v4391 = vsel %vm3744, %v4344, 0
        %4393 = vmatpush.bf16.xpose.msra.mxu0 %v4391
        %4394 = vmatpush.bf16.xpose.msra.mxu0 %v4388
        %4395 = vmatpush.bf16.xpose.msra.mxu0 %v4385
        %4396 = vmatpush.bf16.xpose.msra.mxu0 %v4382
        %4397 = vmatpush.bf16.xpose.msra.mxu0 %v4379
        %4398 = vmatpush.bf16.xpose.msra.mxu0 %v4376
        %4399 = vmatpush.bf16.xpose.msra.mxu0 %v4373
        %4400 = vmatpush.bf16.xpose.msra.mxu0 %v4370
        %4401 = vmatmul.bf16.gmra.mxu0 %v4346
        %v4402 = vpop.f32.mrf.mxu0
        %v4403 = vadd.f32 0.0, %v4402
        %v4404 = vpop.f32.mrf.mxu0
        %v4405 = vadd.f32 0.0, %v4404
        %4406 = vmatmul.bf16.gmra.mxu0 %v4349
        %v4407 = vpop.f32.mrf.mxu0
        %v4408 = vadd.f32 0.0, %v4407
        %v4409 = vpop.f32.mrf.mxu0
        %v4410 = vadd.f32 0.0, %v4409
        %4411 = vmatmul.bf16.gmra.mxu0 %v4352
        %v4412 = vpop.f32.mrf.mxu0
        %v4413 = vadd.f32 0.0, %v4412
        %v4414 = vpop.f32.mrf.mxu0
        %v4415 = vadd.f32 0.0, %v4414
        %4416 = vmatmul.bf16.gmra.mxu0 %v4355
        %v4417 = vpop.f32.mrf.mxu0
        %v4418 = vadd.f32 0.0, %v4417
        %v4419 = vpop.f32.mrf.mxu0
        %v4420 = vadd.f32 0.0, %v4419
        %4421 = vmatmul.bf16.gmra.mxu0 %v4358
        %v4422 = vpop.f32.mrf.mxu0
        %v4423 = vadd.f32 0.0, %v4422
        %v4424 = vpop.f32.mrf.mxu0
        %v4425 = vadd.f32 0.0, %v4424
        %4426 = vmatmul.bf16.gmra.mxu0 %v4361
        %v4427 = vpop.f32.mrf.mxu0
        %v4428 = vadd.f32 0.0, %v4427
        %v4429 = vpop.f32.mrf.mxu0
        %v4430 = vadd.f32 0.0, %v4429
        %4431 = vmatmul.bf16.gmra.mxu0 %v4364
        %v4432 = vpop.f32.mrf.mxu0
        %v4433 = vadd.f32 0.0, %v4432
        %v4434 = vpop.f32.mrf.mxu0
        %v4435 = vadd.f32 0.0, %v4434
        %4436 = vmatmul.bf16.gmra.mxu0 %v4367
        %v4437 = vpop.f32.mrf.mxu0
        %v4438 = vadd.f32 0.0, %v4437
        %v4439 = vpop.f32.mrf.mxu0
        %v4440 = vadd.f32 0.0, %v4439
        %4441 = vdwg.mxu0
        %v4442 = vmul.f32 %v4403, %v3843
        %v4443 = vmul.f32 %v4405, %v3843
        %v4444 = vmul.f32 %v4408, %v3843
        %v4445 = vmul.f32 %v4410, %v3843
        %v4446 = vmul.f32 %v4413, %v3843
        %v4447 = vmul.f32 %v4415, %v3843
        %v4448 = vmul.f32 %v4418, %v3843
        %v4449 = vmul.f32 %v4420, %v3843
        %v4450 = vmul.f32 %v4423, %v3843
        %v4451 = vmul.f32 %v4425, %v3843
        %v4452 = vmul.f32 %v4428, %v3843
        %v4453 = vmul.f32 %v4430, %v3843
        %v4454 = vmul.f32 %v4433, %v3843
        %v4455 = vmul.f32 %v4435, %v3843
        %v4456 = vmul.f32 %v4438, %v3843
        %v4457 = vmul.f32 %v4440, %v3843
        %v4458 = vadd.f32 %v4442, %v3862
        %v4459 = vadd.f32 %v4443, %v3862
        %v4460 = vadd.f32 %v4444, %v3862
        %v4461 = vadd.f32 %v4445, %v3862
        %v4462 = vadd.f32 %v4446, %v3862
        %v4463 = vadd.f32 %v4447, %v3862
        %v4464 = vadd.f32 %v4448, %v3862
        %v4465 = vadd.f32 %v4449, %v3862
        %v4466 = vadd.f32 %v4450, %v3862
        %v4467 = vadd.f32 %v4451, %v3862
        %v4468 = vadd.f32 %v4452, %v3862
        %v4469 = vadd.f32 %v4453, %v3862
        %v4470 = vadd.f32 %v4454, %v3862
        %v4471 = vadd.f32 %v4455, %v3862
        %v4472 = vadd.f32 %v4456, %v3862
        %v4473 = vadd.f32 %v4457, %v3862
        %4474 = vmax.xlane.f32.xlu0 %v4458
        %v4475 = vpop.xlane.xlu0 %4474
        %4476 = vmax.xlane.f32.xlu0 %v4459
        %v4477 = vpop.xlane.xlu0 %4476
        %4478 = vmax.xlane.f32.xlu0 %v4460
        %v4479 = vpop.xlane.xlu0 %4478
        %4480 = vmax.xlane.f32.xlu0 %v4461
        %v4481 = vpop.xlane.xlu0 %4480
        %4482 = vmax.xlane.f32.xlu0 %v4462
        %v4483 = vpop.xlane.xlu0 %4482
        %4484 = vmax.xlane.f32.xlu0 %v4463
        %v4485 = vpop.xlane.xlu0 %4484
        %4486 = vmax.xlane.f32.xlu0 %v4464
        %v4487 = vpop.xlane.xlu0 %4486
        %4488 = vmax.xlane.f32.xlu0 %v4465
        %v4489 = vpop.xlane.xlu0 %4488
        %4490 = vmax.xlane.f32.xlu0 %v4466
        %v4491 = vpop.xlane.xlu0 %4490
        %4492 = vmax.xlane.f32.xlu0 %v4467
        %v4493 = vpop.xlane.xlu0 %4492
        %4494 = vmax.xlane.f32.xlu0 %v4468
        %v4495 = vpop.xlane.xlu0 %4494
        %4496 = vmax.xlane.f32.xlu0 %v4469
        %v4497 = vpop.xlane.xlu0 %4496
        %4498 = vmax.xlane.f32.xlu0 %v4470
        %v4499 = vpop.xlane.xlu0 %4498
        %4500 = vmax.xlane.f32.xlu0 %v4471
        %v4501 = vpop.xlane.xlu0 %4500
        %4502 = vmax.xlane.f32.xlu0 %v4472
        %v4503 = vpop.xlane.xlu0 %4502
        %4504 = vmax.xlane.f32.xlu0 %v4473
        %v4505 = vpop.xlane.xlu0 %4504
        %v4506 = vsub.f32 %v4458, %v4475
        %v4507 = vsub.f32 %v4459, %v4477
        %v4508 = vsub.f32 %v4460, %v4479
        %v4509 = vsub.f32 %v4461, %v4481
        %v4510 = vsub.f32 %v4462, %v4483
        %v4511 = vsub.f32 %v4463, %v4485
        %v4512 = vsub.f32 %v4464, %v4487
        %v4513 = vsub.f32 %v4465, %v4489
        %v4514 = vsub.f32 %v4466, %v4491
        %v4515 = vsub.f32 %v4467, %v4493
        %v4516 = vsub.f32 %v4468, %v4495
        %v4517 = vsub.f32 %v4469, %v4497
        %v4518 = vsub.f32 %v4470, %v4499
        %v4519 = vsub.f32 %v4471, %v4501
        %v4520 = vsub.f32 %v4472, %v4503
        %v4521 = vsub.f32 %v4473, %v4505
        %v4522 = vmul.f32 %v4506, 1.442695
        %v4523 = vpow.pop %v4522
        %v4524 = vmul.f32 %v4507, 1.442695
        %v4525 = vpow.pop %v4524
        %v4526 = vmul.f32 %v4508, 1.442695
        %v4527 = vpow.pop %v4526
        %v4528 = vmul.f32 %v4509, 1.442695
        %v4529 = vpow.pop %v4528
        %v4530 = vmul.f32 %v4510, 1.442695
        %v4531 = vpow.pop %v4530
        %v4532 = vmul.f32 %v4511, 1.442695
        %v4533 = vpow.pop %v4532
        %v4534 = vmul.f32 %v4512, 1.442695
        %v4535 = vpow.pop %v4534
        %v4536 = vmul.f32 %v4513, 1.442695
        %v4537 = vpow.pop %v4536
        %v4538 = vmul.f32 %v4514, 1.442695
        %v4539 = vpow.pop %v4538
        %v4540 = vmul.f32 %v4515, 1.442695
        %v4541 = vpow.pop %v4540
        %v4542 = vmul.f32 %v4516, 1.442695
        %v4543 = vpow.pop %v4542
        %v4544 = vmul.f32 %v4517, 1.442695
        %v4545 = vpow.pop %v4544
        %v4546 = vmul.f32 %v4518, 1.442695
        %v4547 = vpow.pop %v4546
        %v4548 = vmul.f32 %v4519, 1.442695
        %v4549 = vpow.pop %v4548
        %v4550 = vmul.f32 %v4520, 1.442695
        %v4551 = vpow.pop %v4550
        %v4552 = vmul.f32 %v4521, 1.442695
        %v4553 = vpow.pop %v4552
        %4554 = vadd.xlane.f32.xlu0 %v4523
        %v4555 = vpop.xlane.xlu0 %4554
        %4556 = vadd.xlane.f32.xlu0 %v4525
        %v4557 = vpop.xlane.xlu0 %4556
        %4558 = vadd.xlane.f32.xlu0 %v4527
        %v4559 = vpop.xlane.xlu0 %4558
        %4560 = vadd.xlane.f32.xlu0 %v4529
        %v4561 = vpop.xlane.xlu0 %4560
        %4562 = vadd.xlane.f32.xlu0 %v4531
        %v4563 = vpop.xlane.xlu0 %4562
        %4564 = vadd.xlane.f32.xlu0 %v4533
        %v4565 = vpop.xlane.xlu0 %4564
        %4566 = vadd.xlane.f32.xlu0 %v4535
        %v4567 = vpop.xlane.xlu0 %4566
        %4568 = vadd.xlane.f32.xlu0 %v4537
        %v4569 = vpop.xlane.xlu0 %4568
        %4570 = vadd.xlane.f32.xlu0 %v4539
        %v4571 = vpop.xlane.xlu0 %4570
        %4572 = vadd.xlane.f32.xlu0 %v4541
        %v4573 = vpop.xlane.xlu0 %4572
        %4574 = vadd.xlane.f32.xlu0 %v4543
        %v4575 = vpop.xlane.xlu0 %4574
        %4576 = vadd.xlane.f32.xlu0 %v4545
        %v4577 = vpop.xlane.xlu0 %4576
        %4578 = vadd.xlane.f32.xlu0 %v4547
        %v4579 = vpop.xlane.xlu0 %4578
        %4580 = vadd.xlane.f32.xlu0 %v4549
        %v4581 = vpop.xlane.xlu0 %4580
        %4582 = vadd.xlane.f32.xlu0 %v4551
        %v4583 = vpop.xlane.xlu0 %4582
        %4584 = vadd.xlane.f32.xlu0 %v4553
        %v4585 = vpop.xlane.xlu0 %4584
        %v4586 = vrcp.pop %v4555
        %v4587 = vmul.f32 %v4555, %v4586
        %v4588 = vsub.f32 1.0, %v4587
        %v4589 = vmul.f32 %v4586, %v4588
        %v4590 = vadd.f32 %v4586, %v4589
        %vm4591 = vweird.f32 %v4555
        %vm4592 = vweird.f32 %v4586
        %vm4593 = vmor %vm4591, %vm4592
        %v4594 = vsel %vm4593, %v4586, %v4590
        %v4595 = vand.u32 2147483647, %v4555
        %vm4596 = vcmp.eq.f32.partialorder %v4595, 8.507059e+37
        %v4597 = vand.u32 %v4555, 2147483648
        %v4598 = vor.u32 1.1754944e-38, %v4597
        %v4599 = vsel %vm4596, %v4598, %v4594
        %v4600 = vmul.f32 %v4523, %v4599
        %v4601 = vrcp.pop %v4557
        %v4602 = vmul.f32 %v4557, %v4601
        %v4603 = vsub.f32 1.0, %v4602
        %v4604 = vmul.f32 %v4601, %v4603
        %v4605 = vadd.f32 %v4601, %v4604
        %vm4606 = vweird.f32 %v4557
        %vm4607 = vweird.f32 %v4601
        %vm4608 = vmor %vm4606, %vm4607
        %v4609 = vsel %vm4608, %v4601, %v4605
        %v4610 = vand.u32 2147483647, %v4557
        %vm4611 = vcmp.eq.f32.partialorder %v4610, 8.507059e+37
        %v4612 = vand.u32 %v4557, 2147483648
        %v4613 = vor.u32 1.1754944e-38, %v4612
        %v4614 = vsel %vm4611, %v4613, %v4609
        %v4615 = vmul.f32 %v4525, %v4614
        %v4616 = vrcp.pop %v4559
        %v4617 = vmul.f32 %v4559, %v4616
        %v4618 = vsub.f32 1.0, %v4617
        %v4619 = vmul.f32 %v4616, %v4618
        %v4620 = vadd.f32 %v4616, %v4619
        %vm4621 = vweird.f32 %v4559
        %vm4622 = vweird.f32 %v4616
        %vm4623 = vmor %vm4621, %vm4622
        %v4624 = vsel %vm4623, %v4616, %v4620
        %v4625 = vand.u32 2147483647, %v4559
        %vm4626 = vcmp.eq.f32.partialorder %v4625, 8.507059e+37
        %v4627 = vand.u32 %v4559, 2147483648
        %v4628 = vor.u32 1.1754944e-38, %v4627
        %v4629 = vsel %vm4626, %v4628, %v4624
        %v4630 = vmul.f32 %v4527, %v4629
        %v4631 = vrcp.pop %v4561
        %v4632 = vmul.f32 %v4561, %v4631
        %v4633 = vsub.f32 1.0, %v4632
        %v4634 = vmul.f32 %v4631, %v4633
        %v4635 = vadd.f32 %v4631, %v4634
        %vm4636 = vweird.f32 %v4561
        %vm4637 = vweird.f32 %v4631
        %vm4638 = vmor %vm4636, %vm4637
        %v4639 = vsel %vm4638, %v4631, %v4635
        %v4640 = vand.u32 2147483647, %v4561
        %vm4641 = vcmp.eq.f32.partialorder %v4640, 8.507059e+37
        %v4642 = vand.u32 %v4561, 2147483648
        %v4643 = vor.u32 1.1754944e-38, %v4642
        %v4644 = vsel %vm4641, %v4643, %v4639
        %v4645 = vmul.f32 %v4529, %v4644
        %v4646 = vrcp.pop %v4563
        %v4647 = vmul.f32 %v4563, %v4646
        %v4648 = vsub.f32 1.0, %v4647
        %v4649 = vmul.f32 %v4646, %v4648
        %v4650 = vadd.f32 %v4646, %v4649
        %vm4651 = vweird.f32 %v4563
        %vm4652 = vweird.f32 %v4646
        %vm4653 = vmor %vm4651, %vm4652
        %v4654 = vsel %vm4653, %v4646, %v4650
        %v4655 = vand.u32 2147483647, %v4563
        %vm4656 = vcmp.eq.f32.partialorder %v4655, 8.507059e+37
        %v4657 = vand.u32 %v4563, 2147483648
        %v4658 = vor.u32 1.1754944e-38, %v4657
        %v4659 = vsel %vm4656, %v4658, %v4654
        %v4660 = vmul.f32 %v4531, %v4659
        %v4661 = vrcp.pop %v4565
        %v4662 = vmul.f32 %v4565, %v4661
        %v4663 = vsub.f32 1.0, %v4662
        %v4664 = vmul.f32 %v4661, %v4663
        %v4665 = vadd.f32 %v4661, %v4664
        %vm4666 = vweird.f32 %v4565
        %vm4667 = vweird.f32 %v4661
        %vm4668 = vmor %vm4666, %vm4667
        %v4669 = vsel %vm4668, %v4661, %v4665
        %v4670 = vand.u32 2147483647, %v4565
        %vm4671 = vcmp.eq.f32.partialorder %v4670, 8.507059e+37
        %v4672 = vand.u32 %v4565, 2147483648
        %v4673 = vor.u32 1.1754944e-38, %v4672
        %v4674 = vsel %vm4671, %v4673, %v4669
        %v4675 = vmul.f32 %v4533, %v4674
        %v4676 = vrcp.pop %v4567
        %v4677 = vmul.f32 %v4567, %v4676
        %v4678 = vsub.f32 1.0, %v4677
        %v4679 = vmul.f32 %v4676, %v4678
        %v4680 = vadd.f32 %v4676, %v4679
        %vm4681 = vweird.f32 %v4567
        %vm4682 = vweird.f32 %v4676
        %vm4683 = vmor %vm4681, %vm4682
        %v4684 = vsel %vm4683, %v4676, %v4680
        %v4685 = vand.u32 2147483647, %v4567
        %vm4686 = vcmp.eq.f32.partialorder %v4685, 8.507059e+37
        %v4687 = vand.u32 %v4567, 2147483648
        %v4688 = vor.u32 1.1754944e-38, %v4687
        %v4689 = vsel %vm4686, %v4688, %v4684
        %v4690 = vmul.f32 %v4535, %v4689
        %v4691 = vrcp.pop %v4569
        %v4692 = vmul.f32 %v4569, %v4691
        %v4693 = vsub.f32 1.0, %v4692
        %v4694 = vmul.f32 %v4691, %v4693
        %v4695 = vadd.f32 %v4691, %v4694
        %vm4696 = vweird.f32 %v4569
        %vm4697 = vweird.f32 %v4691
        %vm4698 = vmor %vm4696, %vm4697
        %v4699 = vsel %vm4698, %v4691, %v4695
        %v4700 = vand.u32 2147483647, %v4569
        %vm4701 = vcmp.eq.f32.partialorder %v4700, 8.507059e+37
        %v4702 = vand.u32 %v4569, 2147483648
        %v4703 = vor.u32 1.1754944e-38, %v4702
        %v4704 = vsel %vm4701, %v4703, %v4699
        %v4705 = vmul.f32 %v4537, %v4704
        %v4706 = vrcp.pop %v4571
        %v4707 = vmul.f32 %v4571, %v4706
        %v4708 = vsub.f32 1.0, %v4707
        %v4709 = vmul.f32 %v4706, %v4708
        %v4710 = vadd.f32 %v4706, %v4709
        %vm4711 = vweird.f32 %v4571
        %vm4712 = vweird.f32 %v4706
        %vm4713 = vmor %vm4711, %vm4712
        %v4714 = vsel %vm4713, %v4706, %v4710
        %v4715 = vand.u32 2147483647, %v4571
        %vm4716 = vcmp.eq.f32.partialorder %v4715, 8.507059e+37
        %v4717 = vand.u32 %v4571, 2147483648
        %v4718 = vor.u32 1.1754944e-38, %v4717
        %v4719 = vsel %vm4716, %v4718, %v4714
        %v4720 = vmul.f32 %v4539, %v4719
        %v4721 = vrcp.pop %v4573
        %v4722 = vmul.f32 %v4573, %v4721
        %v4723 = vsub.f32 1.0, %v4722
        %v4724 = vmul.f32 %v4721, %v4723
        %v4725 = vadd.f32 %v4721, %v4724
        %vm4726 = vweird.f32 %v4573
        %vm4727 = vweird.f32 %v4721
        %vm4728 = vmor %vm4726, %vm4727
        %v4729 = vsel %vm4728, %v4721, %v4725
        %v4730 = vand.u32 2147483647, %v4573
        %vm4731 = vcmp.eq.f32.partialorder %v4730, 8.507059e+37
        %v4732 = vand.u32 %v4573, 2147483648
        %v4733 = vor.u32 1.1754944e-38, %v4732
        %v4734 = vsel %vm4731, %v4733, %v4729
        %v4735 = vmul.f32 %v4541, %v4734
        %v4736 = vrcp.pop %v4575
        %v4737 = vmul.f32 %v4575, %v4736
        %v4738 = vsub.f32 1.0, %v4737
        %v4739 = vmul.f32 %v4736, %v4738
        %v4740 = vadd.f32 %v4736, %v4739
        %vm4741 = vweird.f32 %v4575
        %vm4742 = vweird.f32 %v4736
        %vm4743 = vmor %vm4741, %vm4742
        %v4744 = vsel %vm4743, %v4736, %v4740
        %v4745 = vand.u32 2147483647, %v4575
        %vm4746 = vcmp.eq.f32.partialorder %v4745, 8.507059e+37
        %v4747 = vand.u32 %v4575, 2147483648
        %v4748 = vor.u32 1.1754944e-38, %v4747
        %v4749 = vsel %vm4746, %v4748, %v4744
        %v4750 = vmul.f32 %v4543, %v4749
        %v4751 = vrcp.pop %v4577
        %v4752 = vmul.f32 %v4577, %v4751
        %v4753 = vsub.f32 1.0, %v4752
        %v4754 = vmul.f32 %v4751, %v4753
        %v4755 = vadd.f32 %v4751, %v4754
        %vm4756 = vweird.f32 %v4577
        %vm4757 = vweird.f32 %v4751
        %vm4758 = vmor %vm4756, %vm4757
        %v4759 = vsel %vm4758, %v4751, %v4755
        %v4760 = vand.u32 2147483647, %v4577
        %vm4761 = vcmp.eq.f32.partialorder %v4760, 8.507059e+37
        %v4762 = vand.u32 %v4577, 2147483648
        %v4763 = vor.u32 1.1754944e-38, %v4762
        %v4764 = vsel %vm4761, %v4763, %v4759
        %v4765 = vmul.f32 %v4545, %v4764
        %v4766 = vrcp.pop %v4579
        %v4767 = vmul.f32 %v4579, %v4766
        %v4768 = vsub.f32 1.0, %v4767
        %v4769 = vmul.f32 %v4766, %v4768
        %v4770 = vadd.f32 %v4766, %v4769
        %vm4771 = vweird.f32 %v4579
        %vm4772 = vweird.f32 %v4766
        %vm4773 = vmor %vm4771, %vm4772
        %v4774 = vsel %vm4773, %v4766, %v4770
        %v4775 = vand.u32 2147483647, %v4579
        %vm4776 = vcmp.eq.f32.partialorder %v4775, 8.507059e+37
        %v4777 = vand.u32 %v4579, 2147483648
        %v4778 = vor.u32 1.1754944e-38, %v4777
        %v4779 = vsel %vm4776, %v4778, %v4774
        %v4780 = vmul.f32 %v4547, %v4779
        %v4781 = vrcp.pop %v4581
        %v4782 = vmul.f32 %v4581, %v4781
        %v4783 = vsub.f32 1.0, %v4782
        %v4784 = vmul.f32 %v4781, %v4783
        %v4785 = vadd.f32 %v4781, %v4784
        %vm4786 = vweird.f32 %v4581
        %vm4787 = vweird.f32 %v4781
        %vm4788 = vmor %vm4786, %vm4787
        %v4789 = vsel %vm4788, %v4781, %v4785
        %v4790 = vand.u32 2147483647, %v4581
        %vm4791 = vcmp.eq.f32.partialorder %v4790, 8.507059e+37
        %v4792 = vand.u32 %v4581, 2147483648
        %v4793 = vor.u32 1.1754944e-38, %v4792
        %v4794 = vsel %vm4791, %v4793, %v4789
        %v4795 = vmul.f32 %v4549, %v4794
        %v4796 = vrcp.pop %v4583
        %v4797 = vmul.f32 %v4583, %v4796
        %v4798 = vsub.f32 1.0, %v4797
        %v4799 = vmul.f32 %v4796, %v4798
        %v4800 = vadd.f32 %v4796, %v4799
        %vm4801 = vweird.f32 %v4583
        %vm4802 = vweird.f32 %v4796
        %vm4803 = vmor %vm4801, %vm4802
        %v4804 = vsel %vm4803, %v4796, %v4800
        %v4805 = vand.u32 2147483647, %v4583
        %vm4806 = vcmp.eq.f32.partialorder %v4805, 8.507059e+37
        %v4807 = vand.u32 %v4583, 2147483648
        %v4808 = vor.u32 1.1754944e-38, %v4807
        %v4809 = vsel %vm4806, %v4808, %v4804
        %v4810 = vmul.f32 %v4551, %v4809
        %v4811 = vrcp.pop %v4585
        %v4812 = vmul.f32 %v4585, %v4811
        %v4813 = vsub.f32 1.0, %v4812
        %v4814 = vmul.f32 %v4811, %v4813
        %v4815 = vadd.f32 %v4811, %v4814
        %vm4816 = vweird.f32 %v4585
        %vm4817 = vweird.f32 %v4811
        %vm4818 = vmor %vm4816, %vm4817
        %v4819 = vsel %vm4818, %v4811, %v4815
        %v4820 = vand.u32 2147483647, %v4585
        %vm4821 = vcmp.eq.f32.partialorder %v4820, 8.507059e+37
        %v4822 = vand.u32 %v4585, 2147483648
        %v4823 = vor.u32 1.1754944e-38, %v4822
        %v4824 = vsel %vm4821, %v4823, %v4819
        %v4825 = vmul.f32 %v4553, %v4824
        %v4826 = vpack.c.bf16 %v4615, %v4600
        %v4827 = vpack.c.bf16 %v4645, %v4630
        %v4828 = vpack.c.bf16 %v4675, %v4660
        %v4829 = vpack.c.bf16 %v4705, %v4690
        %v4830 = vpack.c.bf16 %v4735, %v4720
        %v4831 = vpack.c.bf16 %v4765, %v4750
        %v4832 = vpack.c.bf16 %v4795, %v4780
        %v4833 = vpack.c.bf16 %v4825, %v4810
        %4842 = vrot.lane.b32.xlu0 %v4240, 112
        %v4843 = vpop.permute.xlu0 %4842
        %4844 = vrot.lane.b32.xlu0 %v4241, 112
        %v4845 = vpop.permute.xlu0 %4844
        %4846 = vrot.lane.b32.xlu0 %v4242, 112
        %v4847 = vpop.permute.xlu0 %4846
        %4848 = vrot.lane.b32.xlu0 %v4243, 112
        %v4849 = vpop.permute.xlu0 %4848
        %4850 = vrot.lane.b32.xlu0 %v4244, 112
        %v4851 = vpop.permute.xlu0 %4850
        %4852 = vrot.lane.b32.xlu0 %v4245, 112
        %v4853 = vpop.permute.xlu0 %4852
        %4854 = vrot.lane.b32.xlu0 %v4246, 112
        %v4855 = vpop.permute.xlu0 %4854
        %4856 = vrot.lane.b32.xlu0 %v4247, 112
        %v4857 = vpop.permute.xlu0 %4856
        %4866 = vmatpush.bf16.msra.mxu0 %v4857
        %4867 = vmatpush.bf16.msra.mxu0 %v4855
        %4868 = vmatpush.bf16.msra.mxu0 %v4853
        %4869 = vmatpush.bf16.msra.mxu0 %v4851
        %4870 = vmatpush.bf16.msra.mxu0 %v4849
        %4871 = vmatpush.bf16.msra.mxu0 %v4847
        %4872 = vmatpush.bf16.msra.mxu0 %v4845
        %4873 = vmatpush.bf16.msra.mxu0 %v4843
        %4874 = vmatmul.bf16.gmra.mxu0 %v4826
        %v4875 = vpop.f32.mrf.mxu0
        %v4876 = vadd.f32 0.0, %v4875
        %v4877 = vpop.f32.mrf.mxu0
        %v4878 = vadd.f32 0.0, %v4877
        %4879 = vmatmul.bf16.gmra.mxu0 %v4827
        %v4880 = vpop.f32.mrf.mxu0
        %v4881 = vadd.f32 0.0, %v4880
        %v4882 = vpop.f32.mrf.mxu0
        %v4883 = vadd.f32 0.0, %v4882
        %4884 = vmatmul.bf16.gmra.mxu0 %v4828
        %v4885 = vpop.f32.mrf.mxu0
        %v4886 = vadd.f32 0.0, %v4885
        %v4887 = vpop.f32.mrf.mxu0
        %v4888 = vadd.f32 0.0, %v4887
        %4889 = vmatmul.bf16.gmra.mxu0 %v4829
        %v4890 = vpop.f32.mrf.mxu0
        %v4891 = vadd.f32 0.0, %v4890
        %v4892 = vpop.f32.mrf.mxu0
        %v4893 = vadd.f32 0.0, %v4892
        %4894 = vmatmul.bf16.gmra.mxu0 %v4830
        %v4895 = vpop.f32.mrf.mxu0
        %v4896 = vadd.f32 0.0, %v4895
        %v4897 = vpop.f32.mrf.mxu0
        %v4898 = vadd.f32 0.0, %v4897
        %4899 = vmatmul.bf16.gmra.mxu0 %v4831
        %v4900 = vpop.f32.mrf.mxu0
        %v4901 = vadd.f32 0.0, %v4900
        %v4902 = vpop.f32.mrf.mxu0
        %v4903 = vadd.f32 0.0, %v4902
        %4904 = vmatmul.bf16.gmra.mxu0 %v4832
        %v4905 = vpop.f32.mrf.mxu0
        %v4906 = vadd.f32 0.0, %v4905
        %v4907 = vpop.f32.mrf.mxu0
        %v4908 = vadd.f32 0.0, %v4907
        %4909 = vmatmul.bf16.gmra.mxu0 %v4833
        %v4910 = vpop.f32.mrf.mxu0
        %v4911 = vadd.f32 0.0, %v4910
        %v4912 = vpop.f32.mrf.mxu0
        %v4913 = vadd.f32 0.0, %v4912
        %4914 = vdwg.mxu0
        %4915 = vrot.lane.b32.xlu0 %v3728, 96
        %v4916 = vpop.permute.xlu0 %4915
        %4917 = vrot.lane.b32.xlu0 %v3729, 96
        %v4918 = vpop.permute.xlu0 %4917
        %4919 = vrot.lane.b32.xlu0 %v3730, 96
        %v4920 = vpop.permute.xlu0 %4919
        %4921 = vrot.lane.b32.xlu0 %v3731, 96
        %v4922 = vpop.permute.xlu0 %4921
        %4923 = vrot.lane.b32.xlu0 %v3732, 96
        %v4924 = vpop.permute.xlu0 %4923
        %4925 = vrot.lane.b32.xlu0 %v3733, 96
        %v4926 = vpop.permute.xlu0 %4925
        %4927 = vrot.lane.b32.xlu0 %v3734, 96
        %v4928 = vpop.permute.xlu0 %4927
        %4929 = vrot.lane.b32.xlu0 %v3735, 96
        %v4930 = vpop.permute.xlu0 %4929
        %4931 = vrot.lane.b32.xlu0 %v3736, 96
        %v4932 = vpop.permute.xlu0 %4931
        %4933 = vrot.lane.b32.xlu0 %v3737, 96
        %v4934 = vpop.permute.xlu0 %4933
        %4935 = vrot.lane.b32.xlu0 %v3738, 96
        %v4936 = vpop.permute.xlu0 %4935
        %4937 = vrot.lane.b32.xlu0 %v3739, 96
        %v4938 = vpop.permute.xlu0 %4937
        %4939 = vrot.lane.b32.xlu0 %v3740, 96
        %v4940 = vpop.permute.xlu0 %4939
        %4941 = vrot.lane.b32.xlu0 %v3741, 96
        %v4942 = vpop.permute.xlu0 %4941
        %4943 = vrot.lane.b32.xlu0 %v3742, 96
        %v4944 = vpop.permute.xlu0 %4943
        %4945 = vrot.lane.b32.xlu0 %v3743, 96
        %v4946 = vpop.permute.xlu0 %4945
        %v4948 = vsel %vm3744, %v4916, 0
        %v4951 = vsel %vm3744, %v4918, 0
        %v4954 = vsel %vm3744, %v4920, 0
        %v4957 = vsel %vm3744, %v4922, 0
        %v4960 = vsel %vm3744, %v4924, 0
        %v4963 = vsel %vm3744, %v4926, 0
        %v4966 = vsel %vm3744, %v4928, 0
        %v4969 = vsel %vm3744, %v4930, 0
        %v4972 = vsel %vm3744, %v4932, 0
        %v4975 = vsel %vm3744, %v4934, 0
        %v4978 = vsel %vm3744, %v4936, 0
        %v4981 = vsel %vm3744, %v4938, 0
        %v4984 = vsel %vm3744, %v4940, 0
        %v4987 = vsel %vm3744, %v4942, 0
        %v4990 = vsel %vm3744, %v4944, 0
        %v4993 = vsel %vm3744, %v4946, 0
        %4995 = vmatpush.bf16.xpose.msra.mxu0 %v4993
        %4996 = vmatpush.bf16.xpose.msra.mxu0 %v4990
        %4997 = vmatpush.bf16.xpose.msra.mxu0 %v4987
        %4998 = vmatpush.bf16.xpose.msra.mxu0 %v4984
        %4999 = vmatpush.bf16.xpose.msra.mxu0 %v4981
        %5000 = vmatpush.bf16.xpose.msra.mxu0 %v4978
        %5001 = vmatpush.bf16.xpose.msra.mxu0 %v4975
        %5002 = vmatpush.bf16.xpose.msra.mxu0 %v4972
        %5003 = vmatmul.bf16.gmra.mxu0 %v4948
        %v5004 = vpop.f32.mrf.mxu0
        %v5005 = vadd.f32 0.0, %v5004
        %v5006 = vpop.f32.mrf.mxu0
        %v5007 = vadd.f32 0.0, %v5006
        %5008 = vmatmul.bf16.gmra.mxu0 %v4951
        %v5009 = vpop.f32.mrf.mxu0
        %v5010 = vadd.f32 0.0, %v5009
        %v5011 = vpop.f32.mrf.mxu0
        %v5012 = vadd.f32 0.0, %v5011
        %5013 = vmatmul.bf16.gmra.mxu0 %v4954
        %v5014 = vpop.f32.mrf.mxu0
        %v5015 = vadd.f32 0.0, %v5014
        %v5016 = vpop.f32.mrf.mxu0
        %v5017 = vadd.f32 0.0, %v5016
        %5018 = vmatmul.bf16.gmra.mxu0 %v4957
        %v5019 = vpop.f32.mrf.mxu0
        %v5020 = vadd.f32 0.0, %v5019
        %v5021 = vpop.f32.mrf.mxu0
        %v5022 = vadd.f32 0.0, %v5021
        %5023 = vmatmul.bf16.gmra.mxu0 %v4960
        %v5024 = vpop.f32.mrf.mxu0
        %v5025 = vadd.f32 0.0, %v5024
        %v5026 = vpop.f32.mrf.mxu0
        %v5027 = vadd.f32 0.0, %v5026
        %5028 = vmatmul.bf16.gmra.mxu0 %v4963
        %v5029 = vpop.f32.mrf.mxu0
        %v5030 = vadd.f32 0.0, %v5029
        %v5031 = vpop.f32.mrf.mxu0
        %v5032 = vadd.f32 0.0, %v5031
        %5033 = vmatmul.bf16.gmra.mxu0 %v4966
        %v5034 = vpop.f32.mrf.mxu0
        %v5035 = vadd.f32 0.0, %v5034
        %v5036 = vpop.f32.mrf.mxu0
        %v5037 = vadd.f32 0.0, %v5036
        %5038 = vmatmul.bf16.gmra.mxu0 %v4969
        %v5039 = vpop.f32.mrf.mxu0
        %v5040 = vadd.f32 0.0, %v5039
        %v5041 = vpop.f32.mrf.mxu0
        %v5042 = vadd.f32 0.0, %v5041
        %5043 = vdwg.mxu0
        %v5044 = vmul.f32 %v5005, %v3843
        %v5045 = vmul.f32 %v5007, %v3843
        %v5046 = vmul.f32 %v5010, %v3843
        %v5047 = vmul.f32 %v5012, %v3843
        %v5048 = vmul.f32 %v5015, %v3843
        %v5049 = vmul.f32 %v5017, %v3843
        %v5050 = vmul.f32 %v5020, %v3843
        %v5051 = vmul.f32 %v5022, %v3843
        %v5052 = vmul.f32 %v5025, %v3843
        %v5053 = vmul.f32 %v5027, %v3843
        %v5054 = vmul.f32 %v5030, %v3843
        %v5055 = vmul.f32 %v5032, %v3843
        %v5056 = vmul.f32 %v5035, %v3843
        %v5057 = vmul.f32 %v5037, %v3843
        %v5058 = vmul.f32 %v5040, %v3843
        %v5059 = vmul.f32 %v5042, %v3843
        %v5060 = vadd.f32 %v5044, %v3862
        %v5061 = vadd.f32 %v5045, %v3862
        %v5062 = vadd.f32 %v5046, %v3862
        %v5063 = vadd.f32 %v5047, %v3862
        %v5064 = vadd.f32 %v5048, %v3862
        %v5065 = vadd.f32 %v5049, %v3862
        %v5066 = vadd.f32 %v5050, %v3862
        %v5067 = vadd.f32 %v5051, %v3862
        %v5068 = vadd.f32 %v5052, %v3862
        %v5069 = vadd.f32 %v5053, %v3862
        %v5070 = vadd.f32 %v5054, %v3862
        %v5071 = vadd.f32 %v5055, %v3862
        %v5072 = vadd.f32 %v5056, %v3862
        %v5073 = vadd.f32 %v5057, %v3862
        %v5074 = vadd.f32 %v5058, %v3862
        %v5075 = vadd.f32 %v5059, %v3862
        %5076 = vmax.xlane.f32.xlu0 %v5060
        %v5077 = vpop.xlane.xlu0 %5076
        %5078 = vmax.xlane.f32.xlu0 %v5061
        %v5079 = vpop.xlane.xlu0 %5078
        %5080 = vmax.xlane.f32.xlu0 %v5062
        %v5081 = vpop.xlane.xlu0 %5080
        %5082 = vmax.xlane.f32.xlu0 %v5063
        %v5083 = vpop.xlane.xlu0 %5082
        %5084 = vmax.xlane.f32.xlu0 %v5064
        %v5085 = vpop.xlane.xlu0 %5084
        %5086 = vmax.xlane.f32.xlu0 %v5065
        %v5087 = vpop.xlane.xlu0 %5086
        %5088 = vmax.xlane.f32.xlu0 %v5066
        %v5089 = vpop.xlane.xlu0 %5088
        %5090 = vmax.xlane.f32.xlu0 %v5067
        %v5091 = vpop.xlane.xlu0 %5090
        %5092 = vmax.xlane.f32.xlu0 %v5068
        %v5093 = vpop.xlane.xlu0 %5092
        %5094 = vmax.xlane.f32.xlu0 %v5069
        %v5095 = vpop.xlane.xlu0 %5094
        %5096 = vmax.xlane.f32.xlu0 %v5070
        %v5097 = vpop.xlane.xlu0 %5096
        %5098 = vmax.xlane.f32.xlu0 %v5071
        %v5099 = vpop.xlane.xlu0 %5098
        %5100 = vmax.xlane.f32.xlu0 %v5072
        %v5101 = vpop.xlane.xlu0 %5100
        %5102 = vmax.xlane.f32.xlu0 %v5073
        %v5103 = vpop.xlane.xlu0 %5102
        %5104 = vmax.xlane.f32.xlu0 %v5074
        %v5105 = vpop.xlane.xlu0 %5104
        %5106 = vmax.xlane.f32.xlu0 %v5075
        %v5107 = vpop.xlane.xlu0 %5106
        %v5108 = vsub.f32 %v5060, %v5077
        %v5109 = vsub.f32 %v5061, %v5079
        %v5110 = vsub.f32 %v5062, %v5081
        %v5111 = vsub.f32 %v5063, %v5083
        %v5112 = vsub.f32 %v5064, %v5085
        %v5113 = vsub.f32 %v5065, %v5087
        %v5114 = vsub.f32 %v5066, %v5089
        %v5115 = vsub.f32 %v5067, %v5091
        %v5116 = vsub.f32 %v5068, %v5093
        %v5117 = vsub.f32 %v5069, %v5095
        %v5118 = vsub.f32 %v5070, %v5097
        %v5119 = vsub.f32 %v5071, %v5099
        %v5120 = vsub.f32 %v5072, %v5101
        %v5121 = vsub.f32 %v5073, %v5103
        %v5122 = vsub.f32 %v5074, %v5105
        %v5123 = vsub.f32 %v5075, %v5107
        %v5124 = vmul.f32 %v5108, 1.442695
        %v5125 = vpow.pop %v5124
        %v5126 = vmul.f32 %v5109, 1.442695
        %v5127 = vpow.pop %v5126
        %v5128 = vmul.f32 %v5110, 1.442695
        %v5129 = vpow.pop %v5128
        %v5130 = vmul.f32 %v5111, 1.442695
        %v5131 = vpow.pop %v5130
        %v5132 = vmul.f32 %v5112, 1.442695
        %v5133 = vpow.pop %v5132
        %v5134 = vmul.f32 %v5113, 1.442695
        %v5135 = vpow.pop %v5134
        %v5136 = vmul.f32 %v5114, 1.442695
        %v5137 = vpow.pop %v5136
        %v5138 = vmul.f32 %v5115, 1.442695
        %v5139 = vpow.pop %v5138
        %v5140 = vmul.f32 %v5116, 1.442695
        %v5141 = vpow.pop %v5140
        %v5142 = vmul.f32 %v5117, 1.442695
        %v5143 = vpow.pop %v5142
        %v5144 = vmul.f32 %v5118, 1.442695
        %v5145 = vpow.pop %v5144
        %v5146 = vmul.f32 %v5119, 1.442695
        %v5147 = vpow.pop %v5146
        %v5148 = vmul.f32 %v5120, 1.442695
        %v5149 = vpow.pop %v5148
        %v5150 = vmul.f32 %v5121, 1.442695
        %v5151 = vpow.pop %v5150
        %v5152 = vmul.f32 %v5122, 1.442695
        %v5153 = vpow.pop %v5152
        %v5154 = vmul.f32 %v5123, 1.442695
        %v5155 = vpow.pop %v5154
        %5156 = vadd.xlane.f32.xlu0 %v5125
        %v5157 = vpop.xlane.xlu0 %5156
        %5158 = vadd.xlane.f32.xlu0 %v5127
        %v5159 = vpop.xlane.xlu0 %5158
        %5160 = vadd.xlane.f32.xlu0 %v5129
        %v5161 = vpop.xlane.xlu0 %5160
        %5162 = vadd.xlane.f32.xlu0 %v5131
        %v5163 = vpop.xlane.xlu0 %5162
        %5164 = vadd.xlane.f32.xlu0 %v5133
        %v5165 = vpop.xlane.xlu0 %5164
        %5166 = vadd.xlane.f32.xlu0 %v5135
        %v5167 = vpop.xlane.xlu0 %5166
        %5168 = vadd.xlane.f32.xlu0 %v5137
        %v5169 = vpop.xlane.xlu0 %5168
        %5170 = vadd.xlane.f32.xlu0 %v5139
        %v5171 = vpop.xlane.xlu0 %5170
        %5172 = vadd.xlane.f32.xlu0 %v5141
        %v5173 = vpop.xlane.xlu0 %5172
        %5174 = vadd.xlane.f32.xlu0 %v5143
        %v5175 = vpop.xlane.xlu0 %5174
        %5176 = vadd.xlane.f32.xlu0 %v5145
        %v5177 = vpop.xlane.xlu0 %5176
        %5178 = vadd.xlane.f32.xlu0 %v5147
        %v5179 = vpop.xlane.xlu0 %5178
        %5180 = vadd.xlane.f32.xlu0 %v5149
        %v5181 = vpop.xlane.xlu0 %5180
        %5182 = vadd.xlane.f32.xlu0 %v5151
        %v5183 = vpop.xlane.xlu0 %5182
        %5184 = vadd.xlane.f32.xlu0 %v5153
        %v5185 = vpop.xlane.xlu0 %5184
        %5186 = vadd.xlane.f32.xlu0 %v5155
        %v5187 = vpop.xlane.xlu0 %5186
        %v5188 = vrcp.pop %v5157
        %v5189 = vmul.f32 %v5157, %v5188
        %v5190 = vsub.f32 1.0, %v5189
        %v5191 = vmul.f32 %v5188, %v5190
        %v5192 = vadd.f32 %v5188, %v5191
        %vm5193 = vweird.f32 %v5157
        %vm5194 = vweird.f32 %v5188
        %vm5195 = vmor %vm5193, %vm5194
        %v5196 = vsel %vm5195, %v5188, %v5192
        %v5197 = vand.u32 2147483647, %v5157
        %vm5198 = vcmp.eq.f32.partialorder %v5197, 8.507059e+37
        %v5199 = vand.u32 %v5157, 2147483648
        %v5200 = vor.u32 1.1754944e-38, %v5199
        %v5201 = vsel %vm5198, %v5200, %v5196
        %v5202 = vmul.f32 %v5125, %v5201
        %v5203 = vrcp.pop %v5159
        %v5204 = vmul.f32 %v5159, %v5203
        %v5205 = vsub.f32 1.0, %v5204
        %v5206 = vmul.f32 %v5203, %v5205
        %v5207 = vadd.f32 %v5203, %v5206
        %vm5208 = vweird.f32 %v5159
        %vm5209 = vweird.f32 %v5203
        %vm5210 = vmor %vm5208, %vm5209
        %v5211 = vsel %vm5210, %v5203, %v5207
        %v5212 = vand.u32 2147483647, %v5159
        %vm5213 = vcmp.eq.f32.partialorder %v5212, 8.507059e+37
        %v5214 = vand.u32 %v5159, 2147483648
        %v5215 = vor.u32 1.1754944e-38, %v5214
        %v5216 = vsel %vm5213, %v5215, %v5211
        %v5217 = vmul.f32 %v5127, %v5216
        %v5218 = vrcp.pop %v5161
        %v5219 = vmul.f32 %v5161, %v5218
        %v5220 = vsub.f32 1.0, %v5219
        %v5221 = vmul.f32 %v5218, %v5220
        %v5222 = vadd.f32 %v5218, %v5221
        %vm5223 = vweird.f32 %v5161
        %vm5224 = vweird.f32 %v5218
        %vm5225 = vmor %vm5223, %vm5224
        %v5226 = vsel %vm5225, %v5218, %v5222
        %v5227 = vand.u32 2147483647, %v5161
        %vm5228 = vcmp.eq.f32.partialorder %v5227, 8.507059e+37
        %v5229 = vand.u32 %v5161, 2147483648
        %v5230 = vor.u32 1.1754944e-38, %v5229
        %v5231 = vsel %vm5228, %v5230, %v5226
        %v5232 = vmul.f32 %v5129, %v5231
        %v5233 = vrcp.pop %v5163
        %v5234 = vmul.f32 %v5163, %v5233
        %v5235 = vsub.f32 1.0, %v5234
        %v5236 = vmul.f32 %v5233, %v5235
        %v5237 = vadd.f32 %v5233, %v5236
        %vm5238 = vweird.f32 %v5163
        %vm5239 = vweird.f32 %v5233
        %vm5240 = vmor %vm5238, %vm5239
        %v5241 = vsel %vm5240, %v5233, %v5237
        %v5242 = vand.u32 2147483647, %v5163
        %vm5243 = vcmp.eq.f32.partialorder %v5242, 8.507059e+37
        %v5244 = vand.u32 %v5163, 2147483648
        %v5245 = vor.u32 1.1754944e-38, %v5244
        %v5246 = vsel %vm5243, %v5245, %v5241
        %v5247 = vmul.f32 %v5131, %v5246
        %v5248 = vrcp.pop %v5165
        %v5249 = vmul.f32 %v5165, %v5248
        %v5250 = vsub.f32 1.0, %v5249
        %v5251 = vmul.f32 %v5248, %v5250
        %v5252 = vadd.f32 %v5248, %v5251
        %vm5253 = vweird.f32 %v5165
        %vm5254 = vweird.f32 %v5248
        %vm5255 = vmor %vm5253, %vm5254
        %v5256 = vsel %vm5255, %v5248, %v5252
        %v5257 = vand.u32 2147483647, %v5165
        %vm5258 = vcmp.eq.f32.partialorder %v5257, 8.507059e+37
        %v5259 = vand.u32 %v5165, 2147483648
        %v5260 = vor.u32 1.1754944e-38, %v5259
        %v5261 = vsel %vm5258, %v5260, %v5256
        %v5262 = vmul.f32 %v5133, %v5261
        %v5263 = vrcp.pop %v5167
        %v5264 = vmul.f32 %v5167, %v5263
        %v5265 = vsub.f32 1.0, %v5264
        %v5266 = vmul.f32 %v5263, %v5265
        %v5267 = vadd.f32 %v5263, %v5266
        %vm5268 = vweird.f32 %v5167
        %vm5269 = vweird.f32 %v5263
        %vm5270 = vmor %vm5268, %vm5269
        %v5271 = vsel %vm5270, %v5263, %v5267
        %v5272 = vand.u32 2147483647, %v5167
        %vm5273 = vcmp.eq.f32.partialorder %v5272, 8.507059e+37
        %v5274 = vand.u32 %v5167, 2147483648
        %v5275 = vor.u32 1.1754944e-38, %v5274
        %v5276 = vsel %vm5273, %v5275, %v5271
        %v5277 = vmul.f32 %v5135, %v5276
        %v5278 = vrcp.pop %v5169
        %v5279 = vmul.f32 %v5169, %v5278
        %v5280 = vsub.f32 1.0, %v5279
        %v5281 = vmul.f32 %v5278, %v5280
        %v5282 = vadd.f32 %v5278, %v5281
        %vm5283 = vweird.f32 %v5169
        %vm5284 = vweird.f32 %v5278
        %vm5285 = vmor %vm5283, %vm5284
        %v5286 = vsel %vm5285, %v5278, %v5282
        %v5287 = vand.u32 2147483647, %v5169
        %vm5288 = vcmp.eq.f32.partialorder %v5287, 8.507059e+37
        %v5289 = vand.u32 %v5169, 2147483648
        %v5290 = vor.u32 1.1754944e-38, %v5289
        %v5291 = vsel %vm5288, %v5290, %v5286
        %v5292 = vmul.f32 %v5137, %v5291
        %v5293 = vrcp.pop %v5171
        %v5294 = vmul.f32 %v5171, %v5293
        %v5295 = vsub.f32 1.0, %v5294
        %v5296 = vmul.f32 %v5293, %v5295
        %v5297 = vadd.f32 %v5293, %v5296
        %vm5298 = vweird.f32 %v5171
        %vm5299 = vweird.f32 %v5293
        %vm5300 = vmor %vm5298, %vm5299
        %v5301 = vsel %vm5300, %v5293, %v5297
        %v5302 = vand.u32 2147483647, %v5171
        %vm5303 = vcmp.eq.f32.partialorder %v5302, 8.507059e+37
        %v5304 = vand.u32 %v5171, 2147483648
        %v5305 = vor.u32 1.1754944e-38, %v5304
        %v5306 = vsel %vm5303, %v5305, %v5301
        %v5307 = vmul.f32 %v5139, %v5306
        %v5308 = vrcp.pop %v5173
        %v5309 = vmul.f32 %v5173, %v5308
        %v5310 = vsub.f32 1.0, %v5309
        %v5311 = vmul.f32 %v5308, %v5310
        %v5312 = vadd.f32 %v5308, %v5311
        %vm5313 = vweird.f32 %v5173
        %vm5314 = vweird.f32 %v5308
        %vm5315 = vmor %vm5313, %vm5314
        %v5316 = vsel %vm5315, %v5308, %v5312
        %v5317 = vand.u32 2147483647, %v5173
        %vm5318 = vcmp.eq.f32.partialorder %v5317, 8.507059e+37
        %v5319 = vand.u32 %v5173, 2147483648
        %v5320 = vor.u32 1.1754944e-38, %v5319
        %v5321 = vsel %vm5318, %v5320, %v5316
        %v5322 = vmul.f32 %v5141, %v5321
        %v5323 = vrcp.pop %v5175
        %v5324 = vmul.f32 %v5175, %v5323
        %v5325 = vsub.f32 1.0, %v5324
        %v5326 = vmul.f32 %v5323, %v5325
        %v5327 = vadd.f32 %v5323, %v5326
        %vm5328 = vweird.f32 %v5175
        %vm5329 = vweird.f32 %v5323
        %vm5330 = vmor %vm5328, %vm5329
        %v5331 = vsel %vm5330, %v5323, %v5327
        %v5332 = vand.u32 2147483647, %v5175
        %vm5333 = vcmp.eq.f32.partialorder %v5332, 8.507059e+37
        %v5334 = vand.u32 %v5175, 2147483648
        %v5335 = vor.u32 1.1754944e-38, %v5334
        %v5336 = vsel %vm5333, %v5335, %v5331
        %v5337 = vmul.f32 %v5143, %v5336
        %v5338 = vrcp.pop %v5177
        %v5339 = vmul.f32 %v5177, %v5338
        %v5340 = vsub.f32 1.0, %v5339
        %v5341 = vmul.f32 %v5338, %v5340
        %v5342 = vadd.f32 %v5338, %v5341
        %vm5343 = vweird.f32 %v5177
        %vm5344 = vweird.f32 %v5338
        %vm5345 = vmor %vm5343, %vm5344
        %v5346 = vsel %vm5345, %v5338, %v5342
        %v5347 = vand.u32 2147483647, %v5177
        %vm5348 = vcmp.eq.f32.partialorder %v5347, 8.507059e+37
        %v5349 = vand.u32 %v5177, 2147483648
        %v5350 = vor.u32 1.1754944e-38, %v5349
        %v5351 = vsel %vm5348, %v5350, %v5346
        %v5352 = vmul.f32 %v5145, %v5351
        %v5353 = vrcp.pop %v5179
        %v5354 = vmul.f32 %v5179, %v5353
        %v5355 = vsub.f32 1.0, %v5354
        %v5356 = vmul.f32 %v5353, %v5355
        %v5357 = vadd.f32 %v5353, %v5356
        %vm5358 = vweird.f32 %v5179
        %vm5359 = vweird.f32 %v5353
        %vm5360 = vmor %vm5358, %vm5359
        %v5361 = vsel %vm5360, %v5353, %v5357
        %v5362 = vand.u32 2147483647, %v5179
        %vm5363 = vcmp.eq.f32.partialorder %v5362, 8.507059e+37
        %v5364 = vand.u32 %v5179, 2147483648
        %v5365 = vor.u32 1.1754944e-38, %v5364
        %v5366 = vsel %vm5363, %v5365, %v5361
        %v5367 = vmul.f32 %v5147, %v5366
        %v5368 = vrcp.pop %v5181
        %v5369 = vmul.f32 %v5181, %v5368
        %v5370 = vsub.f32 1.0, %v5369
        %v5371 = vmul.f32 %v5368, %v5370
        %v5372 = vadd.f32 %v5368, %v5371
        %vm5373 = vweird.f32 %v5181
        %vm5374 = vweird.f32 %v5368
        %vm5375 = vmor %vm5373, %vm5374
        %v5376 = vsel %vm5375, %v5368, %v5372
        %v5377 = vand.u32 2147483647, %v5181
        %vm5378 = vcmp.eq.f32.partialorder %v5377, 8.507059e+37
        %v5379 = vand.u32 %v5181, 2147483648
        %v5380 = vor.u32 1.1754944e-38, %v5379
        %v5381 = vsel %vm5378, %v5380, %v5376
        %v5382 = vmul.f32 %v5149, %v5381
        %v5383 = vrcp.pop %v5183
        %v5384 = vmul.f32 %v5183, %v5383
        %v5385 = vsub.f32 1.0, %v5384
        %v5386 = vmul.f32 %v5383, %v5385
        %v5387 = vadd.f32 %v5383, %v5386
        %vm5388 = vweird.f32 %v5183
        %vm5389 = vweird.f32 %v5383
        %vm5390 = vmor %vm5388, %vm5389
        %v5391 = vsel %vm5390, %v5383, %v5387
        %v5392 = vand.u32 2147483647, %v5183
        %vm5393 = vcmp.eq.f32.partialorder %v5392, 8.507059e+37
        %v5394 = vand.u32 %v5183, 2147483648
        %v5395 = vor.u32 1.1754944e-38, %v5394
        %v5396 = vsel %vm5393, %v5395, %v5391
        %v5397 = vmul.f32 %v5151, %v5396
        %v5398 = vrcp.pop %v5185
        %v5399 = vmul.f32 %v5185, %v5398
        %v5400 = vsub.f32 1.0, %v5399
        %v5401 = vmul.f32 %v5398, %v5400
        %v5402 = vadd.f32 %v5398, %v5401
        %vm5403 = vweird.f32 %v5185
        %vm5404 = vweird.f32 %v5398
        %vm5405 = vmor %vm5403, %vm5404
        %v5406 = vsel %vm5405, %v5398, %v5402
        %v5407 = vand.u32 2147483647, %v5185
        %vm5408 = vcmp.eq.f32.partialorder %v5407, 8.507059e+37
        %v5409 = vand.u32 %v5185, 2147483648
        %v5410 = vor.u32 1.1754944e-38, %v5409
        %v5411 = vsel %vm5408, %v5410, %v5406
        %v5412 = vmul.f32 %v5153, %v5411
        %v5413 = vrcp.pop %v5187
        %v5414 = vmul.f32 %v5187, %v5413
        %v5415 = vsub.f32 1.0, %v5414
        %v5416 = vmul.f32 %v5413, %v5415
        %v5417 = vadd.f32 %v5413, %v5416
        %vm5418 = vweird.f32 %v5187
        %vm5419 = vweird.f32 %v5413
        %vm5420 = vmor %vm5418, %vm5419
        %v5421 = vsel %vm5420, %v5413, %v5417
        %v5422 = vand.u32 2147483647, %v5187
        %vm5423 = vcmp.eq.f32.partialorder %v5422, 8.507059e+37
        %v5424 = vand.u32 %v5187, 2147483648
        %v5425 = vor.u32 1.1754944e-38, %v5424
        %v5426 = vsel %vm5423, %v5425, %v5421
        %v5427 = vmul.f32 %v5155, %v5426
        %v5428 = vpack.c.bf16 %v5217, %v5202
        %v5429 = vpack.c.bf16 %v5247, %v5232
        %v5430 = vpack.c.bf16 %v5277, %v5262
        %v5431 = vpack.c.bf16 %v5307, %v5292
        %v5432 = vpack.c.bf16 %v5337, %v5322
        %v5433 = vpack.c.bf16 %v5367, %v5352
        %v5434 = vpack.c.bf16 %v5397, %v5382
        %v5435 = vpack.c.bf16 %v5427, %v5412
        %5436 = vrot.lane.b32.xlu0 %v4240, 96
        %v5437 = vpop.permute.xlu0 %5436
        %5438 = vrot.lane.b32.xlu0 %v4241, 96
        %v5439 = vpop.permute.xlu0 %5438
        %5440 = vrot.lane.b32.xlu0 %v4242, 96
        %v5441 = vpop.permute.xlu0 %5440
        %5442 = vrot.lane.b32.xlu0 %v4243, 96
        %v5443 = vpop.permute.xlu0 %5442
        %5444 = vrot.lane.b32.xlu0 %v4244, 96
        %v5445 = vpop.permute.xlu0 %5444
        %5446 = vrot.lane.b32.xlu0 %v4245, 96
        %v5447 = vpop.permute.xlu0 %5446
        %5448 = vrot.lane.b32.xlu0 %v4246, 96
        %v5449 = vpop.permute.xlu0 %5448
        %5450 = vrot.lane.b32.xlu0 %v4247, 96
        %v5451 = vpop.permute.xlu0 %5450
        %5460 = vmatpush.bf16.msra.mxu0 %v5451
        %5461 = vmatpush.bf16.msra.mxu0 %v5449
        %5462 = vmatpush.bf16.msra.mxu0 %v5447
        %5463 = vmatpush.bf16.msra.mxu0 %v5445
        %5464 = vmatpush.bf16.msra.mxu0 %v5443
        %5465 = vmatpush.bf16.msra.mxu0 %v5441
        %5466 = vmatpush.bf16.msra.mxu0 %v5439
        %5467 = vmatpush.bf16.msra.mxu0 %v5437
        %5468 = vmatmul.bf16.gmra.mxu0 %v5428
        %v5469 = vpop.f32.mrf.mxu0
        %v5470 = vadd.f32 0.0, %v5469
        %v5471 = vpop.f32.mrf.mxu0
        %v5472 = vadd.f32 0.0, %v5471
        %5473 = vmatmul.bf16.gmra.mxu0 %v5429
        %v5474 = vpop.f32.mrf.mxu0
        %v5475 = vadd.f32 0.0, %v5474
        %v5476 = vpop.f32.mrf.mxu0
        %v5477 = vadd.f32 0.0, %v5476
        %5478 = vmatmul.bf16.gmra.mxu0 %v5430
        %v5479 = vpop.f32.mrf.mxu0
        %v5480 = vadd.f32 0.0, %v5479
        %v5481 = vpop.f32.mrf.mxu0
        %v5482 = vadd.f32 0.0, %v5481
        %5483 = vmatmul.bf16.gmra.mxu0 %v5431
        %v5484 = vpop.f32.mrf.mxu0
        %v5485 = vadd.f32 0.0, %v5484
        %v5486 = vpop.f32.mrf.mxu0
        %v5487 = vadd.f32 0.0, %v5486
        %5488 = vmatmul.bf16.gmra.mxu0 %v5432
        %v5489 = vpop.f32.mrf.mxu0
        %v5490 = vadd.f32 0.0, %v5489
        %v5491 = vpop.f32.mrf.mxu0
        %v5492 = vadd.f32 0.0, %v5491
        %5493 = vmatmul.bf16.gmra.mxu0 %v5433
        %v5494 = vpop.f32.mrf.mxu0
        %v5495 = vadd.f32 0.0, %v5494
        %v5496 = vpop.f32.mrf.mxu0
        %v5497 = vadd.f32 0.0, %v5496
        %5498 = vmatmul.bf16.gmra.mxu0 %v5434
        %v5499 = vpop.f32.mrf.mxu0
        %v5500 = vadd.f32 0.0, %v5499
        %v5501 = vpop.f32.mrf.mxu0
        %v5502 = vadd.f32 0.0, %v5501
        %5503 = vmatmul.bf16.gmra.mxu0 %v5435
        %v5504 = vpop.f32.mrf.mxu0
        %v5505 = vadd.f32 0.0, %v5504
        %v5506 = vpop.f32.mrf.mxu0
        %v5507 = vadd.f32 0.0, %v5506
        %5508 = vdwg.mxu0
        %5509 = vrot.lane.b32.xlu0 %v3728, 80
        %v5510 = vpop.permute.xlu0 %5509
        %5511 = vrot.lane.b32.xlu0 %v3729, 80
        %v5512 = vpop.permute.xlu0 %5511
        %5513 = vrot.lane.b32.xlu0 %v3730, 80
        %v5514 = vpop.permute.xlu0 %5513
        %5515 = vrot.lane.b32.xlu0 %v3731, 80
        %v5516 = vpop.permute.xlu0 %5515
        %5517 = vrot.lane.b32.xlu0 %v3732, 80
        %v5518 = vpop.permute.xlu0 %5517
        %5519 = vrot.lane.b32.xlu0 %v3733, 80
        %v5520 = vpop.permute.xlu0 %5519
        %5521 = vrot.lane.b32.xlu0 %v3734, 80
        %v5522 = vpop.permute.xlu0 %5521
        %5523 = vrot.lane.b32.xlu0 %v3735, 80
        %v5524 = vpop.permute.xlu0 %5523
        %5525 = vrot.lane.b32.xlu0 %v3736, 80
        %v5526 = vpop.permute.xlu0 %5525
        %5527 = vrot.lane.b32.xlu0 %v3737, 80
        %v5528 = vpop.permute.xlu0 %5527
        %5529 = vrot.lane.b32.xlu0 %v3738, 80
        %v5530 = vpop.permute.xlu0 %5529
        %5531 = vrot.lane.b32.xlu0 %v3739, 80
        %v5532 = vpop.permute.xlu0 %5531
        %5533 = vrot.lane.b32.xlu0 %v3740, 80
        %v5534 = vpop.permute.xlu0 %5533
        %5535 = vrot.lane.b32.xlu0 %v3741, 80
        %v5536 = vpop.permute.xlu0 %5535
        %5537 = vrot.lane.b32.xlu0 %v3742, 80
        %v5538 = vpop.permute.xlu0 %5537
        %5539 = vrot.lane.b32.xlu0 %v3743, 80
        %v5540 = vpop.permute.xlu0 %5539
        %v5542 = vsel %vm3744, %v5510, 0
        %v5545 = vsel %vm3744, %v5512, 0
        %v5548 = vsel %vm3744, %v5514, 0
        %v5551 = vsel %vm3744, %v5516, 0
        %v5554 = vsel %vm3744, %v5518, 0
        %v5557 = vsel %vm3744, %v5520, 0
        %v5560 = vsel %vm3744, %v5522, 0
        %v5563 = vsel %vm3744, %v5524, 0
        %v5566 = vsel %vm3744, %v5526, 0
        %v5569 = vsel %vm3744, %v5528, 0
        %v5572 = vsel %vm3744, %v5530, 0
        %v5575 = vsel %vm3744, %v5532, 0
        %v5578 = vsel %vm3744, %v5534, 0
        %v5581 = vsel %vm3744, %v5536, 0
        %v5584 = vsel %vm3744, %v5538, 0
        %v5587 = vsel %vm3744, %v5540, 0
        %5589 = vmatpush.bf16.xpose.msra.mxu0 %v5587
        %5590 = vmatpush.bf16.xpose.msra.mxu0 %v5584
        %5591 = vmatpush.bf16.xpose.msra.mxu0 %v5581
        %5592 = vmatpush.bf16.xpose.msra.mxu0 %v5578
        %5593 = vmatpush.bf16.xpose.msra.mxu0 %v5575
        %5594 = vmatpush.bf16.xpose.msra.mxu0 %v5572
        %5595 = vmatpush.bf16.xpose.msra.mxu0 %v5569
        %5596 = vmatpush.bf16.xpose.msra.mxu0 %v5566
        %5597 = vmatmul.bf16.gmra.mxu0 %v5542
        %v5598 = vpop.f32.mrf.mxu0
        %v5599 = vadd.f32 0.0, %v5598
        %v5600 = vpop.f32.mrf.mxu0
        %v5601 = vadd.f32 0.0, %v5600
        %5602 = vmatmul.bf16.gmra.mxu0 %v5545
        %v5603 = vpop.f32.mrf.mxu0
        %v5604 = vadd.f32 0.0, %v5603
        %v5605 = vpop.f32.mrf.mxu0
        %v5606 = vadd.f32 0.0, %v5605
        %5607 = vmatmul.bf16.gmra.mxu0 %v5548
        %v5608 = vpop.f32.mrf.mxu0
        %v5609 = vadd.f32 0.0, %v5608
        %v5610 = vpop.f32.mrf.mxu0
        %v5611 = vadd.f32 0.0, %v5610
        %5612 = vmatmul.bf16.gmra.mxu0 %v5551
        %v5613 = vpop.f32.mrf.mxu0
        %v5614 = vadd.f32 0.0, %v5613
        %v5615 = vpop.f32.mrf.mxu0
        %v5616 = vadd.f32 0.0, %v5615
        %5617 = vmatmul.bf16.gmra.mxu0 %v5554
        %v5618 = vpop.f32.mrf.mxu0
        %v5619 = vadd.f32 0.0, %v5618
        %v5620 = vpop.f32.mrf.mxu0
        %v5621 = vadd.f32 0.0, %v5620
        %5622 = vmatmul.bf16.gmra.mxu0 %v5557
        %v5623 = vpop.f32.mrf.mxu0
        %v5624 = vadd.f32 0.0, %v5623
        %v5625 = vpop.f32.mrf.mxu0
        %v5626 = vadd.f32 0.0, %v5625
        %5627 = vmatmul.bf16.gmra.mxu0 %v5560
        %v5628 = vpop.f32.mrf.mxu0
        %v5629 = vadd.f32 0.0, %v5628
        %v5630 = vpop.f32.mrf.mxu0
        %v5631 = vadd.f32 0.0, %v5630
        %5632 = vmatmul.bf16.gmra.mxu0 %v5563
        %v5633 = vpop.f32.mrf.mxu0
        %v5634 = vadd.f32 0.0, %v5633
        %v5635 = vpop.f32.mrf.mxu0
        %v5636 = vadd.f32 0.0, %v5635
        %5637 = vdwg.mxu0
        %v5638 = vmul.f32 %v5599, %v3843
        %v5639 = vmul.f32 %v5601, %v3843
        %v5640 = vmul.f32 %v5604, %v3843
        %v5641 = vmul.f32 %v5606, %v3843
        %v5642 = vmul.f32 %v5609, %v3843
        %v5643 = vmul.f32 %v5611, %v3843
        %v5644 = vmul.f32 %v5614, %v3843
        %v5645 = vmul.f32 %v5616, %v3843
        %v5646 = vmul.f32 %v5619, %v3843
        %v5647 = vmul.f32 %v5621, %v3843
        %v5648 = vmul.f32 %v5624, %v3843
        %v5649 = vmul.f32 %v5626, %v3843
        %v5650 = vmul.f32 %v5629, %v3843
        %v5651 = vmul.f32 %v5631, %v3843
        %v5652 = vmul.f32 %v5634, %v3843
        %v5653 = vmul.f32 %v5636, %v3843
        %v5654 = vadd.f32 %v5638, %v3862
        %v5655 = vadd.f32 %v5639, %v3862
        %v5656 = vadd.f32 %v5640, %v3862
        %v5657 = vadd.f32 %v5641, %v3862
        %v5658 = vadd.f32 %v5642, %v3862
        %v5659 = vadd.f32 %v5643, %v3862
        %v5660 = vadd.f32 %v5644, %v3862
        %v5661 = vadd.f32 %v5645, %v3862
        %v5662 = vadd.f32 %v5646, %v3862
        %v5663 = vadd.f32 %v5647, %v3862
        %v5664 = vadd.f32 %v5648, %v3862
        %v5665 = vadd.f32 %v5649, %v3862
        %v5666 = vadd.f32 %v5650, %v3862
        %v5667 = vadd.f32 %v5651, %v3862
        %v5668 = vadd.f32 %v5652, %v3862
        %v5669 = vadd.f32 %v5653, %v3862
        %5670 = vmax.xlane.f32.xlu0 %v5654
        %v5671 = vpop.xlane.xlu0 %5670
        %5672 = vmax.xlane.f32.xlu0 %v5655
        %v5673 = vpop.xlane.xlu0 %5672
        %5674 = vmax.xlane.f32.xlu0 %v5656
        %v5675 = vpop.xlane.xlu0 %5674
        %5676 = vmax.xlane.f32.xlu0 %v5657
        %v5677 = vpop.xlane.xlu0 %5676
        %5678 = vmax.xlane.f32.xlu0 %v5658
        %v5679 = vpop.xlane.xlu0 %5678
        %5680 = vmax.xlane.f32.xlu0 %v5659
        %v5681 = vpop.xlane.xlu0 %5680
        %5682 = vmax.xlane.f32.xlu0 %v5660
        %v5683 = vpop.xlane.xlu0 %5682
        %5684 = vmax.xlane.f32.xlu0 %v5661
        %v5685 = vpop.xlane.xlu0 %5684
        %5686 = vmax.xlane.f32.xlu0 %v5662
        %v5687 = vpop.xlane.xlu0 %5686
        %5688 = vmax.xlane.f32.xlu0 %v5663
        %v5689 = vpop.xlane.xlu0 %5688
        %5690 = vmax.xlane.f32.xlu0 %v5664
        %v5691 = vpop.xlane.xlu0 %5690
        %5692 = vmax.xlane.f32.xlu0 %v5665
        %v5693 = vpop.xlane.xlu0 %5692
        %5694 = vmax.xlane.f32.xlu0 %v5666
        %v5695 = vpop.xlane.xlu0 %5694
        %5696 = vmax.xlane.f32.xlu0 %v5667
        %v5697 = vpop.xlane.xlu0 %5696
        %5698 = vmax.xlane.f32.xlu0 %v5668
        %v5699 = vpop.xlane.xlu0 %5698
        %5700 = vmax.xlane.f32.xlu0 %v5669
        %v5701 = vpop.xlane.xlu0 %5700
        %v5702 = vsub.f32 %v5654, %v5671
        %v5703 = vsub.f32 %v5655, %v5673
        %v5704 = vsub.f32 %v5656, %v5675
        %v5705 = vsub.f32 %v5657, %v5677
        %v5706 = vsub.f32 %v5658, %v5679
        %v5707 = vsub.f32 %v5659, %v5681
        %v5708 = vsub.f32 %v5660, %v5683
        %v5709 = vsub.f32 %v5661, %v5685
        %v5710 = vsub.f32 %v5662, %v5687
        %v5711 = vsub.f32 %v5663, %v5689
        %v5712 = vsub.f32 %v5664, %v5691
        %v5713 = vsub.f32 %v5665, %v5693
        %v5714 = vsub.f32 %v5666, %v5695
        %v5715 = vsub.f32 %v5667, %v5697
        %v5716 = vsub.f32 %v5668, %v5699
        %v5717 = vsub.f32 %v5669, %v5701
        %v5718 = vmul.f32 %v5702, 1.442695
        %v5719 = vpow.pop %v5718
        %v5720 = vmul.f32 %v5703, 1.442695
        %v5721 = vpow.pop %v5720
        %v5722 = vmul.f32 %v5704, 1.442695
        %v5723 = vpow.pop %v5722
        %v5724 = vmul.f32 %v5705, 1.442695
        %v5725 = vpow.pop %v5724
        %v5726 = vmul.f32 %v5706, 1.442695
        %v5727 = vpow.pop %v5726
        %v5728 = vmul.f32 %v5707, 1.442695
        %v5729 = vpow.pop %v5728
        %v5730 = vmul.f32 %v5708, 1.442695
        %v5731 = vpow.pop %v5730
        %v5732 = vmul.f32 %v5709, 1.442695
        %v5733 = vpow.pop %v5732
        %v5734 = vmul.f32 %v5710, 1.442695
        %v5735 = vpow.pop %v5734
        %v5736 = vmul.f32 %v5711, 1.442695
        %v5737 = vpow.pop %v5736
        %v5738 = vmul.f32 %v5712, 1.442695
        %v5739 = vpow.pop %v5738
        %v5740 = vmul.f32 %v5713, 1.442695
        %v5741 = vpow.pop %v5740
        %v5742 = vmul.f32 %v5714, 1.442695
        %v5743 = vpow.pop %v5742
        %v5744 = vmul.f32 %v5715, 1.442695
        %v5745 = vpow.pop %v5744
        %v5746 = vmul.f32 %v5716, 1.442695
        %v5747 = vpow.pop %v5746
        %v5748 = vmul.f32 %v5717, 1.442695
        %v5749 = vpow.pop %v5748
        %5750 = vadd.xlane.f32.xlu0 %v5719
        %v5751 = vpop.xlane.xlu0 %5750
        %5752 = vadd.xlane.f32.xlu0 %v5721
        %v5753 = vpop.xlane.xlu0 %5752
        %5754 = vadd.xlane.f32.xlu0 %v5723
        %v5755 = vpop.xlane.xlu0 %5754
        %5756 = vadd.xlane.f32.xlu0 %v5725
        %v5757 = vpop.xlane.xlu0 %5756
        %5758 = vadd.xlane.f32.xlu0 %v5727
        %v5759 = vpop.xlane.xlu0 %5758
        %5760 = vadd.xlane.f32.xlu0 %v5729
        %v5761 = vpop.xlane.xlu0 %5760
        %5762 = vadd.xlane.f32.xlu0 %v5731
        %v5763 = vpop.xlane.xlu0 %5762
        %5764 = vadd.xlane.f32.xlu0 %v5733
        %v5765 = vpop.xlane.xlu0 %5764
        %5766 = vadd.xlane.f32.xlu0 %v5735
        %v5767 = vpop.xlane.xlu0 %5766
        %5768 = vadd.xlane.f32.xlu0 %v5737
        %v5769 = vpop.xlane.xlu0 %5768
        %5770 = vadd.xlane.f32.xlu0 %v5739
        %v5771 = vpop.xlane.xlu0 %5770
        %5772 = vadd.xlane.f32.xlu0 %v5741
        %v5773 = vpop.xlane.xlu0 %5772
        %5774 = vadd.xlane.f32.xlu0 %v5743
        %v5775 = vpop.xlane.xlu0 %5774
        %5776 = vadd.xlane.f32.xlu0 %v5745
        %v5777 = vpop.xlane.xlu0 %5776
        %5778 = vadd.xlane.f32.xlu0 %v5747
        %v5779 = vpop.xlane.xlu0 %5778
        %5780 = vadd.xlane.f32.xlu0 %v5749
        %v5781 = vpop.xlane.xlu0 %5780
        %v5782 = vrcp.pop %v5751
        %v5783 = vmul.f32 %v5751, %v5782
        %v5784 = vsub.f32 1.0, %v5783
        %v5785 = vmul.f32 %v5782, %v5784
        %v5786 = vadd.f32 %v5782, %v5785
        %vm5787 = vweird.f32 %v5751
        %vm5788 = vweird.f32 %v5782
        %vm5789 = vmor %vm5787, %vm5788
        %v5790 = vsel %vm5789, %v5782, %v5786
        %v5791 = vand.u32 2147483647, %v5751
        %vm5792 = vcmp.eq.f32.partialorder %v5791, 8.507059e+37
        %v5793 = vand.u32 %v5751, 2147483648
        %v5794 = vor.u32 1.1754944e-38, %v5793
        %v5795 = vsel %vm5792, %v5794, %v5790
        %v5796 = vmul.f32 %v5719, %v5795
        %v5797 = vrcp.pop %v5753
        %v5798 = vmul.f32 %v5753, %v5797
        %v5799 = vsub.f32 1.0, %v5798
        %v5800 = vmul.f32 %v5797, %v5799
        %v5801 = vadd.f32 %v5797, %v5800
        %vm5802 = vweird.f32 %v5753
        %vm5803 = vweird.f32 %v5797
        %vm5804 = vmor %vm5802, %vm5803
        %v5805 = vsel %vm5804, %v5797, %v5801
        %v5806 = vand.u32 2147483647, %v5753
        %vm5807 = vcmp.eq.f32.partialorder %v5806, 8.507059e+37
        %v5808 = vand.u32 %v5753, 2147483648
        %v5809 = vor.u32 1.1754944e-38, %v5808
        %v5810 = vsel %vm5807, %v5809, %v5805
        %v5811 = vmul.f32 %v5721, %v5810
        %v5812 = vrcp.pop %v5755
        %v5813 = vmul.f32 %v5755, %v5812
        %v5814 = vsub.f32 1.0, %v5813
        %v5815 = vmul.f32 %v5812, %v5814
        %v5816 = vadd.f32 %v5812, %v5815
        %vm5817 = vweird.f32 %v5755
        %vm5818 = vweird.f32 %v5812
        %vm5819 = vmor %vm5817, %vm5818
        %v5820 = vsel %vm5819, %v5812, %v5816
        %v5821 = vand.u32 2147483647, %v5755
        %vm5822 = vcmp.eq.f32.partialorder %v5821, 8.507059e+37
        %v5823 = vand.u32 %v5755, 2147483648
        %v5824 = vor.u32 1.1754944e-38, %v5823
        %v5825 = vsel %vm5822, %v5824, %v5820
        %v5826 = vmul.f32 %v5723, %v5825
        %v5827 = vrcp.pop %v5757
        %v5828 = vmul.f32 %v5757, %v5827
        %v5829 = vsub.f32 1.0, %v5828
        %v5830 = vmul.f32 %v5827, %v5829
        %v5831 = vadd.f32 %v5827, %v5830
        %vm5832 = vweird.f32 %v5757
        %vm5833 = vweird.f32 %v5827
        %vm5834 = vmor %vm5832, %vm5833
        %v5835 = vsel %vm5834, %v5827, %v5831
        %v5836 = vand.u32 2147483647, %v5757
        %vm5837 = vcmp.eq.f32.partialorder %v5836, 8.507059e+37
        %v5838 = vand.u32 %v5757, 2147483648
        %v5839 = vor.u32 1.1754944e-38, %v5838
        %v5840 = vsel %vm5837, %v5839, %v5835
        %v5841 = vmul.f32 %v5725, %v5840
        %v5842 = vrcp.pop %v5759
        %v5843 = vmul.f32 %v5759, %v5842
        %v5844 = vsub.f32 1.0, %v5843
        %v5845 = vmul.f32 %v5842, %v5844
        %v5846 = vadd.f32 %v5842, %v5845
        %vm5847 = vweird.f32 %v5759
        %vm5848 = vweird.f32 %v5842
        %vm5849 = vmor %vm5847, %vm5848
        %v5850 = vsel %vm5849, %v5842, %v5846
        %v5851 = vand.u32 2147483647, %v5759
        %vm5852 = vcmp.eq.f32.partialorder %v5851, 8.507059e+37
        %v5853 = vand.u32 %v5759, 2147483648
        %v5854 = vor.u32 1.1754944e-38, %v5853
        %v5855 = vsel %vm5852, %v5854, %v5850
        %v5856 = vmul.f32 %v5727, %v5855
        %v5857 = vrcp.pop %v5761
        %v5858 = vmul.f32 %v5761, %v5857
        %v5859 = vsub.f32 1.0, %v5858
        %v5860 = vmul.f32 %v5857, %v5859
        %v5861 = vadd.f32 %v5857, %v5860
        %vm5862 = vweird.f32 %v5761
        %vm5863 = vweird.f32 %v5857
        %vm5864 = vmor %vm5862, %vm5863
        %v5865 = vsel %vm5864, %v5857, %v5861
        %v5866 = vand.u32 2147483647, %v5761
        %vm5867 = vcmp.eq.f32.partialorder %v5866, 8.507059e+37
        %v5868 = vand.u32 %v5761, 2147483648
        %v5869 = vor.u32 1.1754944e-38, %v5868
        %v5870 = vsel %vm5867, %v5869, %v5865
        %v5871 = vmul.f32 %v5729, %v5870
        %v5872 = vrcp.pop %v5763
        %v5873 = vmul.f32 %v5763, %v5872
        %v5874 = vsub.f32 1.0, %v5873
        %v5875 = vmul.f32 %v5872, %v5874
        %v5876 = vadd.f32 %v5872, %v5875
        %vm5877 = vweird.f32 %v5763
        %vm5878 = vweird.f32 %v5872
        %vm5879 = vmor %vm5877, %vm5878
        %v5880 = vsel %vm5879, %v5872, %v5876
        %v5881 = vand.u32 2147483647, %v5763
        %vm5882 = vcmp.eq.f32.partialorder %v5881, 8.507059e+37
        %v5883 = vand.u32 %v5763, 2147483648
        %v5884 = vor.u32 1.1754944e-38, %v5883
        %v5885 = vsel %vm5882, %v5884, %v5880
        %v5886 = vmul.f32 %v5731, %v5885
        %v5887 = vrcp.pop %v5765
        %v5888 = vmul.f32 %v5765, %v5887
        %v5889 = vsub.f32 1.0, %v5888
        %v5890 = vmul.f32 %v5887, %v5889
        %v5891 = vadd.f32 %v5887, %v5890
        %vm5892 = vweird.f32 %v5765
        %vm5893 = vweird.f32 %v5887
        %vm5894 = vmor %vm5892, %vm5893
        %v5895 = vsel %vm5894, %v5887, %v5891
        %v5896 = vand.u32 2147483647, %v5765
        %vm5897 = vcmp.eq.f32.partialorder %v5896, 8.507059e+37
        %v5898 = vand.u32 %v5765, 2147483648
        %v5899 = vor.u32 1.1754944e-38, %v5898
        %v5900 = vsel %vm5897, %v5899, %v5895
        %v5901 = vmul.f32 %v5733, %v5900
        %v5902 = vrcp.pop %v5767
        %v5903 = vmul.f32 %v5767, %v5902
        %v5904 = vsub.f32 1.0, %v5903
        %v5905 = vmul.f32 %v5902, %v5904
        %v5906 = vadd.f32 %v5902, %v5905
        %vm5907 = vweird.f32 %v5767
        %vm5908 = vweird.f32 %v5902
        %vm5909 = vmor %vm5907, %vm5908
        %v5910 = vsel %vm5909, %v5902, %v5906
        %v5911 = vand.u32 2147483647, %v5767
        %vm5912 = vcmp.eq.f32.partialorder %v5911, 8.507059e+37
        %v5913 = vand.u32 %v5767, 2147483648
        %v5914 = vor.u32 1.1754944e-38, %v5913
        %v5915 = vsel %vm5912, %v5914, %v5910
        %v5916 = vmul.f32 %v5735, %v5915
        %v5917 = vrcp.pop %v5769
        %v5918 = vmul.f32 %v5769, %v5917
        %v5919 = vsub.f32 1.0, %v5918
        %v5920 = vmul.f32 %v5917, %v5919
        %v5921 = vadd.f32 %v5917, %v5920
        %vm5922 = vweird.f32 %v5769
        %vm5923 = vweird.f32 %v5917
        %vm5924 = vmor %vm5922, %vm5923
        %v5925 = vsel %vm5924, %v5917, %v5921
        %v5926 = vand.u32 2147483647, %v5769
        %vm5927 = vcmp.eq.f32.partialorder %v5926, 8.507059e+37
        %v5928 = vand.u32 %v5769, 2147483648
        %v5929 = vor.u32 1.1754944e-38, %v5928
        %v5930 = vsel %vm5927, %v5929, %v5925
        %v5931 = vmul.f32 %v5737, %v5930
        %v5932 = vrcp.pop %v5771
        %v5933 = vmul.f32 %v5771, %v5932
        %v5934 = vsub.f32 1.0, %v5933
        %v5935 = vmul.f32 %v5932, %v5934
        %v5936 = vadd.f32 %v5932, %v5935
        %vm5937 = vweird.f32 %v5771
        %vm5938 = vweird.f32 %v5932
        %vm5939 = vmor %vm5937, %vm5938
        %v5940 = vsel %vm5939, %v5932, %v5936
        %v5941 = vand.u32 2147483647, %v5771
        %vm5942 = vcmp.eq.f32.partialorder %v5941, 8.507059e+37
        %v5943 = vand.u32 %v5771, 2147483648
        %v5944 = vor.u32 1.1754944e-38, %v5943
        %v5945 = vsel %vm5942, %v5944, %v5940
        %v5946 = vmul.f32 %v5739, %v5945
        %v5947 = vrcp.pop %v5773
        %v5948 = vmul.f32 %v5773, %v5947
        %v5949 = vsub.f32 1.0, %v5948
        %v5950 = vmul.f32 %v5947, %v5949
        %v5951 = vadd.f32 %v5947, %v5950
        %vm5952 = vweird.f32 %v5773
        %vm5953 = vweird.f32 %v5947
        %vm5954 = vmor %vm5952, %vm5953
        %v5955 = vsel %vm5954, %v5947, %v5951
        %v5956 = vand.u32 2147483647, %v5773
        %vm5957 = vcmp.eq.f32.partialorder %v5956, 8.507059e+37
        %v5958 = vand.u32 %v5773, 2147483648
        %v5959 = vor.u32 1.1754944e-38, %v5958
        %v5960 = vsel %vm5957, %v5959, %v5955
        %v5961 = vmul.f32 %v5741, %v5960
        %v5962 = vrcp.pop %v5775
        %v5963 = vmul.f32 %v5775, %v5962
        %v5964 = vsub.f32 1.0, %v5963
        %v5965 = vmul.f32 %v5962, %v5964
        %v5966 = vadd.f32 %v5962, %v5965
        %vm5967 = vweird.f32 %v5775
        %vm5968 = vweird.f32 %v5962
        %vm5969 = vmor %vm5967, %vm5968
        %v5970 = vsel %vm5969, %v5962, %v5966
        %v5971 = vand.u32 2147483647, %v5775
        %vm5972 = vcmp.eq.f32.partialorder %v5971, 8.507059e+37
        %v5973 = vand.u32 %v5775, 2147483648
        %v5974 = vor.u32 1.1754944e-38, %v5973
        %v5975 = vsel %vm5972, %v5974, %v5970
        %v5976 = vmul.f32 %v5743, %v5975
        %v5977 = vrcp.pop %v5777
        %v5978 = vmul.f32 %v5777, %v5977
        %v5979 = vsub.f32 1.0, %v5978
        %v5980 = vmul.f32 %v5977, %v5979
        %v5981 = vadd.f32 %v5977, %v5980
        %vm5982 = vweird.f32 %v5777
        %vm5983 = vweird.f32 %v5977
        %vm5984 = vmor %vm5982, %vm5983
        %v5985 = vsel %vm5984, %v5977, %v5981
        %v5986 = vand.u32 2147483647, %v5777
        %vm5987 = vcmp.eq.f32.partialorder %v5986, 8.507059e+37
        %v5988 = vand.u32 %v5777, 2147483648
        %v5989 = vor.u32 1.1754944e-38, %v5988
        %v5990 = vsel %vm5987, %v5989, %v5985
        %v5991 = vmul.f32 %v5745, %v5990
        %v5992 = vrcp.pop %v5779
        %v5993 = vmul.f32 %v5779, %v5992
        %v5994 = vsub.f32 1.0, %v5993
        %v5995 = vmul.f32 %v5992, %v5994
        %v5996 = vadd.f32 %v5992, %v5995
        %vm5997 = vweird.f32 %v5779
        %vm5998 = vweird.f32 %v5992
        %vm5999 = vmor %vm5997, %vm5998
        %v6000 = vsel %vm5999, %v5992, %v5996
        %v6001 = vand.u32 2147483647, %v5779
        %vm6002 = vcmp.eq.f32.partialorder %v6001, 8.507059e+37
        %v6003 = vand.u32 %v5779, 2147483648
        %v6004 = vor.u32 1.1754944e-38, %v6003
        %v6005 = vsel %vm6002, %v6004, %v6000
        %v6006 = vmul.f32 %v5747, %v6005
        %v6007 = vrcp.pop %v5781
        %v6008 = vmul.f32 %v5781, %v6007
        %v6009 = vsub.f32 1.0, %v6008
        %v6010 = vmul.f32 %v6007, %v6009
        %v6011 = vadd.f32 %v6007, %v6010
        %vm6012 = vweird.f32 %v5781
        %vm6013 = vweird.f32 %v6007
        %vm6014 = vmor %vm6012, %vm6013
        %v6015 = vsel %vm6014, %v6007, %v6011
        %v6016 = vand.u32 2147483647, %v5781
        %vm6017 = vcmp.eq.f32.partialorder %v6016, 8.507059e+37
        %v6018 = vand.u32 %v5781, 2147483648
        %v6019 = vor.u32 1.1754944e-38, %v6018
        %v6020 = vsel %vm6017, %v6019, %v6015
        %v6021 = vmul.f32 %v5749, %v6020
        %v6022 = vpack.c.bf16 %v5811, %v5796
        %v6023 = vpack.c.bf16 %v5841, %v5826
        %v6024 = vpack.c.bf16 %v5871, %v5856
        %v6025 = vpack.c.bf16 %v5901, %v5886
        %v6026 = vpack.c.bf16 %v5931, %v5916
        %v6027 = vpack.c.bf16 %v5961, %v5946
        %v6028 = vpack.c.bf16 %v5991, %v5976
        %v6029 = vpack.c.bf16 %v6021, %v6006
        %6030 = vrot.lane.b32.xlu0 %v4240, 80
        %v6031 = vpop.permute.xlu0 %6030
        %6032 = vrot.lane.b32.xlu0 %v4241, 80
        %v6033 = vpop.permute.xlu0 %6032
        %6034 = vrot.lane.b32.xlu0 %v4242, 80
        %v6035 = vpop.permute.xlu0 %6034
        %6036 = vrot.lane.b32.xlu0 %v4243, 80
        %v6037 = vpop.permute.xlu0 %6036
        %6038 = vrot.lane.b32.xlu0 %v4244, 80
        %v6039 = vpop.permute.xlu0 %6038
        %6040 = vrot.lane.b32.xlu0 %v4245, 80
        %v6041 = vpop.permute.xlu0 %6040
        %6042 = vrot.lane.b32.xlu0 %v4246, 80
        %v6043 = vpop.permute.xlu0 %6042
        %6044 = vrot.lane.b32.xlu0 %v4247, 80
        %v6045 = vpop.permute.xlu0 %6044
        %6054 = vmatpush.bf16.msra.mxu0 %v6045
        %6055 = vmatpush.bf16.msra.mxu0 %v6043
        %6056 = vmatpush.bf16.msra.mxu0 %v6041
        %6057 = vmatpush.bf16.msra.mxu0 %v6039
        %6058 = vmatpush.bf16.msra.mxu0 %v6037
        %6059 = vmatpush.bf16.msra.mxu0 %v6035
        %6060 = vmatpush.bf16.msra.mxu0 %v6033
        %6061 = vmatpush.bf16.msra.mxu0 %v6031
        %6062 = vmatmul.bf16.gmra.mxu0 %v6022
        %v6063 = vpop.f32.mrf.mxu0
        %v6064 = vadd.f32 0.0, %v6063
        %v6065 = vpop.f32.mrf.mxu0
        %v6066 = vadd.f32 0.0, %v6065
        %6067 = vmatmul.bf16.gmra.mxu0 %v6023
        %v6068 = vpop.f32.mrf.mxu0
        %v6069 = vadd.f32 0.0, %v6068
        %v6070 = vpop.f32.mrf.mxu0
        %v6071 = vadd.f32 0.0, %v6070
        %6072 = vmatmul.bf16.gmra.mxu0 %v6024
        %v6073 = vpop.f32.mrf.mxu0
        %v6074 = vadd.f32 0.0, %v6073
        %v6075 = vpop.f32.mrf.mxu0
        %v6076 = vadd.f32 0.0, %v6075
        %6077 = vmatmul.bf16.gmra.mxu0 %v6025
        %v6078 = vpop.f32.mrf.mxu0
        %v6079 = vadd.f32 0.0, %v6078
        %v6080 = vpop.f32.mrf.mxu0
        %v6081 = vadd.f32 0.0, %v6080
        %6082 = vmatmul.bf16.gmra.mxu0 %v6026
        %v6083 = vpop.f32.mrf.mxu0
        %v6084 = vadd.f32 0.0, %v6083
        %v6085 = vpop.f32.mrf.mxu0
        %v6086 = vadd.f32 0.0, %v6085
        %6087 = vmatmul.bf16.gmra.mxu0 %v6027
        %v6088 = vpop.f32.mrf.mxu0
        %v6089 = vadd.f32 0.0, %v6088
        %v6090 = vpop.f32.mrf.mxu0
        %v6091 = vadd.f32 0.0, %v6090
        %6092 = vmatmul.bf16.gmra.mxu0 %v6028
        %v6093 = vpop.f32.mrf.mxu0
        %v6094 = vadd.f32 0.0, %v6093
        %v6095 = vpop.f32.mrf.mxu0
        %v6096 = vadd.f32 0.0, %v6095
        %6097 = vmatmul.bf16.gmra.mxu0 %v6029
        %v6098 = vpop.f32.mrf.mxu0
        %v6099 = vadd.f32 0.0, %v6098
        %v6100 = vpop.f32.mrf.mxu0
        %v6101 = vadd.f32 0.0, %v6100
        %6102 = vdwg.mxu0
        %6103 = vrot.lane.b32.xlu0 %v3728, 64
        %v6104 = vpop.permute.xlu0 %6103
        %6105 = vrot.lane.b32.xlu0 %v3729, 64
        %v6106 = vpop.permute.xlu0 %6105
        %6107 = vrot.lane.b32.xlu0 %v3730, 64
        %v6108 = vpop.permute.xlu0 %6107
        %6109 = vrot.lane.b32.xlu0 %v3731, 64
        %v6110 = vpop.permute.xlu0 %6109
        %6111 = vrot.lane.b32.xlu0 %v3732, 64
        %v6112 = vpop.permute.xlu0 %6111
        %6113 = vrot.lane.b32.xlu0 %v3733, 64
        %v6114 = vpop.permute.xlu0 %6113
        %6115 = vrot.lane.b32.xlu0 %v3734, 64
        %v6116 = vpop.permute.xlu0 %6115
        %6117 = vrot.lane.b32.xlu0 %v3735, 64
        %v6118 = vpop.permute.xlu0 %6117
        %6119 = vrot.lane.b32.xlu0 %v3736, 64
        %v6120 = vpop.permute.xlu0 %6119
        %6121 = vrot.lane.b32.xlu0 %v3737, 64
        %v6122 = vpop.permute.xlu0 %6121
        %6123 = vrot.lane.b32.xlu0 %v3738, 64
        %v6124 = vpop.permute.xlu0 %6123
        %6125 = vrot.lane.b32.xlu0 %v3739, 64
        %v6126 = vpop.permute.xlu0 %6125
        %6127 = vrot.lane.b32.xlu0 %v3740, 64
        %v6128 = vpop.permute.xlu0 %6127
        %6129 = vrot.lane.b32.xlu0 %v3741, 64
        %v6130 = vpop.permute.xlu0 %6129
        %6131 = vrot.lane.b32.xlu0 %v3742, 64
        %v6132 = vpop.permute.xlu0 %6131
        %6133 = vrot.lane.b32.xlu0 %v3743, 64
        %v6134 = vpop.permute.xlu0 %6133
        %v6136 = vsel %vm3744, %v6104, 0
        %v6139 = vsel %vm3744, %v6106, 0
        %v6142 = vsel %vm3744, %v6108, 0
        %v6145 = vsel %vm3744, %v6110, 0
        %v6148 = vsel %vm3744, %v6112, 0
        %v6151 = vsel %vm3744, %v6114, 0
        %v6154 = vsel %vm3744, %v6116, 0
        %v6157 = vsel %vm3744, %v6118, 0
        %v6160 = vsel %vm3744, %v6120, 0
        %v6163 = vsel %vm3744, %v6122, 0
        %v6166 = vsel %vm3744, %v6124, 0
        %v6169 = vsel %vm3744, %v6126, 0
        %v6172 = vsel %vm3744, %v6128, 0
        %v6175 = vsel %vm3744, %v6130, 0
        %v6178 = vsel %vm3744, %v6132, 0
        %v6181 = vsel %vm3744, %v6134, 0
        %6183 = vmatpush.bf16.xpose.msra.mxu0 %v6181
        %6184 = vmatpush.bf16.xpose.msra.mxu0 %v6178
        %6185 = vmatpush.bf16.xpose.msra.mxu0 %v6175
        %6186 = vmatpush.bf16.xpose.msra.mxu0 %v6172
        %6187 = vmatpush.bf16.xpose.msra.mxu0 %v6169
        %6188 = vmatpush.bf16.xpose.msra.mxu0 %v6166
        %6189 = vmatpush.bf16.xpose.msra.mxu0 %v6163
        %6190 = vmatpush.bf16.xpose.msra.mxu0 %v6160
        %6191 = vmatmul.bf16.gmra.mxu0 %v6136
        %v6192 = vpop.f32.mrf.mxu0
        %v6193 = vadd.f32 0.0, %v6192
        %v6194 = vpop.f32.mrf.mxu0
        %v6195 = vadd.f32 0.0, %v6194
        %6196 = vmatmul.bf16.gmra.mxu0 %v6139
        %v6197 = vpop.f32.mrf.mxu0
        %v6198 = vadd.f32 0.0, %v6197
        %v6199 = vpop.f32.mrf.mxu0
        %v6200 = vadd.f32 0.0, %v6199
        %6201 = vmatmul.bf16.gmra.mxu0 %v6142
        %v6202 = vpop.f32.mrf.mxu0
        %v6203 = vadd.f32 0.0, %v6202
        %v6204 = vpop.f32.mrf.mxu0
        %v6205 = vadd.f32 0.0, %v6204
        %6206 = vmatmul.bf16.gmra.mxu0 %v6145
        %v6207 = vpop.f32.mrf.mxu0
        %v6208 = vadd.f32 0.0, %v6207
        %v6209 = vpop.f32.mrf.mxu0
        %v6210 = vadd.f32 0.0, %v6209
        %6211 = vmatmul.bf16.gmra.mxu0 %v6148
        %v6212 = vpop.f32.mrf.mxu0
        %v6213 = vadd.f32 0.0, %v6212
        %v6214 = vpop.f32.mrf.mxu0
        %v6215 = vadd.f32 0.0, %v6214
        %6216 = vmatmul.bf16.gmra.mxu0 %v6151
        %v6217 = vpop.f32.mrf.mxu0
        %v6218 = vadd.f32 0.0, %v6217
        %v6219 = vpop.f32.mrf.mxu0
        %v6220 = vadd.f32 0.0, %v6219
        %6221 = vmatmul.bf16.gmra.mxu0 %v6154
        %v6222 = vpop.f32.mrf.mxu0
        %v6223 = vadd.f32 0.0, %v6222
        %v6224 = vpop.f32.mrf.mxu0
        %v6225 = vadd.f32 0.0, %v6224
        %6226 = vmatmul.bf16.gmra.mxu0 %v6157
        %v6227 = vpop.f32.mrf.mxu0
        %v6228 = vadd.f32 0.0, %v6227
        %v6229 = vpop.f32.mrf.mxu0
        %v6230 = vadd.f32 0.0, %v6229
        %6231 = vdwg.mxu0
        %v6232 = vmul.f32 %v6193, %v3843
        %v6233 = vmul.f32 %v6195, %v3843
        %v6234 = vmul.f32 %v6198, %v3843
        %v6235 = vmul.f32 %v6200, %v3843
        %v6236 = vmul.f32 %v6203, %v3843
        %v6237 = vmul.f32 %v6205, %v3843
        %v6238 = vmul.f32 %v6208, %v3843
        %v6239 = vmul.f32 %v6210, %v3843
        %v6240 = vmul.f32 %v6213, %v3843
        %v6241 = vmul.f32 %v6215, %v3843
        %v6242 = vmul.f32 %v6218, %v3843
        %v6243 = vmul.f32 %v6220, %v3843
        %v6244 = vmul.f32 %v6223, %v3843
        %v6245 = vmul.f32 %v6225, %v3843
        %v6246 = vmul.f32 %v6228, %v3843
        %v6247 = vmul.f32 %v6230, %v3843
        %v6248 = vadd.f32 %v6232, %v3862
        %v6249 = vadd.f32 %v6233, %v3862
        %v6250 = vadd.f32 %v6234, %v3862
        %v6251 = vadd.f32 %v6235, %v3862
        %v6252 = vadd.f32 %v6236, %v3862
        %v6253 = vadd.f32 %v6237, %v3862
        %v6254 = vadd.f32 %v6238, %v3862
        %v6255 = vadd.f32 %v6239, %v3862
        %v6256 = vadd.f32 %v6240, %v3862
        %v6257 = vadd.f32 %v6241, %v3862
        %v6258 = vadd.f32 %v6242, %v3862
        %v6259 = vadd.f32 %v6243, %v3862
        %v6260 = vadd.f32 %v6244, %v3862
        %v6261 = vadd.f32 %v6245, %v3862
        %v6262 = vadd.f32 %v6246, %v3862
        %v6263 = vadd.f32 %v6247, %v3862
        %6264 = vmax.xlane.f32.xlu0 %v6248
        %v6265 = vpop.xlane.xlu0 %6264
        %6266 = vmax.xlane.f32.xlu0 %v6249
        %v6267 = vpop.xlane.xlu0 %6266
        %6268 = vmax.xlane.f32.xlu0 %v6250
        %v6269 = vpop.xlane.xlu0 %6268
        %6270 = vmax.xlane.f32.xlu0 %v6251
        %v6271 = vpop.xlane.xlu0 %6270
        %6272 = vmax.xlane.f32.xlu0 %v6252
        %v6273 = vpop.xlane.xlu0 %6272
        %6274 = vmax.xlane.f32.xlu0 %v6253
        %v6275 = vpop.xlane.xlu0 %6274
        %6276 = vmax.xlane.f32.xlu0 %v6254
        %v6277 = vpop.xlane.xlu0 %6276
        %6278 = vmax.xlane.f32.xlu0 %v6255
        %v6279 = vpop.xlane.xlu0 %6278
        %6280 = vmax.xlane.f32.xlu0 %v6256
        %v6281 = vpop.xlane.xlu0 %6280
        %6282 = vmax.xlane.f32.xlu0 %v6257
        %v6283 = vpop.xlane.xlu0 %6282
        %6284 = vmax.xlane.f32.xlu0 %v6258
        %v6285 = vpop.xlane.xlu0 %6284
        %6286 = vmax.xlane.f32.xlu0 %v6259
        %v6287 = vpop.xlane.xlu0 %6286
        %6288 = vmax.xlane.f32.xlu0 %v6260
        %v6289 = vpop.xlane.xlu0 %6288
        %6290 = vmax.xlane.f32.xlu0 %v6261
        %v6291 = vpop.xlane.xlu0 %6290
        %6292 = vmax.xlane.f32.xlu0 %v6262
        %v6293 = vpop.xlane.xlu0 %6292
        %6294 = vmax.xlane.f32.xlu0 %v6263
        %v6295 = vpop.xlane.xlu0 %6294
        %v6296 = vsub.f32 %v6248, %v6265
        %v6297 = vsub.f32 %v6249, %v6267
        %v6298 = vsub.f32 %v6250, %v6269
        %v6299 = vsub.f32 %v6251, %v6271
        %v6300 = vsub.f32 %v6252, %v6273
        %v6301 = vsub.f32 %v6253, %v6275
        %v6302 = vsub.f32 %v6254, %v6277
        %v6303 = vsub.f32 %v6255, %v6279
        %v6304 = vsub.f32 %v6256, %v6281
        %v6305 = vsub.f32 %v6257, %v6283
        %v6306 = vsub.f32 %v6258, %v6285
        %v6307 = vsub.f32 %v6259, %v6287
        %v6308 = vsub.f32 %v6260, %v6289
        %v6309 = vsub.f32 %v6261, %v6291
        %v6310 = vsub.f32 %v6262, %v6293
        %v6311 = vsub.f32 %v6263, %v6295
        %v6312 = vmul.f32 %v6296, 1.442695
        %v6313 = vpow.pop %v6312
        %v6314 = vmul.f32 %v6297, 1.442695
        %v6315 = vpow.pop %v6314
        %v6316 = vmul.f32 %v6298, 1.442695
        %v6317 = vpow.pop %v6316
        %v6318 = vmul.f32 %v6299, 1.442695
        %v6319 = vpow.pop %v6318
        %v6320 = vmul.f32 %v6300, 1.442695
        %v6321 = vpow.pop %v6320
        %v6322 = vmul.f32 %v6301, 1.442695
        %v6323 = vpow.pop %v6322
        %v6324 = vmul.f32 %v6302, 1.442695
        %v6325 = vpow.pop %v6324
        %v6326 = vmul.f32 %v6303, 1.442695
        %v6327 = vpow.pop %v6326
        %v6328 = vmul.f32 %v6304, 1.442695
        %v6329 = vpow.pop %v6328
        %v6330 = vmul.f32 %v6305, 1.442695
        %v6331 = vpow.pop %v6330
        %v6332 = vmul.f32 %v6306, 1.442695
        %v6333 = vpow.pop %v6332
        %v6334 = vmul.f32 %v6307, 1.442695
        %v6335 = vpow.pop %v6334
        %v6336 = vmul.f32 %v6308, 1.442695
        %v6337 = vpow.pop %v6336
        %v6338 = vmul.f32 %v6309, 1.442695
        %v6339 = vpow.pop %v6338
        %v6340 = vmul.f32 %v6310, 1.442695
        %v6341 = vpow.pop %v6340
        %v6342 = vmul.f32 %v6311, 1.442695
        %v6343 = vpow.pop %v6342
        %6344 = vadd.xlane.f32.xlu0 %v6313
        %v6345 = vpop.xlane.xlu0 %6344
        %6346 = vadd.xlane.f32.xlu0 %v6315
        %v6347 = vpop.xlane.xlu0 %6346
        %6348 = vadd.xlane.f32.xlu0 %v6317
        %v6349 = vpop.xlane.xlu0 %6348
        %6350 = vadd.xlane.f32.xlu0 %v6319
        %v6351 = vpop.xlane.xlu0 %6350
        %6352 = vadd.xlane.f32.xlu0 %v6321
        %v6353 = vpop.xlane.xlu0 %6352
        %6354 = vadd.xlane.f32.xlu0 %v6323
        %v6355 = vpop.xlane.xlu0 %6354
        %6356 = vadd.xlane.f32.xlu0 %v6325
        %v6357 = vpop.xlane.xlu0 %6356
        %6358 = vadd.xlane.f32.xlu0 %v6327
        %v6359 = vpop.xlane.xlu0 %6358
        %6360 = vadd.xlane.f32.xlu0 %v6329
        %v6361 = vpop.xlane.xlu0 %6360
        %6362 = vadd.xlane.f32.xlu0 %v6331
        %v6363 = vpop.xlane.xlu0 %6362
        %6364 = vadd.xlane.f32.xlu0 %v6333
        %v6365 = vpop.xlane.xlu0 %6364
        %6366 = vadd.xlane.f32.xlu0 %v6335
        %v6367 = vpop.xlane.xlu0 %6366
        %6368 = vadd.xlane.f32.xlu0 %v6337
        %v6369 = vpop.xlane.xlu0 %6368
        %6370 = vadd.xlane.f32.xlu0 %v6339
        %v6371 = vpop.xlane.xlu0 %6370
        %6372 = vadd.xlane.f32.xlu0 %v6341
        %v6373 = vpop.xlane.xlu0 %6372
        %6374 = vadd.xlane.f32.xlu0 %v6343
        %v6375 = vpop.xlane.xlu0 %6374
        %v6376 = vrcp.pop %v6345
        %v6377 = vmul.f32 %v6345, %v6376
        %v6378 = vsub.f32 1.0, %v6377
        %v6379 = vmul.f32 %v6376, %v6378
        %v6380 = vadd.f32 %v6376, %v6379
        %vm6381 = vweird.f32 %v6345
        %vm6382 = vweird.f32 %v6376
        %vm6383 = vmor %vm6381, %vm6382
        %v6384 = vsel %vm6383, %v6376, %v6380
        %v6385 = vand.u32 2147483647, %v6345
        %vm6386 = vcmp.eq.f32.partialorder %v6385, 8.507059e+37
        %v6387 = vand.u32 %v6345, 2147483648
        %v6388 = vor.u32 1.1754944e-38, %v6387
        %v6389 = vsel %vm6386, %v6388, %v6384
        %v6390 = vmul.f32 %v6313, %v6389
        %v6391 = vrcp.pop %v6347
        %v6392 = vmul.f32 %v6347, %v6391
        %v6393 = vsub.f32 1.0, %v6392
        %v6394 = vmul.f32 %v6391, %v6393
        %v6395 = vadd.f32 %v6391, %v6394
        %vm6396 = vweird.f32 %v6347
        %vm6397 = vweird.f32 %v6391
        %vm6398 = vmor %vm6396, %vm6397
        %v6399 = vsel %vm6398, %v6391, %v6395
        %v6400 = vand.u32 2147483647, %v6347
        %vm6401 = vcmp.eq.f32.partialorder %v6400, 8.507059e+37
        %v6402 = vand.u32 %v6347, 2147483648
        %v6403 = vor.u32 1.1754944e-38, %v6402
        %v6404 = vsel %vm6401, %v6403, %v6399
        %v6405 = vmul.f32 %v6315, %v6404
        %v6406 = vrcp.pop %v6349
        %v6407 = vmul.f32 %v6349, %v6406
        %v6408 = vsub.f32 1.0, %v6407
        %v6409 = vmul.f32 %v6406, %v6408
        %v6410 = vadd.f32 %v6406, %v6409
        %vm6411 = vweird.f32 %v6349
        %vm6412 = vweird.f32 %v6406
        %vm6413 = vmor %vm6411, %vm6412
        %v6414 = vsel %vm6413, %v6406, %v6410
        %v6415 = vand.u32 2147483647, %v6349
        %vm6416 = vcmp.eq.f32.partialorder %v6415, 8.507059e+37
        %v6417 = vand.u32 %v6349, 2147483648
        %v6418 = vor.u32 1.1754944e-38, %v6417
        %v6419 = vsel %vm6416, %v6418, %v6414
        %v6420 = vmul.f32 %v6317, %v6419
        %v6421 = vrcp.pop %v6351
        %v6422 = vmul.f32 %v6351, %v6421
        %v6423 = vsub.f32 1.0, %v6422
        %v6424 = vmul.f32 %v6421, %v6423
        %v6425 = vadd.f32 %v6421, %v6424
        %vm6426 = vweird.f32 %v6351
        %vm6427 = vweird.f32 %v6421
        %vm6428 = vmor %vm6426, %vm6427
        %v6429 = vsel %vm6428, %v6421, %v6425
        %v6430 = vand.u32 2147483647, %v6351
        %vm6431 = vcmp.eq.f32.partialorder %v6430, 8.507059e+37
        %v6432 = vand.u32 %v6351, 2147483648
        %v6433 = vor.u32 1.1754944e-38, %v6432
        %v6434 = vsel %vm6431, %v6433, %v6429
        %v6435 = vmul.f32 %v6319, %v6434
        %v6436 = vrcp.pop %v6353
        %v6437 = vmul.f32 %v6353, %v6436
        %v6438 = vsub.f32 1.0, %v6437
        %v6439 = vmul.f32 %v6436, %v6438
        %v6440 = vadd.f32 %v6436, %v6439
        %vm6441 = vweird.f32 %v6353
        %vm6442 = vweird.f32 %v6436
        %vm6443 = vmor %vm6441, %vm6442
        %v6444 = vsel %vm6443, %v6436, %v6440
        %v6445 = vand.u32 2147483647, %v6353
        %vm6446 = vcmp.eq.f32.partialorder %v6445, 8.507059e+37
        %v6447 = vand.u32 %v6353, 2147483648
        %v6448 = vor.u32 1.1754944e-38, %v6447
        %v6449 = vsel %vm6446, %v6448, %v6444
        %v6450 = vmul.f32 %v6321, %v6449
        %v6451 = vrcp.pop %v6355
        %v6452 = vmul.f32 %v6355, %v6451
        %v6453 = vsub.f32 1.0, %v6452
        %v6454 = vmul.f32 %v6451, %v6453
        %v6455 = vadd.f32 %v6451, %v6454
        %vm6456 = vweird.f32 %v6355
        %vm6457 = vweird.f32 %v6451
        %vm6458 = vmor %vm6456, %vm6457
        %v6459 = vsel %vm6458, %v6451, %v6455
        %v6460 = vand.u32 2147483647, %v6355
        %vm6461 = vcmp.eq.f32.partialorder %v6460, 8.507059e+37
        %v6462 = vand.u32 %v6355, 2147483648
        %v6463 = vor.u32 1.1754944e-38, %v6462
        %v6464 = vsel %vm6461, %v6463, %v6459
        %v6465 = vmul.f32 %v6323, %v6464
        %v6466 = vrcp.pop %v6357
        %v6467 = vmul.f32 %v6357, %v6466
        %v6468 = vsub.f32 1.0, %v6467
        %v6469 = vmul.f32 %v6466, %v6468
        %v6470 = vadd.f32 %v6466, %v6469
        %vm6471 = vweird.f32 %v6357
        %vm6472 = vweird.f32 %v6466
        %vm6473 = vmor %vm6471, %vm6472
        %v6474 = vsel %vm6473, %v6466, %v6470
        %v6475 = vand.u32 2147483647, %v6357
        %vm6476 = vcmp.eq.f32.partialorder %v6475, 8.507059e+37
        %v6477 = vand.u32 %v6357, 2147483648
        %v6478 = vor.u32 1.1754944e-38, %v6477
        %v6479 = vsel %vm6476, %v6478, %v6474
        %v6480 = vmul.f32 %v6325, %v6479
        %v6481 = vrcp.pop %v6359
        %v6482 = vmul.f32 %v6359, %v6481
        %v6483 = vsub.f32 1.0, %v6482
        %v6484 = vmul.f32 %v6481, %v6483
        %v6485 = vadd.f32 %v6481, %v6484
        %vm6486 = vweird.f32 %v6359
        %vm6487 = vweird.f32 %v6481
        %vm6488 = vmor %vm6486, %vm6487
        %v6489 = vsel %vm6488, %v6481, %v6485
        %v6490 = vand.u32 2147483647, %v6359
        %vm6491 = vcmp.eq.f32.partialorder %v6490, 8.507059e+37
        %v6492 = vand.u32 %v6359, 2147483648
        %v6493 = vor.u32 1.1754944e-38, %v6492
        %v6494 = vsel %vm6491, %v6493, %v6489
        %v6495 = vmul.f32 %v6327, %v6494
        %v6496 = vrcp.pop %v6361
        %v6497 = vmul.f32 %v6361, %v6496
        %v6498 = vsub.f32 1.0, %v6497
        %v6499 = vmul.f32 %v6496, %v6498
        %v6500 = vadd.f32 %v6496, %v6499
        %vm6501 = vweird.f32 %v6361
        %vm6502 = vweird.f32 %v6496
        %vm6503 = vmor %vm6501, %vm6502
        %v6504 = vsel %vm6503, %v6496, %v6500
        %v6505 = vand.u32 2147483647, %v6361
        %vm6506 = vcmp.eq.f32.partialorder %v6505, 8.507059e+37
        %v6507 = vand.u32 %v6361, 2147483648
        %v6508 = vor.u32 1.1754944e-38, %v6507
        %v6509 = vsel %vm6506, %v6508, %v6504
        %v6510 = vmul.f32 %v6329, %v6509
        %v6511 = vrcp.pop %v6363
        %v6512 = vmul.f32 %v6363, %v6511
        %v6513 = vsub.f32 1.0, %v6512
        %v6514 = vmul.f32 %v6511, %v6513
        %v6515 = vadd.f32 %v6511, %v6514
        %vm6516 = vweird.f32 %v6363
        %vm6517 = vweird.f32 %v6511
        %vm6518 = vmor %vm6516, %vm6517
        %v6519 = vsel %vm6518, %v6511, %v6515
        %v6520 = vand.u32 2147483647, %v6363
        %vm6521 = vcmp.eq.f32.partialorder %v6520, 8.507059e+37
        %v6522 = vand.u32 %v6363, 2147483648
        %v6523 = vor.u32 1.1754944e-38, %v6522
        %v6524 = vsel %vm6521, %v6523, %v6519
        %v6525 = vmul.f32 %v6331, %v6524
        %v6526 = vrcp.pop %v6365
        %v6527 = vmul.f32 %v6365, %v6526
        %v6528 = vsub.f32 1.0, %v6527
        %v6529 = vmul.f32 %v6526, %v6528
        %v6530 = vadd.f32 %v6526, %v6529
        %vm6531 = vweird.f32 %v6365
        %vm6532 = vweird.f32 %v6526
        %vm6533 = vmor %vm6531, %vm6532
        %v6534 = vsel %vm6533, %v6526, %v6530
        %v6535 = vand.u32 2147483647, %v6365
        %vm6536 = vcmp.eq.f32.partialorder %v6535, 8.507059e+37
        %v6537 = vand.u32 %v6365, 2147483648
        %v6538 = vor.u32 1.1754944e-38, %v6537
        %v6539 = vsel %vm6536, %v6538, %v6534
        %v6540 = vmul.f32 %v6333, %v6539
        %v6541 = vrcp.pop %v6367
        %v6542 = vmul.f32 %v6367, %v6541
        %v6543 = vsub.f32 1.0, %v6542
        %v6544 = vmul.f32 %v6541, %v6543
        %v6545 = vadd.f32 %v6541, %v6544
        %vm6546 = vweird.f32 %v6367
        %vm6547 = vweird.f32 %v6541
        %vm6548 = vmor %vm6546, %vm6547
        %v6549 = vsel %vm6548, %v6541, %v6545
        %v6550 = vand.u32 2147483647, %v6367
        %vm6551 = vcmp.eq.f32.partialorder %v6550, 8.507059e+37
        %v6552 = vand.u32 %v6367, 2147483648
        %v6553 = vor.u32 1.1754944e-38, %v6552
        %v6554 = vsel %vm6551, %v6553, %v6549
        %v6555 = vmul.f32 %v6335, %v6554
        %v6556 = vrcp.pop %v6369
        %v6557 = vmul.f32 %v6369, %v6556
        %v6558 = vsub.f32 1.0, %v6557
        %v6559 = vmul.f32 %v6556, %v6558
        %v6560 = vadd.f32 %v6556, %v6559
        %vm6561 = vweird.f32 %v6369
        %vm6562 = vweird.f32 %v6556
        %vm6563 = vmor %vm6561, %vm6562
        %v6564 = vsel %vm6563, %v6556, %v6560
        %v6565 = vand.u32 2147483647, %v6369
        %vm6566 = vcmp.eq.f32.partialorder %v6565, 8.507059e+37
        %v6567 = vand.u32 %v6369, 2147483648
        %v6568 = vor.u32 1.1754944e-38, %v6567
        %v6569 = vsel %vm6566, %v6568, %v6564
        %v6570 = vmul.f32 %v6337, %v6569
        %v6571 = vrcp.pop %v6371
        %v6572 = vmul.f32 %v6371, %v6571
        %v6573 = vsub.f32 1.0, %v6572
        %v6574 = vmul.f32 %v6571, %v6573
        %v6575 = vadd.f32 %v6571, %v6574
        %vm6576 = vweird.f32 %v6371
        %vm6577 = vweird.f32 %v6571
        %vm6578 = vmor %vm6576, %vm6577
        %v6579 = vsel %vm6578, %v6571, %v6575
        %v6580 = vand.u32 2147483647, %v6371
        %vm6581 = vcmp.eq.f32.partialorder %v6580, 8.507059e+37
        %v6582 = vand.u32 %v6371, 2147483648
        %v6583 = vor.u32 1.1754944e-38, %v6582
        %v6584 = vsel %vm6581, %v6583, %v6579
        %v6585 = vmul.f32 %v6339, %v6584
        %v6586 = vrcp.pop %v6373
        %v6587 = vmul.f32 %v6373, %v6586
        %v6588 = vsub.f32 1.0, %v6587
        %v6589 = vmul.f32 %v6586, %v6588
        %v6590 = vadd.f32 %v6586, %v6589
        %vm6591 = vweird.f32 %v6373
        %vm6592 = vweird.f32 %v6586
        %vm6593 = vmor %vm6591, %vm6592
        %v6594 = vsel %vm6593, %v6586, %v6590
        %v6595 = vand.u32 2147483647, %v6373
        %vm6596 = vcmp.eq.f32.partialorder %v6595, 8.507059e+37
        %v6597 = vand.u32 %v6373, 2147483648
        %v6598 = vor.u32 1.1754944e-38, %v6597
        %v6599 = vsel %vm6596, %v6598, %v6594
        %v6600 = vmul.f32 %v6341, %v6599
        %v6601 = vrcp.pop %v6375
        %v6602 = vmul.f32 %v6375, %v6601
        %v6603 = vsub.f32 1.0, %v6602
        %v6604 = vmul.f32 %v6601, %v6603
        %v6605 = vadd.f32 %v6601, %v6604
        %vm6606 = vweird.f32 %v6375
        %vm6607 = vweird.f32 %v6601
        %vm6608 = vmor %vm6606, %vm6607
        %v6609 = vsel %vm6608, %v6601, %v6605
        %v6610 = vand.u32 2147483647, %v6375
        %vm6611 = vcmp.eq.f32.partialorder %v6610, 8.507059e+37
        %v6612 = vand.u32 %v6375, 2147483648
        %v6613 = vor.u32 1.1754944e-38, %v6612
        %v6614 = vsel %vm6611, %v6613, %v6609
        %v6615 = vmul.f32 %v6343, %v6614
        %v6616 = vpack.c.bf16 %v6405, %v6390
        %v6617 = vpack.c.bf16 %v6435, %v6420
        %v6618 = vpack.c.bf16 %v6465, %v6450
        %v6619 = vpack.c.bf16 %v6495, %v6480
        %v6620 = vpack.c.bf16 %v6525, %v6510
        %v6621 = vpack.c.bf16 %v6555, %v6540
        %v6622 = vpack.c.bf16 %v6585, %v6570
        %v6623 = vpack.c.bf16 %v6615, %v6600
        %6624 = vrot.lane.b32.xlu0 %v4240, 64
        %v6625 = vpop.permute.xlu0 %6624
        %6626 = vrot.lane.b32.xlu0 %v4241, 64
        %v6627 = vpop.permute.xlu0 %6626
        %6628 = vrot.lane.b32.xlu0 %v4242, 64
        %v6629 = vpop.permute.xlu0 %6628
        %6630 = vrot.lane.b32.xlu0 %v4243, 64
        %v6631 = vpop.permute.xlu0 %6630
        %6632 = vrot.lane.b32.xlu0 %v4244, 64
        %v6633 = vpop.permute.xlu0 %6632
        %6634 = vrot.lane.b32.xlu0 %v4245, 64
        %v6635 = vpop.permute.xlu0 %6634
        %6636 = vrot.lane.b32.xlu0 %v4246, 64
        %v6637 = vpop.permute.xlu0 %6636
        %6638 = vrot.lane.b32.xlu0 %v4247, 64
        %v6639 = vpop.permute.xlu0 %6638
        %6648 = vmatpush.bf16.msra.mxu0 %v6639
        %6649 = vmatpush.bf16.msra.mxu0 %v6637
        %6650 = vmatpush.bf16.msra.mxu0 %v6635
        %6651 = vmatpush.bf16.msra.mxu0 %v6633
        %6652 = vmatpush.bf16.msra.mxu0 %v6631
        %6653 = vmatpush.bf16.msra.mxu0 %v6629
        %6654 = vmatpush.bf16.msra.mxu0 %v6627
        %6655 = vmatpush.bf16.msra.mxu0 %v6625
        %6656 = vmatmul.bf16.gmra.mxu0 %v6616
        %v6657 = vpop.f32.mrf.mxu0
        %v6658 = vadd.f32 0.0, %v6657
        %v6659 = vpop.f32.mrf.mxu0
        %v6660 = vadd.f32 0.0, %v6659
        %6661 = vmatmul.bf16.gmra.mxu0 %v6617
        %v6662 = vpop.f32.mrf.mxu0
        %v6663 = vadd.f32 0.0, %v6662
        %v6664 = vpop.f32.mrf.mxu0
        %v6665 = vadd.f32 0.0, %v6664
        %6666 = vmatmul.bf16.gmra.mxu0 %v6618
        %v6667 = vpop.f32.mrf.mxu0
        %v6668 = vadd.f32 0.0, %v6667
        %v6669 = vpop.f32.mrf.mxu0
        %v6670 = vadd.f32 0.0, %v6669
        %6671 = vmatmul.bf16.gmra.mxu0 %v6619
        %v6672 = vpop.f32.mrf.mxu0
        %v6673 = vadd.f32 0.0, %v6672
        %v6674 = vpop.f32.mrf.mxu0
        %v6675 = vadd.f32 0.0, %v6674
        %6676 = vmatmul.bf16.gmra.mxu0 %v6620
        %v6677 = vpop.f32.mrf.mxu0
        %v6678 = vadd.f32 0.0, %v6677
        %v6679 = vpop.f32.mrf.mxu0
        %v6680 = vadd.f32 0.0, %v6679
        %6681 = vmatmul.bf16.gmra.mxu0 %v6621
        %v6682 = vpop.f32.mrf.mxu0
        %v6683 = vadd.f32 0.0, %v6682
        %v6684 = vpop.f32.mrf.mxu0
        %v6685 = vadd.f32 0.0, %v6684
        %6686 = vmatmul.bf16.gmra.mxu0 %v6622
        %v6687 = vpop.f32.mrf.mxu0
        %v6688 = vadd.f32 0.0, %v6687
        %v6689 = vpop.f32.mrf.mxu0
        %v6690 = vadd.f32 0.0, %v6689
        %6691 = vmatmul.bf16.gmra.mxu0 %v6623
        %v6692 = vpop.f32.mrf.mxu0
        %v6693 = vadd.f32 0.0, %v6692
        %v6694 = vpop.f32.mrf.mxu0
        %v6695 = vadd.f32 0.0, %v6694
        %6696 = vdwg.mxu0
        %6697 = vrot.lane.b32.xlu0 %v3728, 48
        %v6698 = vpop.permute.xlu0 %6697
        %6699 = vrot.lane.b32.xlu0 %v3729, 48
        %v6700 = vpop.permute.xlu0 %6699
        %6701 = vrot.lane.b32.xlu0 %v3730, 48
        %v6702 = vpop.permute.xlu0 %6701
        %6703 = vrot.lane.b32.xlu0 %v3731, 48
        %v6704 = vpop.permute.xlu0 %6703
        %6705 = vrot.lane.b32.xlu0 %v3732, 48
        %v6706 = vpop.permute.xlu0 %6705
        %6707 = vrot.lane.b32.xlu0 %v3733, 48
        %v6708 = vpop.permute.xlu0 %6707
        %6709 = vrot.lane.b32.xlu0 %v3734, 48
        %v6710 = vpop.permute.xlu0 %6709
        %6711 = vrot.lane.b32.xlu0 %v3735, 48
        %v6712 = vpop.permute.xlu0 %6711
        %6713 = vrot.lane.b32.xlu0 %v3736, 48
        %v6714 = vpop.permute.xlu0 %6713
        %6715 = vrot.lane.b32.xlu0 %v3737, 48
        %v6716 = vpop.permute.xlu0 %6715
        %6717 = vrot.lane.b32.xlu0 %v3738, 48
        %v6718 = vpop.permute.xlu0 %6717
        %6719 = vrot.lane.b32.xlu0 %v3739, 48
        %v6720 = vpop.permute.xlu0 %6719
        %6721 = vrot.lane.b32.xlu0 %v3740, 48
        %v6722 = vpop.permute.xlu0 %6721
        %6723 = vrot.lane.b32.xlu0 %v3741, 48
        %v6724 = vpop.permute.xlu0 %6723
        %6725 = vrot.lane.b32.xlu0 %v3742, 48
        %v6726 = vpop.permute.xlu0 %6725
        %6727 = vrot.lane.b32.xlu0 %v3743, 48
        %v6728 = vpop.permute.xlu0 %6727
        %v6730 = vsel %vm3744, %v6698, 0
        %v6733 = vsel %vm3744, %v6700, 0
        %v6736 = vsel %vm3744, %v6702, 0
        %v6739 = vsel %vm3744, %v6704, 0
        %v6742 = vsel %vm3744, %v6706, 0
        %v6745 = vsel %vm3744, %v6708, 0
        %v6748 = vsel %vm3744, %v6710, 0
        %v6751 = vsel %vm3744, %v6712, 0
        %v6754 = vsel %vm3744, %v6714, 0
        %v6757 = vsel %vm3744, %v6716, 0
        %v6760 = vsel %vm3744, %v6718, 0
        %v6763 = vsel %vm3744, %v6720, 0
        %v6766 = vsel %vm3744, %v6722, 0
        %v6769 = vsel %vm3744, %v6724, 0
        %v6772 = vsel %vm3744, %v6726, 0
        %v6775 = vsel %vm3744, %v6728, 0
        %6777 = vmatpush.bf16.xpose.msra.mxu0 %v6775
        %6778 = vmatpush.bf16.xpose.msra.mxu0 %v6772
        %6779 = vmatpush.bf16.xpose.msra.mxu0 %v6769
        %6780 = vmatpush.bf16.xpose.msra.mxu0 %v6766
        %6781 = vmatpush.bf16.xpose.msra.mxu0 %v6763
        %6782 = vmatpush.bf16.xpose.msra.mxu0 %v6760
        %6783 = vmatpush.bf16.xpose.msra.mxu0 %v6757
        %6784 = vmatpush.bf16.xpose.msra.mxu0 %v6754
        %6785 = vmatmul.bf16.gmra.mxu0 %v6730
        %v6786 = vpop.f32.mrf.mxu0
        %v6787 = vadd.f32 0.0, %v6786
        %v6788 = vpop.f32.mrf.mxu0
        %v6789 = vadd.f32 0.0, %v6788
        %6790 = vmatmul.bf16.gmra.mxu0 %v6733
        %v6791 = vpop.f32.mrf.mxu0
        %v6792 = vadd.f32 0.0, %v6791
        %v6793 = vpop.f32.mrf.mxu0
        %v6794 = vadd.f32 0.0, %v6793
        %6795 = vmatmul.bf16.gmra.mxu0 %v6736
        %v6796 = vpop.f32.mrf.mxu0
        %v6797 = vadd.f32 0.0, %v6796
        %v6798 = vpop.f32.mrf.mxu0
        %v6799 = vadd.f32 0.0, %v6798
        %6800 = vmatmul.bf16.gmra.mxu0 %v6739
        %v6801 = vpop.f32.mrf.mxu0
        %v6802 = vadd.f32 0.0, %v6801
        %v6803 = vpop.f32.mrf.mxu0
        %v6804 = vadd.f32 0.0, %v6803
        %6805 = vmatmul.bf16.gmra.mxu0 %v6742
        %v6806 = vpop.f32.mrf.mxu0
        %v6807 = vadd.f32 0.0, %v6806
        %v6808 = vpop.f32.mrf.mxu0
        %v6809 = vadd.f32 0.0, %v6808
        %6810 = vmatmul.bf16.gmra.mxu0 %v6745
        %v6811 = vpop.f32.mrf.mxu0
        %v6812 = vadd.f32 0.0, %v6811
        %v6813 = vpop.f32.mrf.mxu0
        %v6814 = vadd.f32 0.0, %v6813
        %6815 = vmatmul.bf16.gmra.mxu0 %v6748
        %v6816 = vpop.f32.mrf.mxu0
        %v6817 = vadd.f32 0.0, %v6816
        %v6818 = vpop.f32.mrf.mxu0
        %v6819 = vadd.f32 0.0, %v6818
        %6820 = vmatmul.bf16.gmra.mxu0 %v6751
        %v6821 = vpop.f32.mrf.mxu0
        %v6822 = vadd.f32 0.0, %v6821
        %v6823 = vpop.f32.mrf.mxu0
        %v6824 = vadd.f32 0.0, %v6823
        %6825 = vdwg.mxu0
        %v6826 = vmul.f32 %v6787, %v3843
        %v6827 = vmul.f32 %v6789, %v3843
        %v6828 = vmul.f32 %v6792, %v3843
        %v6829 = vmul.f32 %v6794, %v3843
        %v6830 = vmul.f32 %v6797, %v3843
        %v6831 = vmul.f32 %v6799, %v3843
        %v6832 = vmul.f32 %v6802, %v3843
        %v6833 = vmul.f32 %v6804, %v3843
        %v6834 = vmul.f32 %v6807, %v3843
        %v6835 = vmul.f32 %v6809, %v3843
        %v6836 = vmul.f32 %v6812, %v3843
        %v6837 = vmul.f32 %v6814, %v3843
        %v6838 = vmul.f32 %v6817, %v3843
        %v6839 = vmul.f32 %v6819, %v3843
        %v6840 = vmul.f32 %v6822, %v3843
        %v6841 = vmul.f32 %v6824, %v3843
        %v6842 = vadd.f32 %v6826, %v3862
        %v6843 = vadd.f32 %v6827, %v3862
        %v6844 = vadd.f32 %v6828, %v3862
        %v6845 = vadd.f32 %v6829, %v3862
        %v6846 = vadd.f32 %v6830, %v3862
        %v6847 = vadd.f32 %v6831, %v3862
        %v6848 = vadd.f32 %v6832, %v3862
        %v6849 = vadd.f32 %v6833, %v3862
        %v6850 = vadd.f32 %v6834, %v3862
        %v6851 = vadd.f32 %v6835, %v3862
        %v6852 = vadd.f32 %v6836, %v3862
        %v6853 = vadd.f32 %v6837, %v3862
        %v6854 = vadd.f32 %v6838, %v3862
        %v6855 = vadd.f32 %v6839, %v3862
        %v6856 = vadd.f32 %v6840, %v3862
        %v6857 = vadd.f32 %v6841, %v3862
        %6858 = vmax.xlane.f32.xlu0 %v6842
        %v6859 = vpop.xlane.xlu0 %6858
        %6860 = vmax.xlane.f32.xlu0 %v6843
        %v6861 = vpop.xlane.xlu0 %6860
        %6862 = vmax.xlane.f32.xlu0 %v6844
        %v6863 = vpop.xlane.xlu0 %6862
        %6864 = vmax.xlane.f32.xlu0 %v6845
        %v6865 = vpop.xlane.xlu0 %6864
        %6866 = vmax.xlane.f32.xlu0 %v6846
        %v6867 = vpop.xlane.xlu0 %6866
        %6868 = vmax.xlane.f32.xlu0 %v6847
        %v6869 = vpop.xlane.xlu0 %6868
        %6870 = vmax.xlane.f32.xlu0 %v6848
        %v6871 = vpop.xlane.xlu0 %6870
        %6872 = vmax.xlane.f32.xlu0 %v6849
        %v6873 = vpop.xlane.xlu0 %6872
        %6874 = vmax.xlane.f32.xlu0 %v6850
        %v6875 = vpop.xlane.xlu0 %6874
        %6876 = vmax.xlane.f32.xlu0 %v6851
        %v6877 = vpop.xlane.xlu0 %6876
        %6878 = vmax.xlane.f32.xlu0 %v6852
        %v6879 = vpop.xlane.xlu0 %6878
        %6880 = vmax.xlane.f32.xlu0 %v6853
        %v6881 = vpop.xlane.xlu0 %6880
        %6882 = vmax.xlane.f32.xlu0 %v6854
        %v6883 = vpop.xlane.xlu0 %6882
        %6884 = vmax.xlane.f32.xlu0 %v6855
        %v6885 = vpop.xlane.xlu0 %6884
        %6886 = vmax.xlane.f32.xlu0 %v6856
        %v6887 = vpop.xlane.xlu0 %6886
        %6888 = vmax.xlane.f32.xlu0 %v6857
        %v6889 = vpop.xlane.xlu0 %6888
        %v6890 = vsub.f32 %v6842, %v6859
        %v6891 = vsub.f32 %v6843, %v6861
        %v6892 = vsub.f32 %v6844, %v6863
        %v6893 = vsub.f32 %v6845, %v6865
        %v6894 = vsub.f32 %v6846, %v6867
        %v6895 = vsub.f32 %v6847, %v6869
        %v6896 = vsub.f32 %v6848, %v6871
        %v6897 = vsub.f32 %v6849, %v6873
        %v6898 = vsub.f32 %v6850, %v6875
        %v6899 = vsub.f32 %v6851, %v6877
        %v6900 = vsub.f32 %v6852, %v6879
        %v6901 = vsub.f32 %v6853, %v6881
        %v6902 = vsub.f32 %v6854, %v6883
        %v6903 = vsub.f32 %v6855, %v6885
        %v6904 = vsub.f32 %v6856, %v6887
        %v6905 = vsub.f32 %v6857, %v6889
        %v6906 = vmul.f32 %v6890, 1.442695
        %v6907 = vpow.pop %v6906
        %v6908 = vmul.f32 %v6891, 1.442695
        %v6909 = vpow.pop %v6908
        %v6910 = vmul.f32 %v6892, 1.442695
        %v6911 = vpow.pop %v6910
        %v6912 = vmul.f32 %v6893, 1.442695
        %v6913 = vpow.pop %v6912
        %v6914 = vmul.f32 %v6894, 1.442695
        %v6915 = vpow.pop %v6914
        %v6916 = vmul.f32 %v6895, 1.442695
        %v6917 = vpow.pop %v6916
        %v6918 = vmul.f32 %v6896, 1.442695
        %v6919 = vpow.pop %v6918
        %v6920 = vmul.f32 %v6897, 1.442695
        %v6921 = vpow.pop %v6920
        %v6922 = vmul.f32 %v6898, 1.442695
        %v6923 = vpow.pop %v6922
        %v6924 = vmul.f32 %v6899, 1.442695
        %v6925 = vpow.pop %v6924
        %v6926 = vmul.f32 %v6900, 1.442695
        %v6927 = vpow.pop %v6926
        %v6928 = vmul.f32 %v6901, 1.442695
        %v6929 = vpow.pop %v6928
        %v6930 = vmul.f32 %v6902, 1.442695
        %v6931 = vpow.pop %v6930
        %v6932 = vmul.f32 %v6903, 1.442695
        %v6933 = vpow.pop %v6932
        %v6934 = vmul.f32 %v6904, 1.442695
        %v6935 = vpow.pop %v6934
        %v6936 = vmul.f32 %v6905, 1.442695
        %v6937 = vpow.pop %v6936
        %6938 = vadd.xlane.f32.xlu0 %v6907
        %v6939 = vpop.xlane.xlu0 %6938
        %6940 = vadd.xlane.f32.xlu0 %v6909
        %v6941 = vpop.xlane.xlu0 %6940
        %6942 = vadd.xlane.f32.xlu0 %v6911
        %v6943 = vpop.xlane.xlu0 %6942
        %6944 = vadd.xlane.f32.xlu0 %v6913
        %v6945 = vpop.xlane.xlu0 %6944
        %6946 = vadd.xlane.f32.xlu0 %v6915
        %v6947 = vpop.xlane.xlu0 %6946
        %6948 = vadd.xlane.f32.xlu0 %v6917
        %v6949 = vpop.xlane.xlu0 %6948
        %6950 = vadd.xlane.f32.xlu0 %v6919
        %v6951 = vpop.xlane.xlu0 %6950
        %6952 = vadd.xlane.f32.xlu0 %v6921
        %v6953 = vpop.xlane.xlu0 %6952
        %6954 = vadd.xlane.f32.xlu0 %v6923
        %v6955 = vpop.xlane.xlu0 %6954
        %6956 = vadd.xlane.f32.xlu0 %v6925
        %v6957 = vpop.xlane.xlu0 %6956
        %6958 = vadd.xlane.f32.xlu0 %v6927
        %v6959 = vpop.xlane.xlu0 %6958
        %6960 = vadd.xlane.f32.xlu0 %v6929
        %v6961 = vpop.xlane.xlu0 %6960
        %6962 = vadd.xlane.f32.xlu0 %v6931
        %v6963 = vpop.xlane.xlu0 %6962
        %6964 = vadd.xlane.f32.xlu0 %v6933
        %v6965 = vpop.xlane.xlu0 %6964
        %6966 = vadd.xlane.f32.xlu0 %v6935
        %v6967 = vpop.xlane.xlu0 %6966
        %6968 = vadd.xlane.f32.xlu0 %v6937
        %v6969 = vpop.xlane.xlu0 %6968
        %v6970 = vrcp.pop %v6939
        %v6971 = vmul.f32 %v6939, %v6970
        %v6972 = vsub.f32 1.0, %v6971
        %v6973 = vmul.f32 %v6970, %v6972
        %v6974 = vadd.f32 %v6970, %v6973
        %vm6975 = vweird.f32 %v6939
        %vm6976 = vweird.f32 %v6970
        %vm6977 = vmor %vm6975, %vm6976
        %v6978 = vsel %vm6977, %v6970, %v6974
        %v6979 = vand.u32 2147483647, %v6939
        %vm6980 = vcmp.eq.f32.partialorder %v6979, 8.507059e+37
        %v6981 = vand.u32 %v6939, 2147483648
        %v6982 = vor.u32 1.1754944e-38, %v6981
        %v6983 = vsel %vm6980, %v6982, %v6978
        %v6984 = vmul.f32 %v6907, %v6983
        %v6985 = vrcp.pop %v6941
        %v6986 = vmul.f32 %v6941, %v6985
        %v6987 = vsub.f32 1.0, %v6986
        %v6988 = vmul.f32 %v6985, %v6987
        %v6989 = vadd.f32 %v6985, %v6988
        %vm6990 = vweird.f32 %v6941
        %vm6991 = vweird.f32 %v6985
        %vm6992 = vmor %vm6990, %vm6991
        %v6993 = vsel %vm6992, %v6985, %v6989
        %v6994 = vand.u32 2147483647, %v6941
        %vm6995 = vcmp.eq.f32.partialorder %v6994, 8.507059e+37
        %v6996 = vand.u32 %v6941, 2147483648
        %v6997 = vor.u32 1.1754944e-38, %v6996
        %v6998 = vsel %vm6995, %v6997, %v6993
        %v6999 = vmul.f32 %v6909, %v6998
        %v7000 = vrcp.pop %v6943
        %v7001 = vmul.f32 %v6943, %v7000
        %v7002 = vsub.f32 1.0, %v7001
        %v7003 = vmul.f32 %v7000, %v7002
        %v7004 = vadd.f32 %v7000, %v7003
        %vm7005 = vweird.f32 %v6943
        %vm7006 = vweird.f32 %v7000
        %vm7007 = vmor %vm7005, %vm7006
        %v7008 = vsel %vm7007, %v7000, %v7004
        %v7009 = vand.u32 2147483647, %v6943
        %vm7010 = vcmp.eq.f32.partialorder %v7009, 8.507059e+37
        %v7011 = vand.u32 %v6943, 2147483648
        %v7012 = vor.u32 1.1754944e-38, %v7011
        %v7013 = vsel %vm7010, %v7012, %v7008
        %v7014 = vmul.f32 %v6911, %v7013
        %v7015 = vrcp.pop %v6945
        %v7016 = vmul.f32 %v6945, %v7015
        %v7017 = vsub.f32 1.0, %v7016
        %v7018 = vmul.f32 %v7015, %v7017
        %v7019 = vadd.f32 %v7015, %v7018
        %vm7020 = vweird.f32 %v6945
        %vm7021 = vweird.f32 %v7015
        %vm7022 = vmor %vm7020, %vm7021
        %v7023 = vsel %vm7022, %v7015, %v7019
        %v7024 = vand.u32 2147483647, %v6945
        %vm7025 = vcmp.eq.f32.partialorder %v7024, 8.507059e+37
        %v7026 = vand.u32 %v6945, 2147483648
        %v7027 = vor.u32 1.1754944e-38, %v7026
        %v7028 = vsel %vm7025, %v7027, %v7023
        %v7029 = vmul.f32 %v6913, %v7028
        %v7030 = vrcp.pop %v6947
        %v7031 = vmul.f32 %v6947, %v7030
        %v7032 = vsub.f32 1.0, %v7031
        %v7033 = vmul.f32 %v7030, %v7032
        %v7034 = vadd.f32 %v7030, %v7033
        %vm7035 = vweird.f32 %v6947
        %vm7036 = vweird.f32 %v7030
        %vm7037 = vmor %vm7035, %vm7036
        %v7038 = vsel %vm7037, %v7030, %v7034
        %v7039 = vand.u32 2147483647, %v6947
        %vm7040 = vcmp.eq.f32.partialorder %v7039, 8.507059e+37
        %v7041 = vand.u32 %v6947, 2147483648
        %v7042 = vor.u32 1.1754944e-38, %v7041
        %v7043 = vsel %vm7040, %v7042, %v7038
        %v7044 = vmul.f32 %v6915, %v7043
        %v7045 = vrcp.pop %v6949
        %v7046 = vmul.f32 %v6949, %v7045
        %v7047 = vsub.f32 1.0, %v7046
        %v7048 = vmul.f32 %v7045, %v7047
        %v7049 = vadd.f32 %v7045, %v7048
        %vm7050 = vweird.f32 %v6949
        %vm7051 = vweird.f32 %v7045
        %vm7052 = vmor %vm7050, %vm7051
        %v7053 = vsel %vm7052, %v7045, %v7049
        %v7054 = vand.u32 2147483647, %v6949
        %vm7055 = vcmp.eq.f32.partialorder %v7054, 8.507059e+37
        %v7056 = vand.u32 %v6949, 2147483648
        %v7057 = vor.u32 1.1754944e-38, %v7056
        %v7058 = vsel %vm7055, %v7057, %v7053
        %v7059 = vmul.f32 %v6917, %v7058
        %v7060 = vrcp.pop %v6951
        %v7061 = vmul.f32 %v6951, %v7060
        %v7062 = vsub.f32 1.0, %v7061
        %v7063 = vmul.f32 %v7060, %v7062
        %v7064 = vadd.f32 %v7060, %v7063
        %vm7065 = vweird.f32 %v6951
        %vm7066 = vweird.f32 %v7060
        %vm7067 = vmor %vm7065, %vm7066
        %v7068 = vsel %vm7067, %v7060, %v7064
        %v7069 = vand.u32 2147483647, %v6951
        %vm7070 = vcmp.eq.f32.partialorder %v7069, 8.507059e+37
        %v7071 = vand.u32 %v6951, 2147483648
        %v7072 = vor.u32 1.1754944e-38, %v7071
        %v7073 = vsel %vm7070, %v7072, %v7068
        %v7074 = vmul.f32 %v6919, %v7073
        %v7075 = vrcp.pop %v6953
        %v7076 = vmul.f32 %v6953, %v7075
        %v7077 = vsub.f32 1.0, %v7076
        %v7078 = vmul.f32 %v7075, %v7077
        %v7079 = vadd.f32 %v7075, %v7078
        %vm7080 = vweird.f32 %v6953
        %vm7081 = vweird.f32 %v7075
        %vm7082 = vmor %vm7080, %vm7081
        %v7083 = vsel %vm7082, %v7075, %v7079
        %v7084 = vand.u32 2147483647, %v6953
        %vm7085 = vcmp.eq.f32.partialorder %v7084, 8.507059e+37
        %v7086 = vand.u32 %v6953, 2147483648
        %v7087 = vor.u32 1.1754944e-38, %v7086
        %v7088 = vsel %vm7085, %v7087, %v7083
        %v7089 = vmul.f32 %v6921, %v7088
        %v7090 = vrcp.pop %v6955
        %v7091 = vmul.f32 %v6955, %v7090
        %v7092 = vsub.f32 1.0, %v7091
        %v7093 = vmul.f32 %v7090, %v7092
        %v7094 = vadd.f32 %v7090, %v7093
        %vm7095 = vweird.f32 %v6955
        %vm7096 = vweird.f32 %v7090
        %vm7097 = vmor %vm7095, %vm7096
        %v7098 = vsel %vm7097, %v7090, %v7094
        %v7099 = vand.u32 2147483647, %v6955
        %vm7100 = vcmp.eq.f32.partialorder %v7099, 8.507059e+37
        %v7101 = vand.u32 %v6955, 2147483648
        %v7102 = vor.u32 1.1754944e-38, %v7101
        %v7103 = vsel %vm7100, %v7102, %v7098
        %v7104 = vmul.f32 %v6923, %v7103
        %v7105 = vrcp.pop %v6957
        %v7106 = vmul.f32 %v6957, %v7105
        %v7107 = vsub.f32 1.0, %v7106
        %v7108 = vmul.f32 %v7105, %v7107
        %v7109 = vadd.f32 %v7105, %v7108
        %vm7110 = vweird.f32 %v6957
        %vm7111 = vweird.f32 %v7105
        %vm7112 = vmor %vm7110, %vm7111
        %v7113 = vsel %vm7112, %v7105, %v7109
        %v7114 = vand.u32 2147483647, %v6957
        %vm7115 = vcmp.eq.f32.partialorder %v7114, 8.507059e+37
        %v7116 = vand.u32 %v6957, 2147483648
        %v7117 = vor.u32 1.1754944e-38, %v7116
        %v7118 = vsel %vm7115, %v7117, %v7113
        %v7119 = vmul.f32 %v6925, %v7118
        %v7120 = vrcp.pop %v6959
        %v7121 = vmul.f32 %v6959, %v7120
        %v7122 = vsub.f32 1.0, %v7121
        %v7123 = vmul.f32 %v7120, %v7122
        %v7124 = vadd.f32 %v7120, %v7123
        %vm7125 = vweird.f32 %v6959
        %vm7126 = vweird.f32 %v7120
        %vm7127 = vmor %vm7125, %vm7126
        %v7128 = vsel %vm7127, %v7120, %v7124
        %v7129 = vand.u32 2147483647, %v6959
        %vm7130 = vcmp.eq.f32.partialorder %v7129, 8.507059e+37
        %v7131 = vand.u32 %v6959, 2147483648
        %v7132 = vor.u32 1.1754944e-38, %v7131
        %v7133 = vsel %vm7130, %v7132, %v7128
        %v7134 = vmul.f32 %v6927, %v7133
        %v7135 = vrcp.pop %v6961
        %v7136 = vmul.f32 %v6961, %v7135
        %v7137 = vsub.f32 1.0, %v7136
        %v7138 = vmul.f32 %v7135, %v7137
        %v7139 = vadd.f32 %v7135, %v7138
        %vm7140 = vweird.f32 %v6961
        %vm7141 = vweird.f32 %v7135
        %vm7142 = vmor %vm7140, %vm7141
        %v7143 = vsel %vm7142, %v7135, %v7139
        %v7144 = vand.u32 2147483647, %v6961
        %vm7145 = vcmp.eq.f32.partialorder %v7144, 8.507059e+37
        %v7146 = vand.u32 %v6961, 2147483648
        %v7147 = vor.u32 1.1754944e-38, %v7146
        %v7148 = vsel %vm7145, %v7147, %v7143
        %v7149 = vmul.f32 %v6929, %v7148
        %v7150 = vrcp.pop %v6963
        %v7151 = vmul.f32 %v6963, %v7150
        %v7152 = vsub.f32 1.0, %v7151
        %v7153 = vmul.f32 %v7150, %v7152
        %v7154 = vadd.f32 %v7150, %v7153
        %vm7155 = vweird.f32 %v6963
        %vm7156 = vweird.f32 %v7150
        %vm7157 = vmor %vm7155, %vm7156
        %v7158 = vsel %vm7157, %v7150, %v7154
        %v7159 = vand.u32 2147483647, %v6963
        %vm7160 = vcmp.eq.f32.partialorder %v7159, 8.507059e+37
        %v7161 = vand.u32 %v6963, 2147483648
        %v7162 = vor.u32 1.1754944e-38, %v7161
        %v7163 = vsel %vm7160, %v7162, %v7158
        %v7164 = vmul.f32 %v6931, %v7163
        %v7165 = vrcp.pop %v6965
        %v7166 = vmul.f32 %v6965, %v7165
        %v7167 = vsub.f32 1.0, %v7166
        %v7168 = vmul.f32 %v7165, %v7167
        %v7169 = vadd.f32 %v7165, %v7168
        %vm7170 = vweird.f32 %v6965
        %vm7171 = vweird.f32 %v7165
        %vm7172 = vmor %vm7170, %vm7171
        %v7173 = vsel %vm7172, %v7165, %v7169
        %v7174 = vand.u32 2147483647, %v6965
        %vm7175 = vcmp.eq.f32.partialorder %v7174, 8.507059e+37
        %v7176 = vand.u32 %v6965, 2147483648
        %v7177 = vor.u32 1.1754944e-38, %v7176
        %v7178 = vsel %vm7175, %v7177, %v7173
        %v7179 = vmul.f32 %v6933, %v7178
        %v7180 = vrcp.pop %v6967
        %v7181 = vmul.f32 %v6967, %v7180
        %v7182 = vsub.f32 1.0, %v7181
        %v7183 = vmul.f32 %v7180, %v7182
        %v7184 = vadd.f32 %v7180, %v7183
        %vm7185 = vweird.f32 %v6967
        %vm7186 = vweird.f32 %v7180
        %vm7187 = vmor %vm7185, %vm7186
        %v7188 = vsel %vm7187, %v7180, %v7184
        %v7189 = vand.u32 2147483647, %v6967
        %vm7190 = vcmp.eq.f32.partialorder %v7189, 8.507059e+37
        %v7191 = vand.u32 %v6967, 2147483648
        %v7192 = vor.u32 1.1754944e-38, %v7191
        %v7193 = vsel %vm7190, %v7192, %v7188
        %v7194 = vmul.f32 %v6935, %v7193
        %v7195 = vrcp.pop %v6969
        %v7196 = vmul.f32 %v6969, %v7195
        %v7197 = vsub.f32 1.0, %v7196
        %v7198 = vmul.f32 %v7195, %v7197
        %v7199 = vadd.f32 %v7195, %v7198
        %vm7200 = vweird.f32 %v6969
        %vm7201 = vweird.f32 %v7195
        %vm7202 = vmor %vm7200, %vm7201
        %v7203 = vsel %vm7202, %v7195, %v7199
        %v7204 = vand.u32 2147483647, %v6969
        %vm7205 = vcmp.eq.f32.partialorder %v7204, 8.507059e+37
        %v7206 = vand.u32 %v6969, 2147483648
        %v7207 = vor.u32 1.1754944e-38, %v7206
        %v7208 = vsel %vm7205, %v7207, %v7203
        %v7209 = vmul.f32 %v6937, %v7208
        %v7210 = vpack.c.bf16 %v6999, %v6984
        %v7211 = vpack.c.bf16 %v7029, %v7014
        %v7212 = vpack.c.bf16 %v7059, %v7044
        %v7213 = vpack.c.bf16 %v7089, %v7074
        %v7214 = vpack.c.bf16 %v7119, %v7104
        %v7215 = vpack.c.bf16 %v7149, %v7134
        %v7216 = vpack.c.bf16 %v7179, %v7164
        %v7217 = vpack.c.bf16 %v7209, %v7194
        %7218 = vrot.lane.b32.xlu0 %v4240, 48
        %v7219 = vpop.permute.xlu0 %7218
        %7220 = vrot.lane.b32.xlu0 %v4241, 48
        %v7221 = vpop.permute.xlu0 %7220
        %7222 = vrot.lane.b32.xlu0 %v4242, 48
        %v7223 = vpop.permute.xlu0 %7222
        %7224 = vrot.lane.b32.xlu0 %v4243, 48
        %v7225 = vpop.permute.xlu0 %7224
        %7226 = vrot.lane.b32.xlu0 %v4244, 48
        %v7227 = vpop.permute.xlu0 %7226
        %7228 = vrot.lane.b32.xlu0 %v4245, 48
        %v7229 = vpop.permute.xlu0 %7228
        %7230 = vrot.lane.b32.xlu0 %v4246, 48
        %v7231 = vpop.permute.xlu0 %7230
        %7232 = vrot.lane.b32.xlu0 %v4247, 48
        %v7233 = vpop.permute.xlu0 %7232
        %7242 = vmatpush.bf16.msra.mxu0 %v7233
        %7243 = vmatpush.bf16.msra.mxu0 %v7231
        %7244 = vmatpush.bf16.msra.mxu0 %v7229
        %7245 = vmatpush.bf16.msra.mxu0 %v7227
        %7246 = vmatpush.bf16.msra.mxu0 %v7225
        %7247 = vmatpush.bf16.msra.mxu0 %v7223
        %7248 = vmatpush.bf16.msra.mxu0 %v7221
        %7249 = vmatpush.bf16.msra.mxu0 %v7219
        %7250 = vmatmul.bf16.gmra.mxu0 %v7210
        %v7251 = vpop.f32.mrf.mxu0
        %v7252 = vadd.f32 0.0, %v7251
        %v7253 = vpop.f32.mrf.mxu0
        %v7254 = vadd.f32 0.0, %v7253
        %7255 = vmatmul.bf16.gmra.mxu0 %v7211
        %v7256 = vpop.f32.mrf.mxu0
        %v7257 = vadd.f32 0.0, %v7256
        %v7258 = vpop.f32.mrf.mxu0
        %v7259 = vadd.f32 0.0, %v7258
        %7260 = vmatmul.bf16.gmra.mxu0 %v7212
        %v7261 = vpop.f32.mrf.mxu0
        %v7262 = vadd.f32 0.0, %v7261
        %v7263 = vpop.f32.mrf.mxu0
        %v7264 = vadd.f32 0.0, %v7263
        %7265 = vmatmul.bf16.gmra.mxu0 %v7213
        %v7266 = vpop.f32.mrf.mxu0
        %v7267 = vadd.f32 0.0, %v7266
        %v7268 = vpop.f32.mrf.mxu0
        %v7269 = vadd.f32 0.0, %v7268
        %7270 = vmatmul.bf16.gmra.mxu0 %v7214
        %v7271 = vpop.f32.mrf.mxu0
        %v7272 = vadd.f32 0.0, %v7271
        %v7273 = vpop.f32.mrf.mxu0
        %v7274 = vadd.f32 0.0, %v7273
        %7275 = vmatmul.bf16.gmra.mxu0 %v7215
        %v7276 = vpop.f32.mrf.mxu0
        %v7277 = vadd.f32 0.0, %v7276
        %v7278 = vpop.f32.mrf.mxu0
        %v7279 = vadd.f32 0.0, %v7278
        %7280 = vmatmul.bf16.gmra.mxu0 %v7216
        %v7281 = vpop.f32.mrf.mxu0
        %v7282 = vadd.f32 0.0, %v7281
        %v7283 = vpop.f32.mrf.mxu0
        %v7284 = vadd.f32 0.0, %v7283
        %7285 = vmatmul.bf16.gmra.mxu0 %v7217
        %v7286 = vpop.f32.mrf.mxu0
        %v7287 = vadd.f32 0.0, %v7286
        %v7288 = vpop.f32.mrf.mxu0
        %v7289 = vadd.f32 0.0, %v7288
        %7290 = vdwg.mxu0
        %7291 = vrot.lane.b32.xlu0 %v3728, 32
        %v7292 = vpop.permute.xlu0 %7291
        %7293 = vrot.lane.b32.xlu0 %v3729, 32
        %v7294 = vpop.permute.xlu0 %7293
        %7295 = vrot.lane.b32.xlu0 %v3730, 32
        %v7296 = vpop.permute.xlu0 %7295
        %7297 = vrot.lane.b32.xlu0 %v3731, 32
        %v7298 = vpop.permute.xlu0 %7297
        %7299 = vrot.lane.b32.xlu0 %v3732, 32
        %v7300 = vpop.permute.xlu0 %7299
        %7301 = vrot.lane.b32.xlu0 %v3733, 32
        %v7302 = vpop.permute.xlu0 %7301
        %7303 = vrot.lane.b32.xlu0 %v3734, 32
        %v7304 = vpop.permute.xlu0 %7303
        %7305 = vrot.lane.b32.xlu0 %v3735, 32
        %v7306 = vpop.permute.xlu0 %7305
        %7307 = vrot.lane.b32.xlu0 %v3736, 32
        %v7308 = vpop.permute.xlu0 %7307
        %7309 = vrot.lane.b32.xlu0 %v3737, 32
        %v7310 = vpop.permute.xlu0 %7309
        %7311 = vrot.lane.b32.xlu0 %v3738, 32
        %v7312 = vpop.permute.xlu0 %7311
        %7313 = vrot.lane.b32.xlu0 %v3739, 32
        %v7314 = vpop.permute.xlu0 %7313
        %7315 = vrot.lane.b32.xlu0 %v3740, 32
        %v7316 = vpop.permute.xlu0 %7315
        %7317 = vrot.lane.b32.xlu0 %v3741, 32
        %v7318 = vpop.permute.xlu0 %7317
        %7319 = vrot.lane.b32.xlu0 %v3742, 32
        %v7320 = vpop.permute.xlu0 %7319
        %7321 = vrot.lane.b32.xlu0 %v3743, 32
        %v7322 = vpop.permute.xlu0 %7321
        %v7324 = vsel %vm3744, %v7292, 0
        %v7327 = vsel %vm3744, %v7294, 0
        %v7330 = vsel %vm3744, %v7296, 0
        %v7333 = vsel %vm3744, %v7298, 0
        %v7336 = vsel %vm3744, %v7300, 0
        %v7339 = vsel %vm3744, %v7302, 0
        %v7342 = vsel %vm3744, %v7304, 0
        %v7345 = vsel %vm3744, %v7306, 0
        %v7348 = vsel %vm3744, %v7308, 0
        %v7351 = vsel %vm3744, %v7310, 0
        %v7354 = vsel %vm3744, %v7312, 0
        %v7357 = vsel %vm3744, %v7314, 0
        %v7360 = vsel %vm3744, %v7316, 0
        %v7363 = vsel %vm3744, %v7318, 0
        %v7366 = vsel %vm3744, %v7320, 0
        %v7369 = vsel %vm3744, %v7322, 0
        %7371 = vmatpush.bf16.xpose.msra.mxu0 %v7369
        %7372 = vmatpush.bf16.xpose.msra.mxu0 %v7366
        %7373 = vmatpush.bf16.xpose.msra.mxu0 %v7363
        %7374 = vmatpush.bf16.xpose.msra.mxu0 %v7360
        %7375 = vmatpush.bf16.xpose.msra.mxu0 %v7357
        %7376 = vmatpush.bf16.xpose.msra.mxu0 %v7354
        %7377 = vmatpush.bf16.xpose.msra.mxu0 %v7351
        %7378 = vmatpush.bf16.xpose.msra.mxu0 %v7348
        %7379 = vmatmul.bf16.gmra.mxu0 %v7324
        %v7380 = vpop.f32.mrf.mxu0
        %v7381 = vadd.f32 0.0, %v7380
        %v7382 = vpop.f32.mrf.mxu0
        %v7383 = vadd.f32 0.0, %v7382
        %7384 = vmatmul.bf16.gmra.mxu0 %v7327
        %v7385 = vpop.f32.mrf.mxu0
        %v7386 = vadd.f32 0.0, %v7385
        %v7387 = vpop.f32.mrf.mxu0
        %v7388 = vadd.f32 0.0, %v7387
        %7389 = vmatmul.bf16.gmra.mxu0 %v7330
        %v7390 = vpop.f32.mrf.mxu0
        %v7391 = vadd.f32 0.0, %v7390
        %v7392 = vpop.f32.mrf.mxu0
        %v7393 = vadd.f32 0.0, %v7392
        %7394 = vmatmul.bf16.gmra.mxu0 %v7333
        %v7395 = vpop.f32.mrf.mxu0
        %v7396 = vadd.f32 0.0, %v7395
        %v7397 = vpop.f32.mrf.mxu0
        %v7398 = vadd.f32 0.0, %v7397
        %7399 = vmatmul.bf16.gmra.mxu0 %v7336
        %v7400 = vpop.f32.mrf.mxu0
        %v7401 = vadd.f32 0.0, %v7400
        %v7402 = vpop.f32.mrf.mxu0
        %v7403 = vadd.f32 0.0, %v7402
        %7404 = vmatmul.bf16.gmra.mxu0 %v7339
        %v7405 = vpop.f32.mrf.mxu0
        %v7406 = vadd.f32 0.0, %v7405
        %v7407 = vpop.f32.mrf.mxu0
        %v7408 = vadd.f32 0.0, %v7407
        %7409 = vmatmul.bf16.gmra.mxu0 %v7342
        %v7410 = vpop.f32.mrf.mxu0
        %v7411 = vadd.f32 0.0, %v7410
        %v7412 = vpop.f32.mrf.mxu0
        %v7413 = vadd.f32 0.0, %v7412
        %7414 = vmatmul.bf16.gmra.mxu0 %v7345
        %v7415 = vpop.f32.mrf.mxu0
        %v7416 = vadd.f32 0.0, %v7415
        %v7417 = vpop.f32.mrf.mxu0
        %v7418 = vadd.f32 0.0, %v7417
        %7419 = vdwg.mxu0
        %v7420 = vmul.f32 %v7381, %v3843
        %v7421 = vmul.f32 %v7383, %v3843
        %v7422 = vmul.f32 %v7386, %v3843
        %v7423 = vmul.f32 %v7388, %v3843
        %v7424 = vmul.f32 %v7391, %v3843
        %v7425 = vmul.f32 %v7393, %v3843
        %v7426 = vmul.f32 %v7396, %v3843
        %v7427 = vmul.f32 %v7398, %v3843
        %v7428 = vmul.f32 %v7401, %v3843
        %v7429 = vmul.f32 %v7403, %v3843
        %v7430 = vmul.f32 %v7406, %v3843
        %v7431 = vmul.f32 %v7408, %v3843
        %v7432 = vmul.f32 %v7411, %v3843
        %v7433 = vmul.f32 %v7413, %v3843
        %v7434 = vmul.f32 %v7416, %v3843
        %v7435 = vmul.f32 %v7418, %v3843
        %v7436 = vadd.f32 %v7420, %v3862
        %v7437 = vadd.f32 %v7421, %v3862
        %v7438 = vadd.f32 %v7422, %v3862
        %v7439 = vadd.f32 %v7423, %v3862
        %v7440 = vadd.f32 %v7424, %v3862
        %v7441 = vadd.f32 %v7425, %v3862
        %v7442 = vadd.f32 %v7426, %v3862
        %v7443 = vadd.f32 %v7427, %v3862
        %v7444 = vadd.f32 %v7428, %v3862
        %v7445 = vadd.f32 %v7429, %v3862
        %v7446 = vadd.f32 %v7430, %v3862
        %v7447 = vadd.f32 %v7431, %v3862
        %v7448 = vadd.f32 %v7432, %v3862
        %v7449 = vadd.f32 %v7433, %v3862
        %v7450 = vadd.f32 %v7434, %v3862
        %v7451 = vadd.f32 %v7435, %v3862
        %7452 = vmax.xlane.f32.xlu0 %v7436
        %v7453 = vpop.xlane.xlu0 %7452
        %7454 = vmax.xlane.f32.xlu0 %v7437
        %v7455 = vpop.xlane.xlu0 %7454
        %7456 = vmax.xlane.f32.xlu0 %v7438
        %v7457 = vpop.xlane.xlu0 %7456
        %7458 = vmax.xlane.f32.xlu0 %v7439
        %v7459 = vpop.xlane.xlu0 %7458
        %7460 = vmax.xlane.f32.xlu0 %v7440
        %v7461 = vpop.xlane.xlu0 %7460
        %7462 = vmax.xlane.f32.xlu0 %v7441
        %v7463 = vpop.xlane.xlu0 %7462
        %7464 = vmax.xlane.f32.xlu0 %v7442
        %v7465 = vpop.xlane.xlu0 %7464
        %7466 = vmax.xlane.f32.xlu0 %v7443
        %v7467 = vpop.xlane.xlu0 %7466
        %7468 = vmax.xlane.f32.xlu0 %v7444
        %v7469 = vpop.xlane.xlu0 %7468
        %7470 = vmax.xlane.f32.xlu0 %v7445
        %v7471 = vpop.xlane.xlu0 %7470
        %7472 = vmax.xlane.f32.xlu0 %v7446
        %v7473 = vpop.xlane.xlu0 %7472
        %7474 = vmax.xlane.f32.xlu0 %v7447
        %v7475 = vpop.xlane.xlu0 %7474
        %7476 = vmax.xlane.f32.xlu0 %v7448
        %v7477 = vpop.xlane.xlu0 %7476
        %7478 = vmax.xlane.f32.xlu0 %v7449
        %v7479 = vpop.xlane.xlu0 %7478
        %7480 = vmax.xlane.f32.xlu0 %v7450
        %v7481 = vpop.xlane.xlu0 %7480
        %7482 = vmax.xlane.f32.xlu0 %v7451
        %v7483 = vpop.xlane.xlu0 %7482
        %v7484 = vsub.f32 %v7436, %v7453
        %v7485 = vsub.f32 %v7437, %v7455
        %v7486 = vsub.f32 %v7438, %v7457
        %v7487 = vsub.f32 %v7439, %v7459
        %v7488 = vsub.f32 %v7440, %v7461
        %v7489 = vsub.f32 %v7441, %v7463
        %v7490 = vsub.f32 %v7442, %v7465
        %v7491 = vsub.f32 %v7443, %v7467
        %v7492 = vsub.f32 %v7444, %v7469
        %v7493 = vsub.f32 %v7445, %v7471
        %v7494 = vsub.f32 %v7446, %v7473
        %v7495 = vsub.f32 %v7447, %v7475
        %v7496 = vsub.f32 %v7448, %v7477
        %v7497 = vsub.f32 %v7449, %v7479
        %v7498 = vsub.f32 %v7450, %v7481
        %v7499 = vsub.f32 %v7451, %v7483
        %v7500 = vmul.f32 %v7484, 1.442695
        %v7501 = vpow.pop %v7500
        %v7502 = vmul.f32 %v7485, 1.442695
        %v7503 = vpow.pop %v7502
        %v7504 = vmul.f32 %v7486, 1.442695
        %v7505 = vpow.pop %v7504
        %v7506 = vmul.f32 %v7487, 1.442695
        %v7507 = vpow.pop %v7506
        %v7508 = vmul.f32 %v7488, 1.442695
        %v7509 = vpow.pop %v7508
        %v7510 = vmul.f32 %v7489, 1.442695
        %v7511 = vpow.pop %v7510
        %v7512 = vmul.f32 %v7490, 1.442695
        %v7513 = vpow.pop %v7512
        %v7514 = vmul.f32 %v7491, 1.442695
        %v7515 = vpow.pop %v7514
        %v7516 = vmul.f32 %v7492, 1.442695
        %v7517 = vpow.pop %v7516
        %v7518 = vmul.f32 %v7493, 1.442695
        %v7519 = vpow.pop %v7518
        %v7520 = vmul.f32 %v7494, 1.442695
        %v7521 = vpow.pop %v7520
        %v7522 = vmul.f32 %v7495, 1.442695
        %v7523 = vpow.pop %v7522
        %v7524 = vmul.f32 %v7496, 1.442695
        %v7525 = vpow.pop %v7524
        %v7526 = vmul.f32 %v7497, 1.442695
        %v7527 = vpow.pop %v7526
        %v7528 = vmul.f32 %v7498, 1.442695
        %v7529 = vpow.pop %v7528
        %v7530 = vmul.f32 %v7499, 1.442695
        %v7531 = vpow.pop %v7530
        %7532 = vadd.xlane.f32.xlu0 %v7501
        %v7533 = vpop.xlane.xlu0 %7532
        %7534 = vadd.xlane.f32.xlu0 %v7503
        %v7535 = vpop.xlane.xlu0 %7534
        %7536 = vadd.xlane.f32.xlu0 %v7505
        %v7537 = vpop.xlane.xlu0 %7536
        %7538 = vadd.xlane.f32.xlu0 %v7507
        %v7539 = vpop.xlane.xlu0 %7538
        %7540 = vadd.xlane.f32.xlu0 %v7509
        %v7541 = vpop.xlane.xlu0 %7540
        %7542 = vadd.xlane.f32.xlu0 %v7511
        %v7543 = vpop.xlane.xlu0 %7542
        %7544 = vadd.xlane.f32.xlu0 %v7513
        %v7545 = vpop.xlane.xlu0 %7544
        %7546 = vadd.xlane.f32.xlu0 %v7515
        %v7547 = vpop.xlane.xlu0 %7546
        %7548 = vadd.xlane.f32.xlu0 %v7517
        %v7549 = vpop.xlane.xlu0 %7548
        %7550 = vadd.xlane.f32.xlu0 %v7519
        %v7551 = vpop.xlane.xlu0 %7550
        %7552 = vadd.xlane.f32.xlu0 %v7521
        %v7553 = vpop.xlane.xlu0 %7552
        %7554 = vadd.xlane.f32.xlu0 %v7523
        %v7555 = vpop.xlane.xlu0 %7554
        %7556 = vadd.xlane.f32.xlu0 %v7525
        %v7557 = vpop.xlane.xlu0 %7556
        %7558 = vadd.xlane.f32.xlu0 %v7527
        %v7559 = vpop.xlane.xlu0 %7558
        %7560 = vadd.xlane.f32.xlu0 %v7529
        %v7561 = vpop.xlane.xlu0 %7560
        %7562 = vadd.xlane.f32.xlu0 %v7531
        %v7563 = vpop.xlane.xlu0 %7562
        %v7564 = vrcp.pop %v7533
        %v7565 = vmul.f32 %v7533, %v7564
        %v7566 = vsub.f32 1.0, %v7565
        %v7567 = vmul.f32 %v7564, %v7566
        %v7568 = vadd.f32 %v7564, %v7567
        %vm7569 = vweird.f32 %v7533
        %vm7570 = vweird.f32 %v7564
        %vm7571 = vmor %vm7569, %vm7570
        %v7572 = vsel %vm7571, %v7564, %v7568
        %v7573 = vand.u32 2147483647, %v7533
        %vm7574 = vcmp.eq.f32.partialorder %v7573, 8.507059e+37
        %v7575 = vand.u32 %v7533, 2147483648
        %v7576 = vor.u32 1.1754944e-38, %v7575
        %v7577 = vsel %vm7574, %v7576, %v7572
        %v7578 = vmul.f32 %v7501, %v7577
        %v7579 = vrcp.pop %v7535
        %v7580 = vmul.f32 %v7535, %v7579
        %v7581 = vsub.f32 1.0, %v7580
        %v7582 = vmul.f32 %v7579, %v7581
        %v7583 = vadd.f32 %v7579, %v7582
        %vm7584 = vweird.f32 %v7535
        %vm7585 = vweird.f32 %v7579
        %vm7586 = vmor %vm7584, %vm7585
        %v7587 = vsel %vm7586, %v7579, %v7583
        %v7588 = vand.u32 2147483647, %v7535
        %vm7589 = vcmp.eq.f32.partialorder %v7588, 8.507059e+37
        %v7590 = vand.u32 %v7535, 2147483648
        %v7591 = vor.u32 1.1754944e-38, %v7590
        %v7592 = vsel %vm7589, %v7591, %v7587
        %v7593 = vmul.f32 %v7503, %v7592
        %v7594 = vrcp.pop %v7537
        %v7595 = vmul.f32 %v7537, %v7594
        %v7596 = vsub.f32 1.0, %v7595
        %v7597 = vmul.f32 %v7594, %v7596
        %v7598 = vadd.f32 %v7594, %v7597
        %vm7599 = vweird.f32 %v7537
        %vm7600 = vweird.f32 %v7594
        %vm7601 = vmor %vm7599, %vm7600
        %v7602 = vsel %vm7601, %v7594, %v7598
        %v7603 = vand.u32 2147483647, %v7537
        %vm7604 = vcmp.eq.f32.partialorder %v7603, 8.507059e+37
        %v7605 = vand.u32 %v7537, 2147483648
        %v7606 = vor.u32 1.1754944e-38, %v7605
        %v7607 = vsel %vm7604, %v7606, %v7602
        %v7608 = vmul.f32 %v7505, %v7607
        %v7609 = vrcp.pop %v7539
        %v7610 = vmul.f32 %v7539, %v7609
        %v7611 = vsub.f32 1.0, %v7610
        %v7612 = vmul.f32 %v7609, %v7611
        %v7613 = vadd.f32 %v7609, %v7612
        %vm7614 = vweird.f32 %v7539
        %vm7615 = vweird.f32 %v7609
        %vm7616 = vmor %vm7614, %vm7615
        %v7617 = vsel %vm7616, %v7609, %v7613
        %v7618 = vand.u32 2147483647, %v7539
        %vm7619 = vcmp.eq.f32.partialorder %v7618, 8.507059e+37
        %v7620 = vand.u32 %v7539, 2147483648
        %v7621 = vor.u32 1.1754944e-38, %v7620
        %v7622 = vsel %vm7619, %v7621, %v7617
        %v7623 = vmul.f32 %v7507, %v7622
        %v7624 = vrcp.pop %v7541
        %v7625 = vmul.f32 %v7541, %v7624
        %v7626 = vsub.f32 1.0, %v7625
        %v7627 = vmul.f32 %v7624, %v7626
        %v7628 = vadd.f32 %v7624, %v7627
        %vm7629 = vweird.f32 %v7541
        %vm7630 = vweird.f32 %v7624
        %vm7631 = vmor %vm7629, %vm7630
        %v7632 = vsel %vm7631, %v7624, %v7628
        %v7633 = vand.u32 2147483647, %v7541
        %vm7634 = vcmp.eq.f32.partialorder %v7633, 8.507059e+37
        %v7635 = vand.u32 %v7541, 2147483648
        %v7636 = vor.u32 1.1754944e-38, %v7635
        %v7637 = vsel %vm7634, %v7636, %v7632
        %v7638 = vmul.f32 %v7509, %v7637
        %v7639 = vrcp.pop %v7543
        %v7640 = vmul.f32 %v7543, %v7639
        %v7641 = vsub.f32 1.0, %v7640
        %v7642 = vmul.f32 %v7639, %v7641
        %v7643 = vadd.f32 %v7639, %v7642
        %vm7644 = vweird.f32 %v7543
        %vm7645 = vweird.f32 %v7639
        %vm7646 = vmor %vm7644, %vm7645
        %v7647 = vsel %vm7646, %v7639, %v7643
        %v7648 = vand.u32 2147483647, %v7543
        %vm7649 = vcmp.eq.f32.partialorder %v7648, 8.507059e+37
        %v7650 = vand.u32 %v7543, 2147483648
        %v7651 = vor.u32 1.1754944e-38, %v7650
        %v7652 = vsel %vm7649, %v7651, %v7647
        %v7653 = vmul.f32 %v7511, %v7652
        %v7654 = vrcp.pop %v7545
        %v7655 = vmul.f32 %v7545, %v7654
        %v7656 = vsub.f32 1.0, %v7655
        %v7657 = vmul.f32 %v7654, %v7656
        %v7658 = vadd.f32 %v7654, %v7657
        %vm7659 = vweird.f32 %v7545
        %vm7660 = vweird.f32 %v7654
        %vm7661 = vmor %vm7659, %vm7660
        %v7662 = vsel %vm7661, %v7654, %v7658
        %v7663 = vand.u32 2147483647, %v7545
        %vm7664 = vcmp.eq.f32.partialorder %v7663, 8.507059e+37
        %v7665 = vand.u32 %v7545, 2147483648
        %v7666 = vor.u32 1.1754944e-38, %v7665
        %v7667 = vsel %vm7664, %v7666, %v7662
        %v7668 = vmul.f32 %v7513, %v7667
        %v7669 = vrcp.pop %v7547
        %v7670 = vmul.f32 %v7547, %v7669
        %v7671 = vsub.f32 1.0, %v7670
        %v7672 = vmul.f32 %v7669, %v7671
        %v7673 = vadd.f32 %v7669, %v7672
        %vm7674 = vweird.f32 %v7547
        %vm7675 = vweird.f32 %v7669
        %vm7676 = vmor %vm7674, %vm7675
        %v7677 = vsel %vm7676, %v7669, %v7673
        %v7678 = vand.u32 2147483647, %v7547
        %vm7679 = vcmp.eq.f32.partialorder %v7678, 8.507059e+37
        %v7680 = vand.u32 %v7547, 2147483648
        %v7681 = vor.u32 1.1754944e-38, %v7680
        %v7682 = vsel %vm7679, %v7681, %v7677
        %v7683 = vmul.f32 %v7515, %v7682
        %v7684 = vrcp.pop %v7549
        %v7685 = vmul.f32 %v7549, %v7684
        %v7686 = vsub.f32 1.0, %v7685
        %v7687 = vmul.f32 %v7684, %v7686
        %v7688 = vadd.f32 %v7684, %v7687
        %vm7689 = vweird.f32 %v7549
        %vm7690 = vweird.f32 %v7684
        %vm7691 = vmor %vm7689, %vm7690
        %v7692 = vsel %vm7691, %v7684, %v7688
        %v7693 = vand.u32 2147483647, %v7549
        %vm7694 = vcmp.eq.f32.partialorder %v7693, 8.507059e+37
        %v7695 = vand.u32 %v7549, 2147483648
        %v7696 = vor.u32 1.1754944e-38, %v7695
        %v7697 = vsel %vm7694, %v7696, %v7692
        %v7698 = vmul.f32 %v7517, %v7697
        %v7699 = vrcp.pop %v7551
        %v7700 = vmul.f32 %v7551, %v7699
        %v7701 = vsub.f32 1.0, %v7700
        %v7702 = vmul.f32 %v7699, %v7701
        %v7703 = vadd.f32 %v7699, %v7702
        %vm7704 = vweird.f32 %v7551
        %vm7705 = vweird.f32 %v7699
        %vm7706 = vmor %vm7704, %vm7705
        %v7707 = vsel %vm7706, %v7699, %v7703
        %v7708 = vand.u32 2147483647, %v7551
        %vm7709 = vcmp.eq.f32.partialorder %v7708, 8.507059e+37
        %v7710 = vand.u32 %v7551, 2147483648
        %v7711 = vor.u32 1.1754944e-38, %v7710
        %v7712 = vsel %vm7709, %v7711, %v7707
        %v7713 = vmul.f32 %v7519, %v7712
        %v7714 = vrcp.pop %v7553
        %v7715 = vmul.f32 %v7553, %v7714
        %v7716 = vsub.f32 1.0, %v7715
        %v7717 = vmul.f32 %v7714, %v7716
        %v7718 = vadd.f32 %v7714, %v7717
        %vm7719 = vweird.f32 %v7553
        %vm7720 = vweird.f32 %v7714
        %vm7721 = vmor %vm7719, %vm7720
        %v7722 = vsel %vm7721, %v7714, %v7718
        %v7723 = vand.u32 2147483647, %v7553
        %vm7724 = vcmp.eq.f32.partialorder %v7723, 8.507059e+37
        %v7725 = vand.u32 %v7553, 2147483648
        %v7726 = vor.u32 1.1754944e-38, %v7725
        %v7727 = vsel %vm7724, %v7726, %v7722
        %v7728 = vmul.f32 %v7521, %v7727
        %v7729 = vrcp.pop %v7555
        %v7730 = vmul.f32 %v7555, %v7729
        %v7731 = vsub.f32 1.0, %v7730
        %v7732 = vmul.f32 %v7729, %v7731
        %v7733 = vadd.f32 %v7729, %v7732
        %vm7734 = vweird.f32 %v7555
        %vm7735 = vweird.f32 %v7729
        %vm7736 = vmor %vm7734, %vm7735
        %v7737 = vsel %vm7736, %v7729, %v7733
        %v7738 = vand.u32 2147483647, %v7555
        %vm7739 = vcmp.eq.f32.partialorder %v7738, 8.507059e+37
        %v7740 = vand.u32 %v7555, 2147483648
        %v7741 = vor.u32 1.1754944e-38, %v7740
        %v7742 = vsel %vm7739, %v7741, %v7737
        %v7743 = vmul.f32 %v7523, %v7742
        %v7744 = vrcp.pop %v7557
        %v7745 = vmul.f32 %v7557, %v7744
        %v7746 = vsub.f32 1.0, %v7745
        %v7747 = vmul.f32 %v7744, %v7746
        %v7748 = vadd.f32 %v7744, %v7747
        %vm7749 = vweird.f32 %v7557
        %vm7750 = vweird.f32 %v7744
        %vm7751 = vmor %vm7749, %vm7750
        %v7752 = vsel %vm7751, %v7744, %v7748
        %v7753 = vand.u32 2147483647, %v7557
        %vm7754 = vcmp.eq.f32.partialorder %v7753, 8.507059e+37
        %v7755 = vand.u32 %v7557, 2147483648
        %v7756 = vor.u32 1.1754944e-38, %v7755
        %v7757 = vsel %vm7754, %v7756, %v7752
        %v7758 = vmul.f32 %v7525, %v7757
        %v7759 = vrcp.pop %v7559
        %v7760 = vmul.f32 %v7559, %v7759
        %v7761 = vsub.f32 1.0, %v7760
        %v7762 = vmul.f32 %v7759, %v7761
        %v7763 = vadd.f32 %v7759, %v7762
        %vm7764 = vweird.f32 %v7559
        %vm7765 = vweird.f32 %v7759
        %vm7766 = vmor %vm7764, %vm7765
        %v7767 = vsel %vm7766, %v7759, %v7763
        %v7768 = vand.u32 2147483647, %v7559
        %vm7769 = vcmp.eq.f32.partialorder %v7768, 8.507059e+37
        %v7770 = vand.u32 %v7559, 2147483648
        %v7771 = vor.u32 1.1754944e-38, %v7770
        %v7772 = vsel %vm7769, %v7771, %v7767
        %v7773 = vmul.f32 %v7527, %v7772
        %v7774 = vrcp.pop %v7561
        %v7775 = vmul.f32 %v7561, %v7774
        %v7776 = vsub.f32 1.0, %v7775
        %v7777 = vmul.f32 %v7774, %v7776
        %v7778 = vadd.f32 %v7774, %v7777
        %vm7779 = vweird.f32 %v7561
        %vm7780 = vweird.f32 %v7774
        %vm7781 = vmor %vm7779, %vm7780
        %v7782 = vsel %vm7781, %v7774, %v7778
        %v7783 = vand.u32 2147483647, %v7561
        %vm7784 = vcmp.eq.f32.partialorder %v7783, 8.507059e+37
        %v7785 = vand.u32 %v7561, 2147483648
        %v7786 = vor.u32 1.1754944e-38, %v7785
        %v7787 = vsel %vm7784, %v7786, %v7782
        %v7788 = vmul.f32 %v7529, %v7787
        %v7789 = vrcp.pop %v7563
        %v7790 = vmul.f32 %v7563, %v7789
        %v7791 = vsub.f32 1.0, %v7790
        %v7792 = vmul.f32 %v7789, %v7791
        %v7793 = vadd.f32 %v7789, %v7792
        %vm7794 = vweird.f32 %v7563
        %vm7795 = vweird.f32 %v7789
        %vm7796 = vmor %vm7794, %vm7795
        %v7797 = vsel %vm7796, %v7789, %v7793
        %v7798 = vand.u32 2147483647, %v7563
        %vm7799 = vcmp.eq.f32.partialorder %v7798, 8.507059e+37
        %v7800 = vand.u32 %v7563, 2147483648
        %v7801 = vor.u32 1.1754944e-38, %v7800
        %v7802 = vsel %vm7799, %v7801, %v7797
        %v7803 = vmul.f32 %v7531, %v7802
        %v7804 = vpack.c.bf16 %v7593, %v7578
        %v7805 = vpack.c.bf16 %v7623, %v7608
        %v7806 = vpack.c.bf16 %v7653, %v7638
        %v7807 = vpack.c.bf16 %v7683, %v7668
        %v7808 = vpack.c.bf16 %v7713, %v7698
        %v7809 = vpack.c.bf16 %v7743, %v7728
        %v7810 = vpack.c.bf16 %v7773, %v7758
        %v7811 = vpack.c.bf16 %v7803, %v7788
        %7812 = vrot.lane.b32.xlu0 %v4240, 32
        %v7813 = vpop.permute.xlu0 %7812
        %7814 = vrot.lane.b32.xlu0 %v4241, 32
        %v7815 = vpop.permute.xlu0 %7814
        %7816 = vrot.lane.b32.xlu0 %v4242, 32
        %v7817 = vpop.permute.xlu0 %7816
        %7818 = vrot.lane.b32.xlu0 %v4243, 32
        %v7819 = vpop.permute.xlu0 %7818
        %7820 = vrot.lane.b32.xlu0 %v4244, 32
        %v7821 = vpop.permute.xlu0 %7820
        %7822 = vrot.lane.b32.xlu0 %v4245, 32
        %v7823 = vpop.permute.xlu0 %7822
        %7824 = vrot.lane.b32.xlu0 %v4246, 32
        %v7825 = vpop.permute.xlu0 %7824
        %7826 = vrot.lane.b32.xlu0 %v4247, 32
        %v7827 = vpop.permute.xlu0 %7826
        %7836 = vmatpush.bf16.msra.mxu0 %v7827
        %7837 = vmatpush.bf16.msra.mxu0 %v7825
        %7838 = vmatpush.bf16.msra.mxu0 %v7823
        %7839 = vmatpush.bf16.msra.mxu0 %v7821
        %7840 = vmatpush.bf16.msra.mxu0 %v7819
        %7841 = vmatpush.bf16.msra.mxu0 %v7817
        %7842 = vmatpush.bf16.msra.mxu0 %v7815
        %7843 = vmatpush.bf16.msra.mxu0 %v7813
        %7844 = vmatmul.bf16.gmra.mxu0 %v7804
        %v7845 = vpop.f32.mrf.mxu0
        %v7846 = vadd.f32 0.0, %v7845
        %v7847 = vpop.f32.mrf.mxu0
        %v7848 = vadd.f32 0.0, %v7847
        %7849 = vmatmul.bf16.gmra.mxu0 %v7805
        %v7850 = vpop.f32.mrf.mxu0
        %v7851 = vadd.f32 0.0, %v7850
        %v7852 = vpop.f32.mrf.mxu0
        %v7853 = vadd.f32 0.0, %v7852
        %7854 = vmatmul.bf16.gmra.mxu0 %v7806
        %v7855 = vpop.f32.mrf.mxu0
        %v7856 = vadd.f32 0.0, %v7855
        %v7857 = vpop.f32.mrf.mxu0
        %v7858 = vadd.f32 0.0, %v7857
        %7859 = vmatmul.bf16.gmra.mxu0 %v7807
        %v7860 = vpop.f32.mrf.mxu0
        %v7861 = vadd.f32 0.0, %v7860
        %v7862 = vpop.f32.mrf.mxu0
        %v7863 = vadd.f32 0.0, %v7862
        %7864 = vmatmul.bf16.gmra.mxu0 %v7808
        %v7865 = vpop.f32.mrf.mxu0
        %v7866 = vadd.f32 0.0, %v7865
        %v7867 = vpop.f32.mrf.mxu0
        %v7868 = vadd.f32 0.0, %v7867
        %7869 = vmatmul.bf16.gmra.mxu0 %v7809
        %v7870 = vpop.f32.mrf.mxu0
        %v7871 = vadd.f32 0.0, %v7870
        %v7872 = vpop.f32.mrf.mxu0
        %v7873 = vadd.f32 0.0, %v7872
        %7874 = vmatmul.bf16.gmra.mxu0 %v7810
        %v7875 = vpop.f32.mrf.mxu0
        %v7876 = vadd.f32 0.0, %v7875
        %v7877 = vpop.f32.mrf.mxu0
        %v7878 = vadd.f32 0.0, %v7877
        %7879 = vmatmul.bf16.gmra.mxu0 %v7811
        %v7880 = vpop.f32.mrf.mxu0
        %v7881 = vadd.f32 0.0, %v7880
        %v7882 = vpop.f32.mrf.mxu0
        %v7883 = vadd.f32 0.0, %v7882
        %7884 = vdwg.mxu0
        %7885 = vrot.lane.b32.xlu0 %v3728, 16
        %v7886 = vpop.permute.xlu0 %7885
        %7887 = vrot.lane.b32.xlu0 %v3729, 16
        %v7888 = vpop.permute.xlu0 %7887
        %7889 = vrot.lane.b32.xlu0 %v3730, 16
        %v7890 = vpop.permute.xlu0 %7889
        %7891 = vrot.lane.b32.xlu0 %v3731, 16
        %v7892 = vpop.permute.xlu0 %7891
        %7893 = vrot.lane.b32.xlu0 %v3732, 16
        %v7894 = vpop.permute.xlu0 %7893
        %7895 = vrot.lane.b32.xlu0 %v3733, 16
        %v7896 = vpop.permute.xlu0 %7895
        %7897 = vrot.lane.b32.xlu0 %v3734, 16
        %v7898 = vpop.permute.xlu0 %7897
        %7899 = vrot.lane.b32.xlu0 %v3735, 16
        %v7900 = vpop.permute.xlu0 %7899
        %7901 = vrot.lane.b32.xlu0 %v3736, 16
        %v7902 = vpop.permute.xlu0 %7901
        %7903 = vrot.lane.b32.xlu0 %v3737, 16
        %v7904 = vpop.permute.xlu0 %7903
        %7905 = vrot.lane.b32.xlu0 %v3738, 16
        %v7906 = vpop.permute.xlu0 %7905
        %7907 = vrot.lane.b32.xlu0 %v3739, 16
        %v7908 = vpop.permute.xlu0 %7907
        %7909 = vrot.lane.b32.xlu0 %v3740, 16
        %v7910 = vpop.permute.xlu0 %7909
        %7911 = vrot.lane.b32.xlu0 %v3741, 16
        %v7912 = vpop.permute.xlu0 %7911
        %7913 = vrot.lane.b32.xlu0 %v3742, 16
        %v7914 = vpop.permute.xlu0 %7913
        %7915 = vrot.lane.b32.xlu0 %v3743, 16
        %v7916 = vpop.permute.xlu0 %7915
        %v7918 = vsel %vm3744, %v7886, 0
        %v7921 = vsel %vm3744, %v7888, 0
        %v7924 = vsel %vm3744, %v7890, 0
        %v7927 = vsel %vm3744, %v7892, 0
        %v7930 = vsel %vm3744, %v7894, 0
        %v7933 = vsel %vm3744, %v7896, 0
        %v7936 = vsel %vm3744, %v7898, 0
        %v7939 = vsel %vm3744, %v7900, 0
        %v7942 = vsel %vm3744, %v7902, 0
        %v7945 = vsel %vm3744, %v7904, 0
        %v7948 = vsel %vm3744, %v7906, 0
        %v7951 = vsel %vm3744, %v7908, 0
        %v7954 = vsel %vm3744, %v7910, 0
        %v7957 = vsel %vm3744, %v7912, 0
        %v7960 = vsel %vm3744, %v7914, 0
        %v7963 = vsel %vm3744, %v7916, 0
        %7965 = vmatpush.bf16.xpose.msra.mxu0 %v7963
        %7966 = vmatpush.bf16.xpose.msra.mxu0 %v7960
        %7967 = vmatpush.bf16.xpose.msra.mxu0 %v7957
        %7968 = vmatpush.bf16.xpose.msra.mxu0 %v7954
        %7969 = vmatpush.bf16.xpose.msra.mxu0 %v7951
        %7970 = vmatpush.bf16.xpose.msra.mxu0 %v7948
        %7971 = vmatpush.bf16.xpose.msra.mxu0 %v7945
        %7972 = vmatpush.bf16.xpose.msra.mxu0 %v7942
        %7973 = vmatmul.bf16.gmra.mxu0 %v7918
        %v7974 = vpop.f32.mrf.mxu0
        %v7975 = vadd.f32 0.0, %v7974
        %v7976 = vpop.f32.mrf.mxu0
        %v7977 = vadd.f32 0.0, %v7976
        %7978 = vmatmul.bf16.gmra.mxu0 %v7921
        %v7979 = vpop.f32.mrf.mxu0
        %v7980 = vadd.f32 0.0, %v7979
        %v7981 = vpop.f32.mrf.mxu0
        %v7982 = vadd.f32 0.0, %v7981
        %7983 = vmatmul.bf16.gmra.mxu0 %v7924
        %v7984 = vpop.f32.mrf.mxu0
        %v7985 = vadd.f32 0.0, %v7984
        %v7986 = vpop.f32.mrf.mxu0
        %v7987 = vadd.f32 0.0, %v7986
        %7988 = vmatmul.bf16.gmra.mxu0 %v7927
        %v7989 = vpop.f32.mrf.mxu0
        %v7990 = vadd.f32 0.0, %v7989
        %v7991 = vpop.f32.mrf.mxu0
        %v7992 = vadd.f32 0.0, %v7991
        %7993 = vmatmul.bf16.gmra.mxu0 %v7930
        %v7994 = vpop.f32.mrf.mxu0
        %v7995 = vadd.f32 0.0, %v7994
        %v7996 = vpop.f32.mrf.mxu0
        %v7997 = vadd.f32 0.0, %v7996
        %7998 = vmatmul.bf16.gmra.mxu0 %v7933
        %v7999 = vpop.f32.mrf.mxu0
        %v8000 = vadd.f32 0.0, %v7999
        %v8001 = vpop.f32.mrf.mxu0
        %v8002 = vadd.f32 0.0, %v8001
        %8003 = vmatmul.bf16.gmra.mxu0 %v7936
        %v8004 = vpop.f32.mrf.mxu0
        %v8005 = vadd.f32 0.0, %v8004
        %v8006 = vpop.f32.mrf.mxu0
        %v8007 = vadd.f32 0.0, %v8006
        %8008 = vmatmul.bf16.gmra.mxu0 %v7939
        %v8009 = vpop.f32.mrf.mxu0
        %v8010 = vadd.f32 0.0, %v8009
        %v8011 = vpop.f32.mrf.mxu0
        %v8012 = vadd.f32 0.0, %v8011
        %8013 = vdwg.mxu0
        %v8014 = vmul.f32 %v7975, %v3843
        %v8015 = vmul.f32 %v7977, %v3843
        %v8016 = vmul.f32 %v7980, %v3843
        %v8017 = vmul.f32 %v7982, %v3843
        %v8018 = vmul.f32 %v7985, %v3843
        %v8019 = vmul.f32 %v7987, %v3843
        %v8020 = vmul.f32 %v7990, %v3843
        %v8021 = vmul.f32 %v7992, %v3843
        %v8022 = vmul.f32 %v7995, %v3843
        %v8023 = vmul.f32 %v7997, %v3843
        %v8024 = vmul.f32 %v8000, %v3843
        %v8025 = vmul.f32 %v8002, %v3843
        %v8026 = vmul.f32 %v8005, %v3843
        %v8027 = vmul.f32 %v8007, %v3843
        %v8028 = vmul.f32 %v8010, %v3843
        %v8029 = vmul.f32 %v8012, %v3843
        %v8030 = vadd.f32 %v8014, %v3862
        %v8031 = vadd.f32 %v8015, %v3862
        %v8032 = vadd.f32 %v8016, %v3862
        %v8033 = vadd.f32 %v8017, %v3862
        %v8034 = vadd.f32 %v8018, %v3862
        %v8035 = vadd.f32 %v8019, %v3862
        %v8036 = vadd.f32 %v8020, %v3862
        %v8037 = vadd.f32 %v8021, %v3862
        %v8038 = vadd.f32 %v8022, %v3862
        %v8039 = vadd.f32 %v8023, %v3862
        %v8040 = vadd.f32 %v8024, %v3862
        %v8041 = vadd.f32 %v8025, %v3862
        %v8042 = vadd.f32 %v8026, %v3862
        %v8043 = vadd.f32 %v8027, %v3862
        %v8044 = vadd.f32 %v8028, %v3862
        %v8045 = vadd.f32 %v8029, %v3862
        %8046 = vmax.xlane.f32.xlu0 %v8030
        %v8047 = vpop.xlane.xlu0 %8046
        %8048 = vmax.xlane.f32.xlu0 %v8031
        %v8049 = vpop.xlane.xlu0 %8048
        %8050 = vmax.xlane.f32.xlu0 %v8032
        %v8051 = vpop.xlane.xlu0 %8050
        %8052 = vmax.xlane.f32.xlu0 %v8033
        %v8053 = vpop.xlane.xlu0 %8052
        %8054 = vmax.xlane.f32.xlu0 %v8034
        %v8055 = vpop.xlane.xlu0 %8054
        %8056 = vmax.xlane.f32.xlu0 %v8035
        %v8057 = vpop.xlane.xlu0 %8056
        %8058 = vmax.xlane.f32.xlu0 %v8036
        %v8059 = vpop.xlane.xlu0 %8058
        %8060 = vmax.xlane.f32.xlu0 %v8037
        %v8061 = vpop.xlane.xlu0 %8060
        %8062 = vmax.xlane.f32.xlu0 %v8038
        %v8063 = vpop.xlane.xlu0 %8062
        %8064 = vmax.xlane.f32.xlu0 %v8039
        %v8065 = vpop.xlane.xlu0 %8064
        %8066 = vmax.xlane.f32.xlu0 %v8040
        %v8067 = vpop.xlane.xlu0 %8066
        %8068 = vmax.xlane.f32.xlu0 %v8041
        %v8069 = vpop.xlane.xlu0 %8068
        %8070 = vmax.xlane.f32.xlu0 %v8042
        %v8071 = vpop.xlane.xlu0 %8070
        %8072 = vmax.xlane.f32.xlu0 %v8043
        %v8073 = vpop.xlane.xlu0 %8072
        %8074 = vmax.xlane.f32.xlu0 %v8044
        %v8075 = vpop.xlane.xlu0 %8074
        %8076 = vmax.xlane.f32.xlu0 %v8045
        %v8077 = vpop.xlane.xlu0 %8076
        %v8078 = vsub.f32 %v8030, %v8047
        %v8079 = vsub.f32 %v8031, %v8049
        %v8080 = vsub.f32 %v8032, %v8051
        %v8081 = vsub.f32 %v8033, %v8053
        %v8082 = vsub.f32 %v8034, %v8055
        %v8083 = vsub.f32 %v8035, %v8057
        %v8084 = vsub.f32 %v8036, %v8059
        %v8085 = vsub.f32 %v8037, %v8061
        %v8086 = vsub.f32 %v8038, %v8063
        %v8087 = vsub.f32 %v8039, %v8065
        %v8088 = vsub.f32 %v8040, %v8067
        %v8089 = vsub.f32 %v8041, %v8069
        %v8090 = vsub.f32 %v8042, %v8071
        %v8091 = vsub.f32 %v8043, %v8073
        %v8092 = vsub.f32 %v8044, %v8075
        %v8093 = vsub.f32 %v8045, %v8077
        %v8094 = vmul.f32 %v8078, 1.442695
        %v8095 = vpow.pop %v8094
        %v8096 = vmul.f32 %v8079, 1.442695
        %v8097 = vpow.pop %v8096
        %v8098 = vmul.f32 %v8080, 1.442695
        %v8099 = vpow.pop %v8098
        %v8100 = vmul.f32 %v8081, 1.442695
        %v8101 = vpow.pop %v8100
        %v8102 = vmul.f32 %v8082, 1.442695
        %v8103 = vpow.pop %v8102
        %v8104 = vmul.f32 %v8083, 1.442695
        %v8105 = vpow.pop %v8104
        %v8106 = vmul.f32 %v8084, 1.442695
        %v8107 = vpow.pop %v8106
        %v8108 = vmul.f32 %v8085, 1.442695
        %v8109 = vpow.pop %v8108
        %v8110 = vmul.f32 %v8086, 1.442695
        %v8111 = vpow.pop %v8110
        %v8112 = vmul.f32 %v8087, 1.442695
        %v8113 = vpow.pop %v8112
        %v8114 = vmul.f32 %v8088, 1.442695
        %v8115 = vpow.pop %v8114
        %v8116 = vmul.f32 %v8089, 1.442695
        %v8117 = vpow.pop %v8116
        %v8118 = vmul.f32 %v8090, 1.442695
        %v8119 = vpow.pop %v8118
        %v8120 = vmul.f32 %v8091, 1.442695
        %v8121 = vpow.pop %v8120
        %v8122 = vmul.f32 %v8092, 1.442695
        %v8123 = vpow.pop %v8122
        %v8124 = vmul.f32 %v8093, 1.442695
        %v8125 = vpow.pop %v8124
        %8126 = vadd.xlane.f32.xlu0 %v8095
        %v8127 = vpop.xlane.xlu0 %8126
        %8128 = vadd.xlane.f32.xlu0 %v8097
        %v8129 = vpop.xlane.xlu0 %8128
        %8130 = vadd.xlane.f32.xlu0 %v8099
        %v8131 = vpop.xlane.xlu0 %8130
        %8132 = vadd.xlane.f32.xlu0 %v8101
        %v8133 = vpop.xlane.xlu0 %8132
        %8134 = vadd.xlane.f32.xlu0 %v8103
        %v8135 = vpop.xlane.xlu0 %8134
        %8136 = vadd.xlane.f32.xlu0 %v8105
        %v8137 = vpop.xlane.xlu0 %8136
        %8138 = vadd.xlane.f32.xlu0 %v8107
        %v8139 = vpop.xlane.xlu0 %8138
        %8140 = vadd.xlane.f32.xlu0 %v8109
        %v8141 = vpop.xlane.xlu0 %8140
        %8142 = vadd.xlane.f32.xlu0 %v8111
        %v8143 = vpop.xlane.xlu0 %8142
        %8144 = vadd.xlane.f32.xlu0 %v8113
        %v8145 = vpop.xlane.xlu0 %8144
        %8146 = vadd.xlane.f32.xlu0 %v8115
        %v8147 = vpop.xlane.xlu0 %8146
        %8148 = vadd.xlane.f32.xlu0 %v8117
        %v8149 = vpop.xlane.xlu0 %8148
        %8150 = vadd.xlane.f32.xlu0 %v8119
        %v8151 = vpop.xlane.xlu0 %8150
        %8152 = vadd.xlane.f32.xlu0 %v8121
        %v8153 = vpop.xlane.xlu0 %8152
        %8154 = vadd.xlane.f32.xlu0 %v8123
        %v8155 = vpop.xlane.xlu0 %8154
        %8156 = vadd.xlane.f32.xlu0 %v8125
        %v8157 = vpop.xlane.xlu0 %8156
        %v8158 = vrcp.pop %v8127
        %v8159 = vmul.f32 %v8127, %v8158
        %v8160 = vsub.f32 1.0, %v8159
        %v8161 = vmul.f32 %v8158, %v8160
        %v8162 = vadd.f32 %v8158, %v8161
        %vm8163 = vweird.f32 %v8127
        %vm8164 = vweird.f32 %v8158
        %vm8165 = vmor %vm8163, %vm8164
        %v8166 = vsel %vm8165, %v8158, %v8162
        %v8167 = vand.u32 2147483647, %v8127
        %vm8168 = vcmp.eq.f32.partialorder %v8167, 8.507059e+37
        %v8169 = vand.u32 %v8127, 2147483648
        %v8170 = vor.u32 1.1754944e-38, %v8169
        %v8171 = vsel %vm8168, %v8170, %v8166
        %v8172 = vmul.f32 %v8095, %v8171
        %v8173 = vrcp.pop %v8129
        %v8174 = vmul.f32 %v8129, %v8173
        %v8175 = vsub.f32 1.0, %v8174
        %v8176 = vmul.f32 %v8173, %v8175
        %v8177 = vadd.f32 %v8173, %v8176
        %vm8178 = vweird.f32 %v8129
        %vm8179 = vweird.f32 %v8173
        %vm8180 = vmor %vm8178, %vm8179
        %v8181 = vsel %vm8180, %v8173, %v8177
        %v8182 = vand.u32 2147483647, %v8129
        %vm8183 = vcmp.eq.f32.partialorder %v8182, 8.507059e+37
        %v8184 = vand.u32 %v8129, 2147483648
        %v8185 = vor.u32 1.1754944e-38, %v8184
        %v8186 = vsel %vm8183, %v8185, %v8181
        %v8187 = vmul.f32 %v8097, %v8186
        %v8188 = vrcp.pop %v8131
        %v8189 = vmul.f32 %v8131, %v8188
        %v8190 = vsub.f32 1.0, %v8189
        %v8191 = vmul.f32 %v8188, %v8190
        %v8192 = vadd.f32 %v8188, %v8191
        %vm8193 = vweird.f32 %v8131
        %vm8194 = vweird.f32 %v8188
        %vm8195 = vmor %vm8193, %vm8194
        %v8196 = vsel %vm8195, %v8188, %v8192
        %v8197 = vand.u32 2147483647, %v8131
        %vm8198 = vcmp.eq.f32.partialorder %v8197, 8.507059e+37
        %v8199 = vand.u32 %v8131, 2147483648
        %v8200 = vor.u32 1.1754944e-38, %v8199
        %v8201 = vsel %vm8198, %v8200, %v8196
        %v8202 = vmul.f32 %v8099, %v8201
        %v8203 = vrcp.pop %v8133
        %v8204 = vmul.f32 %v8133, %v8203
        %v8205 = vsub.f32 1.0, %v8204
        %v8206 = vmul.f32 %v8203, %v8205
        %v8207 = vadd.f32 %v8203, %v8206
        %vm8208 = vweird.f32 %v8133
        %vm8209 = vweird.f32 %v8203
        %vm8210 = vmor %vm8208, %vm8209
        %v8211 = vsel %vm8210, %v8203, %v8207
        %v8212 = vand.u32 2147483647, %v8133
        %vm8213 = vcmp.eq.f32.partialorder %v8212, 8.507059e+37
        %v8214 = vand.u32 %v8133, 2147483648
        %v8215 = vor.u32 1.1754944e-38, %v8214
        %v8216 = vsel %vm8213, %v8215, %v8211
        %v8217 = vmul.f32 %v8101, %v8216
        %v8218 = vrcp.pop %v8135
        %v8219 = vmul.f32 %v8135, %v8218
        %v8220 = vsub.f32 1.0, %v8219
        %v8221 = vmul.f32 %v8218, %v8220
        %v8222 = vadd.f32 %v8218, %v8221
        %vm8223 = vweird.f32 %v8135
        %vm8224 = vweird.f32 %v8218
        %vm8225 = vmor %vm8223, %vm8224
        %v8226 = vsel %vm8225, %v8218, %v8222
        %v8227 = vand.u32 2147483647, %v8135
        %vm8228 = vcmp.eq.f32.partialorder %v8227, 8.507059e+37
        %v8229 = vand.u32 %v8135, 2147483648
        %v8230 = vor.u32 1.1754944e-38, %v8229
        %v8231 = vsel %vm8228, %v8230, %v8226
        %v8232 = vmul.f32 %v8103, %v8231
        %v8233 = vrcp.pop %v8137
        %v8234 = vmul.f32 %v8137, %v8233
        %v8235 = vsub.f32 1.0, %v8234
        %v8236 = vmul.f32 %v8233, %v8235
        %v8237 = vadd.f32 %v8233, %v8236
        %vm8238 = vweird.f32 %v8137
        %vm8239 = vweird.f32 %v8233
        %vm8240 = vmor %vm8238, %vm8239
        %v8241 = vsel %vm8240, %v8233, %v8237
        %v8242 = vand.u32 2147483647, %v8137
        %vm8243 = vcmp.eq.f32.partialorder %v8242, 8.507059e+37
        %v8244 = vand.u32 %v8137, 2147483648
        %v8245 = vor.u32 1.1754944e-38, %v8244
        %v8246 = vsel %vm8243, %v8245, %v8241
        %v8247 = vmul.f32 %v8105, %v8246
        %v8248 = vrcp.pop %v8139
        %v8249 = vmul.f32 %v8139, %v8248
        %v8250 = vsub.f32 1.0, %v8249
        %v8251 = vmul.f32 %v8248, %v8250
        %v8252 = vadd.f32 %v8248, %v8251
        %vm8253 = vweird.f32 %v8139
        %vm8254 = vweird.f32 %v8248
        %vm8255 = vmor %vm8253, %vm8254
        %v8256 = vsel %vm8255, %v8248, %v8252
        %v8257 = vand.u32 2147483647, %v8139
        %vm8258 = vcmp.eq.f32.partialorder %v8257, 8.507059e+37
        %v8259 = vand.u32 %v8139, 2147483648
        %v8260 = vor.u32 1.1754944e-38, %v8259
        %v8261 = vsel %vm8258, %v8260, %v8256
        %v8262 = vmul.f32 %v8107, %v8261
        %v8263 = vrcp.pop %v8141
        %v8264 = vmul.f32 %v8141, %v8263
        %v8265 = vsub.f32 1.0, %v8264
        %v8266 = vmul.f32 %v8263, %v8265
        %v8267 = vadd.f32 %v8263, %v8266
        %vm8268 = vweird.f32 %v8141
        %vm8269 = vweird.f32 %v8263
        %vm8270 = vmor %vm8268, %vm8269
        %v8271 = vsel %vm8270, %v8263, %v8267
        %v8272 = vand.u32 2147483647, %v8141
        %vm8273 = vcmp.eq.f32.partialorder %v8272, 8.507059e+37
        %v8274 = vand.u32 %v8141, 2147483648
        %v8275 = vor.u32 1.1754944e-38, %v8274
        %v8276 = vsel %vm8273, %v8275, %v8271
        %v8277 = vmul.f32 %v8109, %v8276
        %v8278 = vrcp.pop %v8143
        %v8279 = vmul.f32 %v8143, %v8278
        %v8280 = vsub.f32 1.0, %v8279
        %v8281 = vmul.f32 %v8278, %v8280
        %v8282 = vadd.f32 %v8278, %v8281
        %vm8283 = vweird.f32 %v8143
        %vm8284 = vweird.f32 %v8278
        %vm8285 = vmor %vm8283, %vm8284
        %v8286 = vsel %vm8285, %v8278, %v8282
        %v8287 = vand.u32 2147483647, %v8143
        %vm8288 = vcmp.eq.f32.partialorder %v8287, 8.507059e+37
        %v8289 = vand.u32 %v8143, 2147483648
        %v8290 = vor.u32 1.1754944e-38, %v8289
        %v8291 = vsel %vm8288, %v8290, %v8286
        %v8292 = vmul.f32 %v8111, %v8291
        %v8293 = vrcp.pop %v8145
        %v8294 = vmul.f32 %v8145, %v8293
        %v8295 = vsub.f32 1.0, %v8294
        %v8296 = vmul.f32 %v8293, %v8295
        %v8297 = vadd.f32 %v8293, %v8296
        %vm8298 = vweird.f32 %v8145
        %vm8299 = vweird.f32 %v8293
        %vm8300 = vmor %vm8298, %vm8299
        %v8301 = vsel %vm8300, %v8293, %v8297
        %v8302 = vand.u32 2147483647, %v8145
        %vm8303 = vcmp.eq.f32.partialorder %v8302, 8.507059e+37
        %v8304 = vand.u32 %v8145, 2147483648
        %v8305 = vor.u32 1.1754944e-38, %v8304
        %v8306 = vsel %vm8303, %v8305, %v8301
        %v8307 = vmul.f32 %v8113, %v8306
        %v8308 = vrcp.pop %v8147
        %v8309 = vmul.f32 %v8147, %v8308
        %v8310 = vsub.f32 1.0, %v8309
        %v8311 = vmul.f32 %v8308, %v8310
        %v8312 = vadd.f32 %v8308, %v8311
        %vm8313 = vweird.f32 %v8147
        %vm8314 = vweird.f32 %v8308
        %vm8315 = vmor %vm8313, %vm8314
        %v8316 = vsel %vm8315, %v8308, %v8312
        %v8317 = vand.u32 2147483647, %v8147
        %vm8318 = vcmp.eq.f32.partialorder %v8317, 8.507059e+37
        %v8319 = vand.u32 %v8147, 2147483648
        %v8320 = vor.u32 1.1754944e-38, %v8319
        %v8321 = vsel %vm8318, %v8320, %v8316
        %v8322 = vmul.f32 %v8115, %v8321
        %v8323 = vrcp.pop %v8149
        %v8324 = vmul.f32 %v8149, %v8323
        %v8325 = vsub.f32 1.0, %v8324
        %v8326 = vmul.f32 %v8323, %v8325
        %v8327 = vadd.f32 %v8323, %v8326
        %vm8328 = vweird.f32 %v8149
        %vm8329 = vweird.f32 %v8323
        %vm8330 = vmor %vm8328, %vm8329
        %v8331 = vsel %vm8330, %v8323, %v8327
        %v8332 = vand.u32 2147483647, %v8149
        %vm8333 = vcmp.eq.f32.partialorder %v8332, 8.507059e+37
        %v8334 = vand.u32 %v8149, 2147483648
        %v8335 = vor.u32 1.1754944e-38, %v8334
        %v8336 = vsel %vm8333, %v8335, %v8331
        %v8337 = vmul.f32 %v8117, %v8336
        %v8338 = vrcp.pop %v8151
        %v8339 = vmul.f32 %v8151, %v8338
        %v8340 = vsub.f32 1.0, %v8339
        %v8341 = vmul.f32 %v8338, %v8340
        %v8342 = vadd.f32 %v8338, %v8341
        %vm8343 = vweird.f32 %v8151
        %vm8344 = vweird.f32 %v8338
        %vm8345 = vmor %vm8343, %vm8344
        %v8346 = vsel %vm8345, %v8338, %v8342
        %v8347 = vand.u32 2147483647, %v8151
        %vm8348 = vcmp.eq.f32.partialorder %v8347, 8.507059e+37
        %v8349 = vand.u32 %v8151, 2147483648
        %v8350 = vor.u32 1.1754944e-38, %v8349
        %v8351 = vsel %vm8348, %v8350, %v8346
        %v8352 = vmul.f32 %v8119, %v8351
        %v8353 = vrcp.pop %v8153
        %v8354 = vmul.f32 %v8153, %v8353
        %v8355 = vsub.f32 1.0, %v8354
        %v8356 = vmul.f32 %v8353, %v8355
        %v8357 = vadd.f32 %v8353, %v8356
        %vm8358 = vweird.f32 %v8153
        %vm8359 = vweird.f32 %v8353
        %vm8360 = vmor %vm8358, %vm8359
        %v8361 = vsel %vm8360, %v8353, %v8357
        %v8362 = vand.u32 2147483647, %v8153
        %vm8363 = vcmp.eq.f32.partialorder %v8362, 8.507059e+37
        %v8364 = vand.u32 %v8153, 2147483648
        %v8365 = vor.u32 1.1754944e-38, %v8364
        %v8366 = vsel %vm8363, %v8365, %v8361
        %v8367 = vmul.f32 %v8121, %v8366
        %v8368 = vrcp.pop %v8155
        %v8369 = vmul.f32 %v8155, %v8368
        %v8370 = vsub.f32 1.0, %v8369
        %v8371 = vmul.f32 %v8368, %v8370
        %v8372 = vadd.f32 %v8368, %v8371
        %vm8373 = vweird.f32 %v8155
        %vm8374 = vweird.f32 %v8368
        %vm8375 = vmor %vm8373, %vm8374
        %v8376 = vsel %vm8375, %v8368, %v8372
        %v8377 = vand.u32 2147483647, %v8155
        %vm8378 = vcmp.eq.f32.partialorder %v8377, 8.507059e+37
        %v8379 = vand.u32 %v8155, 2147483648
        %v8380 = vor.u32 1.1754944e-38, %v8379
        %v8381 = vsel %vm8378, %v8380, %v8376
        %v8382 = vmul.f32 %v8123, %v8381
        %v8383 = vrcp.pop %v8157
        %v8384 = vmul.f32 %v8157, %v8383
        %v8385 = vsub.f32 1.0, %v8384
        %v8386 = vmul.f32 %v8383, %v8385
        %v8387 = vadd.f32 %v8383, %v8386
        %vm8388 = vweird.f32 %v8157
        %vm8389 = vweird.f32 %v8383
        %vm8390 = vmor %vm8388, %vm8389
        %v8391 = vsel %vm8390, %v8383, %v8387
        %v8392 = vand.u32 2147483647, %v8157
        %vm8393 = vcmp.eq.f32.partialorder %v8392, 8.507059e+37
        %v8394 = vand.u32 %v8157, 2147483648
        %v8395 = vor.u32 1.1754944e-38, %v8394
        %v8396 = vsel %vm8393, %v8395, %v8391
        %v8397 = vmul.f32 %v8125, %v8396
        %v8398 = vpack.c.bf16 %v8187, %v8172
        %v8399 = vpack.c.bf16 %v8217, %v8202
        %v8400 = vpack.c.bf16 %v8247, %v8232
        %v8401 = vpack.c.bf16 %v8277, %v8262
        %v8402 = vpack.c.bf16 %v8307, %v8292
        %v8403 = vpack.c.bf16 %v8337, %v8322
        %v8404 = vpack.c.bf16 %v8367, %v8352
        %v8405 = vpack.c.bf16 %v8397, %v8382
        %8406 = vrot.lane.b32.xlu0 %v4240, 16
        %v8407 = vpop.permute.xlu0 %8406
        %8408 = vrot.lane.b32.xlu0 %v4241, 16
        %v8409 = vpop.permute.xlu0 %8408
        %8410 = vrot.lane.b32.xlu0 %v4242, 16
        %v8411 = vpop.permute.xlu0 %8410
        %8412 = vrot.lane.b32.xlu0 %v4243, 16
        %v8413 = vpop.permute.xlu0 %8412
        %8414 = vrot.lane.b32.xlu0 %v4244, 16
        %v8415 = vpop.permute.xlu0 %8414
        %8416 = vrot.lane.b32.xlu0 %v4245, 16
        %v8417 = vpop.permute.xlu0 %8416
        %8418 = vrot.lane.b32.xlu0 %v4246, 16
        %v8419 = vpop.permute.xlu0 %8418
        %8420 = vrot.lane.b32.xlu0 %v4247, 16
        %v8421 = vpop.permute.xlu0 %8420
        %8430 = vmatpush.bf16.msra.mxu0 %v8421
        %8431 = vmatpush.bf16.msra.mxu0 %v8419
        %8432 = vmatpush.bf16.msra.mxu0 %v8417
        %8433 = vmatpush.bf16.msra.mxu0 %v8415
        %8434 = vmatpush.bf16.msra.mxu0 %v8413
        %8435 = vmatpush.bf16.msra.mxu0 %v8411
        %8436 = vmatpush.bf16.msra.mxu0 %v8409
        %8437 = vmatpush.bf16.msra.mxu0 %v8407
        %8438 = vmatmul.bf16.gmra.mxu0 %v8398
        %v8439 = vpop.f32.mrf.mxu0
        %v8440 = vadd.f32 0.0, %v8439
        %v8441 = vpop.f32.mrf.mxu0
        %v8442 = vadd.f32 0.0, %v8441
        %8443 = vmatmul.bf16.gmra.mxu0 %v8399
        %v8444 = vpop.f32.mrf.mxu0
        %v8445 = vadd.f32 0.0, %v8444
        %v8446 = vpop.f32.mrf.mxu0
        %v8447 = vadd.f32 0.0, %v8446
        %8448 = vmatmul.bf16.gmra.mxu0 %v8400
        %v8449 = vpop.f32.mrf.mxu0
        %v8450 = vadd.f32 0.0, %v8449
        %v8451 = vpop.f32.mrf.mxu0
        %v8452 = vadd.f32 0.0, %v8451
        %8453 = vmatmul.bf16.gmra.mxu0 %v8401
        %v8454 = vpop.f32.mrf.mxu0
        %v8455 = vadd.f32 0.0, %v8454
        %v8456 = vpop.f32.mrf.mxu0
        %v8457 = vadd.f32 0.0, %v8456
        %8458 = vmatmul.bf16.gmra.mxu0 %v8402
        %v8459 = vpop.f32.mrf.mxu0
        %v8460 = vadd.f32 0.0, %v8459
        %v8461 = vpop.f32.mrf.mxu0
        %v8462 = vadd.f32 0.0, %v8461
        %8463 = vmatmul.bf16.gmra.mxu0 %v8403
        %v8464 = vpop.f32.mrf.mxu0
        %v8465 = vadd.f32 0.0, %v8464
        %v8466 = vpop.f32.mrf.mxu0
        %v8467 = vadd.f32 0.0, %v8466
        %8468 = vmatmul.bf16.gmra.mxu0 %v8404
        %v8469 = vpop.f32.mrf.mxu0
        %v8470 = vadd.f32 0.0, %v8469
        %v8471 = vpop.f32.mrf.mxu0
        %v8472 = vadd.f32 0.0, %v8471
        %8473 = vmatmul.bf16.gmra.mxu0 %v8405
        %v8474 = vpop.f32.mrf.mxu0
        %v8475 = vadd.f32 0.0, %v8474
        %v8476 = vpop.f32.mrf.mxu0
        %v8477 = vadd.f32 0.0, %v8476
        %8478 = vdwg.mxu0
        %8495 = vrot.lane.b32.xlu0 %v4876, 16
        %v8496 = vpop.permute.xlu0 %8495
        %8497 = vrot.lane.b32.xlu0 %v4878, 16
        %v8498 = vpop.permute.xlu0 %8497
        %8499 = vrot.lane.b32.xlu0 %v4881, 16
        %v8500 = vpop.permute.xlu0 %8499
        %8501 = vrot.lane.b32.xlu0 %v4883, 16
        %v8502 = vpop.permute.xlu0 %8501
        %8503 = vrot.lane.b32.xlu0 %v4886, 16
        %v8504 = vpop.permute.xlu0 %8503
        %8505 = vrot.lane.b32.xlu0 %v4888, 16
        %v8506 = vpop.permute.xlu0 %8505
        %8507 = vrot.lane.b32.xlu0 %v4891, 16
        %v8508 = vpop.permute.xlu0 %8507
        %8509 = vrot.lane.b32.xlu0 %v4893, 16
        %v8510 = vpop.permute.xlu0 %8509
        %8511 = vrot.lane.b32.xlu0 %v4896, 16
        %v8512 = vpop.permute.xlu0 %8511
        %8513 = vrot.lane.b32.xlu0 %v4898, 16
        %v8514 = vpop.permute.xlu0 %8513
        %8515 = vrot.lane.b32.xlu0 %v4901, 16
        %v8516 = vpop.permute.xlu0 %8515
        %8517 = vrot.lane.b32.xlu0 %v4903, 16
        %v8518 = vpop.permute.xlu0 %8517
        %8519 = vrot.lane.b32.xlu0 %v4906, 16
        %v8520 = vpop.permute.xlu0 %8519
        %8521 = vrot.lane.b32.xlu0 %v4908, 16
        %v8522 = vpop.permute.xlu0 %8521
        %8523 = vrot.lane.b32.xlu0 %v4911, 16
        %v8524 = vpop.permute.xlu0 %8523
        %8525 = vrot.lane.b32.xlu0 %v4913, 16
        %v8526 = vpop.permute.xlu0 %8525
        %8559 = vrot.lane.b32.xlu0 %v5470, 32
        %v8560 = vpop.permute.xlu0 %8559
        %8561 = vrot.lane.b32.xlu0 %v5472, 32
        %v8562 = vpop.permute.xlu0 %8561
        %8563 = vrot.lane.b32.xlu0 %v5475, 32
        %v8564 = vpop.permute.xlu0 %8563
        %8565 = vrot.lane.b32.xlu0 %v5477, 32
        %v8566 = vpop.permute.xlu0 %8565
        %8567 = vrot.lane.b32.xlu0 %v5480, 32
        %v8568 = vpop.permute.xlu0 %8567
        %8569 = vrot.lane.b32.xlu0 %v5482, 32
        %v8570 = vpop.permute.xlu0 %8569
        %8571 = vrot.lane.b32.xlu0 %v5485, 32
        %v8572 = vpop.permute.xlu0 %8571
        %8573 = vrot.lane.b32.xlu0 %v5487, 32
        %v8574 = vpop.permute.xlu0 %8573
        %8575 = vrot.lane.b32.xlu0 %v5490, 32
        %v8576 = vpop.permute.xlu0 %8575
        %8577 = vrot.lane.b32.xlu0 %v5492, 32
        %v8578 = vpop.permute.xlu0 %8577
        %8579 = vrot.lane.b32.xlu0 %v5495, 32
        %v8580 = vpop.permute.xlu0 %8579
        %8581 = vrot.lane.b32.xlu0 %v5497, 32
        %v8582 = vpop.permute.xlu0 %8581
        %8583 = vrot.lane.b32.xlu0 %v5500, 32
        %v8584 = vpop.permute.xlu0 %8583
        %8585 = vrot.lane.b32.xlu0 %v5502, 32
        %v8586 = vpop.permute.xlu0 %8585
        %8587 = vrot.lane.b32.xlu0 %v5505, 32
        %v8588 = vpop.permute.xlu0 %8587
        %8589 = vrot.lane.b32.xlu0 %v5507, 32
        %v8590 = vpop.permute.xlu0 %8589
        %8623 = vrot.lane.b32.xlu0 %v6064, 48
        %v8624 = vpop.permute.xlu0 %8623
        %8625 = vrot.lane.b32.xlu0 %v6066, 48
        %v8626 = vpop.permute.xlu0 %8625
        %8627 = vrot.lane.b32.xlu0 %v6069, 48
        %v8628 = vpop.permute.xlu0 %8627
        %8629 = vrot.lane.b32.xlu0 %v6071, 48
        %v8630 = vpop.permute.xlu0 %8629
        %8631 = vrot.lane.b32.xlu0 %v6074, 48
        %v8632 = vpop.permute.xlu0 %8631
        %8633 = vrot.lane.b32.xlu0 %v6076, 48
        %v8634 = vpop.permute.xlu0 %8633
        %8635 = vrot.lane.b32.xlu0 %v6079, 48
        %v8636 = vpop.permute.xlu0 %8635
        %8637 = vrot.lane.b32.xlu0 %v6081, 48
        %v8638 = vpop.permute.xlu0 %8637
        %8639 = vrot.lane.b32.xlu0 %v6084, 48
        %v8640 = vpop.permute.xlu0 %8639
        %8641 = vrot.lane.b32.xlu0 %v6086, 48
        %v8642 = vpop.permute.xlu0 %8641
        %8643 = vrot.lane.b32.xlu0 %v6089, 48
        %v8644 = vpop.permute.xlu0 %8643
        %8645 = vrot.lane.b32.xlu0 %v6091, 48
        %v8646 = vpop.permute.xlu0 %8645
        %8647 = vrot.lane.b32.xlu0 %v6094, 48
        %v8648 = vpop.permute.xlu0 %8647
        %8649 = vrot.lane.b32.xlu0 %v6096, 48
        %v8650 = vpop.permute.xlu0 %8649
        %8651 = vrot.lane.b32.xlu0 %v6099, 48
        %v8652 = vpop.permute.xlu0 %8651
        %8653 = vrot.lane.b32.xlu0 %v6101, 48
        %v8654 = vpop.permute.xlu0 %8653
        %8687 = vrot.lane.b32.xlu0 %v6658, 64
        %v8688 = vpop.permute.xlu0 %8687
        %8689 = vrot.lane.b32.xlu0 %v6660, 64
        %v8690 = vpop.permute.xlu0 %8689
        %8691 = vrot.lane.b32.xlu0 %v6663, 64
        %v8692 = vpop.permute.xlu0 %8691
        %8693 = vrot.lane.b32.xlu0 %v6665, 64
        %v8694 = vpop.permute.xlu0 %8693
        %8695 = vrot.lane.b32.xlu0 %v6668, 64
        %v8696 = vpop.permute.xlu0 %8695
        %8697 = vrot.lane.b32.xlu0 %v6670, 64
        %v8698 = vpop.permute.xlu0 %8697
        %8699 = vrot.lane.b32.xlu0 %v6673, 64
        %v8700 = vpop.permute.xlu0 %8699
        %8701 = vrot.lane.b32.xlu0 %v6675, 64
        %v8702 = vpop.permute.xlu0 %8701
        %8703 = vrot.lane.b32.xlu0 %v6678, 64
        %v8704 = vpop.permute.xlu0 %8703
        %8705 = vrot.lane.b32.xlu0 %v6680, 64
        %v8706 = vpop.permute.xlu0 %8705
        %8707 = vrot.lane.b32.xlu0 %v6683, 64
        %v8708 = vpop.permute.xlu0 %8707
        %8709 = vrot.lane.b32.xlu0 %v6685, 64
        %v8710 = vpop.permute.xlu0 %8709
        %8711 = vrot.lane.b32.xlu0 %v6688, 64
        %v8712 = vpop.permute.xlu0 %8711
        %8713 = vrot.lane.b32.xlu0 %v6690, 64
        %v8714 = vpop.permute.xlu0 %8713
        %8715 = vrot.lane.b32.xlu0 %v6693, 64
        %v8716 = vpop.permute.xlu0 %8715
        %8717 = vrot.lane.b32.xlu0 %v6695, 64
        %v8718 = vpop.permute.xlu0 %8717
        %8751 = vrot.lane.b32.xlu0 %v7252, 80
        %v8752 = vpop.permute.xlu0 %8751
        %8753 = vrot.lane.b32.xlu0 %v7254, 80
        %v8754 = vpop.permute.xlu0 %8753
        %8755 = vrot.lane.b32.xlu0 %v7257, 80
        %v8756 = vpop.permute.xlu0 %8755
        %8757 = vrot.lane.b32.xlu0 %v7259, 80
        %v8758 = vpop.permute.xlu0 %8757
        %8759 = vrot.lane.b32.xlu0 %v7262, 80
        %v8760 = vpop.permute.xlu0 %8759
        %8761 = vrot.lane.b32.xlu0 %v7264, 80
        %v8762 = vpop.permute.xlu0 %8761
        %8763 = vrot.lane.b32.xlu0 %v7267, 80
        %v8764 = vpop.permute.xlu0 %8763
        %8765 = vrot.lane.b32.xlu0 %v7269, 80
        %v8766 = vpop.permute.xlu0 %8765
        %8767 = vrot.lane.b32.xlu0 %v7272, 80
        %v8768 = vpop.permute.xlu0 %8767
        %8769 = vrot.lane.b32.xlu0 %v7274, 80
        %v8770 = vpop.permute.xlu0 %8769
        %8771 = vrot.lane.b32.xlu0 %v7277, 80
        %v8772 = vpop.permute.xlu0 %8771
        %8773 = vrot.lane.b32.xlu0 %v7279, 80
        %v8774 = vpop.permute.xlu0 %8773
        %8775 = vrot.lane.b32.xlu0 %v7282, 80
        %v8776 = vpop.permute.xlu0 %8775
        %8777 = vrot.lane.b32.xlu0 %v7284, 80
        %v8778 = vpop.permute.xlu0 %8777
        %8779 = vrot.lane.b32.xlu0 %v7287, 80
        %v8780 = vpop.permute.xlu0 %8779
        %8781 = vrot.lane.b32.xlu0 %v7289, 80
        %v8782 = vpop.permute.xlu0 %8781
        %8815 = vrot.lane.b32.xlu0 %v7846, 96
        %v8816 = vpop.permute.xlu0 %8815
        %8817 = vrot.lane.b32.xlu0 %v7848, 96
        %v8818 = vpop.permute.xlu0 %8817
        %8819 = vrot.lane.b32.xlu0 %v7851, 96
        %v8820 = vpop.permute.xlu0 %8819
        %8821 = vrot.lane.b32.xlu0 %v7853, 96
        %v8822 = vpop.permute.xlu0 %8821
        %8823 = vrot.lane.b32.xlu0 %v7856, 96
        %v8824 = vpop.permute.xlu0 %8823
        %8825 = vrot.lane.b32.xlu0 %v7858, 96
        %v8826 = vpop.permute.xlu0 %8825
        %8827 = vrot.lane.b32.xlu0 %v7861, 96
        %v8828 = vpop.permute.xlu0 %8827
        %8829 = vrot.lane.b32.xlu0 %v7863, 96
        %v8830 = vpop.permute.xlu0 %8829
        %8831 = vrot.lane.b32.xlu0 %v7866, 96
        %v8832 = vpop.permute.xlu0 %8831
        %8833 = vrot.lane.b32.xlu0 %v7868, 96
        %v8834 = vpop.permute.xlu0 %8833
        %8835 = vrot.lane.b32.xlu0 %v7871, 96
        %v8836 = vpop.permute.xlu0 %8835
        %8837 = vrot.lane.b32.xlu0 %v7873, 96
        %v8838 = vpop.permute.xlu0 %8837
        %8839 = vrot.lane.b32.xlu0 %v7876, 96
        %v8840 = vpop.permute.xlu0 %8839
        %8841 = vrot.lane.b32.xlu0 %v7878, 96
        %v8842 = vpop.permute.xlu0 %8841
        %8843 = vrot.lane.b32.xlu0 %v7881, 96
        %v8844 = vpop.permute.xlu0 %8843
        %8845 = vrot.lane.b32.xlu0 %v7883, 96
        %v8846 = vpop.permute.xlu0 %8845
        %8879 = vrot.lane.b32.xlu0 %v8440, 112
        %v8880 = vpop.permute.xlu0 %8879
        %8881 = vrot.lane.b32.xlu0 %v8442, 112
        %v8882 = vpop.permute.xlu0 %8881
        %8883 = vrot.lane.b32.xlu0 %v8445, 112
        %v8884 = vpop.permute.xlu0 %8883
        %8885 = vrot.lane.b32.xlu0 %v8447, 112
        %v8886 = vpop.permute.xlu0 %8885
        %8887 = vrot.lane.b32.xlu0 %v8450, 112
        %v8888 = vpop.permute.xlu0 %8887
        %8889 = vrot.lane.b32.xlu0 %v8452, 112
        %v8890 = vpop.permute.xlu0 %8889
        %8891 = vrot.lane.b32.xlu0 %v8455, 112
        %v8892 = vpop.permute.xlu0 %8891
        %8893 = vrot.lane.b32.xlu0 %v8457, 112
        %v8894 = vpop.permute.xlu0 %8893
        %8895 = vrot.lane.b32.xlu0 %v8460, 112
        %v8896 = vpop.permute.xlu0 %8895
        %8897 = vrot.lane.b32.xlu0 %v8462, 112
        %v8898 = vpop.permute.xlu0 %8897
        %8899 = vrot.lane.b32.xlu0 %v8465, 112
        %v8900 = vpop.permute.xlu0 %8899
        %8901 = vrot.lane.b32.xlu0 %v8467, 112
        %v8902 = vpop.permute.xlu0 %8901
        %8903 = vrot.lane.b32.xlu0 %v8470, 112
        %v8904 = vpop.permute.xlu0 %8903
        %8905 = vrot.lane.b32.xlu0 %v8472, 112
        %v8906 = vpop.permute.xlu0 %8905
        %8907 = vrot.lane.b32.xlu0 %v8475, 112
        %v8908 = vpop.permute.xlu0 %8907
        %8909 = vrot.lane.b32.xlu0 %v8477, 112
        %v8910 = vpop.permute.xlu0 %8909
        %v8927 = vsel %vm3744, %v4258, %v8496
        %v8928 = vsel %vm3744, %v4260, %v8498
        %v8929 = vsel %vm3744, %v4263, %v8500
        %v8930 = vsel %vm3744, %v4265, %v8502
        %v8931 = vsel %vm3744, %v4268, %v8504
        %v8932 = vsel %vm3744, %v4270, %v8506
        %v8933 = vsel %vm3744, %v4273, %v8508
        %v8934 = vsel %vm3744, %v4275, %v8510
        %v8935 = vsel %vm3744, %v4278, %v8512
        %v8936 = vsel %vm3744, %v4280, %v8514
        %v8937 = vsel %vm3744, %v4283, %v8516
        %v8938 = vsel %vm3744, %v4285, %v8518
        %v8939 = vsel %vm3744, %v4288, %v8520
        %v8940 = vsel %vm3744, %v4290, %v8522
        %v8941 = vsel %vm3744, %v4293, %v8524
        %v8942 = vsel %vm3744, %v4295, %v8526
        %vm8943 = vcmask 261120
        %v8944 = vsel %vm8943, %v8927, %v8560
        %v8945 = vsel %vm8943, %v8928, %v8562
        %v8946 = vsel %vm8943, %v8929, %v8564
        %v8947 = vsel %vm8943, %v8930, %v8566
        %v8948 = vsel %vm8943, %v8931, %v8568
        %v8949 = vsel %vm8943, %v8932, %v8570
        %v8950 = vsel %vm8943, %v8933, %v8572
        %v8951 = vsel %vm8943, %v8934, %v8574
        %v8952 = vsel %vm8943, %v8935, %v8576
        %v8953 = vsel %vm8943, %v8936, %v8578
        %v8954 = vsel %vm8943, %v8937, %v8580
        %v8955 = vsel %vm8943, %v8938, %v8582
        %v8956 = vsel %vm8943, %v8939, %v8584
        %v8957 = vsel %vm8943, %v8940, %v8586
        %v8958 = vsel %vm8943, %v8941, %v8588
        %v8959 = vsel %vm8943, %v8942, %v8590
        %vm8960 = vcmask 392192
        %v8961 = vsel %vm8960, %v8944, %v8624
        %v8962 = vsel %vm8960, %v8945, %v8626
        %v8963 = vsel %vm8960, %v8946, %v8628
        %v8964 = vsel %vm8960, %v8947, %v8630
        %v8965 = vsel %vm8960, %v8948, %v8632
        %v8966 = vsel %vm8960, %v8949, %v8634
        %v8967 = vsel %vm8960, %v8950, %v8636
        %v8968 = vsel %vm8960, %v8951, %v8638
        %v8969 = vsel %vm8960, %v8952, %v8640
        %v8970 = vsel %vm8960, %v8953, %v8642
        %v8971 = vsel %vm8960, %v8954, %v8644
        %v8972 = vsel %vm8960, %v8955, %v8646
        %v8973 = vsel %vm8960, %v8956, %v8648
        %v8974 = vsel %vm8960, %v8957, %v8650
        %v8975 = vsel %vm8960, %v8958, %v8652
        %v8976 = vsel %vm8960, %v8959, %v8654
        %vm8977 = vcmask 523264
        %v8978 = vsel %vm8977, %v8961, %v8688
        %v8979 = vsel %vm8977, %v8962, %v8690
        %v8980 = vsel %vm8977, %v8963, %v8692
        %v8981 = vsel %vm8977, %v8964, %v8694
        %v8982 = vsel %vm8977, %v8965, %v8696
        %v8983 = vsel %vm8977, %v8966, %v8698
        %v8984 = vsel %vm8977, %v8967, %v8700
        %v8985 = vsel %vm8977, %v8968, %v8702
        %v8986 = vsel %vm8977, %v8969, %v8704
        %v8987 = vsel %vm8977, %v8970, %v8706
        %v8988 = vsel %vm8977, %v8971, %v8708
        %v8989 = vsel %vm8977, %v8972, %v8710
        %v8990 = vsel %vm8977, %v8973, %v8712
        %v8991 = vsel %vm8977, %v8974, %v8714
        %v8992 = vsel %vm8977, %v8975, %v8716
        %v8993 = vsel %vm8977, %v8976, %v8718
        %vm8994 = vcmask 654336
        %v8995 = vsel %vm8994, %v8978, %v8752
        %v8996 = vsel %vm8994, %v8979, %v8754
        %v8997 = vsel %vm8994, %v8980, %v8756
        %v8998 = vsel %vm8994, %v8981, %v8758
        %v8999 = vsel %vm8994, %v8982, %v8760
        %v9000 = vsel %vm8994, %v8983, %v8762
        %v9001 = vsel %vm8994, %v8984, %v8764
        %v9002 = vsel %vm8994, %v8985, %v8766
        %v9003 = vsel %vm8994, %v8986, %v8768
        %v9004 = vsel %vm8994, %v8987, %v8770
        %v9005 = vsel %vm8994, %v8988, %v8772
        %v9006 = vsel %vm8994, %v8989, %v8774
        %v9007 = vsel %vm8994, %v8990, %v8776
        %v9008 = vsel %vm8994, %v8991, %v8778
        %v9009 = vsel %vm8994, %v8992, %v8780
        %v9010 = vsel %vm8994, %v8993, %v8782
        %vm9011 = vcmask 785408
        %v9012 = vsel %vm9011, %v8995, %v8816
        %v9013 = vsel %vm9011, %v8996, %v8818
        %v9014 = vsel %vm9011, %v8997, %v8820
        %v9015 = vsel %vm9011, %v8998, %v8822
        %v9016 = vsel %vm9011, %v8999, %v8824
        %v9017 = vsel %vm9011, %v9000, %v8826
        %v9018 = vsel %vm9011, %v9001, %v8828
        %v9019 = vsel %vm9011, %v9002, %v8830
        %v9020 = vsel %vm9011, %v9003, %v8832
        %v9021 = vsel %vm9011, %v9004, %v8834
        %v9022 = vsel %vm9011, %v9005, %v8836
        %v9023 = vsel %vm9011, %v9006, %v8838
        %v9024 = vsel %vm9011, %v9007, %v8840
        %v9025 = vsel %vm9011, %v9008, %v8842
        %v9026 = vsel %vm9011, %v9009, %v8844
        %v9027 = vsel %vm9011, %v9010, %v8846
        %vm9028 = vcmask 916480
        %v9029 = vsel %vm9028, %v9012, %v8880
        %v9030 = vsel %vm9028, %v9013, %v8882
        %v9031 = vsel %vm9028, %v9014, %v8884
        %v9032 = vsel %vm9028, %v9015, %v8886
        %v9033 = vsel %vm9028, %v9016, %v8888
        %v9034 = vsel %vm9028, %v9017, %v8890
        %v9035 = vsel %vm9028, %v9018, %v8892
        %v9036 = vsel %vm9028, %v9019, %v8894
        %v9037 = vsel %vm9028, %v9020, %v8896
        %v9038 = vsel %vm9028, %v9021, %v8898
        %v9039 = vsel %vm9028, %v9022, %v8900
        %v9040 = vsel %vm9028, %v9023, %v8902
        %v9041 = vsel %vm9028, %v9024, %v8904
        %v9042 = vsel %vm9028, %v9025, %v8906
        %v9043 = vsel %vm9028, %v9026, %v8908
        %v9044 = vsel %vm9028, %v9027, %v8910
        %v9045 = vadd.f32 %v9029, %v3157
        %v9046 = vadd.f32 %v9030, %v3158
        %v9047 = vadd.f32 %v9031, %v3159
        %v9048 = vadd.f32 %v9032, %v3160
        %v9049 = vadd.f32 %v9033, %v3161
        %v9050 = vadd.f32 %v9034, %v3162
        %v9051 = vadd.f32 %v9035, %v3163
        %v9052 = vadd.f32 %v9036, %v3164
        %v9053 = vadd.f32 %v9037, %v3165
        %v9054 = vadd.f32 %v9038, %v3166
        %v9055 = vadd.f32 %v9039, %v3167
        %v9056 = vadd.f32 %v9040, %v3168
        %v9057 = vadd.f32 %v9041, %v3169
        %v9058 = vadd.f32 %v9042, %v3170
        %v9059 = vadd.f32 %v9043, %v3171
        %v9060 = vadd.f32 %v9044, %v3172
        %9061 = vadd.xlane.f32.xlu0 %v9045
        %v9062 = vpop.xlane.xlu0 %9061
        %9063 = vadd.xlane.f32.xlu0 %v9046
        %v9064 = vpop.xlane.xlu0 %9063
        %9065 = vadd.xlane.f32.xlu0 %v9047
        %v9066 = vpop.xlane.xlu0 %9065
        %9067 = vadd.xlane.f32.xlu0 %v9048
        %v9068 = vpop.xlane.xlu0 %9067
        %9069 = vadd.xlane.f32.xlu0 %v9049
        %v9070 = vpop.xlane.xlu0 %9069
        %9071 = vadd.xlane.f32.xlu0 %v9050
        %v9072 = vpop.xlane.xlu0 %9071
        %9073 = vadd.xlane.f32.xlu0 %v9051
        %v9074 = vpop.xlane.xlu0 %9073
        %9075 = vadd.xlane.f32.xlu0 %v9052
        %v9076 = vpop.xlane.xlu0 %9075
        %9077 = vadd.xlane.f32.xlu0 %v9053
        %v9078 = vpop.xlane.xlu0 %9077
        %9079 = vadd.xlane.f32.xlu0 %v9054
        %v9080 = vpop.xlane.xlu0 %9079
        %9081 = vadd.xlane.f32.xlu0 %v9055
        %v9082 = vpop.xlane.xlu0 %9081
        %9083 = vadd.xlane.f32.xlu0 %v9056
        %v9084 = vpop.xlane.xlu0 %9083
        %9085 = vadd.xlane.f32.xlu0 %v9057
        %v9086 = vpop.xlane.xlu0 %9085
        %9087 = vadd.xlane.f32.xlu0 %v9058
        %v9088 = vpop.xlane.xlu0 %9087
        %9089 = vadd.xlane.f32.xlu0 %v9059
        %v9090 = vpop.xlane.xlu0 %9089
        %9091 = vadd.xlane.f32.xlu0 %v9060
        %v9092 = vpop.xlane.xlu0 %9091
        %v9093 = vmul.f32 %v9062, %v916
        %v9094 = vmul.f32 %v9064, %v916
        %v9095 = vmul.f32 %v9066, %v916
        %v9096 = vmul.f32 %v9068, %v916
        %v9097 = vmul.f32 %v9070, %v916
        %v9098 = vmul.f32 %v9072, %v916
        %v9099 = vmul.f32 %v9074, %v916
        %v9100 = vmul.f32 %v9076, %v916
        %v9101 = vmul.f32 %v9078, %v916
        %v9102 = vmul.f32 %v9080, %v916
        %v9103 = vmul.f32 %v9082, %v916
        %v9104 = vmul.f32 %v9084, %v916
        %v9105 = vmul.f32 %v9086, %v916
        %v9106 = vmul.f32 %v9088, %v916
        %v9107 = vmul.f32 %v9090, %v916
        %v9108 = vmul.f32 %v9092, %v916
        %v9109 = vsub.f32 %v9045, %v9093
        %v9110 = vsub.f32 %v9046, %v9094
        %v9111 = vsub.f32 %v9047, %v9095
        %v9112 = vsub.f32 %v9048, %v9096
        %v9113 = vsub.f32 %v9049, %v9097
        %v9114 = vsub.f32 %v9050, %v9098
        %v9115 = vsub.f32 %v9051, %v9099
        %v9116 = vsub.f32 %v9052, %v9100
        %v9117 = vsub.f32 %v9053, %v9101
        %v9118 = vsub.f32 %v9054, %v9102
        %v9119 = vsub.f32 %v9055, %v9103
        %v9120 = vsub.f32 %v9056, %v9104
        %v9121 = vsub.f32 %v9057, %v9105
        %v9122 = vsub.f32 %v9058, %v9106
        %v9123 = vsub.f32 %v9059, %v9107
        %v9124 = vsub.f32 %v9060, %v9108
        %v9125 = vmul.f32 %v9109, %v9109
        %v9126 = vmul.f32 %v9110, %v9110
        %v9127 = vmul.f32 %v9111, %v9111
        %v9128 = vmul.f32 %v9112, %v9112
        %v9129 = vmul.f32 %v9113, %v9113
        %v9130 = vmul.f32 %v9114, %v9114
        %v9131 = vmul.f32 %v9115, %v9115
        %v9132 = vmul.f32 %v9116, %v9116
        %v9133 = vmul.f32 %v9117, %v9117
        %v9134 = vmul.f32 %v9118, %v9118
        %v9135 = vmul.f32 %v9119, %v9119
        %v9136 = vmul.f32 %v9120, %v9120
        %v9137 = vmul.f32 %v9121, %v9121
        %v9138 = vmul.f32 %v9122, %v9122
        %v9139 = vmul.f32 %v9123, %v9123
        %v9140 = vmul.f32 %v9124, %v9124
        %9141 = vadd.xlane.f32.xlu0 %v9125
        %v9142 = vpop.xlane.xlu0 %9141
        %9143 = vadd.xlane.f32.xlu0 %v9126
        %v9144 = vpop.xlane.xlu0 %9143
        %9145 = vadd.xlane.f32.xlu0 %v9127
        %v9146 = vpop.xlane.xlu0 %9145
        %9147 = vadd.xlane.f32.xlu0 %v9128
        %v9148 = vpop.xlane.xlu0 %9147
        %9149 = vadd.xlane.f32.xlu0 %v9129
        %v9150 = vpop.xlane.xlu0 %9149
        %9151 = vadd.xlane.f32.xlu0 %v9130
        %v9152 = vpop.xlane.xlu0 %9151
        %9153 = vadd.xlane.f32.xlu0 %v9131
        %v9154 = vpop.xlane.xlu0 %9153
        %9155 = vadd.xlane.f32.xlu0 %v9132
        %v9156 = vpop.xlane.xlu0 %9155
        %9157 = vadd.xlane.f32.xlu0 %v9133
        %v9158 = vpop.xlane.xlu0 %9157
        %9159 = vadd.xlane.f32.xlu0 %v9134
        %v9160 = vpop.xlane.xlu0 %9159
        %9161 = vadd.xlane.f32.xlu0 %v9135
        %v9162 = vpop.xlane.xlu0 %9161
        %9163 = vadd.xlane.f32.xlu0 %v9136
        %v9164 = vpop.xlane.xlu0 %9163
        %9165 = vadd.xlane.f32.xlu0 %v9137
        %v9166 = vpop.xlane.xlu0 %9165
        %9167 = vadd.xlane.f32.xlu0 %v9138
        %v9168 = vpop.xlane.xlu0 %9167
        %9169 = vadd.xlane.f32.xlu0 %v9139
        %v9170 = vpop.xlane.xlu0 %9169
        %9171 = vadd.xlane.f32.xlu0 %v9140
        %v9172 = vpop.xlane.xlu0 %9171
        %v9173 = vmul.f32 %v9142, %v916
        %v9174 = vmul.f32 %v9144, %v916
        %v9175 = vmul.f32 %v9146, %v916
        %v9176 = vmul.f32 %v9148, %v916
        %v9177 = vmul.f32 %v9150, %v916
        %v9178 = vmul.f32 %v9152, %v916
        %v9179 = vmul.f32 %v9154, %v916
        %v9180 = vmul.f32 %v9156, %v916
        %v9181 = vmul.f32 %v9158, %v916
        %v9182 = vmul.f32 %v9160, %v916
        %v9183 = vmul.f32 %v9162, %v916
        %v9184 = vmul.f32 %v9164, %v916
        %v9185 = vmul.f32 %v9166, %v916
        %v9186 = vmul.f32 %v9168, %v916
        %v9187 = vmul.f32 %v9170, %v916
        %v9188 = vmul.f32 %v9172, %v916
        %v9189 = vadd.f32 %v9173, 1e-05
        %v9190 = vadd.f32 %v9174, 1e-05
        %v9191 = vadd.f32 %v9175, 1e-05
        %v9192 = vadd.f32 %v9176, 1e-05
        %v9193 = vadd.f32 %v9177, 1e-05
        %v9194 = vadd.f32 %v9178, 1e-05
        %v9195 = vadd.f32 %v9179, 1e-05
        %v9196 = vadd.f32 %v9180, 1e-05
        %v9197 = vadd.f32 %v9181, 1e-05
        %v9198 = vadd.f32 %v9182, 1e-05
        %v9199 = vadd.f32 %v9183, 1e-05
        %v9200 = vadd.f32 %v9184, 1e-05
        %v9201 = vadd.f32 %v9185, 1e-05
        %v9202 = vadd.f32 %v9186, 1e-05
        %v9203 = vadd.f32 %v9187, 1e-05
        %v9204 = vadd.f32 %v9188, 1e-05
        %v9205 = vrsqrt.pop %v9189
        %v9206 = vmul.f32 %v9205, %v9189
        %v9207 = vmul.f32 %v9206, %v9205
        %v9208 = vmul.f32 0.5, %v9207
        %v9209 = vsub.f32 1.5, %v9208
        %v9210 = vmul.f32 %v9205, %v9209
        %vm9211 = vweird.f32 %v9189
        %vm9212 = vweird.f32 %v9205
        %vm9213 = vmor %vm9211, %vm9212
        %v9214 = vsel %vm9213, %v9205, %v9210
        %v9215 = vrsqrt.pop %v9190
        %v9216 = vmul.f32 %v9215, %v9190
        %v9217 = vmul.f32 %v9216, %v9215
        %v9218 = vmul.f32 0.5, %v9217
        %v9219 = vsub.f32 1.5, %v9218
        %v9220 = vmul.f32 %v9215, %v9219
        %vm9221 = vweird.f32 %v9190
        %vm9222 = vweird.f32 %v9215
        %vm9223 = vmor %vm9221, %vm9222
        %v9224 = vsel %vm9223, %v9215, %v9220
        %v9225 = vrsqrt.pop %v9191
        %v9226 = vmul.f32 %v9225, %v9191
        %v9227 = vmul.f32 %v9226, %v9225
        %v9228 = vmul.f32 0.5, %v9227
        %v9229 = vsub.f32 1.5, %v9228
        %v9230 = vmul.f32 %v9225, %v9229
        %vm9231 = vweird.f32 %v9191
        %vm9232 = vweird.f32 %v9225
        %vm9233 = vmor %vm9231, %vm9232
        %v9234 = vsel %vm9233, %v9225, %v9230
        %v9235 = vrsqrt.pop %v9192
        %v9236 = vmul.f32 %v9235, %v9192
        %v9237 = vmul.f32 %v9236, %v9235
        %v9238 = vmul.f32 0.5, %v9237
        %v9239 = vsub.f32 1.5, %v9238
        %v9240 = vmul.f32 %v9235, %v9239
        %vm9241 = vweird.f32 %v9192
        %vm9242 = vweird.f32 %v9235
        %vm9243 = vmor %vm9241, %vm9242
        %v9244 = vsel %vm9243, %v9235, %v9240
        %v9245 = vrsqrt.pop %v9193
        %v9246 = vmul.f32 %v9245, %v9193
        %v9247 = vmul.f32 %v9246, %v9245
        %v9248 = vmul.f32 0.5, %v9247
        %v9249 = vsub.f32 1.5, %v9248
        %v9250 = vmul.f32 %v9245, %v9249
        %vm9251 = vweird.f32 %v9193
        %vm9252 = vweird.f32 %v9245
        %vm9253 = vmor %vm9251, %vm9252
        %v9254 = vsel %vm9253, %v9245, %v9250
        %v9255 = vrsqrt.pop %v9194
        %v9256 = vmul.f32 %v9255, %v9194
        %v9257 = vmul.f32 %v9256, %v9255
        %v9258 = vmul.f32 0.5, %v9257
        %v9259 = vsub.f32 1.5, %v9258
        %v9260 = vmul.f32 %v9255, %v9259
        %vm9261 = vweird.f32 %v9194
        %vm9262 = vweird.f32 %v9255
        %vm9263 = vmor %vm9261, %vm9262
        %v9264 = vsel %vm9263, %v9255, %v9260
        %v9265 = vrsqrt.pop %v9195
        %v9266 = vmul.f32 %v9265, %v9195
        %v9267 = vmul.f32 %v9266, %v9265
        %v9268 = vmul.f32 0.5, %v9267
        %v9269 = vsub.f32 1.5, %v9268
        %v9270 = vmul.f32 %v9265, %v9269
        %vm9271 = vweird.f32 %v9195
        %vm9272 = vweird.f32 %v9265
        %vm9273 = vmor %vm9271, %vm9272
        %v9274 = vsel %vm9273, %v9265, %v9270
        %v9275 = vrsqrt.pop %v9196
        %v9276 = vmul.f32 %v9275, %v9196
        %v9277 = vmul.f32 %v9276, %v9275
        %v9278 = vmul.f32 0.5, %v9277
        %v9279 = vsub.f32 1.5, %v9278
        %v9280 = vmul.f32 %v9275, %v9279
        %vm9281 = vweird.f32 %v9196
        %vm9282 = vweird.f32 %v9275
        %vm9283 = vmor %vm9281, %vm9282
        %v9284 = vsel %vm9283, %v9275, %v9280
        %v9285 = vrsqrt.pop %v9197
        %v9286 = vmul.f32 %v9285, %v9197
        %v9287 = vmul.f32 %v9286, %v9285
        %v9288 = vmul.f32 0.5, %v9287
        %v9289 = vsub.f32 1.5, %v9288
        %v9290 = vmul.f32 %v9285, %v9289
        %vm9291 = vweird.f32 %v9197
        %vm9292 = vweird.f32 %v9285
        %vm9293 = vmor %vm9291, %vm9292
        %v9294 = vsel %vm9293, %v9285, %v9290
        %v9295 = vrsqrt.pop %v9198
        %v9296 = vmul.f32 %v9295, %v9198
        %v9297 = vmul.f32 %v9296, %v9295
        %v9298 = vmul.f32 0.5, %v9297
        %v9299 = vsub.f32 1.5, %v9298
        %v9300 = vmul.f32 %v9295, %v9299
        %vm9301 = vweird.f32 %v9198
        %vm9302 = vweird.f32 %v9295
        %vm9303 = vmor %vm9301, %vm9302
        %v9304 = vsel %vm9303, %v9295, %v9300
        %v9305 = vrsqrt.pop %v9199
        %v9306 = vmul.f32 %v9305, %v9199
        %v9307 = vmul.f32 %v9306, %v9305
        %v9308 = vmul.f32 0.5, %v9307
        %v9309 = vsub.f32 1.5, %v9308
        %v9310 = vmul.f32 %v9305, %v9309
        %vm9311 = vweird.f32 %v9199
        %vm9312 = vweird.f32 %v9305
        %vm9313 = vmor %vm9311, %vm9312
        %v9314 = vsel %vm9313, %v9305, %v9310
        %v9315 = vrsqrt.pop %v9200
        %v9316 = vmul.f32 %v9315, %v9200
        %v9317 = vmul.f32 %v9316, %v9315
        %v9318 = vmul.f32 0.5, %v9317
        %v9319 = vsub.f32 1.5, %v9318
        %v9320 = vmul.f32 %v9315, %v9319
        %vm9321 = vweird.f32 %v9200
        %vm9322 = vweird.f32 %v9315
        %vm9323 = vmor %vm9321, %vm9322
        %v9324 = vsel %vm9323, %v9315, %v9320
        %v9325 = vrsqrt.pop %v9201
        %v9326 = vmul.f32 %v9325, %v9201
        %v9327 = vmul.f32 %v9326, %v9325
        %v9328 = vmul.f32 0.5, %v9327
        %v9329 = vsub.f32 1.5, %v9328
        %v9330 = vmul.f32 %v9325, %v9329
        %vm9331 = vweird.f32 %v9201
        %vm9332 = vweird.f32 %v9325
        %vm9333 = vmor %vm9331, %vm9332
        %v9334 = vsel %vm9333, %v9325, %v9330
        %v9335 = vrsqrt.pop %v9202
        %v9336 = vmul.f32 %v9335, %v9202
        %v9337 = vmul.f32 %v9336, %v9335
        %v9338 = vmul.f32 0.5, %v9337
        %v9339 = vsub.f32 1.5, %v9338
        %v9340 = vmul.f32 %v9335, %v9339
        %vm9341 = vweird.f32 %v9202
        %vm9342 = vweird.f32 %v9335
        %vm9343 = vmor %vm9341, %vm9342
        %v9344 = vsel %vm9343, %v9335, %v9340
        %v9345 = vrsqrt.pop %v9203
        %v9346 = vmul.f32 %v9345, %v9203
        %v9347 = vmul.f32 %v9346, %v9345
        %v9348 = vmul.f32 0.5, %v9347
        %v9349 = vsub.f32 1.5, %v9348
        %v9350 = vmul.f32 %v9345, %v9349
        %vm9351 = vweird.f32 %v9203
        %vm9352 = vweird.f32 %v9345
        %vm9353 = vmor %vm9351, %vm9352
        %v9354 = vsel %vm9353, %v9345, %v9350
        %v9355 = vrsqrt.pop %v9204
        %v9356 = vmul.f32 %v9355, %v9204
        %v9357 = vmul.f32 %v9356, %v9355
        %v9358 = vmul.f32 0.5, %v9357
        %v9359 = vsub.f32 1.5, %v9358
        %v9360 = vmul.f32 %v9355, %v9359
        %vm9361 = vweird.f32 %v9204
        %vm9362 = vweird.f32 %v9355
        %vm9363 = vmor %vm9361, %vm9362
        %v9364 = vsel %vm9363, %v9355, %v9360
        %v9365 = vmul.f32 %v9109, %v9214
        %v9366 = vmul.f32 %v9110, %v9224
        %v9367 = vmul.f32 %v9111, %v9234
        %v9368 = vmul.f32 %v9112, %v9244
        %v9369 = vmul.f32 %v9113, %v9254
        %v9370 = vmul.f32 %v9114, %v9264
        %v9371 = vmul.f32 %v9115, %v9274
        %v9372 = vmul.f32 %v9116, %v9284
        %v9373 = vmul.f32 %v9117, %v9294
        %v9374 = vmul.f32 %v9118, %v9304
        %v9375 = vmul.f32 %v9119, %v9314
        %v9376 = vmul.f32 %v9120, %v9324
        %v9377 = vmul.f32 %v9121, %v9334
        %v9378 = vmul.f32 %v9122, %v9344
        %v9379 = vmul.f32 %v9123, %v9354
        %v9380 = vmul.f32 %v9124, %v9364
        %v9382 = vperm.slane %v794, 0
        %v9384 = vmul.f32 %v9365, %v9382
        %v9385 = vmul.f32 %v9366, %v9382
        %v9386 = vmul.f32 %v9367, %v9382
        %v9387 = vmul.f32 %v9368, %v9382
        %v9388 = vmul.f32 %v9369, %v9382
        %v9389 = vmul.f32 %v9370, %v9382
        %v9390 = vmul.f32 %v9371, %v9382
        %v9391 = vmul.f32 %v9372, %v9382
        %v9392 = vmul.f32 %v9373, %v9382
        %v9393 = vmul.f32 %v9374, %v9382
        %v9394 = vmul.f32 %v9375, %v9382
        %v9395 = vmul.f32 %v9376, %v9382
        %v9396 = vmul.f32 %v9377, %v9382
        %v9397 = vmul.f32 %v9378, %v9382
        %v9398 = vmul.f32 %v9379, %v9382
        %v9399 = vmul.f32 %v9380, %v9382
        %v9401 = vperm.slane %v795, 0
        %v9403 = vadd.f32 %v9384, %v9401
        %v9404 = vadd.f32 %v9385, %v9401
        %v9405 = vadd.f32 %v9386, %v9401
        %v9406 = vadd.f32 %v9387, %v9401
        %v9407 = vadd.f32 %v9388, %v9401
        %v9408 = vadd.f32 %v9389, %v9401
        %v9409 = vadd.f32 %v9390, %v9401
        %v9410 = vadd.f32 %v9391, %v9401
        %v9411 = vadd.f32 %v9392, %v9401
        %v9412 = vadd.f32 %v9393, %v9401
        %v9413 = vadd.f32 %v9394, %v9401
        %v9414 = vadd.f32 %v9395, %v9401
        %v9415 = vadd.f32 %v9396, %v9401
        %v9416 = vadd.f32 %v9397, %v9401
        %v9417 = vadd.f32 %v9398, %v9401
        %v9418 = vadd.f32 %v9399, %v9401
        %v9419 = vpack.c.bf16 %v9404, %v9403
        %v9420 = vpack.c.bf16 %v9406, %v9405
        %v9421 = vpack.c.bf16 %v9408, %v9407
        %v9422 = vpack.c.bf16 %v9410, %v9409
        %v9423 = vpack.c.bf16 %v9412, %v9411
        %v9424 = vpack.c.bf16 %v9414, %v9413
        %v9425 = vpack.c.bf16 %v9416, %v9415
        %v9426 = vpack.c.bf16 %v9418, %v9417
        %v9427 = vpack.c.bf16 %v797, %v796
        %v9428 = vpack.c.bf16 %v799, %v798
        %v9429 = vpack.c.bf16 %v801, %v800
        %v9430 = vpack.c.bf16 %v803, %v802
        %v9431 = vpack.c.bf16 %v805, %v804
        %v9432 = vpack.c.bf16 %v807, %v806
        %v9433 = vpack.c.bf16 %v809, %v808
        %v9434 = vpack.c.bf16 %v811, %v810
        %v9436 = vperm.slane %v812, 0
        %9438 = vmatpush.bf16.msra.mxu0 %v9434
        %9439 = vmatpush.bf16.msra.mxu0 %v9433
        %9440 = vmatpush.bf16.msra.mxu0 %v9432
        %9441 = vmatpush.bf16.msra.mxu0 %v9431
        %9442 = vmatpush.bf16.msra.mxu0 %v9430
        %9443 = vmatpush.bf16.msra.mxu0 %v9429
        %9444 = vmatpush.bf16.msra.mxu0 %v9428
        %9445 = vmatpush.bf16.msra.mxu0 %v9427
        %9446 = vmatmul.bf16.gmra.mxu0 %v9419
        %v9447 = vpop.f32.mrf.mxu0
        %v9448 = vadd.f32 %v9436, %v9447
        %v9449 = vpop.f32.mrf.mxu0
        %v9450 = vadd.f32 %v9436, %v9449
        %9451 = vmatmul.bf16.gmra.mxu0 %v9420
        %v9452 = vpop.f32.mrf.mxu0
        %v9453 = vadd.f32 %v9436, %v9452
        %v9454 = vpop.f32.mrf.mxu0
        %v9455 = vadd.f32 %v9436, %v9454
        %9456 = vmatmul.bf16.gmra.mxu0 %v9421
        %v9457 = vpop.f32.mrf.mxu0
        %v9458 = vadd.f32 %v9436, %v9457
        %v9459 = vpop.f32.mrf.mxu0
        %v9460 = vadd.f32 %v9436, %v9459
        %9461 = vmatmul.bf16.gmra.mxu0 %v9422
        %v9462 = vpop.f32.mrf.mxu0
        %v9463 = vadd.f32 %v9436, %v9462
        %v9464 = vpop.f32.mrf.mxu0
        %v9465 = vadd.f32 %v9436, %v9464
        %9466 = vmatmul.bf16.gmra.mxu0 %v9423
        %v9467 = vpop.f32.mrf.mxu0
        %v9468 = vadd.f32 %v9436, %v9467
        %v9469 = vpop.f32.mrf.mxu0
        %v9470 = vadd.f32 %v9436, %v9469
        %9471 = vmatmul.bf16.gmra.mxu0 %v9424
        %v9472 = vpop.f32.mrf.mxu0
        %v9473 = vadd.f32 %v9436, %v9472
        %v9474 = vpop.f32.mrf.mxu0
        %v9475 = vadd.f32 %v9436, %v9474
        %9476 = vmatmul.bf16.gmra.mxu0 %v9425
        %v9477 = vpop.f32.mrf.mxu0
        %v9478 = vadd.f32 %v9436, %v9477
        %v9479 = vpop.f32.mrf.mxu0
        %v9480 = vadd.f32 %v9436, %v9479
        %9481 = vmatmul.bf16.gmra.mxu0 %v9426
        %v9482 = vpop.f32.mrf.mxu0
        %v9483 = vadd.f32 %v9436, %v9482
        %v9484 = vpop.f32.mrf.mxu0
        %v9485 = vadd.f32 %v9436, %v9484
        %9486 = vdwg.mxu0
        %v9487 = vmax.f32 %v9448, 0.0
        %v9488 = vmax.f32 %v9450, 0.0
        %v9489 = vmax.f32 %v9453, 0.0
        %v9490 = vmax.f32 %v9455, 0.0
        %v9491 = vmax.f32 %v9458, 0.0
        %v9492 = vmax.f32 %v9460, 0.0
        %v9493 = vmax.f32 %v9463, 0.0
        %v9494 = vmax.f32 %v9465, 0.0
        %v9495 = vmax.f32 %v9468, 0.0
        %v9496 = vmax.f32 %v9470, 0.0
        %v9497 = vmax.f32 %v9473, 0.0
        %v9498 = vmax.f32 %v9475, 0.0
        %v9499 = vmax.f32 %v9478, 0.0
        %v9500 = vmax.f32 %v9480, 0.0
        %v9501 = vmax.f32 %v9483, 0.0
        %v9502 = vmax.f32 %v9485, 0.0
        %v9503 = vpack.c.bf16 %v9488, %v9487
        %v9504 = vpack.c.bf16 %v9490, %v9489
        %v9505 = vpack.c.bf16 %v9492, %v9491
        %v9506 = vpack.c.bf16 %v9494, %v9493
        %v9507 = vpack.c.bf16 %v9496, %v9495
        %v9508 = vpack.c.bf16 %v9498, %v9497
        %v9509 = vpack.c.bf16 %v9500, %v9499
        %v9510 = vpack.c.bf16 %v9502, %v9501
        %v9511 = vpack.c.bf16 %v814, %v813
        %v9512 = vpack.c.bf16 %v816, %v815
        %v9513 = vpack.c.bf16 %v818, %v817
        %v9514 = vpack.c.bf16 %v820, %v819
        %v9515 = vpack.c.bf16 %v822, %v821
        %v9516 = vpack.c.bf16 %v824, %v823
        %v9517 = vpack.c.bf16 %v826, %v825
        %v9518 = vpack.c.bf16 %v828, %v827
        %v9520 = vperm.slane %v829, 0
        %9522 = vmatpush.bf16.msra.mxu0 %v9518
        %9523 = vmatpush.bf16.msra.mxu0 %v9517
        %9524 = vmatpush.bf16.msra.mxu0 %v9516
        %9525 = vmatpush.bf16.msra.mxu0 %v9515
        %9526 = vmatpush.bf16.msra.mxu0 %v9514
        %9527 = vmatpush.bf16.msra.mxu0 %v9513
        %9528 = vmatpush.bf16.msra.mxu0 %v9512
        %9529 = vmatpush.bf16.msra.mxu0 %v9511
        %9530 = vmatmul.bf16.gmra.mxu0 %v9503
        %v9531 = vpop.f32.mrf.mxu0
        %v9532 = vadd.f32 %v9520, %v9531
        %v9533 = vpop.f32.mrf.mxu0
        %v9534 = vadd.f32 %v9520, %v9533
        %9535 = vmatmul.bf16.gmra.mxu0 %v9504
        %v9536 = vpop.f32.mrf.mxu0
        %v9537 = vadd.f32 %v9520, %v9536
        %v9538 = vpop.f32.mrf.mxu0
        %v9539 = vadd.f32 %v9520, %v9538
        %9540 = vmatmul.bf16.gmra.mxu0 %v9505
        %v9541 = vpop.f32.mrf.mxu0
        %v9542 = vadd.f32 %v9520, %v9541
        %v9543 = vpop.f32.mrf.mxu0
        %v9544 = vadd.f32 %v9520, %v9543
        %9545 = vmatmul.bf16.gmra.mxu0 %v9506
        %v9546 = vpop.f32.mrf.mxu0
        %v9547 = vadd.f32 %v9520, %v9546
        %v9548 = vpop.f32.mrf.mxu0
        %v9549 = vadd.f32 %v9520, %v9548
        %9550 = vmatmul.bf16.gmra.mxu0 %v9507
        %v9551 = vpop.f32.mrf.mxu0
        %v9552 = vadd.f32 %v9520, %v9551
        %v9553 = vpop.f32.mrf.mxu0
        %v9554 = vadd.f32 %v9520, %v9553
        %9555 = vmatmul.bf16.gmra.mxu0 %v9508
        %v9556 = vpop.f32.mrf.mxu0
        %v9557 = vadd.f32 %v9520, %v9556
        %v9558 = vpop.f32.mrf.mxu0
        %v9559 = vadd.f32 %v9520, %v9558
        %9560 = vmatmul.bf16.gmra.mxu0 %v9509
        %v9561 = vpop.f32.mrf.mxu0
        %v9562 = vadd.f32 %v9520, %v9561
        %v9563 = vpop.f32.mrf.mxu0
        %v9564 = vadd.f32 %v9520, %v9563
        %9565 = vmatmul.bf16.gmra.mxu0 %v9510
        %v9566 = vpop.f32.mrf.mxu0
        %v9567 = vadd.f32 %v9520, %v9566
        %v9568 = vpop.f32.mrf.mxu0
        %v9569 = vadd.f32 %v9520, %v9568
        %9570 = vdwg.mxu0
        %v9571 = vadd.f32 %v9532, %v9045
        %v9572 = vadd.f32 %v9534, %v9046
        %v9573 = vadd.f32 %v9537, %v9047
        %v9574 = vadd.f32 %v9539, %v9048
        %v9575 = vadd.f32 %v9542, %v9049
        %v9576 = vadd.f32 %v9544, %v9050
        %v9577 = vadd.f32 %v9547, %v9051
        %v9578 = vadd.f32 %v9549, %v9052
        %v9579 = vadd.f32 %v9552, %v9053
        %v9580 = vadd.f32 %v9554, %v9054
        %v9581 = vadd.f32 %v9557, %v9055
        %v9582 = vadd.f32 %v9559, %v9056
        %v9583 = vadd.f32 %v9562, %v9057
        %v9584 = vadd.f32 %v9564, %v9058
        %v9585 = vadd.f32 %v9567, %v9059
        %v9586 = vadd.f32 %v9569, %v9060
        %9587 = vxpose.xlu0.b32.start [1/16] %v9571, 128
        %9588 = vxpose.xlu0.b32.cont [2/16] %v9572, 128
        %9589 = vxpose.xlu0.b32.cont [3/16] %v9573, 128
        %9590 = vxpose.xlu0.b32.cont [4/16] %v9574, 128
        %9591 = vxpose.xlu0.b32.cont [5/16] %v9575, 128
        %9592 = vxpose.xlu0.b32.cont [6/16] %v9576, 128
        %9593 = vxpose.xlu0.b32.cont [7/16] %v9577, 128
        %9594 = vxpose.xlu0.b32.cont [8/16] %v9578, 128
        %9595 = vxpose.xlu0.b32.cont [9/16] %v9579, 128
        %9596 = vxpose.xlu0.b32.cont [10/16] %v9580, 128
        %9597 = vxpose.xlu0.b32.cont [11/16] %v9581, 128
        %9598 = vxpose.xlu0.b32.cont [12/16] %v9582, 128
        %9599 = vxpose.xlu0.b32.cont [13/16] %v9583, 128
        %9600 = vxpose.xlu0.b32.cont [14/16] %v9584, 128
        %9601 = vxpose.xlu0.b32.cont [15/16] %v9585, 128
        %9602 = vxpose.xlu0.b32.end [16/16] %v9586, 128
        %v9603 = vpop.trf.xlu0
        %v9604 = vpop.trf.xlu0
        %v9605 = vpop.trf.xlu0
        %v9606 = vpop.trf.xlu0
        %v9607 = vpop.trf.xlu0
        %v9608 = vpop.trf.xlu0
        %v9609 = vpop.trf.xlu0
        %v9610 = vpop.trf.xlu0
        %v9611 = vpop.trf.xlu0
        %v9612 = vpop.trf.xlu0
        %v9613 = vpop.trf.xlu0
        %v9614 = vpop.trf.xlu0
        %v9615 = vpop.trf.xlu0
        %v9616 = vpop.trf.xlu0
        %v9617 = vpop.trf.xlu0
        %v9618 = vpop.trf.xlu0
        %9619 = vst [vmem:[%s662] sm:$0xff] %v9603
        %9620 = vst [vmem:[%s662 + $0x8] sm:$0xff] %v9604
        %9621 = vst [vmem:[%s662 + $0x10] sm:$0xff] %v9605
        %9622 = vst [vmem:[%s662 + $0x18] sm:$0xff] %v9606
        %9623 = vst [vmem:[%s662 + $0x20] sm:$0xff] %v9607
        %9624 = vst [vmem:[%s662 + $0x28] sm:$0xff] %v9608
        %9625 = vst [vmem:[%s662 + $0x30] sm:$0xff] %v9609
        %9626 = vst [vmem:[%s662 + $0x38] sm:$0xff] %v9610
        %9627 = vst [vmem:[%s662 + $0x40] sm:$0xff] %v9611
        %9628 = vst [vmem:[%s662 + $0x48] sm:$0xff] %v9612
        %9629 = vst [vmem:[%s662 + $0x50] sm:$0xff] %v9613
        %9630 = vst [vmem:[%s662 + $0x58] sm:$0xff] %v9614
        %9631 = vst [vmem:[%s662 + $0x60] sm:$0xff] %v9615
        %9632 = vst [vmem:[%s662 + $0x68] sm:$0xff] %v9616
        %9633 = vst [vmem:[%s662 + $0x70] sm:$0xff] %v9617
        %9634 = vst [vmem:[%s662 + $0x78] sm:$0xff] %v9618
        %s9635 = sand.u32 %s412, 1
        %s9636 = scalar_lea.sflag [#allocation4], %s9635
        %s9637 = sand.u32 %s412, 1
        %s9638 = smul.addr %s9637, 128
        %s9639 = scalar_lea.vmem [#allocation13], %s9638
        // Predicated region
        $region113: #{tpu_custom_call.1} parent=87 // pred_check
          %p9640 = pneg %p422
        $region114: #{tpu_custom_call.1} parent=87 // pred_check_branch
          %9642 = sbr.rel (%p9640) target = $region116
        $region115: #{tpu_custom_call.1} parent=87 // pred_region
          %9644 = vsyncadd %s9636, 0
          %s9645 = smul.addr %s37, 16
          %s9646 = smul.addr %s9645, 8
          %s9647 = scalar_lea.hbm %s17, %s9646
          %s9648 = sshll.u32 %s9639, 4
          %s9649 = int_to_ptr.vmem [resolvable:$true] %s9648
          %s9650 = sshll.u32 %s9647, 4
          %s9651 = int_to_ptr.hbm [resolvable:$true] %s9650
          %9656 = dma.vmem_to_hbm [thread:$0]  %s9649, 2048, %s9651, %s9636, 128, 128, 8
        $region116: #{tpu_custom_call.1} parent=87 // pred_fallthru
          _
      $region88: #{tpu_custom_call.1} parent=5 // pred_fallthru
        _
      %p9657 = scmp.le.s32.totalorder 2, %s32
      // Predicated region
      $region117: #{tpu_custom_call.1} parent=5 // pred_check
        %p9658 = pneg %p9657
      $region118: #{tpu_custom_call.1} parent=5 // pred_check_branch
        %9660 = sbr.rel (%p9658) target = $region120
      $region119: #{tpu_custom_call.1} parent=5 // pred_region
        %s9661 = ssub.s32 %s32, 2
        // Predicated region
        $region121: #{tpu_custom_call.1} parent=119 // pred_check
          %p9662 = pneg %p428
        $region122: #{tpu_custom_call.1} parent=119 // pred_check_branch
          %9664 = sbr.rel (%p9662) target = $region124
        $region123: #{tpu_custom_call.1} parent=119 // pred_region
          %s9665 = sand.u32 %s413, 1
          %s9666 = scalar_lea.sflag [#allocation4], %s9665
          %s9667 = sand.u32 %s413, 1
          %s9668 = smul.addr %s9667, 128
          %s9669 = scalar_lea.vmem [#allocation13], %s9668
          %9671 = dma.done %s9666, 2048
        $region124: #{tpu_custom_call.1} parent=119 // pred_fallthru
          _
      $region120: #{tpu_custom_call.1} parent=5 // pred_fallthru
        _
    $region6: #{tpu_custom_call.1} parent=1 // loop_footer
      %s36 = sadd.s32 1, %s32
    $region7: #{tpu_custom_call.1} parent=1 // loop_footer_branch
      %31 = sbr.rel target = $region3
    $region8: #{tpu_custom_call.1} parent=1 // loop_exit
      _
    %9672 = vsyncpa [#allocation3], 1
    %s9673 = scalar_lea.sflag [#allocation3], 1
    %9674 = vsyncpa %s9673, 1
    %9675 = vsyncpa [#allocation6], 1
    %9676 = vsyncpa [#allocation9], 1
    %9677 = vsyncpa [#allocation12], 1
    %9678 = vsyncpa [#allocation4], 1
    %s9679 = scalar_lea.sflag [#allocation4], 1
    %9680 = vsyncpa %s9679, 1

</llo_original>
